<compile_context>
chip_gen: v5e
topology: v5e:2x2
jax: 0.10.0
libtpu: 0.0.40
codegen_flags: <defaults>
</compile_context>

<pallas_src>
import functools

import jax
import jax.numpy as jnp
from jax.experimental import pallas as pl
from jax.experimental.pallas import tpu as pltpu


# ----------------------------------------------------------------------------
# Fused decoder-block kernel (one grid step == one image of the batch)
# ----------------------------------------------------------------------------
def _decoder_block_kernel(x_ref, w1_ref, w2_ref, o_ref, xp_ref, hp_ref, *,
                          H, W, Cin, Cmid, Cout):
    f32 = jnp.float32
    bf16 = jnp.bfloat16

    # ---- stage x with a 1-pixel zero halo in VMEM ---------------------------
    xp_ref[...] = jnp.zeros_like(xp_ref)
    xp_ref[1:H + 1, 1:W + 1, :] = x_ref[...]

    # ---- Conv2d(3x3, pad=1, bias=False) + ReLU ------------------------------
    # 9 shifted (H*W, Cin) @ (Cin, Cmid) MXU matmuls, f32 accumulation.
    acc1 = jnp.zeros((H * W, Cmid), f32)
    for dy in range(3):
        for dx in range(3):
            t = 3 * dy + dx
            xs = xp_ref[dy:dy + H, dx:dx + W, :].reshape(H * W, Cin)
            acc1 = acc1 + jnp.dot(xs, w1_ref[t], preferred_element_type=f32)
    h = jnp.maximum(acc1, 0.0).astype(bf16).reshape(H, W, Cmid)

    # ---- stage h with a 1-pixel zero halo in VMEM (never leaves VMEM) -------
    hp_ref[...] = jnp.zeros_like(hp_ref)
    hp_ref[1:H + 1, 1:W + 1, :] = h

    # ---- ConvTranspose2d(4x4, s=2, p=1, bias=False) + ReLU ------------------
    # All 4 output-pixel phases fused into one lane-dense (.., 4*Cout) result.
    acc2 = jnp.zeros((H * W, 4 * Cout), f32)
    for ry in range(3):
        for rx in range(3):
            t = 3 * ry + rx
            hs = hp_ref[ry:ry + H, rx:rx + W, :].reshape(H * W, Cmid)
            acc2 = acc2 + jnp.dot(hs, w2_ref[t], preferred_element_type=f32)
    o_ref[...] = jnp.maximum(acc2, 0.0).reshape(H, W, 4 * Cout).astype(o_ref.dtype)


# ----------------------------------------------------------------------------
# Weight preparation (tiny, trace-time JAX ops)
# ----------------------------------------------------------------------------
def _conv_weight_blocks(conv_w):
    """(3, 3, Cin, Cmid) HWIO -> (9, Cin, Cmid) bf16, tap t = 3*ky + kx."""
    kh, kw, cin, cmid = conv_w.shape
    return conv_w.reshape(kh * kw, cin, cmid).astype(jnp.bfloat16)


def _deconv_weight_blocks(deconv_w):
    """torch (Cmid, Cout, 4, 4) -> (9, Cmid, 4*Cout) bf16 fused-phase weights.

    Output pixel (2i+ph, 2j+pw) only sees the 2x2 input window h[i-1+ph : i+1+ph,
    j-1+pw : j+1+pw] and 4 of the 16 kernel taps.  Row block t = 3*ry + rx of the
    result corresponds to the 3x3-window position (ry, rx) of the halo-padded h;
    columns are the 4 phases (ph, pw) in row-major order, zero where that phase
    does not use this window position.
    """
    cmid, cout = deconv_w.shape[0], deconv_w.shape[1]
    k_map = ((3, 1), (2, 0))  # window offset d (0/1) -> kernel tap, per parity
    blocks = []
    for ry in range(3):
        for rx in range(3):
            cols = []
            for ph in (0, 1):
                for pw in (0, 1):
                    if ry in (ph, ph + 1) and rx in (pw, pw + 1):
                        ky = k_map[ph][ry - ph]
                        kx = k_map[pw][rx - pw]
                        cols.append(deconv_w[:, :, ky, kx])
                    else:
                        cols.append(jnp.zeros((cmid, cout), deconv_w.dtype))
            blocks.append(jnp.concatenate(cols, axis=1))       # (Cmid, 4*Cout)
    return jnp.stack(blocks, axis=0).astype(jnp.bfloat16)      # (9, Cmid, 4*Cout)


# ----------------------------------------------------------------------------
# UNetVGG16DecoderBlock ('upconv' variant)
# ----------------------------------------------------------------------------
# TODO(synk): the non-'upconv' branch (nn.Upsample + two 3x3 convs) is not
#             implemented; only the default 'upconv' path used by UNetVGG16 is.
def init_params(key, in_channels: int, middle_channels: int, out_channels: int):
    k1, k2 = jax.random.split(key)
    conv_scale = (2.0 / (in_channels * 9)) ** 0.5
    deconv_scale = (2.0 / (middle_channels * 16)) ** 0.5
    return {
        # Conv2d weight in HWIO layout (3, 3, Cin, Cmid)
        "conv_w": jax.random.normal(
            k1, (3, 3, in_channels, middle_channels), jnp.float32) * conv_scale,
        # ConvTranspose2d weight in torch layout (Cin, Cout, 4, 4)
        "deconv_w": jax.random.normal(
            k2, (middle_channels, out_channels, 4, 4), jnp.float32) * deconv_scale,
    }


def decoder_block_forward(x_nchw: jax.Array, params) -> jax.Array:
    """UNetVGG16DecoderBlock('upconv').forward — NCHW in, NCHW out."""
    N, Cin, H, W = x_nchw.shape
    Cmid = params["conv_w"].shape[-1]
    Cout = params["deconv_w"].shape[1]

    # TODO(synk): keep the surrounding network NHWC/bf16 to drop the boundary
    #             transposes entirely (module contract here is NCHW f32).
    x = jnp.transpose(x_nchw, (0, 2, 3, 1)).astype(jnp.bfloat16)     # NHWC bf16
    w1 = _conv_weight_blocks(params["conv_w"])
    w2 = _deconv_weight_blocks(params["deconv_w"])

    kernel = functools.partial(_decoder_block_kernel,
                               H=H, W=W, Cin=Cin, Cmid=Cmid, Cout=Cout)
    # TODO(synk): for very large single images (H*W*Cmid of tens of MB) add a
    #             row-tile grid axis with halo recompute; not needed at decoder sizes.
    out4 = pl.pallas_call(
        kernel,
        out_shape=jax.ShapeDtypeStruct((N, H, W, 4 * Cout), jnp.float32),
        grid=(N,),
        in_specs=[
            pl.BlockSpec((None, H, W, Cin), lambda n: (n, 0, 0, 0)),
            pl.BlockSpec((9, Cin, Cmid), lambda n: (0, 0, 0)),
            pl.BlockSpec((9, Cmid, 4 * Cout), lambda n: (0, 0, 0)),
        ],
        out_specs=pl.BlockSpec((None, H, W, 4 * Cout), lambda n: (n, 0, 0, 0)),
        scratch_shapes=[
            pltpu.VMEM((H + 2, W + 2, Cin), jnp.bfloat16),    # halo-padded x
            pltpu.VMEM((H + 2, W + 2, Cmid), jnp.bfloat16),   # halo-padded h
        ],
        compiler_params=pltpu.CompilerParams(
            dimension_semantics=("parallel",)),
    )(x, w1, w2)

    # Interleave the 4 phase channels -> (2i+ph, 2j+pw), then back to NCHW.
    out = out4.reshape(N, H, W, 2, 2, Cout)
    out = jnp.transpose(out, (0, 1, 3, 2, 4, 5)).reshape(N, 2 * H, 2 * W, Cout)
    return jnp.transpose(out, (0, 3, 1, 2))                           # NCHW f32


# ----------------------------------------------------------------------------
# f32 XLA reference (relaxed-tolerance self-check; kernel uses bf16 MXU inputs)
# ----------------------------------------------------------------------------
def reference_forward(x_nchw, params):
    x = jnp.transpose(x_nchw, (0, 2, 3, 1))
    dn1 = jax.lax.conv_dimension_numbers(
        x.shape, params["conv_w"].shape, ("NHWC", "HWIO", "NHWC"))
    h = jax.lax.conv_general_dilated(
        x, params["conv_w"], (1, 1), ((1, 1), (1, 1)), dimension_numbers=dn1,
        precision=jax.lax.Precision.HIGHEST)
    h = jnp.maximum(h, 0.0)
    # ConvTranspose(4,4,s=2,p=1) == conv over 2x-dilated input, pad 2, flipped kernel.
    w_flip = jnp.transpose(jnp.flip(params["deconv_w"], axis=(2, 3)), (2, 3, 0, 1))
    dn2 = jax.lax.conv_dimension_numbers(
        h.shape, w_flip.shape, ("NHWC", "HWIO", "NHWC"))
    o = jax.lax.conv_general_dilated(
        h, w_flip, (1, 1), ((2, 2), (2, 2)), lhs_dilation=(2, 2),
        dimension_numbers=dn2, precision=jax.lax.Precision.HIGHEST)
    o = jnp.maximum(o, 0.0)
    return jnp.transpose(o, (0, 3, 1, 2))


# ----------------------------------------------------------------------------
if __name__ == "__main__":
    key = jax.random.PRNGKey(0)
    pkey, xkey = jax.random.split(key)

    # Decoder-block-sized but small: Cin=64, Cmid=64, Cout=32, 16x16 spatial.
    in_ch, mid_ch, out_ch = 64, 64, 32
    params = init_params(pkey, in_ch, mid_ch, out_ch)
    x = jax.random.normal(xkey, (2, in_ch, 16, 16), jnp.float32)

    fwd = jax.jit(decoder_block_forward)
    out = jax.block_until_ready(fwd(x, params))

    assert out.shape == (2, out_ch, 32, 32), out.shape
    assert bool(jnp.all(jnp.isfinite(out)))
    assert bool(jnp.all(out >= 0.0))  # final ReLU

    # Relaxed-tolerance numeric check vs the f32 XLA reference (kernel uses bf16 MXU).
    ref = jax.block_until_ready(jax.jit(reference_forward)(x, params))
    max_err = float(jnp.max(jnp.abs(out - ref)))
    tol = 5e-2 * float(jnp.max(jnp.abs(ref))) + 1e-2
    assert max_err <= tol, (max_err, tol)

    print("KERNEL_OK")
</pallas_src>

<mosaic_0001>
module attributes {stable_mosaic.version = 11 : i64} {
  func.func @_decoder_block_kernel(%arg0: i32, %arg1: memref<1x16x16x64xbf16, #tpu.memory_space<vmem>>, %arg2: memref<9x64x64xbf16, #tpu.memory_space<vmem>>, %arg3: memref<9x64x128xbf16, #tpu.memory_space<vmem>>, %arg4: memref<1x16x16x128xf32, #tpu.memory_space<vmem>>, %arg5: memref<18x18x64xbf16, #tpu.memory_space<vmem>>, %arg6: memref<18x18x64xbf16, #tpu.memory_space<vmem>>) attributes {dimension_semantics = [#tpu.dimension_semantics<parallel>], iteration_bounds = array<i64: 2>, scalar_prefetch = 0 : i64, scratch_operands = 2 : i64, tpu.core_type = #tpu.core_type<tc>, window_params = [{transform_indices = @transform_0, window_bounds = array<i64: 1, 16, 16, 64>}, {pipeline_mode = #tpu.pipeline_mode<synchronous>, transform_indices = @transform_1, window_bounds = array<i64: 9, 64, 64>}, {pipeline_mode = #tpu.pipeline_mode<synchronous>, transform_indices = @transform_2, window_bounds = array<i64: 9, 64, 128>}, {transform_indices = @transform_3, window_bounds = array<i64: 1, 16, 16, 128>}]} {
    %cst = arith.constant 0.000000e+00 : bf16
    %0 = vector.broadcast %cst : bf16 to vector<18x18x64xbf16>
    %c0 = arith.constant 0 : index
    %c0_0 = arith.constant 0 : index
    %c0_1 = arith.constant 0 : index
    %1 = vector.load %arg5[%c0, %c0_0, %c0_1] : memref<18x18x64xbf16, #tpu.memory_space<vmem>>, vector<18x18x64xbf16>
    tpu.vector_store %arg5[%c0, %c0_0, %c0_1], %0 {strides = array<i32>} : memref<18x18x64xbf16, #tpu.memory_space<vmem>>, vector<18x18x64xbf16>,
    %c0_2 = arith.constant 0 : index
    %c0_3 = arith.constant 0 : index
    %c0_4 = arith.constant 0 : index
    %c0_5 = arith.constant 0 : index
    %2 = vector.load %arg1[%c0_2, %c0_3, %c0_4, %c0_5] : memref<1x16x16x64xbf16, #tpu.memory_space<vmem>>, vector<1x16x16x64xbf16>
    %3 = vector.shape_cast %2 : vector<1x16x16x64xbf16> to vector<16x16x64xbf16>
    %c1 = arith.constant 1 : index
    %c1_6 = arith.constant 1 : index
    %c0_7 = arith.constant 0 : index
    %4 = vector.load %arg5[%c1, %c1_6, %c0_7] : memref<18x18x64xbf16, #tpu.memory_space<vmem>>, vector<16x16x64xbf16>
    tpu.vector_store %arg5[%c1, %c1_6, %c0_7], %3 {strides = array<i32>} : memref<18x18x64xbf16, #tpu.memory_space<vmem>>, vector<16x16x64xbf16>,
    %cst_8 = arith.constant 0.000000e+00 : f32
    %5 = vector.broadcast %cst_8 : f32 to vector<256x64xf32>
    %c0_9 = arith.constant 0 : index
    %c0_10 = arith.constant 0 : index
    %c0_11 = arith.constant 0 : index
    %6 = vector.load %arg5[%c0_9, %c0_10, %c0_11] : memref<18x18x64xbf16, #tpu.memory_space<vmem>>, vector<16x16x64xbf16>
    %7 = vector.shape_cast %6 : vector<16x16x64xbf16> to vector<256x64xbf16>
    %c0_12 = arith.constant 0 : index
    %c0_13 = arith.constant 0 : index
    %c0_14 = arith.constant 0 : index
    %8 = vector.load %arg2[%c0_12, %c0_13, %c0_14] : memref<9x64x64xbf16, #tpu.memory_space<vmem>>, vector<1x64x64xbf16>
    %9 = vector.shape_cast %8 : vector<1x64x64xbf16> to vector<64x64xbf16>
    %cst_15 = arith.constant dense<0.000000e+00> : vector<256x64xf32>
    %10 = tpu.matmul %7, %9, %cst_15 {dimension_numbers = #tpu.dot_dimension_numbers<[1], [0], [0], [1], [0, 0, 1, 1], [], []>} : vector<256x64xbf16>, vector<64x64xbf16>, vector<256x64xf32> -> vector<256x64xf32>
    %11 = arith.addf %5, %10 : vector<256x64xf32>
    %c0_16 = arith.constant 0 : index
    %c1_17 = arith.constant 1 : index
    %c0_18 = arith.constant 0 : index
    %12 = vector.load %arg5[%c0_16, %c1_17, %c0_18] : memref<18x18x64xbf16, #tpu.memory_space<vmem>>, vector<16x16x64xbf16>
    %13 = vector.shape_cast %12 : vector<16x16x64xbf16> to vector<256x64xbf16>
    %c1_19 = arith.constant 1 : index
    %c0_20 = arith.constant 0 : index
    %c0_21 = arith.constant 0 : index
    %14 = vector.load %arg2[%c1_19, %c0_20, %c0_21] : memref<9x64x64xbf16, #tpu.memory_space<vmem>>, vector<1x64x64xbf16>
    %15 = vector.shape_cast %14 : vector<1x64x64xbf16> to vector<64x64xbf16>
    %cst_22 = arith.constant dense<0.000000e+00> : vector<256x64xf32>
    %16 = tpu.matmul %13, %15, %cst_22 {dimension_numbers = #tpu.dot_dimension_numbers<[1], [0], [0], [1], [0, 0, 1, 1], [], []>} : vector<256x64xbf16>, vector<64x64xbf16>, vector<256x64xf32> -> vector<256x64xf32>
    %17 = arith.addf %11, %16 : vector<256x64xf32>
    %c0_23 = arith.constant 0 : index
    %c2 = arith.constant 2 : index
    %c0_24 = arith.constant 0 : index
    %18 = vector.load %arg5[%c0_23, %c2, %c0_24] : memref<18x18x64xbf16, #tpu.memory_space<vmem>>, vector<16x16x64xbf16>
    %19 = vector.shape_cast %18 : vector<16x16x64xbf16> to vector<256x64xbf16>
    %c2_25 = arith.constant 2 : index
    %c0_26 = arith.constant 0 : index
    %c0_27 = arith.constant 0 : index
    %20 = vector.load %arg2[%c2_25, %c0_26, %c0_27] : memref<9x64x64xbf16, #tpu.memory_space<vmem>>, vector<1x64x64xbf16>
    %21 = vector.shape_cast %20 : vector<1x64x64xbf16> to vector<64x64xbf16>
    %cst_28 = arith.constant dense<0.000000e+00> : vector<256x64xf32>
    %22 = tpu.matmul %19, %21, %cst_28 {dimension_numbers = #tpu.dot_dimension_numbers<[1], [0], [0], [1], [0, 0, 1, 1], [], []>} : vector<256x64xbf16>, vector<64x64xbf16>, vector<256x64xf32> -> vector<256x64xf32>
    %23 = arith.addf %17, %22 : vector<256x64xf32>
    %c1_29 = arith.constant 1 : index
    %c0_30 = arith.constant 0 : index
    %c0_31 = arith.constant 0 : index
    %24 = vector.load %arg5[%c1_29, %c0_30, %c0_31] : memref<18x18x64xbf16, #tpu.memory_space<vmem>>, vector<16x16x64xbf16>
    %25 = vector.shape_cast %24 : vector<16x16x64xbf16> to vector<256x64xbf16>
    %c3 = arith.constant 3 : index
    %c0_32 = arith.constant 0 : index
    %c0_33 = arith.constant 0 : index
    %26 = vector.load %arg2[%c3, %c0_32, %c0_33] : memref<9x64x64xbf16, #tpu.memory_space<vmem>>, vector<1x64x64xbf16>
    %27 = vector.shape_cast %26 : vector<1x64x64xbf16> to vector<64x64xbf16>
    %cst_34 = arith.constant dense<0.000000e+00> : vector<256x64xf32>
    %28 = tpu.matmul %25, %27, %cst_34 {dimension_numbers = #tpu.dot_dimension_numbers<[1], [0], [0], [1], [0, 0, 1, 1], [], []>} : vector<256x64xbf16>, vector<64x64xbf16>, vector<256x64xf32> -> vector<256x64xf32>
    %29 = arith.addf %23, %28 : vector<256x64xf32>
    %c1_35 = arith.constant 1 : index
    %c1_36 = arith.constant 1 : index
    %c0_37 = arith.constant 0 : index
    %30 = vector.load %arg5[%c1_35, %c1_36, %c0_37] : memref<18x18x64xbf16, #tpu.memory_space<vmem>>, vector<16x16x64xbf16>
    %31 = vector.shape_cast %30 : vector<16x16x64xbf16> to vector<256x64xbf16>
    %c4 = arith.constant 4 : index
    %c0_38 = arith.constant 0 : index
    %c0_39 = arith.constant 0 : index
    %32 = vector.load %arg2[%c4, %c0_38, %c0_39] : memref<9x64x64xbf16, #tpu.memory_space<vmem>>, vector<1x64x64xbf16>
    %33 = vector.shape_cast %32 : vector<1x64x64xbf16> to vector<64x64xbf16>
    %cst_40 = arith.constant dense<0.000000e+00> : vector<256x64xf32>
    %34 = tpu.matmul %31, %33, %cst_40 {dimension_numbers = #tpu.dot_dimension_numbers<[1], [0], [0], [1], [0, 0, 1, 1], [], []>} : vector<256x64xbf16>, vector<64x64xbf16>, vector<256x64xf32> -> vector<256x64xf32>
    %35 = arith.addf %29, %34 : vector<256x64xf32>
    %c1_41 = arith.constant 1 : index
    %c2_42 = arith.constant 2 : index
    %c0_43 = arith.constant 0 : index
    %36 = vector.load %arg5[%c1_41, %c2_42, %c0_43] : memref<18x18x64xbf16, #tpu.memory_space<vmem>>, vector<16x16x64xbf16>
    %37 = vector.shape_cast %36 : vector<16x16x64xbf16> to vector<256x64xbf16>
    %c5 = arith.constant 5 : index
    %c0_44 = arith.constant 0 : index
    %c0_45 = arith.constant 0 : index
    %38 = vector.load %arg2[%c5, %c0_44, %c0_45] : memref<9x64x64xbf16, #tpu.memory_space<vmem>>, vector<1x64x64xbf16>
    %39 = vector.shape_cast %38 : vector<1x64x64xbf16> to vector<64x64xbf16>
    %cst_46 = arith.constant dense<0.000000e+00> : vector<256x64xf32>
    %40 = tpu.matmul %37, %39, %cst_46 {dimension_numbers = #tpu.dot_dimension_numbers<[1], [0], [0], [1], [0, 0, 1, 1], [], []>} : vector<256x64xbf16>, vector<64x64xbf16>, vector<256x64xf32> -> vector<256x64xf32>
    %41 = arith.addf %35, %40 : vector<256x64xf32>
    %c2_47 = arith.constant 2 : index
    %c0_48 = arith.constant 0 : index
    %c0_49 = arith.constant 0 : index
    %42 = vector.load %arg5[%c2_47, %c0_48, %c0_49] : memref<18x18x64xbf16, #tpu.memory_space<vmem>>, vector<16x16x64xbf16>
    %43 = vector.shape_cast %42 : vector<16x16x64xbf16> to vector<256x64xbf16>
    %c6 = arith.constant 6 : index
    %c0_50 = arith.constant 0 : index
    %c0_51 = arith.constant 0 : index
    %44 = vector.load %arg2[%c6, %c0_50, %c0_51] : memref<9x64x64xbf16, #tpu.memory_space<vmem>>, vector<1x64x64xbf16>
    %45 = vector.shape_cast %44 : vector<1x64x64xbf16> to vector<64x64xbf16>
    %cst_52 = arith.constant dense<0.000000e+00> : vector<256x64xf32>
    %46 = tpu.matmul %43, %45, %cst_52 {dimension_numbers = #tpu.dot_dimension_numbers<[1], [0], [0], [1], [0, 0, 1, 1], [], []>} : vector<256x64xbf16>, vector<64x64xbf16>, vector<256x64xf32> -> vector<256x64xf32>
    %47 = arith.addf %41, %46 : vector<256x64xf32>
    %c2_53 = arith.constant 2 : index
    %c1_54 = arith.constant 1 : index
    %c0_55 = arith.constant 0 : index
    %48 = vector.load %arg5[%c2_53, %c1_54, %c0_55] : memref<18x18x64xbf16, #tpu.memory_space<vmem>>, vector<16x16x64xbf16>
    %49 = vector.shape_cast %48 : vector<16x16x64xbf16> to vector<256x64xbf16>
    %c7 = arith.constant 7 : index
    %c0_56 = arith.constant 0 : index
    %c0_57 = arith.constant 0 : index
    %50 = vector.load %arg2[%c7, %c0_56, %c0_57] : memref<9x64x64xbf16, #tpu.memory_space<vmem>>, vector<1x64x64xbf16>
    %51 = vector.shape_cast %50 : vector<1x64x64xbf16> to vector<64x64xbf16>
    %cst_58 = arith.constant dense<0.000000e+00> : vector<256x64xf32>
    %52 = tpu.matmul %49, %51, %cst_58 {dimension_numbers = #tpu.dot_dimension_numbers<[1], [0], [0], [1], [0, 0, 1, 1], [], []>} : vector<256x64xbf16>, vector<64x64xbf16>, vector<256x64xf32> -> vector<256x64xf32>
    %53 = arith.addf %47, %52 : vector<256x64xf32>
    %c2_59 = arith.constant 2 : index
    %c2_60 = arith.constant 2 : index
    %c0_61 = arith.constant 0 : index
    %54 = vector.load %arg5[%c2_59, %c2_60, %c0_61] : memref<18x18x64xbf16, #tpu.memory_space<vmem>>, vector<16x16x64xbf16>
    %55 = vector.shape_cast %54 : vector<16x16x64xbf16> to vector<256x64xbf16>
    %c8 = arith.constant 8 : index
    %c0_62 = arith.constant 0 : index
    %c0_63 = arith.constant 0 : index
    %56 = vector.load %arg2[%c8, %c0_62, %c0_63] : memref<9x64x64xbf16, #tpu.memory_space<vmem>>, vector<1x64x64xbf16>
    %57 = vector.shape_cast %56 : vector<1x64x64xbf16> to vector<64x64xbf16>
    %cst_64 = arith.constant dense<0.000000e+00> : vector<256x64xf32>
    %58 = tpu.matmul %55, %57, %cst_64 {dimension_numbers = #tpu.dot_dimension_numbers<[1], [0], [0], [1], [0, 0, 1, 1], [], []>} : vector<256x64xbf16>, vector<64x64xbf16>, vector<256x64xf32> -> vector<256x64xf32>
    %59 = arith.addf %53, %58 : vector<256x64xf32>
    %cst_65 = arith.constant 0.000000e+00 : f32
    %60 = vector.broadcast %cst_65 : f32 to vector<256x64xf32>
    %61 = arith.maximumf %59, %60 : vector<256x64xf32>
    %62 = arith.truncf %61 : vector<256x64xf32> to vector<256x64xbf16>
    %63 = vector.shape_cast %62 : vector<256x64xbf16> to vector<16x16x64xbf16>
    %cst_66 = arith.constant 0.000000e+00 : bf16
    %64 = vector.broadcast %cst_66 : bf16 to vector<18x18x64xbf16>
    %c0_67 = arith.constant 0 : index
    %c0_68 = arith.constant 0 : index
    %c0_69 = arith.constant 0 : index
    %65 = vector.load %arg6[%c0_67, %c0_68, %c0_69] : memref<18x18x64xbf16, #tpu.memory_space<vmem>>, vector<18x18x64xbf16>
    tpu.vector_store %arg6[%c0_67, %c0_68, %c0_69], %64 {strides = array<i32>} : memref<18x18x64xbf16, #tpu.memory_space<vmem>>, vector<18x18x64xbf16>,
    %c1_70 = arith.constant 1 : index
    %c1_71 = arith.constant 1 : index
    %c0_72 = arith.constant 0 : index
    %66 = vector.load %arg6[%c1_70, %c1_71, %c0_72] : memref<18x18x64xbf16, #tpu.memory_space<vmem>>, vector<16x16x64xbf16>
    tpu.vector_store %arg6[%c1_70, %c1_71, %c0_72], %63 {strides = array<i32>} : memref<18x18x64xbf16, #tpu.memory_space<vmem>>, vector<16x16x64xbf16>,
    %cst_73 = arith.constant 0.000000e+00 : f32
    %67 = vector.broadcast %cst_73 : f32 to vector<256x128xf32>
    %c0_74 = arith.constant 0 : index
    %c0_75 = arith.constant 0 : index
    %c0_76 = arith.constant 0 : index
    %68 = vector.load %arg6[%c0_74, %c0_75, %c0_76] : memref<18x18x64xbf16, #tpu.memory_space<vmem>>, vector<16x16x64xbf16>
    %69 = vector.shape_cast %68 : vector<16x16x64xbf16> to vector<256x64xbf16>
    %c0_77 = arith.constant 0 : index
    %c0_78 = arith.constant 0 : index
    %c0_79 = arith.constant 0 : index
    %70 = vector.load %arg3[%c0_77, %c0_78, %c0_79] : memref<9x64x128xbf16, #tpu.memory_space<vmem>>, vector<1x64x128xbf16>
    %71 = vector.shape_cast %70 : vector<1x64x128xbf16> to vector<64x128xbf16>
    %cst_80 = arith.constant dense<0.000000e+00> : vector<256x128xf32>
    %72 = tpu.matmul %69, %71, %cst_80 {dimension_numbers = #tpu.dot_dimension_numbers<[1], [0], [0], [1], [0, 0, 1, 1], [], []>} : vector<256x64xbf16>, vector<64x128xbf16>, vector<256x128xf32> -> vector<256x128xf32>
    %73 = arith.addf %67, %72 : vector<256x128xf32>
    %c0_81 = arith.constant 0 : index
    %c1_82 = arith.constant 1 : index
    %c0_83 = arith.constant 0 : index
    %74 = vector.load %arg6[%c0_81, %c1_82, %c0_83] : memref<18x18x64xbf16, #tpu.memory_space<vmem>>, vector<16x16x64xbf16>
    %75 = vector.shape_cast %74 : vector<16x16x64xbf16> to vector<256x64xbf16>
    %c1_84 = arith.constant 1 : index
    %c0_85 = arith.constant 0 : index
    %c0_86 = arith.constant 0 : index
    %76 = vector.load %arg3[%c1_84, %c0_85, %c0_86] : memref<9x64x128xbf16, #tpu.memory_space<vmem>>, vector<1x64x128xbf16>
    %77 = vector.shape_cast %76 : vector<1x64x128xbf16> to vector<64x128xbf16>
    %cst_87 = arith.constant dense<0.000000e+00> : vector<256x128xf32>
    %78 = tpu.matmul %75, %77, %cst_87 {dimension_numbers = #tpu.dot_dimension_numbers<[1], [0], [0], [1], [0, 0, 1, 1], [], []>} : vector<256x64xbf16>, vector<64x128xbf16>, vector<256x128xf32> -> vector<256x128xf32>
    %79 = arith.addf %73, %78 : vector<256x128xf32>
    %c0_88 = arith.constant 0 : index
    %c2_89 = arith.constant 2 : index
    %c0_90 = arith.constant 0 : index
    %80 = vector.load %arg6[%c0_88, %c2_89, %c0_90] : memref<18x18x64xbf16, #tpu.memory_space<vmem>>, vector<16x16x64xbf16>
    %81 = vector.shape_cast %80 : vector<16x16x64xbf16> to vector<256x64xbf16>
    %c2_91 = arith.constant 2 : index
    %c0_92 = arith.constant 0 : index
    %c0_93 = arith.constant 0 : index
    %82 = vector.load %arg3[%c2_91, %c0_92, %c0_93] : memref<9x64x128xbf16, #tpu.memory_space<vmem>>, vector<1x64x128xbf16>
    %83 = vector.shape_cast %82 : vector<1x64x128xbf16> to vector<64x128xbf16>
    %cst_94 = arith.constant dense<0.000000e+00> : vector<256x128xf32>
    %84 = tpu.matmul %81, %83, %cst_94 {dimension_numbers = #tpu.dot_dimension_numbers<[1], [0], [0], [1], [0, 0, 1, 1], [], []>} : vector<256x64xbf16>, vector<64x128xbf16>, vector<256x128xf32> -> vector<256x128xf32>
    %85 = arith.addf %79, %84 : vector<256x128xf32>
    %c1_95 = arith.constant 1 : index
    %c0_96 = arith.constant 0 : index
    %c0_97 = arith.constant 0 : index
    %86 = vector.load %arg6[%c1_95, %c0_96, %c0_97] : memref<18x18x64xbf16, #tpu.memory_space<vmem>>, vector<16x16x64xbf16>
    %87 = vector.shape_cast %86 : vector<16x16x64xbf16> to vector<256x64xbf16>
    %c3_98 = arith.constant 3 : index
    %c0_99 = arith.constant 0 : index
    %c0_100 = arith.constant 0 : index
    %88 = vector.load %arg3[%c3_98, %c0_99, %c0_100] : memref<9x64x128xbf16, #tpu.memory_space<vmem>>, vector<1x64x128xbf16>
    %89 = vector.shape_cast %88 : vector<1x64x128xbf16> to vector<64x128xbf16>
    %cst_101 = arith.constant dense<0.000000e+00> : vector<256x128xf32>
    %90 = tpu.matmul %87, %89, %cst_101 {dimension_numbers = #tpu.dot_dimension_numbers<[1], [0], [0], [1], [0, 0, 1, 1], [], []>} : vector<256x64xbf16>, vector<64x128xbf16>, vector<256x128xf32> -> vector<256x128xf32>
    %91 = arith.addf %85, %90 : vector<256x128xf32>
    %c1_102 = arith.constant 1 : index
    %c1_103 = arith.constant 1 : index
    %c0_104 = arith.constant 0 : index
    %92 = vector.load %arg6[%c1_102, %c1_103, %c0_104] : memref<18x18x64xbf16, #tpu.memory_space<vmem>>, vector<16x16x64xbf16>
    %93 = vector.shape_cast %92 : vector<16x16x64xbf16> to vector<256x64xbf16>
    %c4_105 = arith.constant 4 : index
    %c0_106 = arith.constant 0 : index
    %c0_107 = arith.constant 0 : index
    %94 = vector.load %arg3[%c4_105, %c0_106, %c0_107] : memref<9x64x128xbf16, #tpu.memory_space<vmem>>, vector<1x64x128xbf16>
    %95 = vector.shape_cast %94 : vector<1x64x128xbf16> to vector<64x128xbf16>
    %cst_108 = arith.constant dense<0.000000e+00> : vector<256x128xf32>
    %96 = tpu.matmul %93, %95, %cst_108 {dimension_numbers = #tpu.dot_dimension_numbers<[1], [0], [0], [1], [0, 0, 1, 1], [], []>} : vector<256x64xbf16>, vector<64x128xbf16>, vector<256x128xf32> -> vector<256x128xf32>
    %97 = arith.addf %91, %96 : vector<256x128xf32>
    %c1_109 = arith.constant 1 : index
    %c2_110 = arith.constant 2 : index
    %c0_111 = arith.constant 0 : index
    %98 = vector.load %arg6[%c1_109, %c2_110, %c0_111] : memref<18x18x64xbf16, #tpu.memory_space<vmem>>, vector<16x16x64xbf16>
    %99 = vector.shape_cast %98 : vector<16x16x64xbf16> to vector<256x64xbf16>
    %c5_112 = arith.constant 5 : index
    %c0_113 = arith.constant 0 : index
    %c0_114 = arith.constant 0 : index
    %100 = vector.load %arg3[%c5_112, %c0_113, %c0_114] : memref<9x64x128xbf16, #tpu.memory_space<vmem>>, vector<1x64x128xbf16>
    %101 = vector.shape_cast %100 : vector<1x64x128xbf16> to vector<64x128xbf16>
    %cst_115 = arith.constant dense<0.000000e+00> : vector<256x128xf32>
    %102 = tpu.matmul %99, %101, %cst_115 {dimension_numbers = #tpu.dot_dimension_numbers<[1], [0], [0], [1], [0, 0, 1, 1], [], []>} : vector<256x64xbf16>, vector<64x128xbf16>, vector<256x128xf32> -> vector<256x128xf32>
    %103 = arith.addf %97, %102 : vector<256x128xf32>
    %c2_116 = arith.constant 2 : index
    %c0_117 = arith.constant 0 : index
    %c0_118 = arith.constant 0 : index
    %104 = vector.load %arg6[%c2_116, %c0_117, %c0_118] : memref<18x18x64xbf16, #tpu.memory_space<vmem>>, vector<16x16x64xbf16>
    %105 = vector.shape_cast %104 : vector<16x16x64xbf16> to vector<256x64xbf16>
    %c6_119 = arith.constant 6 : index
    %c0_120 = arith.constant 0 : index
    %c0_121 = arith.constant 0 : index
    %106 = vector.load %arg3[%c6_119, %c0_120, %c0_121] : memref<9x64x128xbf16, #tpu.memory_space<vmem>>, vector<1x64x128xbf16>
    %107 = vector.shape_cast %106 : vector<1x64x128xbf16> to vector<64x128xbf16>
    %cst_122 = arith.constant dense<0.000000e+00> : vector<256x128xf32>
    %108 = tpu.matmul %105, %107, %cst_122 {dimension_numbers = #tpu.dot_dimension_numbers<[1], [0], [0], [1], [0, 0, 1, 1], [], []>} : vector<256x64xbf16>, vector<64x128xbf16>, vector<256x128xf32> -> vector<256x128xf32>
    %109 = arith.addf %103, %108 : vector<256x128xf32>
    %c2_123 = arith.constant 2 : index
    %c1_124 = arith.constant 1 : index
    %c0_125 = arith.constant 0 : index
    %110 = vector.load %arg6[%c2_123, %c1_124, %c0_125] : memref<18x18x64xbf16, #tpu.memory_space<vmem>>, vector<16x16x64xbf16>
    %111 = vector.shape_cast %110 : vector<16x16x64xbf16> to vector<256x64xbf16>
    %c7_126 = arith.constant 7 : index
    %c0_127 = arith.constant 0 : index
    %c0_128 = arith.constant 0 : index
    %112 = vector.load %arg3[%c7_126, %c0_127, %c0_128] : memref<9x64x128xbf16, #tpu.memory_space<vmem>>, vector<1x64x128xbf16>
    %113 = vector.shape_cast %112 : vector<1x64x128xbf16> to vector<64x128xbf16>
    %cst_129 = arith.constant dense<0.000000e+00> : vector<256x128xf32>
    %114 = tpu.matmul %111, %113, %cst_129 {dimension_numbers = #tpu.dot_dimension_numbers<[1], [0], [0], [1], [0, 0, 1, 1], [], []>} : vector<256x64xbf16>, vector<64x128xbf16>, vector<256x128xf32> -> vector<256x128xf32>
    %115 = arith.addf %109, %114 : vector<256x128xf32>
    %c2_130 = arith.constant 2 : index
    %c2_131 = arith.constant 2 : index
    %c0_132 = arith.constant 0 : index
    %116 = vector.load %arg6[%c2_130, %c2_131, %c0_132] : memref<18x18x64xbf16, #tpu.memory_space<vmem>>, vector<16x16x64xbf16>
    %117 = vector.shape_cast %116 : vector<16x16x64xbf16> to vector<256x64xbf16>
    %c8_133 = arith.constant 8 : index
    %c0_134 = arith.constant 0 : index
    %c0_135 = arith.constant 0 : index
    %118 = vector.load %arg3[%c8_133, %c0_134, %c0_135] : memref<9x64x128xbf16, #tpu.memory_space<vmem>>, vector<1x64x128xbf16>
    %119 = vector.shape_cast %118 : vector<1x64x128xbf16> to vector<64x128xbf16>
    %cst_136 = arith.constant dense<0.000000e+00> : vector<256x128xf32>
    %120 = tpu.matmul %117, %119, %cst_136 {dimension_numbers = #tpu.dot_dimension_numbers<[1], [0], [0], [1], [0, 0, 1, 1], [], []>} : vector<256x64xbf16>, vector<64x128xbf16>, vector<256x128xf32> -> vector<256x128xf32>
    %121 = arith.addf %115, %120 : vector<256x128xf32>
    %cst_137 = arith.constant 0.000000e+00 : f32
    %122 = vector.broadcast %cst_137 : f32 to vector<256x128xf32>
    %123 = arith.maximumf %121, %122 : vector<256x128xf32>
    %124 = vector.shape_cast %123 : vector<256x128xf32> to vector<16x16x128xf32>
    %c0_138 = arith.constant 0 : index
    %c0_139 = arith.constant 0 : index
    %c0_140 = arith.constant 0 : index
    %c0_141 = arith.constant 0 : index
    %125 = vector.load %arg4[%c0_138, %c0_139, %c0_140, %c0_141] : memref<1x16x16x128xf32, #tpu.memory_space<vmem>>, vector<1x16x16x128xf32>
    %126 = vector.shape_cast %125 : vector<1x16x16x128xf32> to vector<16x16x128xf32>
    %127 = vector.shape_cast %124 : vector<16x16x128xf32> to vector<1x16x16x128xf32>
    tpu.vector_store %arg4[%c0_138, %c0_139, %c0_140, %c0_141], %127 {strides = array<i32>} : memref<1x16x16x128xf32, #tpu.memory_space<vmem>>, vector<1x16x16x128xf32>,
    return
  }
  func.func @transform_0(%arg0: i32) -> (i32, i32, i32, i32) {
    %c0_i32 = arith.constant 0 : i32
    %c0_i32_0 = arith.constant 0 : i32
    %c0_i32_1 = arith.constant 0 : i32
    %c0_i32_2 = arith.constant 0 : i32
    return %arg0, %c0_i32, %c0_i32_0, %c0_i32_1 : i32, i32, i32, i32
  }
  func.func @transform_1(%arg0: i32) -> (i32, i32, i32) {
    %c0_i32 = arith.constant 0 : i32
    %c0_i32_0 = arith.constant 0 : i32
    %c0_i32_1 = arith.constant 0 : i32
    %c0_i32_2 = arith.constant 0 : i32
    return %c0_i32, %c0_i32_0, %c0_i32_1 : i32, i32, i32
  }
  func.func @transform_2(%arg0: i32) -> (i32, i32, i32) {
    %c0_i32 = arith.constant 0 : i32
    %c0_i32_0 = arith.constant 0 : i32
    %c0_i32_1 = arith.constant 0 : i32
    %c0_i32_2 = arith.constant 0 : i32
    return %c0_i32, %c0_i32_0, %c0_i32_1 : i32, i32, i32
  }
  func.func @transform_3(%arg0: i32) -> (i32, i32, i32, i32) {
    %c0_i32 = arith.constant 0 : i32
    %c0_i32_0 = arith.constant 0 : i32
    %c0_i32_1 = arith.constant 0 : i32
    %c0_i32_2 = arith.constant 0 : i32
    return %arg0, %c0_i32, %c0_i32_0, %c0_i32_1 : i32, i32, i32, i32
  }
}

</mosaic_0001>

<llo_original>
// kernel: decoder_block_forward.1
$region0: #{decoder_block_forward.1}
  #allocation0 [shape = 'u32[]', space=smem, size = 0x4, offset = 0x4, fixed_abs, tag = 'smem constant byte address 0x4 - core index']
  #allocation1 [shape = 'u32[72,128]{1,0:T(1,128)}', space=vmem, size = 0x9000, scoped, tag = 'internal scratch']
  #allocation2 [shape = 'bf16[18,18,64]{2,1,0:T(8,128)(2,1)}', space=vmem, size = 0x1b000, scoped, tag = 'scratch operand']
  #allocation3 [shape = 'bf16[18,18,64]{2,1,0:T(8,128)(2,1)}', space=vmem, size = 0x1b000, scoped, tag = 'scratch operand']
  %s0 = inlined_call_operand.vmem [shape: bf16[2,16,16,64], index: 0, kind: input, shape index: {}]
  %s1 = inlined_call_operand.vmem [shape: bf16[9,64,64], index: 1, kind: input, shape index: {}]
  %s2 = inlined_call_operand.vmem [shape: bf16[9,64,128], index: 2, kind: input, shape index: {}]
  %s3 = inlined_call_operand.vmem [shape: f32[2,16,16,128], index: 3, kind: output, shape index: {}]
  %s4 = sld [smem:[#allocation0]]
  $region45: #{decoder_block_forward.1} parent=0
    _
  %s6 = ssub.s32 1, %s4
  %s7 = scalar_select 0, %s6, %s4
  loop: start=0, step=1, limit=4
  $region2: #{decoder_block_forward.1} parent=0 // loop_pre_header
    _
  $region3: #{decoder_block_forward.1} parent=0 // loop_header
    %s9 = sphi 0, %s13
    %p10 = scmp.ge.s32.totalorder %s9, 4
    %s19 = sphi 0, %s21
    %s22 = sphi 0, %s19
    %s23 = sphi 0, %s22
    %s39 = sphi 0, %s23
    %s43 = sphi 0, %s43
    %s45 = sphi 0, %s43
    %s46 = sphi 0, %s45
    %s60 = sphi 0, %s46
    %s64 = sphi 0, %s64
    %s66 = sphi 0, %s64
    %s67 = sphi 0, %s66
    %s81 = sphi 0, %s67
    %s87 = sphi 0, %s89
    %s90 = sphi 0, %s87
    %s91 = sphi 0, %s90
    %s107 = sphi 0, %s91
  $region4: #{decoder_block_forward.1} parent=0 // loop_header_branch
    %12 = sbr.rel (%p10) target = $region8
  $region5: #{decoder_block_forward.1} parent=0 // loop_body
    %s14 = ssub.s32 %s9, 1
    %s15 = ssub.s32 %s9, 2
    %s16 = sadd.s32 %s9, 1
    %s17 = ssub.s32 %s9, %s16
    %p18 = scmp.eq.s32.totalorder %s17, 0
    %s20 = sadd.s32 %s19, 1
    %s21 = scalar_select %p18, %s19, %s20
    %p24 = pneg %p18
    %p25 = scmp.eq.s32.totalorder %s9, 1
    %p26 = por %p24, %p25
    %p27 = scmp.ne.s32.totalorder %s19, %s22
    %p28 = scmp.eq.s32.totalorder %s9, 0
    %p29 = por %p27, %p28
    %p30 = scmp.ne.s32.totalorder %s19, %s22
    %p31 = scmp.eq.s32.totalorder %s14, 1
    %p32 = por %p30, %p31
    %p33 = scmp.ne.s32.totalorder %s22, %s23
    %p34 = scmp.eq.s32.totalorder %s14, 0
    %p35 = por %p33, %p34
    %p36 = scmp.ne.s32.totalorder %s22, %s23
    %p37 = scmp.eq.s32.totalorder %s15, 1
    %p38 = por %p36, %p37
    %p40 = scmp.ne.s32.totalorder %s23, %s39
    %p41 = scmp.eq.s32.totalorder %s15, 0
    %p42 = por %p40, %p41
    %s44 = sadd.s32 %s43, 1
    %p47 = scmp.eq.s32.totalorder %s9, 1
    %p48 = scmp.ne.s32.totalorder %s43, %s45
    %p49 = scmp.eq.s32.totalorder %s9, 0
    %p50 = por %p48, %p49
    %p51 = scmp.ne.s32.totalorder %s43, %s45
    %p52 = scmp.eq.s32.totalorder %s14, 1
    %p53 = por %p51, %p52
    %p54 = scmp.ne.s32.totalorder %s45, %s46
    %p55 = scmp.eq.s32.totalorder %s14, 0
    %p56 = por %p54, %p55
    %p57 = scmp.ne.s32.totalorder %s45, %s46
    %p58 = scmp.eq.s32.totalorder %s15, 1
    %p59 = por %p57, %p58
    %p61 = scmp.ne.s32.totalorder %s46, %s60
    %p62 = scmp.eq.s32.totalorder %s15, 0
    %p63 = por %p61, %p62
    %s65 = sadd.s32 %s64, 1
    %p68 = scmp.eq.s32.totalorder %s9, 1
    %p69 = scmp.ne.s32.totalorder %s64, %s66
    %p70 = scmp.eq.s32.totalorder %s9, 0
    %p71 = por %p69, %p70
    %p72 = scmp.ne.s32.totalorder %s64, %s66
    %p73 = scmp.eq.s32.totalorder %s14, 1
    %p74 = por %p72, %p73
    %p75 = scmp.ne.s32.totalorder %s66, %s67
    %p76 = scmp.eq.s32.totalorder %s14, 0
    %p77 = por %p75, %p76
    %p78 = scmp.ne.s32.totalorder %s66, %s67
    %p79 = scmp.eq.s32.totalorder %s15, 1
    %p80 = por %p78, %p79
    %p82 = scmp.ne.s32.totalorder %s67, %s81
    %p83 = scmp.eq.s32.totalorder %s15, 0
    %p84 = por %p82, %p83
    %s85 = ssub.s32 %s9, %s16
    %p86 = scmp.eq.s32.totalorder %s85, 0
    %s88 = sadd.s32 %s87, 1
    %s89 = scalar_select %p86, %s87, %s88
    %p92 = pneg %p86
    %p93 = scmp.eq.s32.totalorder %s9, 1
    %p94 = por %p92, %p93
    %p95 = scmp.ne.s32.totalorder %s87, %s90
    %p96 = scmp.eq.s32.totalorder %s9, 0
    %p97 = por %p95, %p96
    %p98 = scmp.ne.s32.totalorder %s87, %s90
    %p99 = scmp.eq.s32.totalorder %s14, 1
    %p100 = por %p98, %p99
    %p101 = scmp.ne.s32.totalorder %s90, %s91
    %p102 = scmp.eq.s32.totalorder %s14, 0
    %p103 = por %p101, %p102
    %p104 = scmp.ne.s32.totalorder %s90, %s91
    %p105 = scmp.eq.s32.totalorder %s15, 1
    %p106 = por %p104, %p105
    %p108 = scmp.ne.s32.totalorder %s91, %s107
    %p109 = scmp.eq.s32.totalorder %s15, 0
    %p110 = por %p108, %p109
    %p111 = scmp.le.s32.totalorder 1, %s9
    %p112 = scmp.lt.s32.totalorder %s9, 3
    %p113 = pnand %p111, %p112
    %p114 = pneg %p113
    // Predicated region
    $region9: #{decoder_block_forward.1} parent=5 // pred_check
      _
    $region10: #{decoder_block_forward.1} parent=5 // pred_check_branch
      %116 = sbr.rel (%p113) target = $region12
    $region11: #{decoder_block_forward.1} parent=5 // pred_region
      %s117 = ssub.s32 %s9, 1
      // Predicated region
      $region13: #{decoder_block_forward.1} parent=11 // pred_check
        %p118 = pneg %p56
      $region14: #{decoder_block_forward.1} parent=11 // pred_check_branch
        %120 = sbr.rel (%p118) target = $region16
      $region15: #{decoder_block_forward.1} parent=11 // pred_region
        _
      $region16: #{decoder_block_forward.1} parent=11 // pred_fallthru
        _
      // Predicated region
      $region17: #{decoder_block_forward.1} parent=11 // pred_check
        %p121 = pneg %p77
      $region18: #{decoder_block_forward.1} parent=11 // pred_check_branch
        %123 = sbr.rel (%p121) target = $region20
      $region19: #{decoder_block_forward.1} parent=11 // pred_region
        _
      $region20: #{decoder_block_forward.1} parent=11 // pred_fallthru
        _
    $region12: #{decoder_block_forward.1} parent=5 // pred_fallthru
      _
    %p124 = scmp.lt.s32.totalorder %s9, 2
    // Predicated region
    $region21: #{decoder_block_forward.1} parent=5 // pred_check
      %p125 = pneg %p124
    $region22: #{decoder_block_forward.1} parent=5 // pred_check_branch
      %127 = sbr.rel (%p125) target = $region24
    $region23: #{decoder_block_forward.1} parent=5 // pred_region
      // Predicated region
      $region25: #{decoder_block_forward.1} parent=23 // pred_check
        %p128 = pneg %p29
      $region26: #{decoder_block_forward.1} parent=23 // pred_check_branch
        %130 = sbr.rel (%p128) target = $region28
      $region27: #{decoder_block_forward.1} parent=23 // pred_region
        %p131 = scmp.lt.s32.totalorder %s9, 1
        %s132 = scalar_select %p131, %s9, 1
        %s133 = smul.addr %s132, 32
        %s134 = smul.addr %s133, 4
        %s135 = scalar_lea.vmem %s0, %s134
      $region28: #{decoder_block_forward.1} parent=23 // pred_fallthru
        _
    $region24: #{decoder_block_forward.1} parent=5 // pred_fallthru
      _
    %p136 = scmp.le.s32.totalorder 1, %s9
    %p137 = scmp.lt.s32.totalorder %s9, 3
    %p138 = pnand %p136, %p137
    %p139 = pneg %p138
    // Predicated region
    $region29: #{decoder_block_forward.1} parent=5 // pred_check
      _
    $region30: #{decoder_block_forward.1} parent=5 // pred_check_branch
      %141 = sbr.rel (%p138) target = $region32
    $region31: #{decoder_block_forward.1} parent=5 // pred_region
      %s142 = ssub.s32 %s9, 1
      %p143 = scmp.lt.s32.totalorder %s14, 1
      %s144 = scalar_select %p143, %s14, 1
      %s145 = smul.addr %s144, 32
      %s146 = smul.addr %s145, 4
      %s147 = scalar_lea.vmem %s0, %s146
      %p148 = pneg %p35
      %p149 = pneg %p32
      %p150 = pneg %p56
      %p151 = pneg %p53
      %p152 = pneg %p77
      %p153 = pneg %p74
      %p154 = pneg %p103
      %p155 = pneg %p100
      %p156 = scmp.lt.s32.totalorder %s14, 1
      %s157 = scalar_select %p156, %s14, 1
      %s158 = smul.addr %s157, 32
      %s159 = smul.addr %s158, 8
      %s160 = scalar_lea.vmem %s3, %s159
      %p161 = scmp.lt.s32.totalorder %s14, 1
      %s162 = scalar_select %p161, %s14, 1
      %s163 = smul.addr %s162, 32
      %s164 = smul.addr %s163, 4
      %s165 = scalar_lea.vmem %s0, %s164
      %p166 = scmp.lt.s32.totalorder %s14, 1
      %s167 = scalar_select %p166, %s14, 1
      %s168 = smul.addr %s167, 32
      %s169 = smul.addr %s168, 8
      %s170 = scalar_lea.vmem %s3, %s169
      %vm172 = vcmask 519168
      %173 = vst.msk [vmem:[#allocation2] sm:$0xf] %vm172, 0
      %174 = vst.msk [vmem:[#allocation2 + $0x4] sm:$0xf] %vm172, 0
      %vm175 = vcmask 516096
      %176 = vst.msk [vmem:[#allocation2 + $0x8] sm:$0x1] %vm175, 0
      %177 = vst.msk [vmem:[#allocation2 + $0xc] sm:$0xf] %vm172, 0
      %178 = vst.msk [vmem:[#allocation2 + $0x10] sm:$0xf] %vm172, 0
      %179 = vst.msk [vmem:[#allocation2 + $0x14] sm:$0x1] %vm175, 0
      %180 = vst.msk [vmem:[#allocation2 + $0x18] sm:$0xf] %vm172, 0
      %181 = vst.msk [vmem:[#allocation2 + $0x1c] sm:$0xf] %vm172, 0
      %182 = vst.msk [vmem:[#allocation2 + $0x20] sm:$0x1] %vm175, 0
      %183 = vst.msk [vmem:[#allocation2 + $0x24] sm:$0xf] %vm172, 0
      %184 = vst.msk [vmem:[#allocation2 + $0x28] sm:$0xf] %vm172, 0
      %185 = vst.msk [vmem:[#allocation2 + $0x2c] sm:$0x1] %vm175, 0
      %186 = vst.msk [vmem:[#allocation2 + $0x30] sm:$0xf] %vm172, 0
      %187 = vst.msk [vmem:[#allocation2 + $0x34] sm:$0xf] %vm172, 0
      %188 = vst.msk [vmem:[#allocation2 + $0x38] sm:$0x1] %vm175, 0
      %189 = vst.msk [vmem:[#allocation2 + $0x3c] sm:$0xf] %vm172, 0
      %190 = vst.msk [vmem:[#allocation2 + $0x40] sm:$0xf] %vm172, 0
      %191 = vst.msk [vmem:[#allocation2 + $0x44] sm:$0x1] %vm175, 0
      %192 = vst.msk [vmem:[#allocation2 + $0x48] sm:$0xf] %vm172, 0
      %193 = vst.msk [vmem:[#allocation2 + $0x4c] sm:$0xf] %vm172, 0
      %194 = vst.msk [vmem:[#allocation2 + $0x50] sm:$0x1] %vm175, 0
      %195 = vst.msk [vmem:[#allocation2 + $0x54] sm:$0xf] %vm172, 0
      %196 = vst.msk [vmem:[#allocation2 + $0x58] sm:$0xf] %vm172, 0
      %197 = vst.msk [vmem:[#allocation2 + $0x5c] sm:$0x1] %vm175, 0
      %198 = vst.msk [vmem:[#allocation2 + $0x60] sm:$0xf] %vm172, 0
      %199 = vst.msk [vmem:[#allocation2 + $0x64] sm:$0xf] %vm172, 0
      %200 = vst.msk [vmem:[#allocation2 + $0x68] sm:$0x1] %vm175, 0
      %201 = vst.msk [vmem:[#allocation2 + $0x6c] sm:$0xf] %vm172, 0
      %202 = vst.msk [vmem:[#allocation2 + $0x70] sm:$0xf] %vm172, 0
      %203 = vst.msk [vmem:[#allocation2 + $0x74] sm:$0x1] %vm175, 0
      %204 = vst.msk [vmem:[#allocation2 + $0x78] sm:$0xf] %vm172, 0
      %205 = vst.msk [vmem:[#allocation2 + $0x7c] sm:$0xf] %vm172, 0
      %206 = vst.msk [vmem:[#allocation2 + $0x80] sm:$0x1] %vm175, 0
      %207 = vst.msk [vmem:[#allocation2 + $0x84] sm:$0xf] %vm172, 0
      %208 = vst.msk [vmem:[#allocation2 + $0x88] sm:$0xf] %vm172, 0
      %209 = vst.msk [vmem:[#allocation2 + $0x8c] sm:$0x1] %vm175, 0
      %210 = vst.msk [vmem:[#allocation2 + $0x90] sm:$0xf] %vm172, 0
      %211 = vst.msk [vmem:[#allocation2 + $0x94] sm:$0xf] %vm172, 0
      %212 = vst.msk [vmem:[#allocation2 + $0x98] sm:$0x1] %vm175, 0
      %213 = vst.msk [vmem:[#allocation2 + $0x9c] sm:$0xf] %vm172, 0
      %214 = vst.msk [vmem:[#allocation2 + $0xa0] sm:$0xf] %vm172, 0
      %215 = vst.msk [vmem:[#allocation2 + $0xa4] sm:$0x1] %vm175, 0
      %216 = vst.msk [vmem:[#allocation2 + $0xa8] sm:$0xf] %vm172, 0
      %217 = vst.msk [vmem:[#allocation2 + $0xac] sm:$0xf] %vm172, 0
      %218 = vst.msk [vmem:[#allocation2 + $0xb0] sm:$0x1] %vm175, 0
      %219 = vst.msk [vmem:[#allocation2 + $0xb4] sm:$0xf] %vm172, 0
      %220 = vst.msk [vmem:[#allocation2 + $0xb8] sm:$0xf] %vm172, 0
      %221 = vst.msk [vmem:[#allocation2 + $0xbc] sm:$0x1] %vm175, 0
      %222 = vst.msk [vmem:[#allocation2 + $0xc0] sm:$0xf] %vm172, 0
      %223 = vst.msk [vmem:[#allocation2 + $0xc4] sm:$0xf] %vm172, 0
      %224 = vst.msk [vmem:[#allocation2 + $0xc8] sm:$0x1] %vm175, 0
      %225 = vst.msk [vmem:[#allocation2 + $0xcc] sm:$0xf] %vm172, 0
      %226 = vst.msk [vmem:[#allocation2 + $0xd0] sm:$0xf] %vm172, 0
      %227 = vst.msk [vmem:[#allocation2 + $0xd4] sm:$0x1] %vm175, 0
      %v228 = vld [vmem:[%s165] sm:$0xf]
      %v229 = vld [vmem:[%s165 + $0x4] sm:$0xf]
      %v230 = vld [vmem:[%s165 + $0x8] sm:$0xf]
      %v231 = vld [vmem:[%s165 + $0xc] sm:$0xf]
      %v232 = vld [vmem:[%s165 + $0x10] sm:$0xf]
      %v233 = vld [vmem:[%s165 + $0x14] sm:$0xf]
      %v234 = vld [vmem:[%s165 + $0x18] sm:$0xf]
      %v235 = vld [vmem:[%s165 + $0x1c] sm:$0xf]
      %v236 = vld [vmem:[%s165 + $0x20] sm:$0xf]
      %v237 = vld [vmem:[%s165 + $0x24] sm:$0xf]
      %v238 = vld [vmem:[%s165 + $0x28] sm:$0xf]
      %v239 = vld [vmem:[%s165 + $0x2c] sm:$0xf]
      %v240 = vld [vmem:[%s165 + $0x30] sm:$0xf]
      %v241 = vld [vmem:[%s165 + $0x34] sm:$0xf]
      %v242 = vld [vmem:[%s165 + $0x38] sm:$0xf]
      %v243 = vld [vmem:[%s165 + $0x3c] sm:$0xf]
      %v244 = vld [vmem:[%s165 + $0x40] sm:$0xf]
      %v245 = vld [vmem:[%s165 + $0x44] sm:$0xf]
      %v246 = vld [vmem:[%s165 + $0x48] sm:$0xf]
      %v247 = vld [vmem:[%s165 + $0x4c] sm:$0xf]
      %v248 = vld [vmem:[%s165 + $0x50] sm:$0xf]
      %v249 = vld [vmem:[%s165 + $0x54] sm:$0xf]
      %v250 = vld [vmem:[%s165 + $0x58] sm:$0xf]
      %v251 = vld [vmem:[%s165 + $0x5c] sm:$0xf]
      %v252 = vld [vmem:[%s165 + $0x60] sm:$0xf]
      %v253 = vld [vmem:[%s165 + $0x64] sm:$0xf]
      %v254 = vld [vmem:[%s165 + $0x68] sm:$0xf]
      %v255 = vld [vmem:[%s165 + $0x6c] sm:$0xf]
      %v256 = vld [vmem:[%s165 + $0x70] sm:$0xf]
      %v257 = vld [vmem:[%s165 + $0x74] sm:$0xf]
      %v258 = vld [vmem:[%s165 + $0x78] sm:$0xf]
      %v259 = vld [vmem:[%s165 + $0x7c] sm:$0xf]
      %vm260 = vsmask.f32 256
      %vm261 = vsmask.f32 4368
      %vm262 = vmor %vm260, %vm261
      %v264 = vshrl.u32 %v228, 16
      %v266 = vrot.slane %v264, 7
      %v267 = vshll.u32 %v228, 16
      %v269 = vor.u32 %v266, %v267
      %v270 = vrot.slane %v266, 4
      %v272 = vshrl.u32 %v229, 16
      %v274 = vrot.slane %v272, 7
      %v275 = vshll.u32 %v229, 16
      %v277 = vor.u32 %v274, %v275
      %v278 = vsel %vm262, %v270, %v277
      %v279 = vrot.slane %v274, 4
      %v281 = vshrl.u32 %v230, 16
      %v283 = vrot.slane %v281, 7
      %v284 = vshll.u32 %v230, 16
      %v286 = vor.u32 %v283, %v284
      %v287 = vrot.slane %v283, 4
      %v289 = vshrl.u32 %v231, 16
      %v291 = vrot.slane %v289, 7
      %v292 = vshll.u32 %v231, 16
      %v294 = vor.u32 %v291, %v292
      %v295 = vsel %vm262, %v287, %v294
      %v296 = vrot.slane %v291, 4
      %v298 = vshrl.u32 %v232, 16
      %v300 = vrot.slane %v298, 7
      %v301 = vshll.u32 %v232, 16
      %v303 = vor.u32 %v300, %v301
      %v304 = vrot.slane %v300, 4
      %v306 = vshrl.u32 %v233, 16
      %v308 = vrot.slane %v306, 7
      %v309 = vshll.u32 %v233, 16
      %v311 = vor.u32 %v308, %v309
      %v312 = vsel %vm262, %v304, %v311
      %v313 = vrot.slane %v308, 4
      %v315 = vshrl.u32 %v234, 16
      %v317 = vrot.slane %v315, 7
      %v318 = vshll.u32 %v234, 16
      %v320 = vor.u32 %v317, %v318
      %v321 = vrot.slane %v317, 4
      %v323 = vshrl.u32 %v235, 16
      %v325 = vrot.slane %v323, 7
      %v326 = vshll.u32 %v235, 16
      %v328 = vor.u32 %v325, %v326
      %v329 = vsel %vm262, %v321, %v328
      %v330 = vrot.slane %v325, 4
      %v332 = vshrl.u32 %v236, 16
      %v334 = vrot.slane %v332, 7
      %v335 = vshll.u32 %v236, 16
      %v337 = vor.u32 %v334, %v335
      %v338 = vrot.slane %v334, 4
      %v340 = vshrl.u32 %v237, 16
      %v342 = vrot.slane %v340, 7
      %v343 = vshll.u32 %v237, 16
      %v345 = vor.u32 %v342, %v343
      %v346 = vsel %vm262, %v338, %v345
      %v347 = vrot.slane %v342, 4
      %v349 = vshrl.u32 %v238, 16
      %v351 = vrot.slane %v349, 7
      %v352 = vshll.u32 %v238, 16
      %v354 = vor.u32 %v351, %v352
      %v355 = vrot.slane %v351, 4
      %v357 = vshrl.u32 %v239, 16
      %v359 = vrot.slane %v357, 7
      %v360 = vshll.u32 %v239, 16
      %v362 = vor.u32 %v359, %v360
      %v363 = vsel %vm262, %v355, %v362
      %v364 = vrot.slane %v359, 4
      %v366 = vshrl.u32 %v240, 16
      %v368 = vrot.slane %v366, 7
      %v369 = vshll.u32 %v240, 16
      %v371 = vor.u32 %v368, %v369
      %v372 = vrot.slane %v368, 4
      %v374 = vshrl.u32 %v241, 16
      %v376 = vrot.slane %v374, 7
      %v377 = vshll.u32 %v241, 16
      %v379 = vor.u32 %v376, %v377
      %v380 = vsel %vm262, %v372, %v379
      %v381 = vrot.slane %v376, 4
      %v383 = vshrl.u32 %v242, 16
      %v385 = vrot.slane %v383, 7
      %v386 = vshll.u32 %v242, 16
      %v388 = vor.u32 %v385, %v386
      %v389 = vrot.slane %v385, 4
      %v391 = vshrl.u32 %v243, 16
      %v393 = vrot.slane %v391, 7
      %v394 = vshll.u32 %v243, 16
      %v396 = vor.u32 %v393, %v394
      %v397 = vsel %vm262, %v389, %v396
      %v398 = vrot.slane %v393, 4
      %v400 = vshrl.u32 %v244, 16
      %v402 = vrot.slane %v400, 7
      %v403 = vshll.u32 %v244, 16
      %v405 = vor.u32 %v402, %v403
      %v406 = vrot.slane %v402, 4
      %v408 = vshrl.u32 %v245, 16
      %v410 = vrot.slane %v408, 7
      %v411 = vshll.u32 %v245, 16
      %v413 = vor.u32 %v410, %v411
      %v414 = vsel %vm262, %v406, %v413
      %v415 = vrot.slane %v410, 4
      %v417 = vshrl.u32 %v246, 16
      %v419 = vrot.slane %v417, 7
      %v420 = vshll.u32 %v246, 16
      %v422 = vor.u32 %v419, %v420
      %v423 = vrot.slane %v419, 4
      %v425 = vshrl.u32 %v247, 16
      %v427 = vrot.slane %v425, 7
      %v428 = vshll.u32 %v247, 16
      %v430 = vor.u32 %v427, %v428
      %v431 = vsel %vm262, %v423, %v430
      %v432 = vrot.slane %v427, 4
      %v434 = vshrl.u32 %v248, 16
      %v436 = vrot.slane %v434, 7
      %v437 = vshll.u32 %v248, 16
      %v439 = vor.u32 %v436, %v437
      %v440 = vrot.slane %v436, 4
      %v442 = vshrl.u32 %v249, 16
      %v444 = vrot.slane %v442, 7
      %v445 = vshll.u32 %v249, 16
      %v447 = vor.u32 %v444, %v445
      %v448 = vsel %vm262, %v440, %v447
      %v449 = vrot.slane %v444, 4
      %v451 = vshrl.u32 %v250, 16
      %v453 = vrot.slane %v451, 7
      %v454 = vshll.u32 %v250, 16
      %v456 = vor.u32 %v453, %v454
      %v457 = vrot.slane %v453, 4
      %v459 = vshrl.u32 %v251, 16
      %v461 = vrot.slane %v459, 7
      %v462 = vshll.u32 %v251, 16
      %v464 = vor.u32 %v461, %v462
      %v465 = vsel %vm262, %v457, %v464
      %v466 = vrot.slane %v461, 4
      %v468 = vshrl.u32 %v252, 16
      %v470 = vrot.slane %v468, 7
      %v471 = vshll.u32 %v252, 16
      %v473 = vor.u32 %v470, %v471
      %v474 = vrot.slane %v470, 4
      %v476 = vshrl.u32 %v253, 16
      %v478 = vrot.slane %v476, 7
      %v479 = vshll.u32 %v253, 16
      %v481 = vor.u32 %v478, %v479
      %v482 = vsel %vm262, %v474, %v481
      %v483 = vrot.slane %v478, 4
      %v485 = vshrl.u32 %v254, 16
      %v487 = vrot.slane %v485, 7
      %v488 = vshll.u32 %v254, 16
      %v490 = vor.u32 %v487, %v488
      %v491 = vrot.slane %v487, 4
      %v493 = vshrl.u32 %v255, 16
      %v495 = vrot.slane %v493, 7
      %v496 = vshll.u32 %v255, 16
      %v498 = vor.u32 %v495, %v496
      %v499 = vsel %vm262, %v491, %v498
      %v500 = vrot.slane %v495, 4
      %v502 = vshrl.u32 %v256, 16
      %v504 = vrot.slane %v502, 7
      %v505 = vshll.u32 %v256, 16
      %v507 = vor.u32 %v504, %v505
      %v508 = vrot.slane %v504, 4
      %v510 = vshrl.u32 %v257, 16
      %v512 = vrot.slane %v510, 7
      %v513 = vshll.u32 %v257, 16
      %v515 = vor.u32 %v512, %v513
      %v516 = vsel %vm262, %v508, %v515
      %v517 = vrot.slane %v512, 4
      %v519 = vshrl.u32 %v258, 16
      %v521 = vrot.slane %v519, 7
      %v522 = vshll.u32 %v258, 16
      %v524 = vor.u32 %v521, %v522
      %v525 = vrot.slane %v521, 4
      %v527 = vshrl.u32 %v259, 16
      %v529 = vrot.slane %v527, 7
      %v530 = vshll.u32 %v259, 16
      %v532 = vor.u32 %v529, %v530
      %v533 = vsel %vm262, %v525, %v532
      %v534 = vrot.slane %v529, 4
      %s583 = scalar_lea.vmem [#allocation2], 12
      %vm584 = vcmask 519168
      %vm585 = vsmask.f32 7938
      %vm586 = vmand %vm584, %vm585
      %v587 = vld [vmem:[%s583] sm:$0xf]
      %v588 = vsel %vm586, %v269, %v587
      %589 = vst [vmem:[%s583] sm:$0xf] %v588
      %590 = vst.msk [vmem:[%s583 + $0x4] sm:$0xf] %vm172, %v278
      %vm591 = vcmask 516096
      %vm592 = vmand %vm591, %vm260
      %v593 = vld [vmem:[%s583 + $0x8] sm:$0x1]
      %v594 = vsel %vm592, %v279, %v593
      %595 = vst [vmem:[%s583 + $0x8] sm:$0x1] %v594
      %v596 = vld [vmem:[%s583 + $0xc] sm:$0xf]
      %v597 = vsel %vm586, %v286, %v596
      %598 = vst [vmem:[%s583 + $0xc] sm:$0xf] %v597
      %599 = vst.msk [vmem:[%s583 + $0x10] sm:$0xf] %vm172, %v295
      %v600 = vld [vmem:[%s583 + $0x14] sm:$0x1]
      %v601 = vsel %vm592, %v296, %v600
      %602 = vst [vmem:[%s583 + $0x14] sm:$0x1] %v601
      %v603 = vld [vmem:[%s583 + $0x18] sm:$0xf]
      %v604 = vsel %vm586, %v303, %v603
      %605 = vst [vmem:[%s583 + $0x18] sm:$0xf] %v604
      %606 = vst.msk [vmem:[%s583 + $0x1c] sm:$0xf] %vm172, %v312
      %v607 = vld [vmem:[%s583 + $0x20] sm:$0x1]
      %v608 = vsel %vm592, %v313, %v607
      %609 = vst [vmem:[%s583 + $0x20] sm:$0x1] %v608
      %v610 = vld [vmem:[%s583 + $0x24] sm:$0xf]
      %v611 = vsel %vm586, %v320, %v610
      %612 = vst [vmem:[%s583 + $0x24] sm:$0xf] %v611
      %613 = vst.msk [vmem:[%s583 + $0x28] sm:$0xf] %vm172, %v329
      %v614 = vld [vmem:[%s583 + $0x2c] sm:$0x1]
      %v615 = vsel %vm592, %v330, %v614
      %616 = vst [vmem:[%s583 + $0x2c] sm:$0x1] %v615
      %v617 = vld [vmem:[%s583 + $0x30] sm:$0xf]
      %v618 = vsel %vm586, %v337, %v617
      %619 = vst [vmem:[%s583 + $0x30] sm:$0xf] %v618
      %620 = vst.msk [vmem:[%s583 + $0x34] sm:$0xf] %vm172, %v346
      %v621 = vld [vmem:[%s583 + $0x38] sm:$0x1]
      %v622 = vsel %vm592, %v347, %v621
      %623 = vst [vmem:[%s583 + $0x38] sm:$0x1] %v622
      %v624 = vld [vmem:[%s583 + $0x3c] sm:$0xf]
      %v625 = vsel %vm586, %v354, %v624
      %626 = vst [vmem:[%s583 + $0x3c] sm:$0xf] %v625
      %627 = vst.msk [vmem:[%s583 + $0x40] sm:$0xf] %vm172, %v363
      %v628 = vld [vmem:[%s583 + $0x44] sm:$0x1]
      %v629 = vsel %vm592, %v364, %v628
      %630 = vst [vmem:[%s583 + $0x44] sm:$0x1] %v629
      %v631 = vld [vmem:[%s583 + $0x48] sm:$0xf]
      %v632 = vsel %vm586, %v371, %v631
      %633 = vst [vmem:[%s583 + $0x48] sm:$0xf] %v632
      %634 = vst.msk [vmem:[%s583 + $0x4c] sm:$0xf] %vm172, %v380
      %v635 = vld [vmem:[%s583 + $0x50] sm:$0x1]
      %v636 = vsel %vm592, %v381, %v635
      %637 = vst [vmem:[%s583 + $0x50] sm:$0x1] %v636
      %v638 = vld [vmem:[%s583 + $0x54] sm:$0xf]
      %v639 = vsel %vm586, %v388, %v638
      %640 = vst [vmem:[%s583 + $0x54] sm:$0xf] %v639
      %641 = vst.msk [vmem:[%s583 + $0x58] sm:$0xf] %vm172, %v397
      %v642 = vld [vmem:[%s583 + $0x5c] sm:$0x1]
      %v643 = vsel %vm592, %v398, %v642
      %644 = vst [vmem:[%s583 + $0x5c] sm:$0x1] %v643
      %v645 = vld [vmem:[%s583 + $0x60] sm:$0xf]
      %v646 = vsel %vm586, %v405, %v645
      %647 = vst [vmem:[%s583 + $0x60] sm:$0xf] %v646
      %648 = vst.msk [vmem:[%s583 + $0x64] sm:$0xf] %vm172, %v414
      %v649 = vld [vmem:[%s583 + $0x68] sm:$0x1]
      %v650 = vsel %vm592, %v415, %v649
      %651 = vst [vmem:[%s583 + $0x68] sm:$0x1] %v650
      %v652 = vld [vmem:[%s583 + $0x6c] sm:$0xf]
      %v653 = vsel %vm586, %v422, %v652
      %654 = vst [vmem:[%s583 + $0x6c] sm:$0xf] %v653
      %655 = vst.msk [vmem:[%s583 + $0x70] sm:$0xf] %vm172, %v431
      %v656 = vld [vmem:[%s583 + $0x74] sm:$0x1]
      %v657 = vsel %vm592, %v432, %v656
      %658 = vst [vmem:[%s583 + $0x74] sm:$0x1] %v657
      %v659 = vld [vmem:[%s583 + $0x78] sm:$0xf]
      %v660 = vsel %vm586, %v439, %v659
      %661 = vst [vmem:[%s583 + $0x78] sm:$0xf] %v660
      %662 = vst.msk [vmem:[%s583 + $0x7c] sm:$0xf] %vm172, %v448
      %v663 = vld [vmem:[%s583 + $0x80] sm:$0x1]
      %v664 = vsel %vm592, %v449, %v663
      %665 = vst [vmem:[%s583 + $0x80] sm:$0x1] %v664
      %v666 = vld [vmem:[%s583 + $0x84] sm:$0xf]
      %v667 = vsel %vm586, %v456, %v666
      %668 = vst [vmem:[%s583 + $0x84] sm:$0xf] %v667
      %669 = vst.msk [vmem:[%s583 + $0x88] sm:$0xf] %vm172, %v465
      %v670 = vld [vmem:[%s583 + $0x8c] sm:$0x1]
      %v671 = vsel %vm592, %v466, %v670
      %672 = vst [vmem:[%s583 + $0x8c] sm:$0x1] %v671
      %v673 = vld [vmem:[%s583 + $0x90] sm:$0xf]
      %v674 = vsel %vm586, %v473, %v673
      %675 = vst [vmem:[%s583 + $0x90] sm:$0xf] %v674
      %676 = vst.msk [vmem:[%s583 + $0x94] sm:$0xf] %vm172, %v482
      %v677 = vld [vmem:[%s583 + $0x98] sm:$0x1]
      %v678 = vsel %vm592, %v483, %v677
      %679 = vst [vmem:[%s583 + $0x98] sm:$0x1] %v678
      %v680 = vld [vmem:[%s583 + $0x9c] sm:$0xf]
      %v681 = vsel %vm586, %v490, %v680
      %682 = vst [vmem:[%s583 + $0x9c] sm:$0xf] %v681
      %683 = vst.msk [vmem:[%s583 + $0xa0] sm:$0xf] %vm172, %v499
      %v684 = vld [vmem:[%s583 + $0xa4] sm:$0x1]
      %v685 = vsel %vm592, %v500, %v684
      %686 = vst [vmem:[%s583 + $0xa4] sm:$0x1] %v685
      %v687 = vld [vmem:[%s583 + $0xa8] sm:$0xf]
      %v688 = vsel %vm586, %v507, %v687
      %689 = vst [vmem:[%s583 + $0xa8] sm:$0xf] %v688
      %690 = vst.msk [vmem:[%s583 + $0xac] sm:$0xf] %vm172, %v516
      %v691 = vld [vmem:[%s583 + $0xb0] sm:$0x1]
      %v692 = vsel %vm592, %v517, %v691
      %693 = vst [vmem:[%s583 + $0xb0] sm:$0x1] %v692
      %v694 = vld [vmem:[%s583 + $0xb4] sm:$0xf]
      %v695 = vsel %vm586, %v524, %v694
      %696 = vst [vmem:[%s583 + $0xb4] sm:$0xf] %v695
      %697 = vst.msk [vmem:[%s583 + $0xb8] sm:$0xf] %vm172, %v533
      %v698 = vld [vmem:[%s583 + $0xbc] sm:$0x1]
      %v699 = vsel %vm592, %v534, %v698
      %700 = vst [vmem:[%s583 + $0xbc] sm:$0x1] %v699
      %v701 = vld [vmem:[#allocation2] sm:$0xf]
      %v702 = vld [vmem:[#allocation2 + $0x4] sm:$0xf]
      %v703 = vld [vmem:[#allocation2 + $0xc] sm:$0xf]
      %v704 = vld [vmem:[#allocation2 + $0x10] sm:$0xf]
      %v705 = vld [vmem:[#allocation2 + $0x18] sm:$0xf]
      %v706 = vld [vmem:[#allocation2 + $0x1c] sm:$0xf]
      %v707 = vld [vmem:[#allocation2 + $0x24] sm:$0xf]
      %v708 = vld [vmem:[#allocation2 + $0x28] sm:$0xf]
      %v709 = vld [vmem:[#allocation2 + $0x30] sm:$0xf]
      %v710 = vld [vmem:[#allocation2 + $0x34] sm:$0xf]
      %v711 = vld [vmem:[#allocation2 + $0x3c] sm:$0xf]
      %v712 = vld [vmem:[#allocation2 + $0x40] sm:$0xf]
      %v713 = vld [vmem:[#allocation2 + $0x48] sm:$0xf]
      %v714 = vld [vmem:[#allocation2 + $0x4c] sm:$0xf]
      %v715 = vld [vmem:[#allocation2 + $0x54] sm:$0xf]
      %v716 = vld [vmem:[#allocation2 + $0x58] sm:$0xf]
      %v717 = vld [vmem:[#allocation2 + $0x60] sm:$0xf]
      %v718 = vld [vmem:[#allocation2 + $0x64] sm:$0xf]
      %v719 = vld [vmem:[#allocation2 + $0x6c] sm:$0xf]
      %v720 = vld [vmem:[#allocation2 + $0x70] sm:$0xf]
      %v721 = vld [vmem:[#allocation2 + $0x78] sm:$0xf]
      %v722 = vld [vmem:[#allocation2 + $0x7c] sm:$0xf]
      %v723 = vld [vmem:[#allocation2 + $0x84] sm:$0xf]
      %v724 = vld [vmem:[#allocation2 + $0x88] sm:$0xf]
      %v725 = vld [vmem:[#allocation2 + $0x90] sm:$0xf]
      %v726 = vld [vmem:[#allocation2 + $0x94] sm:$0xf]
      %v727 = vld [vmem:[#allocation2 + $0x9c] sm:$0xf]
      %v728 = vld [vmem:[#allocation2 + $0xa0] sm:$0xf]
      %v729 = vld [vmem:[#allocation2 + $0xa8] sm:$0xf]
      %v730 = vld [vmem:[#allocation2 + $0xac] sm:$0xf]
      %v731 = vld [vmem:[#allocation2 + $0xb4] sm:$0xf]
      %v732 = vld [vmem:[#allocation2 + $0xb8] sm:$0xf]
      %v733 = vld [vmem:[%s1] sm:$0xf]
      %v734 = vld [vmem:[%s1 + $0x4] sm:$0xf]
      %v735 = vld [vmem:[%s1 + $0x8] sm:$0xf]
      %v736 = vld [vmem:[%s1 + $0xc] sm:$0xf]
      %v737 = vld [vmem:[%s1 + $0x10] sm:$0xf]
      %v738 = vld [vmem:[%s1 + $0x14] sm:$0xf]
      %v739 = vld [vmem:[%s1 + $0x18] sm:$0xf]
      %v740 = vld [vmem:[%s1 + $0x1c] sm:$0xf]
      %v741 = vld [vmem:[#allocation2 + $0x8] sm:$0x1]
      %v742 = vld [vmem:[#allocation2 + $0x14] sm:$0x1]
      %v743 = vld [vmem:[#allocation2 + $0x20] sm:$0x1]
      %v744 = vld [vmem:[#allocation2 + $0x2c] sm:$0x1]
      %v745 = vld [vmem:[#allocation2 + $0x38] sm:$0x1]
      %v746 = vld [vmem:[#allocation2 + $0x44] sm:$0x1]
      %v747 = vld [vmem:[#allocation2 + $0x50] sm:$0x1]
      %v748 = vld [vmem:[#allocation2 + $0x5c] sm:$0x1]
      %v749 = vld [vmem:[#allocation2 + $0x68] sm:$0x1]
      %v750 = vld [vmem:[#allocation2 + $0x74] sm:$0x1]
      %v751 = vld [vmem:[#allocation2 + $0x80] sm:$0x1]
      %v752 = vld [vmem:[#allocation2 + $0x8c] sm:$0x1]
      %v753 = vld [vmem:[#allocation2 + $0x98] sm:$0x1]
      %v754 = vld [vmem:[#allocation2 + $0xa4] sm:$0x1]
      %v755 = vld [vmem:[#allocation2 + $0xb0] sm:$0x1]
      %v756 = vld [vmem:[#allocation2 + $0xbc] sm:$0x1]
      %vm757 = vsmask.f32 3328
      %vm758 = vsmask.f32 7440
      %vm759 = vmor %vm757, %vm758
      %v761 = vshrl.u32 %v701, 16
      %v763 = vrot.slane %v761, 4
      %v764 = vshll.u32 %v701, 16
      %v766 = vrot.slane %v764, 5
      %v767 = vor.u32 %v763, %v766
      %v768 = vrot.slane %v767, 4
      %v770 = vshll.u32 %v702, 16
      %v772 = vrot.slane %v770, 5
      %v773 = vsel %vm759, %v768, %v772
      %v774 = vshrl.u32 %v702, 16
      %v776 = vrot.slane %v774, 4
      %v777 = vor.u32 %v776, %v772
      %v778 = vrot.slane %v777, 4
      %v780 = vshll.u32 %v741, 16
      %v782 = vrot.slane %v780, 5
      %v783 = vsel %vm759, %v778, %v782
      %v785 = vshrl.u32 %v703, 16
      %v787 = vrot.slane %v785, 4
      %v788 = vshll.u32 %v703, 16
      %v790 = vrot.slane %v788, 5
      %v791 = vor.u32 %v787, %v790
      %v792 = vrot.slane %v791, 4
      %v794 = vshll.u32 %v704, 16
      %v796 = vrot.slane %v794, 5
      %v797 = vsel %vm759, %v792, %v796
      %v798 = vshrl.u32 %v704, 16
      %v800 = vrot.slane %v798, 4
      %v801 = vor.u32 %v800, %v796
      %v802 = vrot.slane %v801, 4
      %v804 = vshll.u32 %v742, 16
      %v806 = vrot.slane %v804, 5
      %v807 = vsel %vm759, %v802, %v806
      %v809 = vshrl.u32 %v705, 16
      %v811 = vrot.slane %v809, 4
      %v812 = vshll.u32 %v705, 16
      %v814 = vrot.slane %v812, 5
      %v815 = vor.u32 %v811, %v814
      %v816 = vrot.slane %v815, 4
      %v818 = vshll.u32 %v706, 16
      %v820 = vrot.slane %v818, 5
      %v821 = vsel %vm759, %v816, %v820
      %v822 = vshrl.u32 %v706, 16
      %v824 = vrot.slane %v822, 4
      %v825 = vor.u32 %v824, %v820
      %v826 = vrot.slane %v825, 4
      %v828 = vshll.u32 %v743, 16
      %v830 = vrot.slane %v828, 5
      %v831 = vsel %vm759, %v826, %v830
      %v833 = vshrl.u32 %v707, 16
      %v835 = vrot.slane %v833, 4
      %v836 = vshll.u32 %v707, 16
      %v838 = vrot.slane %v836, 5
      %v839 = vor.u32 %v835, %v838
      %v840 = vrot.slane %v839, 4
      %v842 = vshll.u32 %v708, 16
      %v844 = vrot.slane %v842, 5
      %v845 = vsel %vm759, %v840, %v844
      %v846 = vshrl.u32 %v708, 16
      %v848 = vrot.slane %v846, 4
      %v849 = vor.u32 %v848, %v844
      %v850 = vrot.slane %v849, 4
      %v852 = vshll.u32 %v744, 16
      %v854 = vrot.slane %v852, 5
      %v855 = vsel %vm759, %v850, %v854
      %v857 = vshrl.u32 %v709, 16
      %v859 = vrot.slane %v857, 4
      %v860 = vshll.u32 %v709, 16
      %v862 = vrot.slane %v860, 5
      %v863 = vor.u32 %v859, %v862
      %v864 = vrot.slane %v863, 4
      %v866 = vshll.u32 %v710, 16
      %v868 = vrot.slane %v866, 5
      %v869 = vsel %vm759, %v864, %v868
      %v870 = vshrl.u32 %v710, 16
      %v872 = vrot.slane %v870, 4
      %v873 = vor.u32 %v872, %v868
      %v874 = vrot.slane %v873, 4
      %v876 = vshll.u32 %v745, 16
      %v878 = vrot.slane %v876, 5
      %v879 = vsel %vm759, %v874, %v878
      %v881 = vshrl.u32 %v711, 16
      %v883 = vrot.slane %v881, 4
      %v884 = vshll.u32 %v711, 16
      %v886 = vrot.slane %v884, 5
      %v887 = vor.u32 %v883, %v886
      %v888 = vrot.slane %v887, 4
      %v890 = vshll.u32 %v712, 16
      %v892 = vrot.slane %v890, 5
      %v893 = vsel %vm759, %v888, %v892
      %v894 = vshrl.u32 %v712, 16
      %v896 = vrot.slane %v894, 4
      %v897 = vor.u32 %v896, %v892
      %v898 = vrot.slane %v897, 4
      %v900 = vshll.u32 %v746, 16
      %v902 = vrot.slane %v900, 5
      %v903 = vsel %vm759, %v898, %v902
      %v905 = vshrl.u32 %v713, 16
      %v907 = vrot.slane %v905, 4
      %v908 = vshll.u32 %v713, 16
      %v910 = vrot.slane %v908, 5
      %v911 = vor.u32 %v907, %v910
      %v912 = vrot.slane %v911, 4
      %v914 = vshll.u32 %v714, 16
      %v916 = vrot.slane %v914, 5
      %v917 = vsel %vm759, %v912, %v916
      %v918 = vshrl.u32 %v714, 16
      %v920 = vrot.slane %v918, 4
      %v921 = vor.u32 %v920, %v916
      %v922 = vrot.slane %v921, 4
      %v924 = vshll.u32 %v747, 16
      %v926 = vrot.slane %v924, 5
      %v927 = vsel %vm759, %v922, %v926
      %v929 = vshrl.u32 %v715, 16
      %v931 = vrot.slane %v929, 4
      %v932 = vshll.u32 %v715, 16
      %v934 = vrot.slane %v932, 5
      %v935 = vor.u32 %v931, %v934
      %v936 = vrot.slane %v935, 4
      %v938 = vshll.u32 %v716, 16
      %v940 = vrot.slane %v938, 5
      %v941 = vsel %vm759, %v936, %v940
      %v942 = vshrl.u32 %v716, 16
      %v944 = vrot.slane %v942, 4
      %v945 = vor.u32 %v944, %v940
      %v946 = vrot.slane %v945, 4
      %v948 = vshll.u32 %v748, 16
      %v950 = vrot.slane %v948, 5
      %v951 = vsel %vm759, %v946, %v950
      %v953 = vshrl.u32 %v717, 16
      %v955 = vrot.slane %v953, 4
      %v956 = vshll.u32 %v717, 16
      %v958 = vrot.slane %v956, 5
      %v959 = vor.u32 %v955, %v958
      %v960 = vrot.slane %v959, 4
      %v962 = vshll.u32 %v718, 16
      %v964 = vrot.slane %v962, 5
      %v965 = vsel %vm759, %v960, %v964
      %v966 = vshrl.u32 %v718, 16
      %v968 = vrot.slane %v966, 4
      %v969 = vor.u32 %v968, %v964
      %v970 = vrot.slane %v969, 4
      %v972 = vshll.u32 %v749, 16
      %v974 = vrot.slane %v972, 5
      %v975 = vsel %vm759, %v970, %v974
      %v977 = vshrl.u32 %v719, 16
      %v979 = vrot.slane %v977, 4
      %v980 = vshll.u32 %v719, 16
      %v982 = vrot.slane %v980, 5
      %v983 = vor.u32 %v979, %v982
      %v984 = vrot.slane %v983, 4
      %v986 = vshll.u32 %v720, 16
      %v988 = vrot.slane %v986, 5
      %v989 = vsel %vm759, %v984, %v988
      %v990 = vshrl.u32 %v720, 16
      %v992 = vrot.slane %v990, 4
      %v993 = vor.u32 %v992, %v988
      %v994 = vrot.slane %v993, 4
      %v996 = vshll.u32 %v750, 16
      %v998 = vrot.slane %v996, 5
      %v999 = vsel %vm759, %v994, %v998
      %v1001 = vshrl.u32 %v721, 16
      %v1003 = vrot.slane %v1001, 4
      %v1004 = vshll.u32 %v721, 16
      %v1006 = vrot.slane %v1004, 5
      %v1007 = vor.u32 %v1003, %v1006
      %v1008 = vrot.slane %v1007, 4
      %v1010 = vshll.u32 %v722, 16
      %v1012 = vrot.slane %v1010, 5
      %v1013 = vsel %vm759, %v1008, %v1012
      %v1014 = vshrl.u32 %v722, 16
      %v1016 = vrot.slane %v1014, 4
      %v1017 = vor.u32 %v1016, %v1012
      %v1018 = vrot.slane %v1017, 4
      %v1020 = vshll.u32 %v751, 16
      %v1022 = vrot.slane %v1020, 5
      %v1023 = vsel %vm759, %v1018, %v1022
      %v1025 = vshrl.u32 %v723, 16
      %v1027 = vrot.slane %v1025, 4
      %v1028 = vshll.u32 %v723, 16
      %v1030 = vrot.slane %v1028, 5
      %v1031 = vor.u32 %v1027, %v1030
      %v1032 = vrot.slane %v1031, 4
      %v1034 = vshll.u32 %v724, 16
      %v1036 = vrot.slane %v1034, 5
      %v1037 = vsel %vm759, %v1032, %v1036
      %v1038 = vshrl.u32 %v724, 16
      %v1040 = vrot.slane %v1038, 4
      %v1041 = vor.u32 %v1040, %v1036
      %v1042 = vrot.slane %v1041, 4
      %v1044 = vshll.u32 %v752, 16
      %v1046 = vrot.slane %v1044, 5
      %v1047 = vsel %vm759, %v1042, %v1046
      %v1049 = vshrl.u32 %v725, 16
      %v1051 = vrot.slane %v1049, 4
      %v1052 = vshll.u32 %v725, 16
      %v1054 = vrot.slane %v1052, 5
      %v1055 = vor.u32 %v1051, %v1054
      %v1056 = vrot.slane %v1055, 4
      %v1058 = vshll.u32 %v726, 16
      %v1060 = vrot.slane %v1058, 5
      %v1061 = vsel %vm759, %v1056, %v1060
      %v1062 = vshrl.u32 %v726, 16
      %v1064 = vrot.slane %v1062, 4
      %v1065 = vor.u32 %v1064, %v1060
      %v1066 = vrot.slane %v1065, 4
      %v1068 = vshll.u32 %v753, 16
      %v1070 = vrot.slane %v1068, 5
      %v1071 = vsel %vm759, %v1066, %v1070
      %v1073 = vshrl.u32 %v727, 16
      %v1075 = vrot.slane %v1073, 4
      %v1076 = vshll.u32 %v727, 16
      %v1078 = vrot.slane %v1076, 5
      %v1079 = vor.u32 %v1075, %v1078
      %v1080 = vrot.slane %v1079, 4
      %v1082 = vshll.u32 %v728, 16
      %v1084 = vrot.slane %v1082, 5
      %v1085 = vsel %vm759, %v1080, %v1084
      %v1086 = vshrl.u32 %v728, 16
      %v1088 = vrot.slane %v1086, 4
      %v1089 = vor.u32 %v1088, %v1084
      %v1090 = vrot.slane %v1089, 4
      %v1092 = vshll.u32 %v754, 16
      %v1094 = vrot.slane %v1092, 5
      %v1095 = vsel %vm759, %v1090, %v1094
      %v1097 = vshrl.u32 %v729, 16
      %v1099 = vrot.slane %v1097, 4
      %v1100 = vshll.u32 %v729, 16
      %v1102 = vrot.slane %v1100, 5
      %v1103 = vor.u32 %v1099, %v1102
      %v1104 = vrot.slane %v1103, 4
      %v1106 = vshll.u32 %v730, 16
      %v1108 = vrot.slane %v1106, 5
      %v1109 = vsel %vm759, %v1104, %v1108
      %v1110 = vshrl.u32 %v730, 16
      %v1112 = vrot.slane %v1110, 4
      %v1113 = vor.u32 %v1112, %v1108
      %v1114 = vrot.slane %v1113, 4
      %v1116 = vshll.u32 %v755, 16
      %v1118 = vrot.slane %v1116, 5
      %v1119 = vsel %vm759, %v1114, %v1118
      %v1121 = vshrl.u32 %v731, 16
      %v1123 = vrot.slane %v1121, 4
      %v1124 = vshll.u32 %v731, 16
      %v1126 = vrot.slane %v1124, 5
      %v1127 = vor.u32 %v1123, %v1126
      %v1128 = vrot.slane %v1127, 4
      %v1130 = vshll.u32 %v732, 16
      %v1132 = vrot.slane %v1130, 5
      %v1133 = vsel %vm759, %v1128, %v1132
      %v1134 = vshrl.u32 %v732, 16
      %v1136 = vrot.slane %v1134, 4
      %v1137 = vor.u32 %v1136, %v1132
      %v1138 = vrot.slane %v1137, 4
      %v1140 = vshll.u32 %v756, 16
      %v1142 = vrot.slane %v1140, 5
      %v1143 = vsel %vm759, %v1138, %v1142
      %s1144 = scalar_lea.vmem %s1, 32
      %v1145 = vld [vmem:[%s1144] sm:$0xf]
      %v1146 = vld [vmem:[%s1144 + $0x4] sm:$0xf]
      %v1147 = vld [vmem:[%s1144 + $0x8] sm:$0xf]
      %v1148 = vld [vmem:[%s1144 + $0xc] sm:$0xf]
      %v1149 = vld [vmem:[%s1144 + $0x10] sm:$0xf]
      %v1150 = vld [vmem:[%s1144 + $0x14] sm:$0xf]
      %v1151 = vld [vmem:[%s1144 + $0x18] sm:$0xf]
      %v1152 = vld [vmem:[%s1144 + $0x1c] sm:$0xf]
      %v1153 = vunpack.c.l.b16 %v773
      %v1154 = vunpack.c.l.b16 %v783
      %v1155 = vunpack.c.l.b16 %v797
      %v1156 = vunpack.c.l.b16 %v807
      %v1157 = vunpack.c.l.b16 %v821
      %v1158 = vunpack.c.l.b16 %v831
      %v1159 = vunpack.c.l.b16 %v845
      %v1160 = vunpack.c.l.b16 %v855
      %v1161 = vunpack.c.l.b16 %v869
      %v1162 = vunpack.c.l.b16 %v879
      %v1163 = vunpack.c.l.b16 %v893
      %v1164 = vunpack.c.l.b16 %v903
      %v1165 = vunpack.c.l.b16 %v917
      %v1166 = vunpack.c.l.b16 %v927
      %v1167 = vunpack.c.l.b16 %v941
      %v1168 = vunpack.c.l.b16 %v951
      %v1169 = vunpack.c.l.b16 %v965
      %v1170 = vunpack.c.l.b16 %v975
      %v1171 = vunpack.c.l.b16 %v989
      %v1172 = vunpack.c.l.b16 %v999
      %v1173 = vunpack.c.l.b16 %v1013
      %v1174 = vunpack.c.l.b16 %v1023
      %v1175 = vunpack.c.l.b16 %v1037
      %v1176 = vunpack.c.l.b16 %v1047
      %v1177 = vunpack.c.l.b16 %v1061
      %v1178 = vunpack.c.l.b16 %v1071
      %v1179 = vunpack.c.l.b16 %v1085
      %v1180 = vunpack.c.l.b16 %v1095
      %v1181 = vunpack.c.l.b16 %v1109
      %v1182 = vunpack.c.l.b16 %v1119
      %v1183 = vunpack.c.l.b16 %v1133
      %v1184 = vunpack.c.l.b16 %v1143
      %v1185 = vpack.c.b16 %v1154, %v1153
      %v1186 = vpack.c.b16 %v1156, %v1155
      %v1187 = vpack.c.b16 %v1158, %v1157
      %v1188 = vpack.c.b16 %v1160, %v1159
      %v1189 = vpack.c.b16 %v1162, %v1161
      %v1190 = vpack.c.b16 %v1164, %v1163
      %v1191 = vpack.c.b16 %v1166, %v1165
      %v1192 = vpack.c.b16 %v1168, %v1167
      %v1193 = vpack.c.b16 %v1170, %v1169
      %v1194 = vpack.c.b16 %v1172, %v1171
      %v1195 = vpack.c.b16 %v1174, %v1173
      %v1196 = vpack.c.b16 %v1176, %v1175
      %v1197 = vpack.c.b16 %v1178, %v1177
      %v1198 = vpack.c.b16 %v1180, %v1179
      %v1199 = vpack.c.b16 %v1182, %v1181
      %v1200 = vpack.c.b16 %v1184, %v1183
      %v1209 = vunpack.c.l.b16 %v1145
      %v1210 = vunpack.c.l.b16 %v1146
      %v1211 = vunpack.c.l.b16 %v1147
      %v1212 = vunpack.c.l.b16 %v1148
      %v1213 = vunpack.c.l.b16 %v1149
      %v1214 = vunpack.c.l.b16 %v1150
      %v1215 = vunpack.c.l.b16 %v1151
      %v1216 = vunpack.c.l.b16 %v1152
      %v1217 = vpack.c.b16 %v1210, %v1209
      %v1218 = vpack.c.b16 %v1212, %v1211
      %v1219 = vpack.c.b16 %v1214, %v1213
      %v1220 = vpack.c.b16 %v1216, %v1215
      %vm1225 = vcmask 523264
      %v1227 = vsel %vm1225, %v1185, 0
      %v1230 = vsel %vm1225, %v1186, 0
      %v1233 = vsel %vm1225, %v1187, 0
      %v1236 = vsel %vm1225, %v1188, 0
      %v1239 = vsel %vm1225, %v1189, 0
      %v1242 = vsel %vm1225, %v1190, 0
      %v1245 = vsel %vm1225, %v1191, 0
      %v1248 = vsel %vm1225, %v1192, 0
      %v1251 = vsel %vm1225, %v1193, 0
      %v1254 = vsel %vm1225, %v1194, 0
      %v1257 = vsel %vm1225, %v1195, 0
      %v1260 = vsel %vm1225, %v1196, 0
      %v1263 = vsel %vm1225, %v1197, 0
      %v1266 = vsel %vm1225, %v1198, 0
      %v1269 = vsel %vm1225, %v1199, 0
      %v1272 = vsel %vm1225, %v1200, 0
      %1274 = vmatpush.bf16.msra.mxu0 0
      %1275 = vmatpush.bf16.msra.mxu0 0
      %1276 = vmatpush.bf16.msra.mxu0 0
      %1277 = vmatpush.bf16.msra.mxu0 0
      %1278 = vmatpush.bf16.msra.mxu0 %v1220
      %1279 = vmatpush.bf16.msra.mxu0 %v1219
      %1280 = vmatpush.bf16.msra.mxu0 %v1218
      %1281 = vmatpush.bf16.msra.mxu0 %v1217
      %1282 = vmatmul.bf16.gmra.mxu0 %v1227
      %v1283 = vpop.f32.mrf.mxu0
      %v1284 = vadd.f32 0.0, %v1283
      %v1285 = vpop.f32.mrf.mxu0
      %v1286 = vadd.f32 0.0, %v1285
      %1287 = vmatmul.bf16.gmra.mxu0 %v1230
      %v1288 = vpop.f32.mrf.mxu0
      %v1289 = vadd.f32 0.0, %v1288
      %v1290 = vpop.f32.mrf.mxu0
      %v1291 = vadd.f32 0.0, %v1290
      %1292 = vmatmul.bf16.gmra.mxu0 %v1233
      %v1293 = vpop.f32.mrf.mxu0
      %v1294 = vadd.f32 0.0, %v1293
      %v1295 = vpop.f32.mrf.mxu0
      %v1296 = vadd.f32 0.0, %v1295
      %1297 = vmatmul.bf16.gmra.mxu0 %v1236
      %v1298 = vpop.f32.mrf.mxu0
      %v1299 = vadd.f32 0.0, %v1298
      %v1300 = vpop.f32.mrf.mxu0
      %v1301 = vadd.f32 0.0, %v1300
      %1302 = vmatmul.bf16.gmra.mxu0 %v1239
      %v1303 = vpop.f32.mrf.mxu0
      %v1304 = vadd.f32 0.0, %v1303
      %v1305 = vpop.f32.mrf.mxu0
      %v1306 = vadd.f32 0.0, %v1305
      %1307 = vmatmul.bf16.gmra.mxu0 %v1242
      %v1308 = vpop.f32.mrf.mxu0
      %v1309 = vadd.f32 0.0, %v1308
      %v1310 = vpop.f32.mrf.mxu0
      %v1311 = vadd.f32 0.0, %v1310
      %1312 = vmatmul.bf16.gmra.mxu0 %v1245
      %v1313 = vpop.f32.mrf.mxu0
      %v1314 = vadd.f32 0.0, %v1313
      %v1315 = vpop.f32.mrf.mxu0
      %v1316 = vadd.f32 0.0, %v1315
      %1317 = vmatmul.bf16.gmra.mxu0 %v1248
      %v1318 = vpop.f32.mrf.mxu0
      %v1319 = vadd.f32 0.0, %v1318
      %v1320 = vpop.f32.mrf.mxu0
      %v1321 = vadd.f32 0.0, %v1320
      %1322 = vmatmul.bf16.gmra.mxu0 %v1251
      %v1323 = vpop.f32.mrf.mxu0
      %v1324 = vadd.f32 0.0, %v1323
      %v1325 = vpop.f32.mrf.mxu0
      %v1326 = vadd.f32 0.0, %v1325
      %1327 = vmatmul.bf16.gmra.mxu0 %v1254
      %v1328 = vpop.f32.mrf.mxu0
      %v1329 = vadd.f32 0.0, %v1328
      %v1330 = vpop.f32.mrf.mxu0
      %v1331 = vadd.f32 0.0, %v1330
      %1332 = vmatmul.bf16.gmra.mxu0 %v1257
      %v1333 = vpop.f32.mrf.mxu0
      %v1334 = vadd.f32 0.0, %v1333
      %v1335 = vpop.f32.mrf.mxu0
      %v1336 = vadd.f32 0.0, %v1335
      %1337 = vmatmul.bf16.gmra.mxu0 %v1260
      %v1338 = vpop.f32.mrf.mxu0
      %v1339 = vadd.f32 0.0, %v1338
      %v1340 = vpop.f32.mrf.mxu0
      %v1341 = vadd.f32 0.0, %v1340
      %1342 = vmatmul.bf16.gmra.mxu0 %v1263
      %v1343 = vpop.f32.mrf.mxu0
      %v1344 = vadd.f32 0.0, %v1343
      %v1345 = vpop.f32.mrf.mxu0
      %v1346 = vadd.f32 0.0, %v1345
      %1347 = vmatmul.bf16.gmra.mxu0 %v1266
      %v1348 = vpop.f32.mrf.mxu0
      %v1349 = vadd.f32 0.0, %v1348
      %v1350 = vpop.f32.mrf.mxu0
      %v1351 = vadd.f32 0.0, %v1350
      %1352 = vmatmul.bf16.gmra.mxu0 %v1269
      %v1353 = vpop.f32.mrf.mxu0
      %v1354 = vadd.f32 0.0, %v1353
      %v1355 = vpop.f32.mrf.mxu0
      %v1356 = vadd.f32 0.0, %v1355
      %1357 = vmatmul.bf16.gmra.mxu0 %v1272
      %v1358 = vpop.f32.mrf.mxu0
      %v1359 = vadd.f32 0.0, %v1358
      %v1360 = vpop.f32.mrf.mxu0
      %v1361 = vadd.f32 0.0, %v1360
      %1362 = vdwg.mxu0
      %v1395 = vunpack.c.l.b16 %v701
      %v1396 = vunpack.c.l.b16 %v702
      %v1397 = vunpack.c.l.b16 %v703
      %v1398 = vunpack.c.l.b16 %v704
      %v1399 = vunpack.c.l.b16 %v705
      %v1400 = vunpack.c.l.b16 %v706
      %v1401 = vunpack.c.l.b16 %v707
      %v1402 = vunpack.c.l.b16 %v708
      %v1403 = vunpack.c.l.b16 %v709
      %v1404 = vunpack.c.l.b16 %v710
      %v1405 = vunpack.c.l.b16 %v711
      %v1406 = vunpack.c.l.b16 %v712
      %v1407 = vunpack.c.l.b16 %v713
      %v1408 = vunpack.c.l.b16 %v714
      %v1409 = vunpack.c.l.b16 %v715
      %v1410 = vunpack.c.l.b16 %v716
      %v1411 = vunpack.c.l.b16 %v717
      %v1412 = vunpack.c.l.b16 %v718
      %v1413 = vunpack.c.l.b16 %v719
      %v1414 = vunpack.c.l.b16 %v720
      %v1415 = vunpack.c.l.b16 %v721
      %v1416 = vunpack.c.l.b16 %v722
      %v1417 = vunpack.c.l.b16 %v723
      %v1418 = vunpack.c.l.b16 %v724
      %v1419 = vunpack.c.l.b16 %v725
      %v1420 = vunpack.c.l.b16 %v726
      %v1421 = vunpack.c.l.b16 %v727
      %v1422 = vunpack.c.l.b16 %v728
      %v1423 = vunpack.c.l.b16 %v729
      %v1424 = vunpack.c.l.b16 %v730
      %v1425 = vunpack.c.l.b16 %v731
      %v1426 = vunpack.c.l.b16 %v732
      %v1427 = vpack.c.b16 %v1396, %v1395
      %v1428 = vpack.c.b16 %v1398, %v1397
      %v1429 = vpack.c.b16 %v1400, %v1399
      %v1430 = vpack.c.b16 %v1402, %v1401
      %v1431 = vpack.c.b16 %v1404, %v1403
      %v1432 = vpack.c.b16 %v1406, %v1405
      %v1433 = vpack.c.b16 %v1408, %v1407
      %v1434 = vpack.c.b16 %v1410, %v1409
      %v1435 = vpack.c.b16 %v1412, %v1411
      %v1436 = vpack.c.b16 %v1414, %v1413
      %v1437 = vpack.c.b16 %v1416, %v1415
      %v1438 = vpack.c.b16 %v1418, %v1417
      %v1439 = vpack.c.b16 %v1420, %v1419
      %v1440 = vpack.c.b16 %v1422, %v1421
      %v1441 = vpack.c.b16 %v1424, %v1423
      %v1442 = vpack.c.b16 %v1426, %v1425
      %v1451 = vunpack.c.l.b16 %v733
      %v1452 = vunpack.c.l.b16 %v734
      %v1453 = vunpack.c.l.b16 %v735
      %v1454 = vunpack.c.l.b16 %v736
      %v1455 = vunpack.c.l.b16 %v737
      %v1456 = vunpack.c.l.b16 %v738
      %v1457 = vunpack.c.l.b16 %v739
      %v1458 = vunpack.c.l.b16 %v740
      %v1459 = vpack.c.b16 %v1452, %v1451
      %v1460 = vpack.c.b16 %v1454, %v1453
      %v1461 = vpack.c.b16 %v1456, %v1455
      %v1462 = vpack.c.b16 %v1458, %v1457
      %v1468 = vsel %vm1225, %v1427, 0
      %v1471 = vsel %vm1225, %v1428, 0
      %v1474 = vsel %vm1225, %v1429, 0
      %v1477 = vsel %vm1225, %v1430, 0
      %v1480 = vsel %vm1225, %v1431, 0
      %v1483 = vsel %vm1225, %v1432, 0
      %v1486 = vsel %vm1225, %v1433, 0
      %v1489 = vsel %vm1225, %v1434, 0
      %v1492 = vsel %vm1225, %v1435, 0
      %v1495 = vsel %vm1225, %v1436, 0
      %v1498 = vsel %vm1225, %v1437, 0
      %v1501 = vsel %vm1225, %v1438, 0
      %v1504 = vsel %vm1225, %v1439, 0
      %v1507 = vsel %vm1225, %v1440, 0
      %v1510 = vsel %vm1225, %v1441, 0
      %v1513 = vsel %vm1225, %v1442, 0
      %1515 = vmatpush.bf16.msra.mxu0 0
      %1516 = vmatpush.bf16.msra.mxu0 0
      %1517 = vmatpush.bf16.msra.mxu0 0
      %1518 = vmatpush.bf16.msra.mxu0 0
      %1519 = vmatpush.bf16.msra.mxu0 %v1462
      %1520 = vmatpush.bf16.msra.mxu0 %v1461
      %1521 = vmatpush.bf16.msra.mxu0 %v1460
      %1522 = vmatpush.bf16.msra.mxu0 %v1459
      %1523 = vmatmul.bf16.gmra.mxu0 %v1468
      %v1524 = vpop.f32.mrf.mxu0
      %v1525 = vadd.f32 %v1284, %v1524
      %v1526 = vpop.f32.mrf.mxu0
      %v1527 = vadd.f32 %v1286, %v1526
      %1528 = vmatmul.bf16.gmra.mxu0 %v1471
      %v1529 = vpop.f32.mrf.mxu0
      %v1530 = vadd.f32 %v1289, %v1529
      %v1531 = vpop.f32.mrf.mxu0
      %v1532 = vadd.f32 %v1291, %v1531
      %1533 = vmatmul.bf16.gmra.mxu0 %v1474
      %v1534 = vpop.f32.mrf.mxu0
      %v1535 = vadd.f32 %v1294, %v1534
      %v1536 = vpop.f32.mrf.mxu0
      %v1537 = vadd.f32 %v1296, %v1536
      %1538 = vmatmul.bf16.gmra.mxu0 %v1477
      %v1539 = vpop.f32.mrf.mxu0
      %v1540 = vadd.f32 %v1299, %v1539
      %v1541 = vpop.f32.mrf.mxu0
      %v1542 = vadd.f32 %v1301, %v1541
      %1543 = vmatmul.bf16.gmra.mxu0 %v1480
      %v1544 = vpop.f32.mrf.mxu0
      %v1545 = vadd.f32 %v1304, %v1544
      %v1546 = vpop.f32.mrf.mxu0
      %v1547 = vadd.f32 %v1306, %v1546
      %1548 = vmatmul.bf16.gmra.mxu0 %v1483
      %v1549 = vpop.f32.mrf.mxu0
      %v1550 = vadd.f32 %v1309, %v1549
      %v1551 = vpop.f32.mrf.mxu0
      %v1552 = vadd.f32 %v1311, %v1551
      %1553 = vmatmul.bf16.gmra.mxu0 %v1486
      %v1554 = vpop.f32.mrf.mxu0
      %v1555 = vadd.f32 %v1314, %v1554
      %v1556 = vpop.f32.mrf.mxu0
      %v1557 = vadd.f32 %v1316, %v1556
      %1558 = vmatmul.bf16.gmra.mxu0 %v1489
      %v1559 = vpop.f32.mrf.mxu0
      %v1560 = vadd.f32 %v1319, %v1559
      %v1561 = vpop.f32.mrf.mxu0
      %v1562 = vadd.f32 %v1321, %v1561
      %1563 = vmatmul.bf16.gmra.mxu0 %v1492
      %v1564 = vpop.f32.mrf.mxu0
      %v1565 = vadd.f32 %v1324, %v1564
      %v1566 = vpop.f32.mrf.mxu0
      %v1567 = vadd.f32 %v1326, %v1566
      %1568 = vmatmul.bf16.gmra.mxu0 %v1495
      %v1569 = vpop.f32.mrf.mxu0
      %v1570 = vadd.f32 %v1329, %v1569
      %v1571 = vpop.f32.mrf.mxu0
      %v1572 = vadd.f32 %v1331, %v1571
      %1573 = vmatmul.bf16.gmra.mxu0 %v1498
      %v1574 = vpop.f32.mrf.mxu0
      %v1575 = vadd.f32 %v1334, %v1574
      %v1576 = vpop.f32.mrf.mxu0
      %v1577 = vadd.f32 %v1336, %v1576
      %1578 = vmatmul.bf16.gmra.mxu0 %v1501
      %v1579 = vpop.f32.mrf.mxu0
      %v1580 = vadd.f32 %v1339, %v1579
      %v1581 = vpop.f32.mrf.mxu0
      %v1582 = vadd.f32 %v1341, %v1581
      %1583 = vmatmul.bf16.gmra.mxu0 %v1504
      %v1584 = vpop.f32.mrf.mxu0
      %v1585 = vadd.f32 %v1344, %v1584
      %v1586 = vpop.f32.mrf.mxu0
      %v1587 = vadd.f32 %v1346, %v1586
      %1588 = vmatmul.bf16.gmra.mxu0 %v1507
      %v1589 = vpop.f32.mrf.mxu0
      %v1590 = vadd.f32 %v1349, %v1589
      %v1591 = vpop.f32.mrf.mxu0
      %v1592 = vadd.f32 %v1351, %v1591
      %1593 = vmatmul.bf16.gmra.mxu0 %v1510
      %v1594 = vpop.f32.mrf.mxu0
      %v1595 = vadd.f32 %v1354, %v1594
      %v1596 = vpop.f32.mrf.mxu0
      %v1597 = vadd.f32 %v1356, %v1596
      %1598 = vmatmul.bf16.gmra.mxu0 %v1513
      %v1599 = vpop.f32.mrf.mxu0
      %v1600 = vadd.f32 %v1359, %v1599
      %v1601 = vpop.f32.mrf.mxu0
      %v1602 = vadd.f32 %v1361, %v1601
      %1603 = vdwg.mxu0
      %v1604 = vld [vmem:[#allocation2] sm:$0xe]
      %v1605 = vld [vmem:[#allocation2 + $0xc] sm:$0xe]
      %v1606 = vld [vmem:[#allocation2 + $0x18] sm:$0xe]
      %v1607 = vld [vmem:[#allocation2 + $0x24] sm:$0xe]
      %v1608 = vld [vmem:[#allocation2 + $0x30] sm:$0xe]
      %v1609 = vld [vmem:[#allocation2 + $0x3c] sm:$0xe]
      %v1610 = vld [vmem:[#allocation2 + $0x48] sm:$0xe]
      %v1611 = vld [vmem:[#allocation2 + $0x54] sm:$0xe]
      %v1612 = vld [vmem:[#allocation2 + $0x60] sm:$0xe]
      %v1613 = vld [vmem:[#allocation2 + $0x6c] sm:$0xe]
      %v1614 = vld [vmem:[#allocation2 + $0x78] sm:$0xe]
      %v1615 = vld [vmem:[#allocation2 + $0x84] sm:$0xe]
      %v1616 = vld [vmem:[#allocation2 + $0x90] sm:$0xe]
      %v1617 = vld [vmem:[#allocation2 + $0x9c] sm:$0xe]
      %v1618 = vld [vmem:[#allocation2 + $0xa8] sm:$0xe]
      %v1619 = vld [vmem:[#allocation2 + $0xb4] sm:$0xe]
      %vm1652 = vcmask 1042432
      %vm1653 = vcmask 1046532
      %vm1654 = vmor %vm1652, %vm1653
      %v1655 = vrot.slane %v1604, 5
      %v1656 = vrot.slane %v1655, 4
      %v1657 = vrot.slane %v702, 5
      %v1658 = vsel %vm1654, %v1656, %v1657
      %v1659 = vrot.slane %v1657, 4
      %v1660 = vrot.slane %v741, 5
      %v1661 = vsel %vm1654, %v1659, %v1660
      %v1662 = vrot.slane %v1605, 5
      %v1663 = vrot.slane %v1662, 4
      %v1664 = vrot.slane %v704, 5
      %v1665 = vsel %vm1654, %v1663, %v1664
      %v1666 = vrot.slane %v1664, 4
      %v1667 = vrot.slane %v742, 5
      %v1668 = vsel %vm1654, %v1666, %v1667
      %v1669 = vrot.slane %v1606, 5
      %v1670 = vrot.slane %v1669, 4
      %v1671 = vrot.slane %v706, 5
      %v1672 = vsel %vm1654, %v1670, %v1671
      %v1673 = vrot.slane %v1671, 4
      %v1674 = vrot.slane %v743, 5
      %v1675 = vsel %vm1654, %v1673, %v1674
      %v1676 = vrot.slane %v1607, 5
      %v1677 = vrot.slane %v1676, 4
      %v1678 = vrot.slane %v708, 5
      %v1679 = vsel %vm1654, %v1677, %v1678
      %v1680 = vrot.slane %v1678, 4
      %v1681 = vrot.slane %v744, 5
      %v1682 = vsel %vm1654, %v1680, %v1681
      %v1683 = vrot.slane %v1608, 5
      %v1684 = vrot.slane %v1683, 4
      %v1685 = vrot.slane %v710, 5
      %v1686 = vsel %vm1654, %v1684, %v1685
      %v1687 = vrot.slane %v1685, 4
      %v1688 = vrot.slane %v745, 5
      %v1689 = vsel %vm1654, %v1687, %v1688
      %v1690 = vrot.slane %v1609, 5
      %v1691 = vrot.slane %v1690, 4
      %v1692 = vrot.slane %v712, 5
      %v1693 = vsel %vm1654, %v1691, %v1692
      %v1694 = vrot.slane %v1692, 4
      %v1695 = vrot.slane %v746, 5
      %v1696 = vsel %vm1654, %v1694, %v1695
      %v1697 = vrot.slane %v1610, 5
      %v1698 = vrot.slane %v1697, 4
      %v1699 = vrot.slane %v714, 5
      %v1700 = vsel %vm1654, %v1698, %v1699
      %v1701 = vrot.slane %v1699, 4
      %v1702 = vrot.slane %v747, 5
      %v1703 = vsel %vm1654, %v1701, %v1702
      %v1704 = vrot.slane %v1611, 5
      %v1705 = vrot.slane %v1704, 4
      %v1706 = vrot.slane %v716, 5
      %v1707 = vsel %vm1654, %v1705, %v1706
      %v1708 = vrot.slane %v1706, 4
      %v1709 = vrot.slane %v748, 5
      %v1710 = vsel %vm1654, %v1708, %v1709
      %v1711 = vrot.slane %v1612, 5
      %v1712 = vrot.slane %v1711, 4
      %v1713 = vrot.slane %v718, 5
      %v1714 = vsel %vm1654, %v1712, %v1713
      %v1715 = vrot.slane %v1713, 4
      %v1716 = vrot.slane %v749, 5
      %v1717 = vsel %vm1654, %v1715, %v1716
      %v1718 = vrot.slane %v1613, 5
      %v1719 = vrot.slane %v1718, 4
      %v1720 = vrot.slane %v720, 5
      %v1721 = vsel %vm1654, %v1719, %v1720
      %v1722 = vrot.slane %v1720, 4
      %v1723 = vrot.slane %v750, 5
      %v1724 = vsel %vm1654, %v1722, %v1723
      %v1725 = vrot.slane %v1614, 5
      %v1726 = vrot.slane %v1725, 4
      %v1727 = vrot.slane %v722, 5
      %v1728 = vsel %vm1654, %v1726, %v1727
      %v1729 = vrot.slane %v1727, 4
      %v1730 = vrot.slane %v751, 5
      %v1731 = vsel %vm1654, %v1729, %v1730
      %v1732 = vrot.slane %v1615, 5
      %v1733 = vrot.slane %v1732, 4
      %v1734 = vrot.slane %v724, 5
      %v1735 = vsel %vm1654, %v1733, %v1734
      %v1736 = vrot.slane %v1734, 4
      %v1737 = vrot.slane %v752, 5
      %v1738 = vsel %vm1654, %v1736, %v1737
      %v1739 = vrot.slane %v1616, 5
      %v1740 = vrot.slane %v1739, 4
      %v1741 = vrot.slane %v726, 5
      %v1742 = vsel %vm1654, %v1740, %v1741
      %v1743 = vrot.slane %v1741, 4
      %v1744 = vrot.slane %v753, 5
      %v1745 = vsel %vm1654, %v1743, %v1744
      %v1746 = vrot.slane %v1617, 5
      %v1747 = vrot.slane %v1746, 4
      %v1748 = vrot.slane %v728, 5
      %v1749 = vsel %vm1654, %v1747, %v1748
      %v1750 = vrot.slane %v1748, 4
      %v1751 = vrot.slane %v754, 5
      %v1752 = vsel %vm1654, %v1750, %v1751
      %v1753 = vrot.slane %v1618, 5
      %v1754 = vrot.slane %v1753, 4
      %v1755 = vrot.slane %v730, 5
      %v1756 = vsel %vm1654, %v1754, %v1755
      %v1757 = vrot.slane %v1755, 4
      %v1758 = vrot.slane %v755, 5
      %v1759 = vsel %vm1654, %v1757, %v1758
      %v1760 = vrot.slane %v1619, 5
      %v1761 = vrot.slane %v1760, 4
      %v1762 = vrot.slane %v732, 5
      %v1763 = vsel %vm1654, %v1761, %v1762
      %v1764 = vrot.slane %v1762, 4
      %v1765 = vrot.slane %v756, 5
      %v1766 = vsel %vm1654, %v1764, %v1765
      %s1767 = scalar_lea.vmem %s1, 64
      %v1768 = vld [vmem:[%s1767] sm:$0xf]
      %v1769 = vld [vmem:[%s1767 + $0x4] sm:$0xf]
      %v1770 = vld [vmem:[%s1767 + $0x8] sm:$0xf]
      %v1771 = vld [vmem:[%s1767 + $0xc] sm:$0xf]
      %v1772 = vld [vmem:[%s1767 + $0x10] sm:$0xf]
      %v1773 = vld [vmem:[%s1767 + $0x14] sm:$0xf]
      %v1774 = vld [vmem:[%s1767 + $0x18] sm:$0xf]
      %v1775 = vld [vmem:[%s1767 + $0x1c] sm:$0xf]
      %v1776 = vunpack.c.l.b16 %v1658
      %v1777 = vunpack.c.l.b16 %v1661
      %v1778 = vunpack.c.l.b16 %v1665
      %v1779 = vunpack.c.l.b16 %v1668
      %v1780 = vunpack.c.l.b16 %v1672
      %v1781 = vunpack.c.l.b16 %v1675
      %v1782 = vunpack.c.l.b16 %v1679
      %v1783 = vunpack.c.l.b16 %v1682
      %v1784 = vunpack.c.l.b16 %v1686
      %v1785 = vunpack.c.l.b16 %v1689
      %v1786 = vunpack.c.l.b16 %v1693
      %v1787 = vunpack.c.l.b16 %v1696
      %v1788 = vunpack.c.l.b16 %v1700
      %v1789 = vunpack.c.l.b16 %v1703
      %v1790 = vunpack.c.l.b16 %v1707
      %v1791 = vunpack.c.l.b16 %v1710
      %v1792 = vunpack.c.l.b16 %v1714
      %v1793 = vunpack.c.l.b16 %v1717
      %v1794 = vunpack.c.l.b16 %v1721
      %v1795 = vunpack.c.l.b16 %v1724
      %v1796 = vunpack.c.l.b16 %v1728
      %v1797 = vunpack.c.l.b16 %v1731
      %v1798 = vunpack.c.l.b16 %v1735
      %v1799 = vunpack.c.l.b16 %v1738
      %v1800 = vunpack.c.l.b16 %v1742
      %v1801 = vunpack.c.l.b16 %v1745
      %v1802 = vunpack.c.l.b16 %v1749
      %v1803 = vunpack.c.l.b16 %v1752
      %v1804 = vunpack.c.l.b16 %v1756
      %v1805 = vunpack.c.l.b16 %v1759
      %v1806 = vunpack.c.l.b16 %v1763
      %v1807 = vunpack.c.l.b16 %v1766
      %v1808 = vpack.c.b16 %v1777, %v1776
      %v1809 = vpack.c.b16 %v1779, %v1778
      %v1810 = vpack.c.b16 %v1781, %v1780
      %v1811 = vpack.c.b16 %v1783, %v1782
      %v1812 = vpack.c.b16 %v1785, %v1784
      %v1813 = vpack.c.b16 %v1787, %v1786
      %v1814 = vpack.c.b16 %v1789, %v1788
      %v1815 = vpack.c.b16 %v1791, %v1790
      %v1816 = vpack.c.b16 %v1793, %v1792
      %v1817 = vpack.c.b16 %v1795, %v1794
      %v1818 = vpack.c.b16 %v1797, %v1796
      %v1819 = vpack.c.b16 %v1799, %v1798
      %v1820 = vpack.c.b16 %v1801, %v1800
      %v1821 = vpack.c.b16 %v1803, %v1802
      %v1822 = vpack.c.b16 %v1805, %v1804
      %v1823 = vpack.c.b16 %v1807, %v1806
      %v1832 = vunpack.c.l.b16 %v1768
      %v1833 = vunpack.c.l.b16 %v1769
      %v1834 = vunpack.c.l.b16 %v1770
      %v1835 = vunpack.c.l.b16 %v1771
      %v1836 = vunpack.c.l.b16 %v1772
      %v1837 = vunpack.c.l.b16 %v1773
      %v1838 = vunpack.c.l.b16 %v1774
      %v1839 = vunpack.c.l.b16 %v1775
      %v1840 = vpack.c.b16 %v1833, %v1832
      %v1841 = vpack.c.b16 %v1835, %v1834
      %v1842 = vpack.c.b16 %v1837, %v1836
      %v1843 = vpack.c.b16 %v1839, %v1838
      %v1849 = vsel %vm1225, %v1808, 0
      %v1852 = vsel %vm1225, %v1809, 0
      %v1855 = vsel %vm1225, %v1810, 0
      %v1858 = vsel %vm1225, %v1811, 0
      %v1861 = vsel %vm1225, %v1812, 0
      %v1864 = vsel %vm1225, %v1813, 0
      %v1867 = vsel %vm1225, %v1814, 0
      %v1870 = vsel %vm1225, %v1815, 0
      %v1873 = vsel %vm1225, %v1816, 0
      %v1876 = vsel %vm1225, %v1817, 0
      %v1879 = vsel %vm1225, %v1818, 0
      %v1882 = vsel %vm1225, %v1819, 0
      %v1885 = vsel %vm1225, %v1820, 0
      %v1888 = vsel %vm1225, %v1821, 0
      %v1891 = vsel %vm1225, %v1822, 0
      %v1894 = vsel %vm1225, %v1823, 0
      %1896 = vmatpush.bf16.msra.mxu0 0
      %1897 = vmatpush.bf16.msra.mxu0 0
      %1898 = vmatpush.bf16.msra.mxu0 0
      %1899 = vmatpush.bf16.msra.mxu0 0
      %1900 = vmatpush.bf16.msra.mxu0 %v1843
      %1901 = vmatpush.bf16.msra.mxu0 %v1842
      %1902 = vmatpush.bf16.msra.mxu0 %v1841
      %1903 = vmatpush.bf16.msra.mxu0 %v1840
      %1904 = vmatmul.bf16.gmra.mxu0 %v1849
      %v1905 = vpop.f32.mrf.mxu0
      %v1906 = vadd.f32 0.0, %v1905
      %v1907 = vpop.f32.mrf.mxu0
      %v1908 = vadd.f32 0.0, %v1907
      %1909 = vmatmul.bf16.gmra.mxu0 %v1852
      %v1910 = vpop.f32.mrf.mxu0
      %v1911 = vadd.f32 0.0, %v1910
      %v1912 = vpop.f32.mrf.mxu0
      %v1913 = vadd.f32 0.0, %v1912
      %1914 = vmatmul.bf16.gmra.mxu0 %v1855
      %v1915 = vpop.f32.mrf.mxu0
      %v1916 = vadd.f32 0.0, %v1915
      %v1917 = vpop.f32.mrf.mxu0
      %v1918 = vadd.f32 0.0, %v1917
      %1919 = vmatmul.bf16.gmra.mxu0 %v1858
      %v1920 = vpop.f32.mrf.mxu0
      %v1921 = vadd.f32 0.0, %v1920
      %v1922 = vpop.f32.mrf.mxu0
      %v1923 = vadd.f32 0.0, %v1922
      %1924 = vmatmul.bf16.gmra.mxu0 %v1861
      %v1925 = vpop.f32.mrf.mxu0
      %v1926 = vadd.f32 0.0, %v1925
      %v1927 = vpop.f32.mrf.mxu0
      %v1928 = vadd.f32 0.0, %v1927
      %1929 = vmatmul.bf16.gmra.mxu0 %v1864
      %v1930 = vpop.f32.mrf.mxu0
      %v1931 = vadd.f32 0.0, %v1930
      %v1932 = vpop.f32.mrf.mxu0
      %v1933 = vadd.f32 0.0, %v1932
      %1934 = vmatmul.bf16.gmra.mxu0 %v1867
      %v1935 = vpop.f32.mrf.mxu0
      %v1936 = vadd.f32 0.0, %v1935
      %v1937 = vpop.f32.mrf.mxu0
      %v1938 = vadd.f32 0.0, %v1937
      %1939 = vmatmul.bf16.gmra.mxu0 %v1870
      %v1940 = vpop.f32.mrf.mxu0
      %v1941 = vadd.f32 0.0, %v1940
      %v1942 = vpop.f32.mrf.mxu0
      %v1943 = vadd.f32 0.0, %v1942
      %1944 = vmatmul.bf16.gmra.mxu0 %v1873
      %v1945 = vpop.f32.mrf.mxu0
      %v1946 = vadd.f32 0.0, %v1945
      %v1947 = vpop.f32.mrf.mxu0
      %v1948 = vadd.f32 0.0, %v1947
      %1949 = vmatmul.bf16.gmra.mxu0 %v1876
      %v1950 = vpop.f32.mrf.mxu0
      %v1951 = vadd.f32 0.0, %v1950
      %v1952 = vpop.f32.mrf.mxu0
      %v1953 = vadd.f32 0.0, %v1952
      %1954 = vmatmul.bf16.gmra.mxu0 %v1879
      %v1955 = vpop.f32.mrf.mxu0
      %v1956 = vadd.f32 0.0, %v1955
      %v1957 = vpop.f32.mrf.mxu0
      %v1958 = vadd.f32 0.0, %v1957
      %1959 = vmatmul.bf16.gmra.mxu0 %v1882
      %v1960 = vpop.f32.mrf.mxu0
      %v1961 = vadd.f32 0.0, %v1960
      %v1962 = vpop.f32.mrf.mxu0
      %v1963 = vadd.f32 0.0, %v1962
      %1964 = vmatmul.bf16.gmra.mxu0 %v1885
      %v1965 = vpop.f32.mrf.mxu0
      %v1966 = vadd.f32 0.0, %v1965
      %v1967 = vpop.f32.mrf.mxu0
      %v1968 = vadd.f32 0.0, %v1967
      %1969 = vmatmul.bf16.gmra.mxu0 %v1888
      %v1970 = vpop.f32.mrf.mxu0
      %v1971 = vadd.f32 0.0, %v1970
      %v1972 = vpop.f32.mrf.mxu0
      %v1973 = vadd.f32 0.0, %v1972
      %1974 = vmatmul.bf16.gmra.mxu0 %v1891
      %v1975 = vpop.f32.mrf.mxu0
      %v1976 = vadd.f32 0.0, %v1975
      %v1977 = vpop.f32.mrf.mxu0
      %v1978 = vadd.f32 0.0, %v1977
      %1979 = vmatmul.bf16.gmra.mxu0 %v1894
      %v1980 = vpop.f32.mrf.mxu0
      %v1981 = vadd.f32 0.0, %v1980
      %v1982 = vpop.f32.mrf.mxu0
      %v1983 = vadd.f32 0.0, %v1982
      %1984 = vdwg.mxu0
      %v1985 = vadd.f32 %v1525, %v1906
      %v1986 = vadd.f32 %v1527, %v1908
      %v1987 = vadd.f32 %v1530, %v1911
      %v1988 = vadd.f32 %v1532, %v1913
      %v1989 = vadd.f32 %v1535, %v1916
      %v1990 = vadd.f32 %v1537, %v1918
      %v1991 = vadd.f32 %v1540, %v1921
      %v1992 = vadd.f32 %v1542, %v1923
      %v1993 = vadd.f32 %v1545, %v1926
      %v1994 = vadd.f32 %v1547, %v1928
      %v1995 = vadd.f32 %v1550, %v1931
      %v1996 = vadd.f32 %v1552, %v1933
      %v1997 = vadd.f32 %v1555, %v1936
      %v1998 = vadd.f32 %v1557, %v1938
      %v1999 = vadd.f32 %v1560, %v1941
      %v2000 = vadd.f32 %v1562, %v1943
      %v2001 = vadd.f32 %v1565, %v1946
      %v2002 = vadd.f32 %v1567, %v1948
      %v2003 = vadd.f32 %v1570, %v1951
      %v2004 = vadd.f32 %v1572, %v1953
      %v2005 = vadd.f32 %v1575, %v1956
      %v2006 = vadd.f32 %v1577, %v1958
      %v2007 = vadd.f32 %v1580, %v1961
      %v2008 = vadd.f32 %v1582, %v1963
      %v2009 = vadd.f32 %v1585, %v1966
      %v2010 = vadd.f32 %v1587, %v1968
      %v2011 = vadd.f32 %v1590, %v1971
      %v2012 = vadd.f32 %v1592, %v1973
      %v2013 = vadd.f32 %v1595, %v1976
      %v2014 = vadd.f32 %v1597, %v1978
      %v2015 = vadd.f32 %v1600, %v1981
      %v2016 = vadd.f32 %v1602, %v1983
      %v2017 = vld [vmem:[%s583] sm:$0xf]
      %v2018 = vld [vmem:[%s583 + $0x4] sm:$0xf]
      %v2019 = vld [vmem:[%s583 + $0xc] sm:$0xf]
      %v2020 = vld [vmem:[%s583 + $0x10] sm:$0xf]
      %v2021 = vld [vmem:[%s583 + $0x18] sm:$0xf]
      %v2022 = vld [vmem:[%s583 + $0x1c] sm:$0xf]
      %v2023 = vld [vmem:[%s583 + $0x24] sm:$0xf]
      %v2024 = vld [vmem:[%s583 + $0x28] sm:$0xf]
      %v2025 = vld [vmem:[%s583 + $0x30] sm:$0xf]
      %v2026 = vld [vmem:[%s583 + $0x34] sm:$0xf]
      %v2027 = vld [vmem:[%s583 + $0x3c] sm:$0xf]
      %v2028 = vld [vmem:[%s583 + $0x40] sm:$0xf]
      %v2029 = vld [vmem:[%s583 + $0x48] sm:$0xf]
      %v2030 = vld [vmem:[%s583 + $0x4c] sm:$0xf]
      %v2031 = vld [vmem:[%s583 + $0x54] sm:$0xf]
      %v2032 = vld [vmem:[%s583 + $0x58] sm:$0xf]
      %v2033 = vld [vmem:[%s583 + $0x60] sm:$0xf]
      %v2034 = vld [vmem:[%s583 + $0x64] sm:$0xf]
      %v2035 = vld [vmem:[%s583 + $0x6c] sm:$0xf]
      %v2036 = vld [vmem:[%s583 + $0x70] sm:$0xf]
      %v2037 = vld [vmem:[%s583 + $0x78] sm:$0xf]
      %v2038 = vld [vmem:[%s583 + $0x7c] sm:$0xf]
      %v2039 = vld [vmem:[%s583 + $0x84] sm:$0xf]
      %v2040 = vld [vmem:[%s583 + $0x88] sm:$0xf]
      %v2041 = vld [vmem:[%s583 + $0x90] sm:$0xf]
      %v2042 = vld [vmem:[%s583 + $0x94] sm:$0xf]
      %v2043 = vld [vmem:[%s583 + $0x9c] sm:$0xf]
      %v2044 = vld [vmem:[%s583 + $0xa0] sm:$0xf]
      %v2045 = vld [vmem:[%s583 + $0xa8] sm:$0xf]
      %v2046 = vld [vmem:[%s583 + $0xac] sm:$0xf]
      %v2047 = vld [vmem:[%s583 + $0xb4] sm:$0xf]
      %v2048 = vld [vmem:[%s583 + $0xb8] sm:$0xf]
      %s2049 = scalar_lea.vmem %s1, 96
      %v2050 = vld [vmem:[%s2049] sm:$0xf]
      %v2051 = vld [vmem:[%s2049 + $0x4] sm:$0xf]
      %v2052 = vld [vmem:[%s2049 + $0x8] sm:$0xf]
      %v2053 = vld [vmem:[%s2049 + $0xc] sm:$0xf]
      %v2054 = vld [vmem:[%s2049 + $0x10] sm:$0xf]
      %v2055 = vld [vmem:[%s2049 + $0x14] sm:$0xf]
      %v2056 = vld [vmem:[%s2049 + $0x18] sm:$0xf]
      %v2057 = vld [vmem:[%s2049 + $0x1c] sm:$0xf]
      %v2090 = vunpack.c.l.b16 %v2017
      %v2091 = vunpack.c.l.b16 %v2018
      %v2092 = vunpack.c.l.b16 %v2019
      %v2093 = vunpack.c.l.b16 %v2020
      %v2094 = vunpack.c.l.b16 %v2021
      %v2095 = vunpack.c.l.b16 %v2022
      %v2096 = vunpack.c.l.b16 %v2023
      %v2097 = vunpack.c.l.b16 %v2024
      %v2098 = vunpack.c.l.b16 %v2025
      %v2099 = vunpack.c.l.b16 %v2026
      %v2100 = vunpack.c.l.b16 %v2027
      %v2101 = vunpack.c.l.b16 %v2028
      %v2102 = vunpack.c.l.b16 %v2029
      %v2103 = vunpack.c.l.b16 %v2030
      %v2104 = vunpack.c.l.b16 %v2031
      %v2105 = vunpack.c.l.b16 %v2032
      %v2106 = vunpack.c.l.b16 %v2033
      %v2107 = vunpack.c.l.b16 %v2034
      %v2108 = vunpack.c.l.b16 %v2035
      %v2109 = vunpack.c.l.b16 %v2036
      %v2110 = vunpack.c.l.b16 %v2037
      %v2111 = vunpack.c.l.b16 %v2038
      %v2112 = vunpack.c.l.b16 %v2039
      %v2113 = vunpack.c.l.b16 %v2040
      %v2114 = vunpack.c.l.b16 %v2041
      %v2115 = vunpack.c.l.b16 %v2042
      %v2116 = vunpack.c.l.b16 %v2043
      %v2117 = vunpack.c.l.b16 %v2044
      %v2118 = vunpack.c.l.b16 %v2045
      %v2119 = vunpack.c.l.b16 %v2046
      %v2120 = vunpack.c.l.b16 %v2047
      %v2121 = vunpack.c.l.b16 %v2048
      %v2122 = vpack.c.b16 %v2091, %v2090
      %v2123 = vpack.c.b16 %v2093, %v2092
      %v2124 = vpack.c.b16 %v2095, %v2094
      %v2125 = vpack.c.b16 %v2097, %v2096
      %v2126 = vpack.c.b16 %v2099, %v2098
      %v2127 = vpack.c.b16 %v2101, %v2100
      %v2128 = vpack.c.b16 %v2103, %v2102
      %v2129 = vpack.c.b16 %v2105, %v2104
      %v2130 = vpack.c.b16 %v2107, %v2106
      %v2131 = vpack.c.b16 %v2109, %v2108
      %v2132 = vpack.c.b16 %v2111, %v2110
      %v2133 = vpack.c.b16 %v2113, %v2112
      %v2134 = vpack.c.b16 %v2115, %v2114
      %v2135 = vpack.c.b16 %v2117, %v2116
      %v2136 = vpack.c.b16 %v2119, %v2118
      %v2137 = vpack.c.b16 %v2121, %v2120
      %v2146 = vunpack.c.l.b16 %v2050
      %v2147 = vunpack.c.l.b16 %v2051
      %v2148 = vunpack.c.l.b16 %v2052
      %v2149 = vunpack.c.l.b16 %v2053
      %v2150 = vunpack.c.l.b16 %v2054
      %v2151 = vunpack.c.l.b16 %v2055
      %v2152 = vunpack.c.l.b16 %v2056
      %v2153 = vunpack.c.l.b16 %v2057
      %v2154 = vpack.c.b16 %v2147, %v2146
      %v2155 = vpack.c.b16 %v2149, %v2148
      %v2156 = vpack.c.b16 %v2151, %v2150
      %v2157 = vpack.c.b16 %v2153, %v2152
      %v2163 = vsel %vm1225, %v2122, 0
      %v2166 = vsel %vm1225, %v2123, 0
      %v2169 = vsel %vm1225, %v2124, 0
      %v2172 = vsel %vm1225, %v2125, 0
      %v2175 = vsel %vm1225, %v2126, 0
      %v2178 = vsel %vm1225, %v2127, 0
      %v2181 = vsel %vm1225, %v2128, 0
      %v2184 = vsel %vm1225, %v2129, 0
      %v2187 = vsel %vm1225, %v2130, 0
      %v2190 = vsel %vm1225, %v2131, 0
      %v2193 = vsel %vm1225, %v2132, 0
      %v2196 = vsel %vm1225, %v2133, 0
      %v2199 = vsel %vm1225, %v2134, 0
      %v2202 = vsel %vm1225, %v2135, 0
      %v2205 = vsel %vm1225, %v2136, 0
      %v2208 = vsel %vm1225, %v2137, 0
      %2210 = vmatpush.bf16.msra.mxu0 0
      %2211 = vmatpush.bf16.msra.mxu0 0
      %2212 = vmatpush.bf16.msra.mxu0 0
      %2213 = vmatpush.bf16.msra.mxu0 0
      %2214 = vmatpush.bf16.msra.mxu0 %v2157
      %2215 = vmatpush.bf16.msra.mxu0 %v2156
      %2216 = vmatpush.bf16.msra.mxu0 %v2155
      %2217 = vmatpush.bf16.msra.mxu0 %v2154
      %2218 = vmatmul.bf16.gmra.mxu0 %v2163
      %v2219 = vpop.f32.mrf.mxu0
      %v2220 = vadd.f32 0.0, %v2219
      %v2221 = vpop.f32.mrf.mxu0
      %v2222 = vadd.f32 0.0, %v2221
      %2223 = vmatmul.bf16.gmra.mxu0 %v2166
      %v2224 = vpop.f32.mrf.mxu0
      %v2225 = vadd.f32 0.0, %v2224
      %v2226 = vpop.f32.mrf.mxu0
      %v2227 = vadd.f32 0.0, %v2226
      %2228 = vmatmul.bf16.gmra.mxu0 %v2169
      %v2229 = vpop.f32.mrf.mxu0
      %v2230 = vadd.f32 0.0, %v2229
      %v2231 = vpop.f32.mrf.mxu0
      %v2232 = vadd.f32 0.0, %v2231
      %2233 = vmatmul.bf16.gmra.mxu0 %v2172
      %v2234 = vpop.f32.mrf.mxu0
      %v2235 = vadd.f32 0.0, %v2234
      %v2236 = vpop.f32.mrf.mxu0
      %v2237 = vadd.f32 0.0, %v2236
      %2238 = vmatmul.bf16.gmra.mxu0 %v2175
      %v2239 = vpop.f32.mrf.mxu0
      %v2240 = vadd.f32 0.0, %v2239
      %v2241 = vpop.f32.mrf.mxu0
      %v2242 = vadd.f32 0.0, %v2241
      %2243 = vmatmul.bf16.gmra.mxu0 %v2178
      %v2244 = vpop.f32.mrf.mxu0
      %v2245 = vadd.f32 0.0, %v2244
      %v2246 = vpop.f32.mrf.mxu0
      %v2247 = vadd.f32 0.0, %v2246
      %2248 = vmatmul.bf16.gmra.mxu0 %v2181
      %v2249 = vpop.f32.mrf.mxu0
      %v2250 = vadd.f32 0.0, %v2249
      %v2251 = vpop.f32.mrf.mxu0
      %v2252 = vadd.f32 0.0, %v2251
      %2253 = vmatmul.bf16.gmra.mxu0 %v2184
      %v2254 = vpop.f32.mrf.mxu0
      %v2255 = vadd.f32 0.0, %v2254
      %v2256 = vpop.f32.mrf.mxu0
      %v2257 = vadd.f32 0.0, %v2256
      %2258 = vmatmul.bf16.gmra.mxu0 %v2187
      %v2259 = vpop.f32.mrf.mxu0
      %v2260 = vadd.f32 0.0, %v2259
      %v2261 = vpop.f32.mrf.mxu0
      %v2262 = vadd.f32 0.0, %v2261
      %2263 = vmatmul.bf16.gmra.mxu0 %v2190
      %v2264 = vpop.f32.mrf.mxu0
      %v2265 = vadd.f32 0.0, %v2264
      %v2266 = vpop.f32.mrf.mxu0
      %v2267 = vadd.f32 0.0, %v2266
      %2268 = vmatmul.bf16.gmra.mxu0 %v2193
      %v2269 = vpop.f32.mrf.mxu0
      %v2270 = vadd.f32 0.0, %v2269
      %v2271 = vpop.f32.mrf.mxu0
      %v2272 = vadd.f32 0.0, %v2271
      %2273 = vmatmul.bf16.gmra.mxu0 %v2196
      %v2274 = vpop.f32.mrf.mxu0
      %v2275 = vadd.f32 0.0, %v2274
      %v2276 = vpop.f32.mrf.mxu0
      %v2277 = vadd.f32 0.0, %v2276
      %2278 = vmatmul.bf16.gmra.mxu0 %v2199
      %v2279 = vpop.f32.mrf.mxu0
      %v2280 = vadd.f32 0.0, %v2279
      %v2281 = vpop.f32.mrf.mxu0
      %v2282 = vadd.f32 0.0, %v2281
      %2283 = vmatmul.bf16.gmra.mxu0 %v2202
      %v2284 = vpop.f32.mrf.mxu0
      %v2285 = vadd.f32 0.0, %v2284
      %v2286 = vpop.f32.mrf.mxu0
      %v2287 = vadd.f32 0.0, %v2286
      %2288 = vmatmul.bf16.gmra.mxu0 %v2205
      %v2289 = vpop.f32.mrf.mxu0
      %v2290 = vadd.f32 0.0, %v2289
      %v2291 = vpop.f32.mrf.mxu0
      %v2292 = vadd.f32 0.0, %v2291
      %2293 = vmatmul.bf16.gmra.mxu0 %v2208
      %v2294 = vpop.f32.mrf.mxu0
      %v2295 = vadd.f32 0.0, %v2294
      %v2296 = vpop.f32.mrf.mxu0
      %v2297 = vadd.f32 0.0, %v2296
      %2298 = vdwg.mxu0
      %v2299 = vadd.f32 %v1985, %v2220
      %v2300 = vadd.f32 %v1986, %v2222
      %v2301 = vadd.f32 %v1987, %v2225
      %v2302 = vadd.f32 %v1988, %v2227
      %v2303 = vadd.f32 %v1989, %v2230
      %v2304 = vadd.f32 %v1990, %v2232
      %v2305 = vadd.f32 %v1991, %v2235
      %v2306 = vadd.f32 %v1992, %v2237
      %v2307 = vadd.f32 %v1993, %v2240
      %v2308 = vadd.f32 %v1994, %v2242
      %v2309 = vadd.f32 %v1995, %v2245
      %v2310 = vadd.f32 %v1996, %v2247
      %v2311 = vadd.f32 %v1997, %v2250
      %v2312 = vadd.f32 %v1998, %v2252
      %v2313 = vadd.f32 %v1999, %v2255
      %v2314 = vadd.f32 %v2000, %v2257
      %v2315 = vadd.f32 %v2001, %v2260
      %v2316 = vadd.f32 %v2002, %v2262
      %v2317 = vadd.f32 %v2003, %v2265
      %v2318 = vadd.f32 %v2004, %v2267
      %v2319 = vadd.f32 %v2005, %v2270
      %v2320 = vadd.f32 %v2006, %v2272
      %v2321 = vadd.f32 %v2007, %v2275
      %v2322 = vadd.f32 %v2008, %v2277
      %v2323 = vadd.f32 %v2009, %v2280
      %v2324 = vadd.f32 %v2010, %v2282
      %v2325 = vadd.f32 %v2011, %v2285
      %v2326 = vadd.f32 %v2012, %v2287
      %v2327 = vadd.f32 %v2013, %v2290
      %v2328 = vadd.f32 %v2014, %v2292
      %v2329 = vadd.f32 %v2015, %v2295
      %v2330 = vadd.f32 %v2016, %v2297
      %v2331 = vld [vmem:[%s583] sm:$0xf]
      %v2332 = vld [vmem:[%s583 + $0x4] sm:$0xf]
      %v2333 = vld [vmem:[%s583 + $0x8] sm:$0x1]
      %v2334 = vld [vmem:[%s583 + $0xc] sm:$0xf]
      %v2335 = vld [vmem:[%s583 + $0x10] sm:$0xf]
      %v2336 = vld [vmem:[%s583 + $0x14] sm:$0x1]
      %v2337 = vld [vmem:[%s583 + $0x18] sm:$0xf]
      %v2338 = vld [vmem:[%s583 + $0x1c] sm:$0xf]
      %v2339 = vld [vmem:[%s583 + $0x20] sm:$0x1]
      %v2340 = vld [vmem:[%s583 + $0x24] sm:$0xf]
      %v2341 = vld [vmem:[%s583 + $0x28] sm:$0xf]
      %v2342 = vld [vmem:[%s583 + $0x2c] sm:$0x1]
      %v2343 = vld [vmem:[%s583 + $0x30] sm:$0xf]
      %v2344 = vld [vmem:[%s583 + $0x34] sm:$0xf]
      %v2345 = vld [vmem:[%s583 + $0x38] sm:$0x1]
      %v2346 = vld [vmem:[%s583 + $0x3c] sm:$0xf]
      %v2347 = vld [vmem:[%s583 + $0x40] sm:$0xf]
      %v2348 = vld [vmem:[%s583 + $0x44] sm:$0x1]
      %v2349 = vld [vmem:[%s583 + $0x48] sm:$0xf]
      %v2350 = vld [vmem:[%s583 + $0x4c] sm:$0xf]
      %v2351 = vld [vmem:[%s583 + $0x50] sm:$0x1]
      %v2352 = vld [vmem:[%s583 + $0x54] sm:$0xf]
      %v2353 = vld [vmem:[%s583 + $0x58] sm:$0xf]
      %v2354 = vld [vmem:[%s583 + $0x5c] sm:$0x1]
      %v2355 = vld [vmem:[%s583 + $0x60] sm:$0xf]
      %v2356 = vld [vmem:[%s583 + $0x64] sm:$0xf]
      %v2357 = vld [vmem:[%s583 + $0x68] sm:$0x1]
      %v2358 = vld [vmem:[%s583 + $0x6c] sm:$0xf]
      %v2359 = vld [vmem:[%s583 + $0x70] sm:$0xf]
      %v2360 = vld [vmem:[%s583 + $0x74] sm:$0x1]
      %v2361 = vld [vmem:[%s583 + $0x78] sm:$0xf]
      %v2362 = vld [vmem:[%s583 + $0x7c] sm:$0xf]
      %v2363 = vld [vmem:[%s583 + $0x80] sm:$0x1]
      %v2364 = vld [vmem:[%s583 + $0x84] sm:$0xf]
      %v2365 = vld [vmem:[%s583 + $0x88] sm:$0xf]
      %v2366 = vld [vmem:[%s583 + $0x8c] sm:$0x1]
      %v2367 = vld [vmem:[%s583 + $0x90] sm:$0xf]
      %v2368 = vld [vmem:[%s583 + $0x94] sm:$0xf]
      %v2369 = vld [vmem:[%s583 + $0x98] sm:$0x1]
      %v2370 = vld [vmem:[%s583 + $0x9c] sm:$0xf]
      %v2371 = vld [vmem:[%s583 + $0xa0] sm:$0xf]
      %v2372 = vld [vmem:[%s583 + $0xa4] sm:$0x1]
      %v2373 = vld [vmem:[%s583 + $0xa8] sm:$0xf]
      %v2374 = vld [vmem:[%s583 + $0xac] sm:$0xf]
      %v2375 = vld [vmem:[%s583 + $0xb0] sm:$0x1]
      %v2376 = vld [vmem:[%s583 + $0xb4] sm:$0xf]
      %v2377 = vld [vmem:[%s583 + $0xb8] sm:$0xf]
      %v2378 = vld [vmem:[%s583 + $0xbc] sm:$0x1]
      %v2380 = vshrl.u32 %v2331, 16
      %v2382 = vrot.slane %v2380, 4
      %v2383 = vshll.u32 %v2331, 16
      %v2385 = vrot.slane %v2383, 5
      %v2386 = vor.u32 %v2382, %v2385
      %v2387 = vrot.slane %v2386, 4
      %v2389 = vshll.u32 %v2332, 16
      %v2391 = vrot.slane %v2389, 5
      %v2392 = vsel %vm759, %v2387, %v2391
      %v2393 = vshrl.u32 %v2332, 16
      %v2395 = vrot.slane %v2393, 4
      %v2396 = vor.u32 %v2395, %v2391
      %v2397 = vrot.slane %v2396, 4
      %v2399 = vshll.u32 %v2333, 16
      %v2401 = vrot.slane %v2399, 5
      %v2402 = vsel %vm759, %v2397, %v2401
      %v2404 = vshrl.u32 %v2334, 16
      %v2406 = vrot.slane %v2404, 4
      %v2407 = vshll.u32 %v2334, 16
      %v2409 = vrot.slane %v2407, 5
      %v2410 = vor.u32 %v2406, %v2409
      %v2411 = vrot.slane %v2410, 4
      %v2413 = vshll.u32 %v2335, 16
      %v2415 = vrot.slane %v2413, 5
      %v2416 = vsel %vm759, %v2411, %v2415
      %v2417 = vshrl.u32 %v2335, 16
      %v2419 = vrot.slane %v2417, 4
      %v2420 = vor.u32 %v2419, %v2415
      %v2421 = vrot.slane %v2420, 4
      %v2423 = vshll.u32 %v2336, 16
      %v2425 = vrot.slane %v2423, 5
      %v2426 = vsel %vm759, %v2421, %v2425
      %v2428 = vshrl.u32 %v2337, 16
      %v2430 = vrot.slane %v2428, 4
      %v2431 = vshll.u32 %v2337, 16
      %v2433 = vrot.slane %v2431, 5
      %v2434 = vor.u32 %v2430, %v2433
      %v2435 = vrot.slane %v2434, 4
      %v2437 = vshll.u32 %v2338, 16
      %v2439 = vrot.slane %v2437, 5
      %v2440 = vsel %vm759, %v2435, %v2439
      %v2441 = vshrl.u32 %v2338, 16
      %v2443 = vrot.slane %v2441, 4
      %v2444 = vor.u32 %v2443, %v2439
      %v2445 = vrot.slane %v2444, 4
      %v2447 = vshll.u32 %v2339, 16
      %v2449 = vrot.slane %v2447, 5
      %v2450 = vsel %vm759, %v2445, %v2449
      %v2452 = vshrl.u32 %v2340, 16
      %v2454 = vrot.slane %v2452, 4
      %v2455 = vshll.u32 %v2340, 16
      %v2457 = vrot.slane %v2455, 5
      %v2458 = vor.u32 %v2454, %v2457
      %v2459 = vrot.slane %v2458, 4
      %v2461 = vshll.u32 %v2341, 16
      %v2463 = vrot.slane %v2461, 5
      %v2464 = vsel %vm759, %v2459, %v2463
      %v2465 = vshrl.u32 %v2341, 16
      %v2467 = vrot.slane %v2465, 4
      %v2468 = vor.u32 %v2467, %v2463
      %v2469 = vrot.slane %v2468, 4
      %v2471 = vshll.u32 %v2342, 16
      %v2473 = vrot.slane %v2471, 5
      %v2474 = vsel %vm759, %v2469, %v2473
      %v2476 = vshrl.u32 %v2343, 16
      %v2478 = vrot.slane %v2476, 4
      %v2479 = vshll.u32 %v2343, 16
      %v2481 = vrot.slane %v2479, 5
      %v2482 = vor.u32 %v2478, %v2481
      %v2483 = vrot.slane %v2482, 4
      %v2485 = vshll.u32 %v2344, 16
      %v2487 = vrot.slane %v2485, 5
      %v2488 = vsel %vm759, %v2483, %v2487
      %v2489 = vshrl.u32 %v2344, 16
      %v2491 = vrot.slane %v2489, 4
      %v2492 = vor.u32 %v2491, %v2487
      %v2493 = vrot.slane %v2492, 4
      %v2495 = vshll.u32 %v2345, 16
      %v2497 = vrot.slane %v2495, 5
      %v2498 = vsel %vm759, %v2493, %v2497
      %v2500 = vshrl.u32 %v2346, 16
      %v2502 = vrot.slane %v2500, 4
      %v2503 = vshll.u32 %v2346, 16
      %v2505 = vrot.slane %v2503, 5
      %v2506 = vor.u32 %v2502, %v2505
      %v2507 = vrot.slane %v2506, 4
      %v2509 = vshll.u32 %v2347, 16
      %v2511 = vrot.slane %v2509, 5
      %v2512 = vsel %vm759, %v2507, %v2511
      %v2513 = vshrl.u32 %v2347, 16
      %v2515 = vrot.slane %v2513, 4
      %v2516 = vor.u32 %v2515, %v2511
      %v2517 = vrot.slane %v2516, 4
      %v2519 = vshll.u32 %v2348, 16
      %v2521 = vrot.slane %v2519, 5
      %v2522 = vsel %vm759, %v2517, %v2521
      %v2524 = vshrl.u32 %v2349, 16
      %v2526 = vrot.slane %v2524, 4
      %v2527 = vshll.u32 %v2349, 16
      %v2529 = vrot.slane %v2527, 5
      %v2530 = vor.u32 %v2526, %v2529
      %v2531 = vrot.slane %v2530, 4
      %v2533 = vshll.u32 %v2350, 16
      %v2535 = vrot.slane %v2533, 5
      %v2536 = vsel %vm759, %v2531, %v2535
      %v2537 = vshrl.u32 %v2350, 16
      %v2539 = vrot.slane %v2537, 4
      %v2540 = vor.u32 %v2539, %v2535
      %v2541 = vrot.slane %v2540, 4
      %v2543 = vshll.u32 %v2351, 16
      %v2545 = vrot.slane %v2543, 5
      %v2546 = vsel %vm759, %v2541, %v2545
      %v2548 = vshrl.u32 %v2352, 16
      %v2550 = vrot.slane %v2548, 4
      %v2551 = vshll.u32 %v2352, 16
      %v2553 = vrot.slane %v2551, 5
      %v2554 = vor.u32 %v2550, %v2553
      %v2555 = vrot.slane %v2554, 4
      %v2557 = vshll.u32 %v2353, 16
      %v2559 = vrot.slane %v2557, 5
      %v2560 = vsel %vm759, %v2555, %v2559
      %v2561 = vshrl.u32 %v2353, 16
      %v2563 = vrot.slane %v2561, 4
      %v2564 = vor.u32 %v2563, %v2559
      %v2565 = vrot.slane %v2564, 4
      %v2567 = vshll.u32 %v2354, 16
      %v2569 = vrot.slane %v2567, 5
      %v2570 = vsel %vm759, %v2565, %v2569
      %v2572 = vshrl.u32 %v2355, 16
      %v2574 = vrot.slane %v2572, 4
      %v2575 = vshll.u32 %v2355, 16
      %v2577 = vrot.slane %v2575, 5
      %v2578 = vor.u32 %v2574, %v2577
      %v2579 = vrot.slane %v2578, 4
      %v2581 = vshll.u32 %v2356, 16
      %v2583 = vrot.slane %v2581, 5
      %v2584 = vsel %vm759, %v2579, %v2583
      %v2585 = vshrl.u32 %v2356, 16
      %v2587 = vrot.slane %v2585, 4
      %v2588 = vor.u32 %v2587, %v2583
      %v2589 = vrot.slane %v2588, 4
      %v2591 = vshll.u32 %v2357, 16
      %v2593 = vrot.slane %v2591, 5
      %v2594 = vsel %vm759, %v2589, %v2593
      %v2596 = vshrl.u32 %v2358, 16
      %v2598 = vrot.slane %v2596, 4
      %v2599 = vshll.u32 %v2358, 16
      %v2601 = vrot.slane %v2599, 5
      %v2602 = vor.u32 %v2598, %v2601
      %v2603 = vrot.slane %v2602, 4
      %v2605 = vshll.u32 %v2359, 16
      %v2607 = vrot.slane %v2605, 5
      %v2608 = vsel %vm759, %v2603, %v2607
      %v2609 = vshrl.u32 %v2359, 16
      %v2611 = vrot.slane %v2609, 4
      %v2612 = vor.u32 %v2611, %v2607
      %v2613 = vrot.slane %v2612, 4
      %v2615 = vshll.u32 %v2360, 16
      %v2617 = vrot.slane %v2615, 5
      %v2618 = vsel %vm759, %v2613, %v2617
      %v2620 = vshrl.u32 %v2361, 16
      %v2622 = vrot.slane %v2620, 4
      %v2623 = vshll.u32 %v2361, 16
      %v2625 = vrot.slane %v2623, 5
      %v2626 = vor.u32 %v2622, %v2625
      %v2627 = vrot.slane %v2626, 4
      %v2629 = vshll.u32 %v2362, 16
      %v2631 = vrot.slane %v2629, 5
      %v2632 = vsel %vm759, %v2627, %v2631
      %v2633 = vshrl.u32 %v2362, 16
      %v2635 = vrot.slane %v2633, 4
      %v2636 = vor.u32 %v2635, %v2631
      %v2637 = vrot.slane %v2636, 4
      %v2639 = vshll.u32 %v2363, 16
      %v2641 = vrot.slane %v2639, 5
      %v2642 = vsel %vm759, %v2637, %v2641
      %v2644 = vshrl.u32 %v2364, 16
      %v2646 = vrot.slane %v2644, 4
      %v2647 = vshll.u32 %v2364, 16
      %v2649 = vrot.slane %v2647, 5
      %v2650 = vor.u32 %v2646, %v2649
      %v2651 = vrot.slane %v2650, 4
      %v2653 = vshll.u32 %v2365, 16
      %v2655 = vrot.slane %v2653, 5
      %v2656 = vsel %vm759, %v2651, %v2655
      %v2657 = vshrl.u32 %v2365, 16
      %v2659 = vrot.slane %v2657, 4
      %v2660 = vor.u32 %v2659, %v2655
      %v2661 = vrot.slane %v2660, 4
      %v2663 = vshll.u32 %v2366, 16
      %v2665 = vrot.slane %v2663, 5
      %v2666 = vsel %vm759, %v2661, %v2665
      %v2668 = vshrl.u32 %v2367, 16
      %v2670 = vrot.slane %v2668, 4
      %v2671 = vshll.u32 %v2367, 16
      %v2673 = vrot.slane %v2671, 5
      %v2674 = vor.u32 %v2670, %v2673
      %v2675 = vrot.slane %v2674, 4
      %v2677 = vshll.u32 %v2368, 16
      %v2679 = vrot.slane %v2677, 5
      %v2680 = vsel %vm759, %v2675, %v2679
      %v2681 = vshrl.u32 %v2368, 16
      %v2683 = vrot.slane %v2681, 4
      %v2684 = vor.u32 %v2683, %v2679
      %v2685 = vrot.slane %v2684, 4
      %v2687 = vshll.u32 %v2369, 16
      %v2689 = vrot.slane %v2687, 5
      %v2690 = vsel %vm759, %v2685, %v2689
      %v2692 = vshrl.u32 %v2370, 16
      %v2694 = vrot.slane %v2692, 4
      %v2695 = vshll.u32 %v2370, 16
      %v2697 = vrot.slane %v2695, 5
      %v2698 = vor.u32 %v2694, %v2697
      %v2699 = vrot.slane %v2698, 4
      %v2701 = vshll.u32 %v2371, 16
      %v2703 = vrot.slane %v2701, 5
      %v2704 = vsel %vm759, %v2699, %v2703
      %v2705 = vshrl.u32 %v2371, 16
      %v2707 = vrot.slane %v2705, 4
      %v2708 = vor.u32 %v2707, %v2703
      %v2709 = vrot.slane %v2708, 4
      %v2711 = vshll.u32 %v2372, 16
      %v2713 = vrot.slane %v2711, 5
      %v2714 = vsel %vm759, %v2709, %v2713
      %v2716 = vshrl.u32 %v2373, 16
      %v2718 = vrot.slane %v2716, 4
      %v2719 = vshll.u32 %v2373, 16
      %v2721 = vrot.slane %v2719, 5
      %v2722 = vor.u32 %v2718, %v2721
      %v2723 = vrot.slane %v2722, 4
      %v2725 = vshll.u32 %v2374, 16
      %v2727 = vrot.slane %v2725, 5
      %v2728 = vsel %vm759, %v2723, %v2727
      %v2729 = vshrl.u32 %v2374, 16
      %v2731 = vrot.slane %v2729, 4
      %v2732 = vor.u32 %v2731, %v2727
      %v2733 = vrot.slane %v2732, 4
      %v2735 = vshll.u32 %v2375, 16
      %v2737 = vrot.slane %v2735, 5
      %v2738 = vsel %vm759, %v2733, %v2737
      %v2740 = vshrl.u32 %v2376, 16
      %v2742 = vrot.slane %v2740, 4
      %v2743 = vshll.u32 %v2376, 16
      %v2745 = vrot.slane %v2743, 5
      %v2746 = vor.u32 %v2742, %v2745
      %v2747 = vrot.slane %v2746, 4
      %v2749 = vshll.u32 %v2377, 16
      %v2751 = vrot.slane %v2749, 5
      %v2752 = vsel %vm759, %v2747, %v2751
      %v2753 = vshrl.u32 %v2377, 16
      %v2755 = vrot.slane %v2753, 4
      %v2756 = vor.u32 %v2755, %v2751
      %v2757 = vrot.slane %v2756, 4
      %v2759 = vshll.u32 %v2378, 16
      %v2761 = vrot.slane %v2759, 5
      %v2762 = vsel %vm759, %v2757, %v2761
      %s2763 = scalar_lea.vmem %s1, 128
      %v2764 = vld [vmem:[%s2763] sm:$0xf]
      %v2765 = vld [vmem:[%s2763 + $0x4] sm:$0xf]
      %v2766 = vld [vmem:[%s2763 + $0x8] sm:$0xf]
      %v2767 = vld [vmem:[%s2763 + $0xc] sm:$0xf]
      %v2768 = vld [vmem:[%s2763 + $0x10] sm:$0xf]
      %v2769 = vld [vmem:[%s2763 + $0x14] sm:$0xf]
      %v2770 = vld [vmem:[%s2763 + $0x18] sm:$0xf]
      %v2771 = vld [vmem:[%s2763 + $0x1c] sm:$0xf]
      %v2772 = vunpack.c.l.b16 %v2392
      %v2773 = vunpack.c.l.b16 %v2402
      %v2774 = vunpack.c.l.b16 %v2416
      %v2775 = vunpack.c.l.b16 %v2426
      %v2776 = vunpack.c.l.b16 %v2440
      %v2777 = vunpack.c.l.b16 %v2450
      %v2778 = vunpack.c.l.b16 %v2464
      %v2779 = vunpack.c.l.b16 %v2474
      %v2780 = vunpack.c.l.b16 %v2488
      %v2781 = vunpack.c.l.b16 %v2498
      %v2782 = vunpack.c.l.b16 %v2512
      %v2783 = vunpack.c.l.b16 %v2522
      %v2784 = vunpack.c.l.b16 %v2536
      %v2785 = vunpack.c.l.b16 %v2546
      %v2786 = vunpack.c.l.b16 %v2560
      %v2787 = vunpack.c.l.b16 %v2570
      %v2788 = vunpack.c.l.b16 %v2584
      %v2789 = vunpack.c.l.b16 %v2594
      %v2790 = vunpack.c.l.b16 %v2608
      %v2791 = vunpack.c.l.b16 %v2618
      %v2792 = vunpack.c.l.b16 %v2632
      %v2793 = vunpack.c.l.b16 %v2642
      %v2794 = vunpack.c.l.b16 %v2656
      %v2795 = vunpack.c.l.b16 %v2666
      %v2796 = vunpack.c.l.b16 %v2680
      %v2797 = vunpack.c.l.b16 %v2690
      %v2798 = vunpack.c.l.b16 %v2704
      %v2799 = vunpack.c.l.b16 %v2714
      %v2800 = vunpack.c.l.b16 %v2728
      %v2801 = vunpack.c.l.b16 %v2738
      %v2802 = vunpack.c.l.b16 %v2752
      %v2803 = vunpack.c.l.b16 %v2762
      %v2804 = vpack.c.b16 %v2773, %v2772
      %v2805 = vpack.c.b16 %v2775, %v2774
      %v2806 = vpack.c.b16 %v2777, %v2776
      %v2807 = vpack.c.b16 %v2779, %v2778
      %v2808 = vpack.c.b16 %v2781, %v2780
      %v2809 = vpack.c.b16 %v2783, %v2782
      %v2810 = vpack.c.b16 %v2785, %v2784
      %v2811 = vpack.c.b16 %v2787, %v2786
      %v2812 = vpack.c.b16 %v2789, %v2788
      %v2813 = vpack.c.b16 %v2791, %v2790
      %v2814 = vpack.c.b16 %v2793, %v2792
      %v2815 = vpack.c.b16 %v2795, %v2794
      %v2816 = vpack.c.b16 %v2797, %v2796
      %v2817 = vpack.c.b16 %v2799, %v2798
      %v2818 = vpack.c.b16 %v2801, %v2800
      %v2819 = vpack.c.b16 %v2803, %v2802
      %v2828 = vunpack.c.l.b16 %v2764
      %v2829 = vunpack.c.l.b16 %v2765
      %v2830 = vunpack.c.l.b16 %v2766
      %v2831 = vunpack.c.l.b16 %v2767
      %v2832 = vunpack.c.l.b16 %v2768
      %v2833 = vunpack.c.l.b16 %v2769
      %v2834 = vunpack.c.l.b16 %v2770
      %v2835 = vunpack.c.l.b16 %v2771
      %v2836 = vpack.c.b16 %v2829, %v2828
      %v2837 = vpack.c.b16 %v2831, %v2830
      %v2838 = vpack.c.b16 %v2833, %v2832
      %v2839 = vpack.c.b16 %v2835, %v2834
      %v2845 = vsel %vm1225, %v2804, 0
      %v2848 = vsel %vm1225, %v2805, 0
      %v2851 = vsel %vm1225, %v2806, 0
      %v2854 = vsel %vm1225, %v2807, 0
      %v2857 = vsel %vm1225, %v2808, 0
      %v2860 = vsel %vm1225, %v2809, 0
      %v2863 = vsel %vm1225, %v2810, 0
      %v2866 = vsel %vm1225, %v2811, 0
      %v2869 = vsel %vm1225, %v2812, 0
      %v2872 = vsel %vm1225, %v2813, 0
      %v2875 = vsel %vm1225, %v2814, 0
      %v2878 = vsel %vm1225, %v2815, 0
      %v2881 = vsel %vm1225, %v2816, 0
      %v2884 = vsel %vm1225, %v2817, 0
      %v2887 = vsel %vm1225, %v2818, 0
      %v2890 = vsel %vm1225, %v2819, 0
      %2892 = vmatpush.bf16.msra.mxu0 0
      %2893 = vmatpush.bf16.msra.mxu0 0
      %2894 = vmatpush.bf16.msra.mxu0 0
      %2895 = vmatpush.bf16.msra.mxu0 0
      %2896 = vmatpush.bf16.msra.mxu0 %v2839
      %2897 = vmatpush.bf16.msra.mxu0 %v2838
      %2898 = vmatpush.bf16.msra.mxu0 %v2837
      %2899 = vmatpush.bf16.msra.mxu0 %v2836
      %2900 = vmatmul.bf16.gmra.mxu0 %v2845
      %v2901 = vpop.f32.mrf.mxu0
      %v2902 = vadd.f32 0.0, %v2901
      %v2903 = vpop.f32.mrf.mxu0
      %v2904 = vadd.f32 0.0, %v2903
      %2905 = vmatmul.bf16.gmra.mxu0 %v2848
      %v2906 = vpop.f32.mrf.mxu0
      %v2907 = vadd.f32 0.0, %v2906
      %v2908 = vpop.f32.mrf.mxu0
      %v2909 = vadd.f32 0.0, %v2908
      %2910 = vmatmul.bf16.gmra.mxu0 %v2851
      %v2911 = vpop.f32.mrf.mxu0
      %v2912 = vadd.f32 0.0, %v2911
      %v2913 = vpop.f32.mrf.mxu0
      %v2914 = vadd.f32 0.0, %v2913
      %2915 = vmatmul.bf16.gmra.mxu0 %v2854
      %v2916 = vpop.f32.mrf.mxu0
      %v2917 = vadd.f32 0.0, %v2916
      %v2918 = vpop.f32.mrf.mxu0
      %v2919 = vadd.f32 0.0, %v2918
      %2920 = vmatmul.bf16.gmra.mxu0 %v2857
      %v2921 = vpop.f32.mrf.mxu0
      %v2922 = vadd.f32 0.0, %v2921
      %v2923 = vpop.f32.mrf.mxu0
      %v2924 = vadd.f32 0.0, %v2923
      %2925 = vmatmul.bf16.gmra.mxu0 %v2860
      %v2926 = vpop.f32.mrf.mxu0
      %v2927 = vadd.f32 0.0, %v2926
      %v2928 = vpop.f32.mrf.mxu0
      %v2929 = vadd.f32 0.0, %v2928
      %2930 = vmatmul.bf16.gmra.mxu0 %v2863
      %v2931 = vpop.f32.mrf.mxu0
      %v2932 = vadd.f32 0.0, %v2931
      %v2933 = vpop.f32.mrf.mxu0
      %v2934 = vadd.f32 0.0, %v2933
      %2935 = vmatmul.bf16.gmra.mxu0 %v2866
      %v2936 = vpop.f32.mrf.mxu0
      %v2937 = vadd.f32 0.0, %v2936
      %v2938 = vpop.f32.mrf.mxu0
      %v2939 = vadd.f32 0.0, %v2938
      %2940 = vmatmul.bf16.gmra.mxu0 %v2869
      %v2941 = vpop.f32.mrf.mxu0
      %v2942 = vadd.f32 0.0, %v2941
      %v2943 = vpop.f32.mrf.mxu0
      %v2944 = vadd.f32 0.0, %v2943
      %2945 = vmatmul.bf16.gmra.mxu0 %v2872
      %v2946 = vpop.f32.mrf.mxu0
      %v2947 = vadd.f32 0.0, %v2946
      %v2948 = vpop.f32.mrf.mxu0
      %v2949 = vadd.f32 0.0, %v2948
      %2950 = vmatmul.bf16.gmra.mxu0 %v2875
      %v2951 = vpop.f32.mrf.mxu0
      %v2952 = vadd.f32 0.0, %v2951
      %v2953 = vpop.f32.mrf.mxu0
      %v2954 = vadd.f32 0.0, %v2953
      %2955 = vmatmul.bf16.gmra.mxu0 %v2878
      %v2956 = vpop.f32.mrf.mxu0
      %v2957 = vadd.f32 0.0, %v2956
      %v2958 = vpop.f32.mrf.mxu0
      %v2959 = vadd.f32 0.0, %v2958
      %2960 = vmatmul.bf16.gmra.mxu0 %v2881
      %v2961 = vpop.f32.mrf.mxu0
      %v2962 = vadd.f32 0.0, %v2961
      %v2963 = vpop.f32.mrf.mxu0
      %v2964 = vadd.f32 0.0, %v2963
      %2965 = vmatmul.bf16.gmra.mxu0 %v2884
      %v2966 = vpop.f32.mrf.mxu0
      %v2967 = vadd.f32 0.0, %v2966
      %v2968 = vpop.f32.mrf.mxu0
      %v2969 = vadd.f32 0.0, %v2968
      %2970 = vmatmul.bf16.gmra.mxu0 %v2887
      %v2971 = vpop.f32.mrf.mxu0
      %v2972 = vadd.f32 0.0, %v2971
      %v2973 = vpop.f32.mrf.mxu0
      %v2974 = vadd.f32 0.0, %v2973
      %2975 = vmatmul.bf16.gmra.mxu0 %v2890
      %v2976 = vpop.f32.mrf.mxu0
      %v2977 = vadd.f32 0.0, %v2976
      %v2978 = vpop.f32.mrf.mxu0
      %v2979 = vadd.f32 0.0, %v2978
      %2980 = vdwg.mxu0
      %v2981 = vadd.f32 %v2299, %v2902
      %v2982 = vadd.f32 %v2300, %v2904
      %v2983 = vadd.f32 %v2301, %v2907
      %v2984 = vadd.f32 %v2302, %v2909
      %v2985 = vadd.f32 %v2303, %v2912
      %v2986 = vadd.f32 %v2304, %v2914
      %v2987 = vadd.f32 %v2305, %v2917
      %v2988 = vadd.f32 %v2306, %v2919
      %v2989 = vadd.f32 %v2307, %v2922
      %v2990 = vadd.f32 %v2308, %v2924
      %v2991 = vadd.f32 %v2309, %v2927
      %v2992 = vadd.f32 %v2310, %v2929
      %v2993 = vadd.f32 %v2311, %v2932
      %v2994 = vadd.f32 %v2312, %v2934
      %v2995 = vadd.f32 %v2313, %v2937
      %v2996 = vadd.f32 %v2314, %v2939
      %v2997 = vadd.f32 %v2315, %v2942
      %v2998 = vadd.f32 %v2316, %v2944
      %v2999 = vadd.f32 %v2317, %v2947
      %v3000 = vadd.f32 %v2318, %v2949
      %v3001 = vadd.f32 %v2319, %v2952
      %v3002 = vadd.f32 %v2320, %v2954
      %v3003 = vadd.f32 %v2321, %v2957
      %v3004 = vadd.f32 %v2322, %v2959
      %v3005 = vadd.f32 %v2323, %v2962
      %v3006 = vadd.f32 %v2324, %v2964
      %v3007 = vadd.f32 %v2325, %v2967
      %v3008 = vadd.f32 %v2326, %v2969
      %v3009 = vadd.f32 %v2327, %v2972
      %v3010 = vadd.f32 %v2328, %v2974
      %v3011 = vadd.f32 %v2329, %v2977
      %v3012 = vadd.f32 %v2330, %v2979
      %v3013 = vld [vmem:[%s583] sm:$0xe]
      %v3014 = vld [vmem:[%s583 + $0xc] sm:$0xe]
      %v3015 = vld [vmem:[%s583 + $0x18] sm:$0xe]
      %v3016 = vld [vmem:[%s583 + $0x24] sm:$0xe]
      %v3017 = vld [vmem:[%s583 + $0x30] sm:$0xe]
      %v3018 = vld [vmem:[%s583 + $0x3c] sm:$0xe]
      %v3019 = vld [vmem:[%s583 + $0x48] sm:$0xe]
      %v3020 = vld [vmem:[%s583 + $0x54] sm:$0xe]
      %v3021 = vld [vmem:[%s583 + $0x60] sm:$0xe]
      %v3022 = vld [vmem:[%s583 + $0x6c] sm:$0xe]
      %v3023 = vld [vmem:[%s583 + $0x78] sm:$0xe]
      %v3024 = vld [vmem:[%s583 + $0x84] sm:$0xe]
      %v3025 = vld [vmem:[%s583 + $0x90] sm:$0xe]
      %v3026 = vld [vmem:[%s583 + $0x9c] sm:$0xe]
      %v3027 = vld [vmem:[%s583 + $0xa8] sm:$0xe]
      %v3028 = vld [vmem:[%s583 + $0xb4] sm:$0xe]
      %v3077 = vrot.slane %v3013, 5
      %v3078 = vrot.slane %v3077, 4
      %v3079 = vrot.slane %v2332, 5
      %v3080 = vsel %vm1654, %v3078, %v3079
      %v3081 = vrot.slane %v3079, 4
      %v3082 = vrot.slane %v2333, 5
      %v3083 = vsel %vm1654, %v3081, %v3082
      %v3084 = vrot.slane %v3014, 5
      %v3085 = vrot.slane %v3084, 4
      %v3086 = vrot.slane %v2335, 5
      %v3087 = vsel %vm1654, %v3085, %v3086
      %v3088 = vrot.slane %v3086, 4
      %v3089 = vrot.slane %v2336, 5
      %v3090 = vsel %vm1654, %v3088, %v3089
      %v3091 = vrot.slane %v3015, 5
      %v3092 = vrot.slane %v3091, 4
      %v3093 = vrot.slane %v2338, 5
      %v3094 = vsel %vm1654, %v3092, %v3093
      %v3095 = vrot.slane %v3093, 4
      %v3096 = vrot.slane %v2339, 5
      %v3097 = vsel %vm1654, %v3095, %v3096
      %v3098 = vrot.slane %v3016, 5
      %v3099 = vrot.slane %v3098, 4
      %v3100 = vrot.slane %v2341, 5
      %v3101 = vsel %vm1654, %v3099, %v3100
      %v3102 = vrot.slane %v3100, 4
      %v3103 = vrot.slane %v2342, 5
      %v3104 = vsel %vm1654, %v3102, %v3103
      %v3105 = vrot.slane %v3017, 5
      %v3106 = vrot.slane %v3105, 4
      %v3107 = vrot.slane %v2344, 5
      %v3108 = vsel %vm1654, %v3106, %v3107
      %v3109 = vrot.slane %v3107, 4
      %v3110 = vrot.slane %v2345, 5
      %v3111 = vsel %vm1654, %v3109, %v3110
      %v3112 = vrot.slane %v3018, 5
      %v3113 = vrot.slane %v3112, 4
      %v3114 = vrot.slane %v2347, 5
      %v3115 = vsel %vm1654, %v3113, %v3114
      %v3116 = vrot.slane %v3114, 4
      %v3117 = vrot.slane %v2348, 5
      %v3118 = vsel %vm1654, %v3116, %v3117
      %v3119 = vrot.slane %v3019, 5
      %v3120 = vrot.slane %v3119, 4
      %v3121 = vrot.slane %v2350, 5
      %v3122 = vsel %vm1654, %v3120, %v3121
      %v3123 = vrot.slane %v3121, 4
      %v3124 = vrot.slane %v2351, 5
      %v3125 = vsel %vm1654, %v3123, %v3124
      %v3126 = vrot.slane %v3020, 5
      %v3127 = vrot.slane %v3126, 4
      %v3128 = vrot.slane %v2353, 5
      %v3129 = vsel %vm1654, %v3127, %v3128
      %v3130 = vrot.slane %v3128, 4
      %v3131 = vrot.slane %v2354, 5
      %v3132 = vsel %vm1654, %v3130, %v3131
      %v3133 = vrot.slane %v3021, 5
      %v3134 = vrot.slane %v3133, 4
      %v3135 = vrot.slane %v2356, 5
      %v3136 = vsel %vm1654, %v3134, %v3135
      %v3137 = vrot.slane %v3135, 4
      %v3138 = vrot.slane %v2357, 5
      %v3139 = vsel %vm1654, %v3137, %v3138
      %v3140 = vrot.slane %v3022, 5
      %v3141 = vrot.slane %v3140, 4
      %v3142 = vrot.slane %v2359, 5
      %v3143 = vsel %vm1654, %v3141, %v3142
      %v3144 = vrot.slane %v3142, 4
      %v3145 = vrot.slane %v2360, 5
      %v3146 = vsel %vm1654, %v3144, %v3145
      %v3147 = vrot.slane %v3023, 5
      %v3148 = vrot.slane %v3147, 4
      %v3149 = vrot.slane %v2362, 5
      %v3150 = vsel %vm1654, %v3148, %v3149
      %v3151 = vrot.slane %v3149, 4
      %v3152 = vrot.slane %v2363, 5
      %v3153 = vsel %vm1654, %v3151, %v3152
      %v3154 = vrot.slane %v3024, 5
      %v3155 = vrot.slane %v3154, 4
      %v3156 = vrot.slane %v2365, 5
      %v3157 = vsel %vm1654, %v3155, %v3156
      %v3158 = vrot.slane %v3156, 4
      %v3159 = vrot.slane %v2366, 5
      %v3160 = vsel %vm1654, %v3158, %v3159
      %v3161 = vrot.slane %v3025, 5
      %v3162 = vrot.slane %v3161, 4
      %v3163 = vrot.slane %v2368, 5
      %v3164 = vsel %vm1654, %v3162, %v3163
      %v3165 = vrot.slane %v3163, 4
      %v3166 = vrot.slane %v2369, 5
      %v3167 = vsel %vm1654, %v3165, %v3166
      %v3168 = vrot.slane %v3026, 5
      %v3169 = vrot.slane %v3168, 4
      %v3170 = vrot.slane %v2371, 5
      %v3171 = vsel %vm1654, %v3169, %v3170
      %v3172 = vrot.slane %v3170, 4
      %v3173 = vrot.slane %v2372, 5
      %v3174 = vsel %vm1654, %v3172, %v3173
      %v3175 = vrot.slane %v3027, 5
      %v3176 = vrot.slane %v3175, 4
      %v3177 = vrot.slane %v2374, 5
      %v3178 = vsel %vm1654, %v3176, %v3177
      %v3179 = vrot.slane %v3177, 4
      %v3180 = vrot.slane %v2375, 5
      %v3181 = vsel %vm1654, %v3179, %v3180
      %v3182 = vrot.slane %v3028, 5
      %v3183 = vrot.slane %v3182, 4
      %v3184 = vrot.slane %v2377, 5
      %v3185 = vsel %vm1654, %v3183, %v3184
      %v3186 = vrot.slane %v3184, 4
      %v3187 = vrot.slane %v2378, 5
      %v3188 = vsel %vm1654, %v3186, %v3187
      %s3189 = scalar_lea.vmem %s1, 160
      %v3190 = vld [vmem:[%s3189] sm:$0xf]
      %v3191 = vld [vmem:[%s3189 + $0x4] sm:$0xf]
      %v3192 = vld [vmem:[%s3189 + $0x8] sm:$0xf]
      %v3193 = vld [vmem:[%s3189 + $0xc] sm:$0xf]
      %v3194 = vld [vmem:[%s3189 + $0x10] sm:$0xf]
      %v3195 = vld [vmem:[%s3189 + $0x14] sm:$0xf]
      %v3196 = vld [vmem:[%s3189 + $0x18] sm:$0xf]
      %v3197 = vld [vmem:[%s3189 + $0x1c] sm:$0xf]
      %v3198 = vunpack.c.l.b16 %v3080
      %v3199 = vunpack.c.l.b16 %v3083
      %v3200 = vunpack.c.l.b16 %v3087
      %v3201 = vunpack.c.l.b16 %v3090
      %v3202 = vunpack.c.l.b16 %v3094
      %v3203 = vunpack.c.l.b16 %v3097
      %v3204 = vunpack.c.l.b16 %v3101
      %v3205 = vunpack.c.l.b16 %v3104
      %v3206 = vunpack.c.l.b16 %v3108
      %v3207 = vunpack.c.l.b16 %v3111
      %v3208 = vunpack.c.l.b16 %v3115
      %v3209 = vunpack.c.l.b16 %v3118
      %v3210 = vunpack.c.l.b16 %v3122
      %v3211 = vunpack.c.l.b16 %v3125
      %v3212 = vunpack.c.l.b16 %v3129
      %v3213 = vunpack.c.l.b16 %v3132
      %v3214 = vunpack.c.l.b16 %v3136
      %v3215 = vunpack.c.l.b16 %v3139
      %v3216 = vunpack.c.l.b16 %v3143
      %v3217 = vunpack.c.l.b16 %v3146
      %v3218 = vunpack.c.l.b16 %v3150
      %v3219 = vunpack.c.l.b16 %v3153
      %v3220 = vunpack.c.l.b16 %v3157
      %v3221 = vunpack.c.l.b16 %v3160
      %v3222 = vunpack.c.l.b16 %v3164
      %v3223 = vunpack.c.l.b16 %v3167
      %v3224 = vunpack.c.l.b16 %v3171
      %v3225 = vunpack.c.l.b16 %v3174
      %v3226 = vunpack.c.l.b16 %v3178
      %v3227 = vunpack.c.l.b16 %v3181
      %v3228 = vunpack.c.l.b16 %v3185
      %v3229 = vunpack.c.l.b16 %v3188
      %v3230 = vpack.c.b16 %v3199, %v3198
      %v3231 = vpack.c.b16 %v3201, %v3200
      %v3232 = vpack.c.b16 %v3203, %v3202
      %v3233 = vpack.c.b16 %v3205, %v3204
      %v3234 = vpack.c.b16 %v3207, %v3206
      %v3235 = vpack.c.b16 %v3209, %v3208
      %v3236 = vpack.c.b16 %v3211, %v3210
      %v3237 = vpack.c.b16 %v3213, %v3212
      %v3238 = vpack.c.b16 %v3215, %v3214
      %v3239 = vpack.c.b16 %v3217, %v3216
      %v3240 = vpack.c.b16 %v3219, %v3218
      %v3241 = vpack.c.b16 %v3221, %v3220
      %v3242 = vpack.c.b16 %v3223, %v3222
      %v3243 = vpack.c.b16 %v3225, %v3224
      %v3244 = vpack.c.b16 %v3227, %v3226
      %v3245 = vpack.c.b16 %v3229, %v3228
      %v3254 = vunpack.c.l.b16 %v3190
      %v3255 = vunpack.c.l.b16 %v3191
      %v3256 = vunpack.c.l.b16 %v3192
      %v3257 = vunpack.c.l.b16 %v3193
      %v3258 = vunpack.c.l.b16 %v3194
      %v3259 = vunpack.c.l.b16 %v3195
      %v3260 = vunpack.c.l.b16 %v3196
      %v3261 = vunpack.c.l.b16 %v3197
      %v3262 = vpack.c.b16 %v3255, %v3254
      %v3263 = vpack.c.b16 %v3257, %v3256
      %v3264 = vpack.c.b16 %v3259, %v3258
      %v3265 = vpack.c.b16 %v3261, %v3260
      %v3271 = vsel %vm1225, %v3230, 0
      %v3274 = vsel %vm1225, %v3231, 0
      %v3277 = vsel %vm1225, %v3232, 0
      %v3280 = vsel %vm1225, %v3233, 0
      %v3283 = vsel %vm1225, %v3234, 0
      %v3286 = vsel %vm1225, %v3235, 0
      %v3289 = vsel %vm1225, %v3236, 0
      %v3292 = vsel %vm1225, %v3237, 0
      %v3295 = vsel %vm1225, %v3238, 0
      %v3298 = vsel %vm1225, %v3239, 0
      %v3301 = vsel %vm1225, %v3240, 0
      %v3304 = vsel %vm1225, %v3241, 0
      %v3307 = vsel %vm1225, %v3242, 0
      %v3310 = vsel %vm1225, %v3243, 0
      %v3313 = vsel %vm1225, %v3244, 0
      %v3316 = vsel %vm1225, %v3245, 0
      %3318 = vmatpush.bf16.msra.mxu0 0
      %3319 = vmatpush.bf16.msra.mxu0 0
      %3320 = vmatpush.bf16.msra.mxu0 0
      %3321 = vmatpush.bf16.msra.mxu0 0
      %3322 = vmatpush.bf16.msra.mxu0 %v3265
      %3323 = vmatpush.bf16.msra.mxu0 %v3264
      %3324 = vmatpush.bf16.msra.mxu0 %v3263
      %3325 = vmatpush.bf16.msra.mxu0 %v3262
      %3326 = vmatmul.bf16.gmra.mxu0 %v3271
      %v3327 = vpop.f32.mrf.mxu0
      %v3328 = vadd.f32 0.0, %v3327
      %v3329 = vpop.f32.mrf.mxu0
      %v3330 = vadd.f32 0.0, %v3329
      %3331 = vmatmul.bf16.gmra.mxu0 %v3274
      %v3332 = vpop.f32.mrf.mxu0
      %v3333 = vadd.f32 0.0, %v3332
      %v3334 = vpop.f32.mrf.mxu0
      %v3335 = vadd.f32 0.0, %v3334
      %3336 = vmatmul.bf16.gmra.mxu0 %v3277
      %v3337 = vpop.f32.mrf.mxu0
      %v3338 = vadd.f32 0.0, %v3337
      %v3339 = vpop.f32.mrf.mxu0
      %v3340 = vadd.f32 0.0, %v3339
      %3341 = vmatmul.bf16.gmra.mxu0 %v3280
      %v3342 = vpop.f32.mrf.mxu0
      %v3343 = vadd.f32 0.0, %v3342
      %v3344 = vpop.f32.mrf.mxu0
      %v3345 = vadd.f32 0.0, %v3344
      %3346 = vmatmul.bf16.gmra.mxu0 %v3283
      %v3347 = vpop.f32.mrf.mxu0
      %v3348 = vadd.f32 0.0, %v3347
      %v3349 = vpop.f32.mrf.mxu0
      %v3350 = vadd.f32 0.0, %v3349
      %3351 = vmatmul.bf16.gmra.mxu0 %v3286
      %v3352 = vpop.f32.mrf.mxu0
      %v3353 = vadd.f32 0.0, %v3352
      %v3354 = vpop.f32.mrf.mxu0
      %v3355 = vadd.f32 0.0, %v3354
      %3356 = vmatmul.bf16.gmra.mxu0 %v3289
      %v3357 = vpop.f32.mrf.mxu0
      %v3358 = vadd.f32 0.0, %v3357
      %v3359 = vpop.f32.mrf.mxu0
      %v3360 = vadd.f32 0.0, %v3359
      %3361 = vmatmul.bf16.gmra.mxu0 %v3292
      %v3362 = vpop.f32.mrf.mxu0
      %v3363 = vadd.f32 0.0, %v3362
      %v3364 = vpop.f32.mrf.mxu0
      %v3365 = vadd.f32 0.0, %v3364
      %3366 = vmatmul.bf16.gmra.mxu0 %v3295
      %v3367 = vpop.f32.mrf.mxu0
      %v3368 = vadd.f32 0.0, %v3367
      %v3369 = vpop.f32.mrf.mxu0
      %v3370 = vadd.f32 0.0, %v3369
      %3371 = vmatmul.bf16.gmra.mxu0 %v3298
      %v3372 = vpop.f32.mrf.mxu0
      %v3373 = vadd.f32 0.0, %v3372
      %v3374 = vpop.f32.mrf.mxu0
      %v3375 = vadd.f32 0.0, %v3374
      %3376 = vmatmul.bf16.gmra.mxu0 %v3301
      %v3377 = vpop.f32.mrf.mxu0
      %v3378 = vadd.f32 0.0, %v3377
      %v3379 = vpop.f32.mrf.mxu0
      %v3380 = vadd.f32 0.0, %v3379
      %3381 = vmatmul.bf16.gmra.mxu0 %v3304
      %v3382 = vpop.f32.mrf.mxu0
      %v3383 = vadd.f32 0.0, %v3382
      %v3384 = vpop.f32.mrf.mxu0
      %v3385 = vadd.f32 0.0, %v3384
      %3386 = vmatmul.bf16.gmra.mxu0 %v3307
      %v3387 = vpop.f32.mrf.mxu0
      %v3388 = vadd.f32 0.0, %v3387
      %v3389 = vpop.f32.mrf.mxu0
      %v3390 = vadd.f32 0.0, %v3389
      %3391 = vmatmul.bf16.gmra.mxu0 %v3310
      %v3392 = vpop.f32.mrf.mxu0
      %v3393 = vadd.f32 0.0, %v3392
      %v3394 = vpop.f32.mrf.mxu0
      %v3395 = vadd.f32 0.0, %v3394
      %3396 = vmatmul.bf16.gmra.mxu0 %v3313
      %v3397 = vpop.f32.mrf.mxu0
      %v3398 = vadd.f32 0.0, %v3397
      %v3399 = vpop.f32.mrf.mxu0
      %v3400 = vadd.f32 0.0, %v3399
      %3401 = vmatmul.bf16.gmra.mxu0 %v3316
      %v3402 = vpop.f32.mrf.mxu0
      %v3403 = vadd.f32 0.0, %v3402
      %v3404 = vpop.f32.mrf.mxu0
      %v3405 = vadd.f32 0.0, %v3404
      %3406 = vdwg.mxu0
      %v3407 = vadd.f32 %v2981, %v3328
      %v3408 = vadd.f32 %v2982, %v3330
      %v3409 = vadd.f32 %v2983, %v3333
      %v3410 = vadd.f32 %v2984, %v3335
      %v3411 = vadd.f32 %v2985, %v3338
      %v3412 = vadd.f32 %v2986, %v3340
      %v3413 = vadd.f32 %v2987, %v3343
      %v3414 = vadd.f32 %v2988, %v3345
      %v3415 = vadd.f32 %v2989, %v3348
      %v3416 = vadd.f32 %v2990, %v3350
      %v3417 = vadd.f32 %v2991, %v3353
      %v3418 = vadd.f32 %v2992, %v3355
      %v3419 = vadd.f32 %v2993, %v3358
      %v3420 = vadd.f32 %v2994, %v3360
      %v3421 = vadd.f32 %v2995, %v3363
      %v3422 = vadd.f32 %v2996, %v3365
      %v3423 = vadd.f32 %v2997, %v3368
      %v3424 = vadd.f32 %v2998, %v3370
      %v3425 = vadd.f32 %v2999, %v3373
      %v3426 = vadd.f32 %v3000, %v3375
      %v3427 = vadd.f32 %v3001, %v3378
      %v3428 = vadd.f32 %v3002, %v3380
      %v3429 = vadd.f32 %v3003, %v3383
      %v3430 = vadd.f32 %v3004, %v3385
      %v3431 = vadd.f32 %v3005, %v3388
      %v3432 = vadd.f32 %v3006, %v3390
      %v3433 = vadd.f32 %v3007, %v3393
      %v3434 = vadd.f32 %v3008, %v3395
      %v3435 = vadd.f32 %v3009, %v3398
      %v3436 = vadd.f32 %v3010, %v3400
      %v3437 = vadd.f32 %v3011, %v3403
      %v3438 = vadd.f32 %v3012, %v3405
      %s3439 = scalar_lea.vmem [#allocation2], 24
      %v3440 = vld [vmem:[%s3439] sm:$0xf]
      %v3441 = vld [vmem:[%s3439 + $0x4] sm:$0xf]
      %v3442 = vld [vmem:[%s3439 + $0xc] sm:$0xf]
      %v3443 = vld [vmem:[%s3439 + $0x10] sm:$0xf]
      %v3444 = vld [vmem:[%s3439 + $0x18] sm:$0xf]
      %v3445 = vld [vmem:[%s3439 + $0x1c] sm:$0xf]
      %v3446 = vld [vmem:[%s3439 + $0x24] sm:$0xf]
      %v3447 = vld [vmem:[%s3439 + $0x28] sm:$0xf]
      %v3448 = vld [vmem:[%s3439 + $0x30] sm:$0xf]
      %v3449 = vld [vmem:[%s3439 + $0x34] sm:$0xf]
      %v3450 = vld [vmem:[%s3439 + $0x3c] sm:$0xf]
      %v3451 = vld [vmem:[%s3439 + $0x40] sm:$0xf]
      %v3452 = vld [vmem:[%s3439 + $0x48] sm:$0xf]
      %v3453 = vld [vmem:[%s3439 + $0x4c] sm:$0xf]
      %v3454 = vld [vmem:[%s3439 + $0x54] sm:$0xf]
      %v3455 = vld [vmem:[%s3439 + $0x58] sm:$0xf]
      %v3456 = vld [vmem:[%s3439 + $0x60] sm:$0xf]
      %v3457 = vld [vmem:[%s3439 + $0x64] sm:$0xf]
      %v3458 = vld [vmem:[%s3439 + $0x6c] sm:$0xf]
      %v3459 = vld [vmem:[%s3439 + $0x70] sm:$0xf]
      %v3460 = vld [vmem:[%s3439 + $0x78] sm:$0xf]
      %v3461 = vld [vmem:[%s3439 + $0x7c] sm:$0xf]
      %v3462 = vld [vmem:[%s3439 + $0x84] sm:$0xf]
      %v3463 = vld [vmem:[%s3439 + $0x88] sm:$0xf]
      %v3464 = vld [vmem:[%s3439 + $0x90] sm:$0xf]
      %v3465 = vld [vmem:[%s3439 + $0x94] sm:$0xf]
      %v3466 = vld [vmem:[%s3439 + $0x9c] sm:$0xf]
      %v3467 = vld [vmem:[%s3439 + $0xa0] sm:$0xf]
      %v3468 = vld [vmem:[%s3439 + $0xa8] sm:$0xf]
      %v3469 = vld [vmem:[%s3439 + $0xac] sm:$0xf]
      %v3470 = vld [vmem:[%s3439 + $0xb4] sm:$0xf]
      %v3471 = vld [vmem:[%s3439 + $0xb8] sm:$0xf]
      %s3472 = scalar_lea.vmem %s1, 192
      %v3473 = vld [vmem:[%s3472] sm:$0xf]
      %v3474 = vld [vmem:[%s3472 + $0x4] sm:$0xf]
      %v3475 = vld [vmem:[%s3472 + $0x8] sm:$0xf]
      %v3476 = vld [vmem:[%s3472 + $0xc] sm:$0xf]
      %v3477 = vld [vmem:[%s3472 + $0x10] sm:$0xf]
      %v3478 = vld [vmem:[%s3472 + $0x14] sm:$0xf]
      %v3479 = vld [vmem:[%s3472 + $0x18] sm:$0xf]
      %v3480 = vld [vmem:[%s3472 + $0x1c] sm:$0xf]
      %v3513 = vunpack.c.l.b16 %v3440
      %v3514 = vunpack.c.l.b16 %v3441
      %v3515 = vunpack.c.l.b16 %v3442
      %v3516 = vunpack.c.l.b16 %v3443
      %v3517 = vunpack.c.l.b16 %v3444
      %v3518 = vunpack.c.l.b16 %v3445
      %v3519 = vunpack.c.l.b16 %v3446
      %v3520 = vunpack.c.l.b16 %v3447
      %v3521 = vunpack.c.l.b16 %v3448
      %v3522 = vunpack.c.l.b16 %v3449
      %v3523 = vunpack.c.l.b16 %v3450
      %v3524 = vunpack.c.l.b16 %v3451
      %v3525 = vunpack.c.l.b16 %v3452
      %v3526 = vunpack.c.l.b16 %v3453
      %v3527 = vunpack.c.l.b16 %v3454
      %v3528 = vunpack.c.l.b16 %v3455
      %v3529 = vunpack.c.l.b16 %v3456
      %v3530 = vunpack.c.l.b16 %v3457
      %v3531 = vunpack.c.l.b16 %v3458
      %v3532 = vunpack.c.l.b16 %v3459
      %v3533 = vunpack.c.l.b16 %v3460
      %v3534 = vunpack.c.l.b16 %v3461
      %v3535 = vunpack.c.l.b16 %v3462
      %v3536 = vunpack.c.l.b16 %v3463
      %v3537 = vunpack.c.l.b16 %v3464
      %v3538 = vunpack.c.l.b16 %v3465
      %v3539 = vunpack.c.l.b16 %v3466
      %v3540 = vunpack.c.l.b16 %v3467
      %v3541 = vunpack.c.l.b16 %v3468
      %v3542 = vunpack.c.l.b16 %v3469
      %v3543 = vunpack.c.l.b16 %v3470
      %v3544 = vunpack.c.l.b16 %v3471
      %v3545 = vpack.c.b16 %v3514, %v3513
      %v3546 = vpack.c.b16 %v3516, %v3515
      %v3547 = vpack.c.b16 %v3518, %v3517
      %v3548 = vpack.c.b16 %v3520, %v3519
      %v3549 = vpack.c.b16 %v3522, %v3521
      %v3550 = vpack.c.b16 %v3524, %v3523
      %v3551 = vpack.c.b16 %v3526, %v3525
      %v3552 = vpack.c.b16 %v3528, %v3527
      %v3553 = vpack.c.b16 %v3530, %v3529
      %v3554 = vpack.c.b16 %v3532, %v3531
      %v3555 = vpack.c.b16 %v3534, %v3533
      %v3556 = vpack.c.b16 %v3536, %v3535
      %v3557 = vpack.c.b16 %v3538, %v3537
      %v3558 = vpack.c.b16 %v3540, %v3539
      %v3559 = vpack.c.b16 %v3542, %v3541
      %v3560 = vpack.c.b16 %v3544, %v3543
      %v3569 = vunpack.c.l.b16 %v3473
      %v3570 = vunpack.c.l.b16 %v3474
      %v3571 = vunpack.c.l.b16 %v3475
      %v3572 = vunpack.c.l.b16 %v3476
      %v3573 = vunpack.c.l.b16 %v3477
      %v3574 = vunpack.c.l.b16 %v3478
      %v3575 = vunpack.c.l.b16 %v3479
      %v3576 = vunpack.c.l.b16 %v3480
      %v3577 = vpack.c.b16 %v3570, %v3569
      %v3578 = vpack.c.b16 %v3572, %v3571
      %v3579 = vpack.c.b16 %v3574, %v3573
      %v3580 = vpack.c.b16 %v3576, %v3575
      %v3586 = vsel %vm1225, %v3545, 0
      %v3589 = vsel %vm1225, %v3546, 0
      %v3592 = vsel %vm1225, %v3547, 0
      %v3595 = vsel %vm1225, %v3548, 0
      %v3598 = vsel %vm1225, %v3549, 0
      %v3601 = vsel %vm1225, %v3550, 0
      %v3604 = vsel %vm1225, %v3551, 0
      %v3607 = vsel %vm1225, %v3552, 0
      %v3610 = vsel %vm1225, %v3553, 0
      %v3613 = vsel %vm1225, %v3554, 0
      %v3616 = vsel %vm1225, %v3555, 0
      %v3619 = vsel %vm1225, %v3556, 0
      %v3622 = vsel %vm1225, %v3557, 0
      %v3625 = vsel %vm1225, %v3558, 0
      %v3628 = vsel %vm1225, %v3559, 0
      %v3631 = vsel %vm1225, %v3560, 0
      %3633 = vmatpush.bf16.msra.mxu0 0
      %3634 = vmatpush.bf16.msra.mxu0 0
      %3635 = vmatpush.bf16.msra.mxu0 0
      %3636 = vmatpush.bf16.msra.mxu0 0
      %3637 = vmatpush.bf16.msra.mxu0 %v3580
      %3638 = vmatpush.bf16.msra.mxu0 %v3579
      %3639 = vmatpush.bf16.msra.mxu0 %v3578
      %3640 = vmatpush.bf16.msra.mxu0 %v3577
      %3641 = vmatmul.bf16.gmra.mxu0 %v3586
      %v3642 = vpop.f32.mrf.mxu0
      %v3643 = vadd.f32 0.0, %v3642
      %v3644 = vpop.f32.mrf.mxu0
      %v3645 = vadd.f32 0.0, %v3644
      %3646 = vmatmul.bf16.gmra.mxu0 %v3589
      %v3647 = vpop.f32.mrf.mxu0
      %v3648 = vadd.f32 0.0, %v3647
      %v3649 = vpop.f32.mrf.mxu0
      %v3650 = vadd.f32 0.0, %v3649
      %3651 = vmatmul.bf16.gmra.mxu0 %v3592
      %v3652 = vpop.f32.mrf.mxu0
      %v3653 = vadd.f32 0.0, %v3652
      %v3654 = vpop.f32.mrf.mxu0
      %v3655 = vadd.f32 0.0, %v3654
      %3656 = vmatmul.bf16.gmra.mxu0 %v3595
      %v3657 = vpop.f32.mrf.mxu0
      %v3658 = vadd.f32 0.0, %v3657
      %v3659 = vpop.f32.mrf.mxu0
      %v3660 = vadd.f32 0.0, %v3659
      %3661 = vmatmul.bf16.gmra.mxu0 %v3598
      %v3662 = vpop.f32.mrf.mxu0
      %v3663 = vadd.f32 0.0, %v3662
      %v3664 = vpop.f32.mrf.mxu0
      %v3665 = vadd.f32 0.0, %v3664
      %3666 = vmatmul.bf16.gmra.mxu0 %v3601
      %v3667 = vpop.f32.mrf.mxu0
      %v3668 = vadd.f32 0.0, %v3667
      %v3669 = vpop.f32.mrf.mxu0
      %v3670 = vadd.f32 0.0, %v3669
      %3671 = vmatmul.bf16.gmra.mxu0 %v3604
      %v3672 = vpop.f32.mrf.mxu0
      %v3673 = vadd.f32 0.0, %v3672
      %v3674 = vpop.f32.mrf.mxu0
      %v3675 = vadd.f32 0.0, %v3674
      %3676 = vmatmul.bf16.gmra.mxu0 %v3607
      %v3677 = vpop.f32.mrf.mxu0
      %v3678 = vadd.f32 0.0, %v3677
      %v3679 = vpop.f32.mrf.mxu0
      %v3680 = vadd.f32 0.0, %v3679
      %3681 = vmatmul.bf16.gmra.mxu0 %v3610
      %v3682 = vpop.f32.mrf.mxu0
      %v3683 = vadd.f32 0.0, %v3682
      %v3684 = vpop.f32.mrf.mxu0
      %v3685 = vadd.f32 0.0, %v3684
      %3686 = vmatmul.bf16.gmra.mxu0 %v3613
      %v3687 = vpop.f32.mrf.mxu0
      %v3688 = vadd.f32 0.0, %v3687
      %v3689 = vpop.f32.mrf.mxu0
      %v3690 = vadd.f32 0.0, %v3689
      %3691 = vmatmul.bf16.gmra.mxu0 %v3616
      %v3692 = vpop.f32.mrf.mxu0
      %v3693 = vadd.f32 0.0, %v3692
      %v3694 = vpop.f32.mrf.mxu0
      %v3695 = vadd.f32 0.0, %v3694
      %3696 = vmatmul.bf16.gmra.mxu0 %v3619
      %v3697 = vpop.f32.mrf.mxu0
      %v3698 = vadd.f32 0.0, %v3697
      %v3699 = vpop.f32.mrf.mxu0
      %v3700 = vadd.f32 0.0, %v3699
      %3701 = vmatmul.bf16.gmra.mxu0 %v3622
      %v3702 = vpop.f32.mrf.mxu0
      %v3703 = vadd.f32 0.0, %v3702
      %v3704 = vpop.f32.mrf.mxu0
      %v3705 = vadd.f32 0.0, %v3704
      %3706 = vmatmul.bf16.gmra.mxu0 %v3625
      %v3707 = vpop.f32.mrf.mxu0
      %v3708 = vadd.f32 0.0, %v3707
      %v3709 = vpop.f32.mrf.mxu0
      %v3710 = vadd.f32 0.0, %v3709
      %3711 = vmatmul.bf16.gmra.mxu0 %v3628
      %v3712 = vpop.f32.mrf.mxu0
      %v3713 = vadd.f32 0.0, %v3712
      %v3714 = vpop.f32.mrf.mxu0
      %v3715 = vadd.f32 0.0, %v3714
      %3716 = vmatmul.bf16.gmra.mxu0 %v3631
      %v3717 = vpop.f32.mrf.mxu0
      %v3718 = vadd.f32 0.0, %v3717
      %v3719 = vpop.f32.mrf.mxu0
      %v3720 = vadd.f32 0.0, %v3719
      %3721 = vdwg.mxu0
      %v3722 = vadd.f32 %v3407, %v3643
      %v3723 = vadd.f32 %v3408, %v3645
      %v3724 = vadd.f32 %v3409, %v3648
      %v3725 = vadd.f32 %v3410, %v3650
      %v3726 = vadd.f32 %v3411, %v3653
      %v3727 = vadd.f32 %v3412, %v3655
      %v3728 = vadd.f32 %v3413, %v3658
      %v3729 = vadd.f32 %v3414, %v3660
      %v3730 = vadd.f32 %v3415, %v3663
      %v3731 = vadd.f32 %v3416, %v3665
      %v3732 = vadd.f32 %v3417, %v3668
      %v3733 = vadd.f32 %v3418, %v3670
      %v3734 = vadd.f32 %v3419, %v3673
      %v3735 = vadd.f32 %v3420, %v3675
      %v3736 = vadd.f32 %v3421, %v3678
      %v3737 = vadd.f32 %v3422, %v3680
      %v3738 = vadd.f32 %v3423, %v3683
      %v3739 = vadd.f32 %v3424, %v3685
      %v3740 = vadd.f32 %v3425, %v3688
      %v3741 = vadd.f32 %v3426, %v3690
      %v3742 = vadd.f32 %v3427, %v3693
      %v3743 = vadd.f32 %v3428, %v3695
      %v3744 = vadd.f32 %v3429, %v3698
      %v3745 = vadd.f32 %v3430, %v3700
      %v3746 = vadd.f32 %v3431, %v3703
      %v3747 = vadd.f32 %v3432, %v3705
      %v3748 = vadd.f32 %v3433, %v3708
      %v3749 = vadd.f32 %v3434, %v3710
      %v3750 = vadd.f32 %v3435, %v3713
      %v3751 = vadd.f32 %v3436, %v3715
      %v3752 = vadd.f32 %v3437, %v3718
      %v3753 = vadd.f32 %v3438, %v3720
      %v3754 = vld [vmem:[%s3439] sm:$0xf]
      %v3755 = vld [vmem:[%s3439 + $0x4] sm:$0xf]
      %v3756 = vld [vmem:[%s3439 + $0x8] sm:$0x1]
      %v3757 = vld [vmem:[%s3439 + $0xc] sm:$0xf]
      %v3758 = vld [vmem:[%s3439 + $0x10] sm:$0xf]
      %v3759 = vld [vmem:[%s3439 + $0x14] sm:$0x1]
      %v3760 = vld [vmem:[%s3439 + $0x18] sm:$0xf]
      %v3761 = vld [vmem:[%s3439 + $0x1c] sm:$0xf]
      %v3762 = vld [vmem:[%s3439 + $0x20] sm:$0x1]
      %v3763 = vld [vmem:[%s3439 + $0x24] sm:$0xf]
      %v3764 = vld [vmem:[%s3439 + $0x28] sm:$0xf]
      %v3765 = vld [vmem:[%s3439 + $0x2c] sm:$0x1]
      %v3766 = vld [vmem:[%s3439 + $0x30] sm:$0xf]
      %v3767 = vld [vmem:[%s3439 + $0x34] sm:$0xf]
      %v3768 = vld [vmem:[%s3439 + $0x38] sm:$0x1]
      %v3769 = vld [vmem:[%s3439 + $0x3c] sm:$0xf]
      %v3770 = vld [vmem:[%s3439 + $0x40] sm:$0xf]
      %v3771 = vld [vmem:[%s3439 + $0x44] sm:$0x1]
      %v3772 = vld [vmem:[%s3439 + $0x48] sm:$0xf]
      %v3773 = vld [vmem:[%s3439 + $0x4c] sm:$0xf]
      %v3774 = vld [vmem:[%s3439 + $0x50] sm:$0x1]
      %v3775 = vld [vmem:[%s3439 + $0x54] sm:$0xf]
      %v3776 = vld [vmem:[%s3439 + $0x58] sm:$0xf]
      %v3777 = vld [vmem:[%s3439 + $0x5c] sm:$0x1]
      %v3778 = vld [vmem:[%s3439 + $0x60] sm:$0xf]
      %v3779 = vld [vmem:[%s3439 + $0x64] sm:$0xf]
      %v3780 = vld [vmem:[%s3439 + $0x68] sm:$0x1]
      %v3781 = vld [vmem:[%s3439 + $0x6c] sm:$0xf]
      %v3782 = vld [vmem:[%s3439 + $0x70] sm:$0xf]
      %v3783 = vld [vmem:[%s3439 + $0x74] sm:$0x1]
      %v3784 = vld [vmem:[%s3439 + $0x78] sm:$0xf]
      %v3785 = vld [vmem:[%s3439 + $0x7c] sm:$0xf]
      %v3786 = vld [vmem:[%s3439 + $0x80] sm:$0x1]
      %v3787 = vld [vmem:[%s3439 + $0x84] sm:$0xf]
      %v3788 = vld [vmem:[%s3439 + $0x88] sm:$0xf]
      %v3789 = vld [vmem:[%s3439 + $0x8c] sm:$0x1]
      %v3790 = vld [vmem:[%s3439 + $0x90] sm:$0xf]
      %v3791 = vld [vmem:[%s3439 + $0x94] sm:$0xf]
      %v3792 = vld [vmem:[%s3439 + $0x98] sm:$0x1]
      %v3793 = vld [vmem:[%s3439 + $0x9c] sm:$0xf]
      %v3794 = vld [vmem:[%s3439 + $0xa0] sm:$0xf]
      %v3795 = vld [vmem:[%s3439 + $0xa4] sm:$0x1]
      %v3796 = vld [vmem:[%s3439 + $0xa8] sm:$0xf]
      %v3797 = vld [vmem:[%s3439 + $0xac] sm:$0xf]
      %v3798 = vld [vmem:[%s3439 + $0xb0] sm:$0x1]
      %v3799 = vld [vmem:[%s3439 + $0xb4] sm:$0xf]
      %v3800 = vld [vmem:[%s3439 + $0xb8] sm:$0xf]
      %v3801 = vld [vmem:[%s3439 + $0xbc] sm:$0x1]
      %v3803 = vshrl.u32 %v3754, 16
      %v3805 = vrot.slane %v3803, 4
      %v3806 = vshll.u32 %v3754, 16
      %v3808 = vrot.slane %v3806, 5
      %v3809 = vor.u32 %v3805, %v3808
      %v3810 = vrot.slane %v3809, 4
      %v3812 = vshll.u32 %v3755, 16
      %v3814 = vrot.slane %v3812, 5
      %v3815 = vsel %vm759, %v3810, %v3814
      %v3816 = vshrl.u32 %v3755, 16
      %v3818 = vrot.slane %v3816, 4
      %v3819 = vor.u32 %v3818, %v3814
      %v3820 = vrot.slane %v3819, 4
      %v3822 = vshll.u32 %v3756, 16
      %v3824 = vrot.slane %v3822, 5
      %v3825 = vsel %vm759, %v3820, %v3824
      %v3827 = vshrl.u32 %v3757, 16
      %v3829 = vrot.slane %v3827, 4
      %v3830 = vshll.u32 %v3757, 16
      %v3832 = vrot.slane %v3830, 5
      %v3833 = vor.u32 %v3829, %v3832
      %v3834 = vrot.slane %v3833, 4
      %v3836 = vshll.u32 %v3758, 16
      %v3838 = vrot.slane %v3836, 5
      %v3839 = vsel %vm759, %v3834, %v3838
      %v3840 = vshrl.u32 %v3758, 16
      %v3842 = vrot.slane %v3840, 4
      %v3843 = vor.u32 %v3842, %v3838
      %v3844 = vrot.slane %v3843, 4
      %v3846 = vshll.u32 %v3759, 16
      %v3848 = vrot.slane %v3846, 5
      %v3849 = vsel %vm759, %v3844, %v3848
      %v3851 = vshrl.u32 %v3760, 16
      %v3853 = vrot.slane %v3851, 4
      %v3854 = vshll.u32 %v3760, 16
      %v3856 = vrot.slane %v3854, 5
      %v3857 = vor.u32 %v3853, %v3856
      %v3858 = vrot.slane %v3857, 4
      %v3860 = vshll.u32 %v3761, 16
      %v3862 = vrot.slane %v3860, 5
      %v3863 = vsel %vm759, %v3858, %v3862
      %v3864 = vshrl.u32 %v3761, 16
      %v3866 = vrot.slane %v3864, 4
      %v3867 = vor.u32 %v3866, %v3862
      %v3868 = vrot.slane %v3867, 4
      %v3870 = vshll.u32 %v3762, 16
      %v3872 = vrot.slane %v3870, 5
      %v3873 = vsel %vm759, %v3868, %v3872
      %v3875 = vshrl.u32 %v3763, 16
      %v3877 = vrot.slane %v3875, 4
      %v3878 = vshll.u32 %v3763, 16
      %v3880 = vrot.slane %v3878, 5
      %v3881 = vor.u32 %v3877, %v3880
      %v3882 = vrot.slane %v3881, 4
      %v3884 = vshll.u32 %v3764, 16
      %v3886 = vrot.slane %v3884, 5
      %v3887 = vsel %vm759, %v3882, %v3886
      %v3888 = vshrl.u32 %v3764, 16
      %v3890 = vrot.slane %v3888, 4
      %v3891 = vor.u32 %v3890, %v3886
      %v3892 = vrot.slane %v3891, 4
      %v3894 = vshll.u32 %v3765, 16
      %v3896 = vrot.slane %v3894, 5
      %v3897 = vsel %vm759, %v3892, %v3896
      %v3899 = vshrl.u32 %v3766, 16
      %v3901 = vrot.slane %v3899, 4
      %v3902 = vshll.u32 %v3766, 16
      %v3904 = vrot.slane %v3902, 5
      %v3905 = vor.u32 %v3901, %v3904
      %v3906 = vrot.slane %v3905, 4
      %v3908 = vshll.u32 %v3767, 16
      %v3910 = vrot.slane %v3908, 5
      %v3911 = vsel %vm759, %v3906, %v3910
      %v3912 = vshrl.u32 %v3767, 16
      %v3914 = vrot.slane %v3912, 4
      %v3915 = vor.u32 %v3914, %v3910
      %v3916 = vrot.slane %v3915, 4
      %v3918 = vshll.u32 %v3768, 16
      %v3920 = vrot.slane %v3918, 5
      %v3921 = vsel %vm759, %v3916, %v3920
      %v3923 = vshrl.u32 %v3769, 16
      %v3925 = vrot.slane %v3923, 4
      %v3926 = vshll.u32 %v3769, 16
      %v3928 = vrot.slane %v3926, 5
      %v3929 = vor.u32 %v3925, %v3928
      %v3930 = vrot.slane %v3929, 4
      %v3932 = vshll.u32 %v3770, 16
      %v3934 = vrot.slane %v3932, 5
      %v3935 = vsel %vm759, %v3930, %v3934
      %v3936 = vshrl.u32 %v3770, 16
      %v3938 = vrot.slane %v3936, 4
      %v3939 = vor.u32 %v3938, %v3934
      %v3940 = vrot.slane %v3939, 4
      %v3942 = vshll.u32 %v3771, 16
      %v3944 = vrot.slane %v3942, 5
      %v3945 = vsel %vm759, %v3940, %v3944
      %v3947 = vshrl.u32 %v3772, 16
      %v3949 = vrot.slane %v3947, 4
      %v3950 = vshll.u32 %v3772, 16
      %v3952 = vrot.slane %v3950, 5
      %v3953 = vor.u32 %v3949, %v3952
      %v3954 = vrot.slane %v3953, 4
      %v3956 = vshll.u32 %v3773, 16
      %v3958 = vrot.slane %v3956, 5
      %v3959 = vsel %vm759, %v3954, %v3958
      %v3960 = vshrl.u32 %v3773, 16
      %v3962 = vrot.slane %v3960, 4
      %v3963 = vor.u32 %v3962, %v3958
      %v3964 = vrot.slane %v3963, 4
      %v3966 = vshll.u32 %v3774, 16
      %v3968 = vrot.slane %v3966, 5
      %v3969 = vsel %vm759, %v3964, %v3968
      %v3971 = vshrl.u32 %v3775, 16
      %v3973 = vrot.slane %v3971, 4
      %v3974 = vshll.u32 %v3775, 16
      %v3976 = vrot.slane %v3974, 5
      %v3977 = vor.u32 %v3973, %v3976
      %v3978 = vrot.slane %v3977, 4
      %v3980 = vshll.u32 %v3776, 16
      %v3982 = vrot.slane %v3980, 5
      %v3983 = vsel %vm759, %v3978, %v3982
      %v3984 = vshrl.u32 %v3776, 16
      %v3986 = vrot.slane %v3984, 4
      %v3987 = vor.u32 %v3986, %v3982
      %v3988 = vrot.slane %v3987, 4
      %v3990 = vshll.u32 %v3777, 16
      %v3992 = vrot.slane %v3990, 5
      %v3993 = vsel %vm759, %v3988, %v3992
      %v3995 = vshrl.u32 %v3778, 16
      %v3997 = vrot.slane %v3995, 4
      %v3998 = vshll.u32 %v3778, 16
      %v4000 = vrot.slane %v3998, 5
      %v4001 = vor.u32 %v3997, %v4000
      %v4002 = vrot.slane %v4001, 4
      %v4004 = vshll.u32 %v3779, 16
      %v4006 = vrot.slane %v4004, 5
      %v4007 = vsel %vm759, %v4002, %v4006
      %v4008 = vshrl.u32 %v3779, 16
      %v4010 = vrot.slane %v4008, 4
      %v4011 = vor.u32 %v4010, %v4006
      %v4012 = vrot.slane %v4011, 4
      %v4014 = vshll.u32 %v3780, 16
      %v4016 = vrot.slane %v4014, 5
      %v4017 = vsel %vm759, %v4012, %v4016
      %v4019 = vshrl.u32 %v3781, 16
      %v4021 = vrot.slane %v4019, 4
      %v4022 = vshll.u32 %v3781, 16
      %v4024 = vrot.slane %v4022, 5
      %v4025 = vor.u32 %v4021, %v4024
      %v4026 = vrot.slane %v4025, 4
      %v4028 = vshll.u32 %v3782, 16
      %v4030 = vrot.slane %v4028, 5
      %v4031 = vsel %vm759, %v4026, %v4030
      %v4032 = vshrl.u32 %v3782, 16
      %v4034 = vrot.slane %v4032, 4
      %v4035 = vor.u32 %v4034, %v4030
      %v4036 = vrot.slane %v4035, 4
      %v4038 = vshll.u32 %v3783, 16
      %v4040 = vrot.slane %v4038, 5
      %v4041 = vsel %vm759, %v4036, %v4040
      %v4043 = vshrl.u32 %v3784, 16
      %v4045 = vrot.slane %v4043, 4
      %v4046 = vshll.u32 %v3784, 16
      %v4048 = vrot.slane %v4046, 5
      %v4049 = vor.u32 %v4045, %v4048
      %v4050 = vrot.slane %v4049, 4
      %v4052 = vshll.u32 %v3785, 16
      %v4054 = vrot.slane %v4052, 5
      %v4055 = vsel %vm759, %v4050, %v4054
      %v4056 = vshrl.u32 %v3785, 16
      %v4058 = vrot.slane %v4056, 4
      %v4059 = vor.u32 %v4058, %v4054
      %v4060 = vrot.slane %v4059, 4
      %v4062 = vshll.u32 %v3786, 16
      %v4064 = vrot.slane %v4062, 5
      %v4065 = vsel %vm759, %v4060, %v4064
      %v4067 = vshrl.u32 %v3787, 16
      %v4069 = vrot.slane %v4067, 4
      %v4070 = vshll.u32 %v3787, 16
      %v4072 = vrot.slane %v4070, 5
      %v4073 = vor.u32 %v4069, %v4072
      %v4074 = vrot.slane %v4073, 4
      %v4076 = vshll.u32 %v3788, 16
      %v4078 = vrot.slane %v4076, 5
      %v4079 = vsel %vm759, %v4074, %v4078
      %v4080 = vshrl.u32 %v3788, 16
      %v4082 = vrot.slane %v4080, 4
      %v4083 = vor.u32 %v4082, %v4078
      %v4084 = vrot.slane %v4083, 4
      %v4086 = vshll.u32 %v3789, 16
      %v4088 = vrot.slane %v4086, 5
      %v4089 = vsel %vm759, %v4084, %v4088
      %v4091 = vshrl.u32 %v3790, 16
      %v4093 = vrot.slane %v4091, 4
      %v4094 = vshll.u32 %v3790, 16
      %v4096 = vrot.slane %v4094, 5
      %v4097 = vor.u32 %v4093, %v4096
      %v4098 = vrot.slane %v4097, 4
      %v4100 = vshll.u32 %v3791, 16
      %v4102 = vrot.slane %v4100, 5
      %v4103 = vsel %vm759, %v4098, %v4102
      %v4104 = vshrl.u32 %v3791, 16
      %v4106 = vrot.slane %v4104, 4
      %v4107 = vor.u32 %v4106, %v4102
      %v4108 = vrot.slane %v4107, 4
      %v4110 = vshll.u32 %v3792, 16
      %v4112 = vrot.slane %v4110, 5
      %v4113 = vsel %vm759, %v4108, %v4112
      %v4115 = vshrl.u32 %v3793, 16
      %v4117 = vrot.slane %v4115, 4
      %v4118 = vshll.u32 %v3793, 16
      %v4120 = vrot.slane %v4118, 5
      %v4121 = vor.u32 %v4117, %v4120
      %v4122 = vrot.slane %v4121, 4
      %v4124 = vshll.u32 %v3794, 16
      %v4126 = vrot.slane %v4124, 5
      %v4127 = vsel %vm759, %v4122, %v4126
      %v4128 = vshrl.u32 %v3794, 16
      %v4130 = vrot.slane %v4128, 4
      %v4131 = vor.u32 %v4130, %v4126
      %v4132 = vrot.slane %v4131, 4
      %v4134 = vshll.u32 %v3795, 16
      %v4136 = vrot.slane %v4134, 5
      %v4137 = vsel %vm759, %v4132, %v4136
      %v4139 = vshrl.u32 %v3796, 16
      %v4141 = vrot.slane %v4139, 4
      %v4142 = vshll.u32 %v3796, 16
      %v4144 = vrot.slane %v4142, 5
      %v4145 = vor.u32 %v4141, %v4144
      %v4146 = vrot.slane %v4145, 4
      %v4148 = vshll.u32 %v3797, 16
      %v4150 = vrot.slane %v4148, 5
      %v4151 = vsel %vm759, %v4146, %v4150
      %v4152 = vshrl.u32 %v3797, 16
      %v4154 = vrot.slane %v4152, 4
      %v4155 = vor.u32 %v4154, %v4150
      %v4156 = vrot.slane %v4155, 4
      %v4158 = vshll.u32 %v3798, 16
      %v4160 = vrot.slane %v4158, 5
      %v4161 = vsel %vm759, %v4156, %v4160
      %v4163 = vshrl.u32 %v3799, 16
      %v4165 = vrot.slane %v4163, 4
      %v4166 = vshll.u32 %v3799, 16
      %v4168 = vrot.slane %v4166, 5
      %v4169 = vor.u32 %v4165, %v4168
      %v4170 = vrot.slane %v4169, 4
      %v4172 = vshll.u32 %v3800, 16
      %v4174 = vrot.slane %v4172, 5
      %v4175 = vsel %vm759, %v4170, %v4174
      %v4176 = vshrl.u32 %v3800, 16
      %v4178 = vrot.slane %v4176, 4
      %v4179 = vor.u32 %v4178, %v4174
      %v4180 = vrot.slane %v4179, 4
      %v4182 = vshll.u32 %v3801, 16
      %v4184 = vrot.slane %v4182, 5
      %v4185 = vsel %vm759, %v4180, %v4184
      %s4186 = scalar_lea.vmem %s1, 224
      %v4187 = vld [vmem:[%s4186] sm:$0xf]
      %v4188 = vld [vmem:[%s4186 + $0x4] sm:$0xf]
      %v4189 = vld [vmem:[%s4186 + $0x8] sm:$0xf]
      %v4190 = vld [vmem:[%s4186 + $0xc] sm:$0xf]
      %v4191 = vld [vmem:[%s4186 + $0x10] sm:$0xf]
      %v4192 = vld [vmem:[%s4186 + $0x14] sm:$0xf]
      %v4193 = vld [vmem:[%s4186 + $0x18] sm:$0xf]
      %v4194 = vld [vmem:[%s4186 + $0x1c] sm:$0xf]
      %v4195 = vunpack.c.l.b16 %v3815
      %v4196 = vunpack.c.l.b16 %v3825
      %v4197 = vunpack.c.l.b16 %v3839
      %v4198 = vunpack.c.l.b16 %v3849
      %v4199 = vunpack.c.l.b16 %v3863
      %v4200 = vunpack.c.l.b16 %v3873
      %v4201 = vunpack.c.l.b16 %v3887
      %v4202 = vunpack.c.l.b16 %v3897
      %v4203 = vunpack.c.l.b16 %v3911
      %v4204 = vunpack.c.l.b16 %v3921
      %v4205 = vunpack.c.l.b16 %v3935
      %v4206 = vunpack.c.l.b16 %v3945
      %v4207 = vunpack.c.l.b16 %v3959
      %v4208 = vunpack.c.l.b16 %v3969
      %v4209 = vunpack.c.l.b16 %v3983
      %v4210 = vunpack.c.l.b16 %v3993
      %v4211 = vunpack.c.l.b16 %v4007
      %v4212 = vunpack.c.l.b16 %v4017
      %v4213 = vunpack.c.l.b16 %v4031
      %v4214 = vunpack.c.l.b16 %v4041
      %v4215 = vunpack.c.l.b16 %v4055
      %v4216 = vunpack.c.l.b16 %v4065
      %v4217 = vunpack.c.l.b16 %v4079
      %v4218 = vunpack.c.l.b16 %v4089
      %v4219 = vunpack.c.l.b16 %v4103
      %v4220 = vunpack.c.l.b16 %v4113
      %v4221 = vunpack.c.l.b16 %v4127
      %v4222 = vunpack.c.l.b16 %v4137
      %v4223 = vunpack.c.l.b16 %v4151
      %v4224 = vunpack.c.l.b16 %v4161
      %v4225 = vunpack.c.l.b16 %v4175
      %v4226 = vunpack.c.l.b16 %v4185
      %v4227 = vpack.c.b16 %v4196, %v4195
      %v4228 = vpack.c.b16 %v4198, %v4197
      %v4229 = vpack.c.b16 %v4200, %v4199
      %v4230 = vpack.c.b16 %v4202, %v4201
      %v4231 = vpack.c.b16 %v4204, %v4203
      %v4232 = vpack.c.b16 %v4206, %v4205
      %v4233 = vpack.c.b16 %v4208, %v4207
      %v4234 = vpack.c.b16 %v4210, %v4209
      %v4235 = vpack.c.b16 %v4212, %v4211
      %v4236 = vpack.c.b16 %v4214, %v4213
      %v4237 = vpack.c.b16 %v4216, %v4215
      %v4238 = vpack.c.b16 %v4218, %v4217
      %v4239 = vpack.c.b16 %v4220, %v4219
      %v4240 = vpack.c.b16 %v4222, %v4221
      %v4241 = vpack.c.b16 %v4224, %v4223
      %v4242 = vpack.c.b16 %v4226, %v4225
      %v4251 = vunpack.c.l.b16 %v4187
      %v4252 = vunpack.c.l.b16 %v4188
      %v4253 = vunpack.c.l.b16 %v4189
      %v4254 = vunpack.c.l.b16 %v4190
      %v4255 = vunpack.c.l.b16 %v4191
      %v4256 = vunpack.c.l.b16 %v4192
      %v4257 = vunpack.c.l.b16 %v4193
      %v4258 = vunpack.c.l.b16 %v4194
      %v4259 = vpack.c.b16 %v4252, %v4251
      %v4260 = vpack.c.b16 %v4254, %v4253
      %v4261 = vpack.c.b16 %v4256, %v4255
      %v4262 = vpack.c.b16 %v4258, %v4257
      %v4268 = vsel %vm1225, %v4227, 0
      %v4271 = vsel %vm1225, %v4228, 0
      %v4274 = vsel %vm1225, %v4229, 0
      %v4277 = vsel %vm1225, %v4230, 0
      %v4280 = vsel %vm1225, %v4231, 0
      %v4283 = vsel %vm1225, %v4232, 0
      %v4286 = vsel %vm1225, %v4233, 0
      %v4289 = vsel %vm1225, %v4234, 0
      %v4292 = vsel %vm1225, %v4235, 0
      %v4295 = vsel %vm1225, %v4236, 0
      %v4298 = vsel %vm1225, %v4237, 0
      %v4301 = vsel %vm1225, %v4238, 0
      %v4304 = vsel %vm1225, %v4239, 0
      %v4307 = vsel %vm1225, %v4240, 0
      %v4310 = vsel %vm1225, %v4241, 0
      %v4313 = vsel %vm1225, %v4242, 0
      %4315 = vmatpush.bf16.msra.mxu0 0
      %4316 = vmatpush.bf16.msra.mxu0 0
      %4317 = vmatpush.bf16.msra.mxu0 0
      %4318 = vmatpush.bf16.msra.mxu0 0
      %4319 = vmatpush.bf16.msra.mxu0 %v4262
      %4320 = vmatpush.bf16.msra.mxu0 %v4261
      %4321 = vmatpush.bf16.msra.mxu0 %v4260
      %4322 = vmatpush.bf16.msra.mxu0 %v4259
      %4323 = vmatmul.bf16.gmra.mxu0 %v4268
      %v4324 = vpop.f32.mrf.mxu0
      %v4325 = vadd.f32 0.0, %v4324
      %v4326 = vpop.f32.mrf.mxu0
      %v4327 = vadd.f32 0.0, %v4326
      %4328 = vmatmul.bf16.gmra.mxu0 %v4271
      %v4329 = vpop.f32.mrf.mxu0
      %v4330 = vadd.f32 0.0, %v4329
      %v4331 = vpop.f32.mrf.mxu0
      %v4332 = vadd.f32 0.0, %v4331
      %4333 = vmatmul.bf16.gmra.mxu0 %v4274
      %v4334 = vpop.f32.mrf.mxu0
      %v4335 = vadd.f32 0.0, %v4334
      %v4336 = vpop.f32.mrf.mxu0
      %v4337 = vadd.f32 0.0, %v4336
      %4338 = vmatmul.bf16.gmra.mxu0 %v4277
      %v4339 = vpop.f32.mrf.mxu0
      %v4340 = vadd.f32 0.0, %v4339
      %v4341 = vpop.f32.mrf.mxu0
      %v4342 = vadd.f32 0.0, %v4341
      %4343 = vmatmul.bf16.gmra.mxu0 %v4280
      %v4344 = vpop.f32.mrf.mxu0
      %v4345 = vadd.f32 0.0, %v4344
      %v4346 = vpop.f32.mrf.mxu0
      %v4347 = vadd.f32 0.0, %v4346
      %4348 = vmatmul.bf16.gmra.mxu0 %v4283
      %v4349 = vpop.f32.mrf.mxu0
      %v4350 = vadd.f32 0.0, %v4349
      %v4351 = vpop.f32.mrf.mxu0
      %v4352 = vadd.f32 0.0, %v4351
      %4353 = vmatmul.bf16.gmra.mxu0 %v4286
      %v4354 = vpop.f32.mrf.mxu0
      %v4355 = vadd.f32 0.0, %v4354
      %v4356 = vpop.f32.mrf.mxu0
      %v4357 = vadd.f32 0.0, %v4356
      %4358 = vmatmul.bf16.gmra.mxu0 %v4289
      %v4359 = vpop.f32.mrf.mxu0
      %v4360 = vadd.f32 0.0, %v4359
      %v4361 = vpop.f32.mrf.mxu0
      %v4362 = vadd.f32 0.0, %v4361
      %4363 = vmatmul.bf16.gmra.mxu0 %v4292
      %v4364 = vpop.f32.mrf.mxu0
      %v4365 = vadd.f32 0.0, %v4364
      %v4366 = vpop.f32.mrf.mxu0
      %v4367 = vadd.f32 0.0, %v4366
      %4368 = vmatmul.bf16.gmra.mxu0 %v4295
      %v4369 = vpop.f32.mrf.mxu0
      %v4370 = vadd.f32 0.0, %v4369
      %v4371 = vpop.f32.mrf.mxu0
      %v4372 = vadd.f32 0.0, %v4371
      %4373 = vmatmul.bf16.gmra.mxu0 %v4298
      %v4374 = vpop.f32.mrf.mxu0
      %v4375 = vadd.f32 0.0, %v4374
      %v4376 = vpop.f32.mrf.mxu0
      %v4377 = vadd.f32 0.0, %v4376
      %4378 = vmatmul.bf16.gmra.mxu0 %v4301
      %v4379 = vpop.f32.mrf.mxu0
      %v4380 = vadd.f32 0.0, %v4379
      %v4381 = vpop.f32.mrf.mxu0
      %v4382 = vadd.f32 0.0, %v4381
      %4383 = vmatmul.bf16.gmra.mxu0 %v4304
      %v4384 = vpop.f32.mrf.mxu0
      %v4385 = vadd.f32 0.0, %v4384
      %v4386 = vpop.f32.mrf.mxu0
      %v4387 = vadd.f32 0.0, %v4386
      %4388 = vmatmul.bf16.gmra.mxu0 %v4307
      %v4389 = vpop.f32.mrf.mxu0
      %v4390 = vadd.f32 0.0, %v4389
      %v4391 = vpop.f32.mrf.mxu0
      %v4392 = vadd.f32 0.0, %v4391
      %4393 = vmatmul.bf16.gmra.mxu0 %v4310
      %v4394 = vpop.f32.mrf.mxu0
      %v4395 = vadd.f32 0.0, %v4394
      %v4396 = vpop.f32.mrf.mxu0
      %v4397 = vadd.f32 0.0, %v4396
      %4398 = vmatmul.bf16.gmra.mxu0 %v4313
      %v4399 = vpop.f32.mrf.mxu0
      %v4400 = vadd.f32 0.0, %v4399
      %v4401 = vpop.f32.mrf.mxu0
      %v4402 = vadd.f32 0.0, %v4401
      %4403 = vdwg.mxu0
      %v4404 = vadd.f32 %v3722, %v4325
      %v4405 = vadd.f32 %v3723, %v4327
      %v4406 = vadd.f32 %v3724, %v4330
      %v4407 = vadd.f32 %v3725, %v4332
      %v4408 = vadd.f32 %v3726, %v4335
      %v4409 = vadd.f32 %v3727, %v4337
      %v4410 = vadd.f32 %v3728, %v4340
      %v4411 = vadd.f32 %v3729, %v4342
      %v4412 = vadd.f32 %v3730, %v4345
      %v4413 = vadd.f32 %v3731, %v4347
      %v4414 = vadd.f32 %v3732, %v4350
      %v4415 = vadd.f32 %v3733, %v4352
      %v4416 = vadd.f32 %v3734, %v4355
      %v4417 = vadd.f32 %v3735, %v4357
      %v4418 = vadd.f32 %v3736, %v4360
      %v4419 = vadd.f32 %v3737, %v4362
      %v4420 = vadd.f32 %v3738, %v4365
      %v4421 = vadd.f32 %v3739, %v4367
      %v4422 = vadd.f32 %v3740, %v4370
      %v4423 = vadd.f32 %v3741, %v4372
      %v4424 = vadd.f32 %v3742, %v4375
      %v4425 = vadd.f32 %v3743, %v4377
      %v4426 = vadd.f32 %v3744, %v4380
      %v4427 = vadd.f32 %v3745, %v4382
      %v4428 = vadd.f32 %v3746, %v4385
      %v4429 = vadd.f32 %v3747, %v4387
      %v4430 = vadd.f32 %v3748, %v4390
      %v4431 = vadd.f32 %v3749, %v4392
      %v4432 = vadd.f32 %v3750, %v4395
      %v4433 = vadd.f32 %v3751, %v4397
      %v4434 = vadd.f32 %v3752, %v4400
      %v4435 = vadd.f32 %v3753, %v4402
      %v4436 = vld [vmem:[%s3439] sm:$0xe]
      %v4437 = vld [vmem:[%s3439 + $0xc] sm:$0xe]
      %v4438 = vld [vmem:[%s3439 + $0x18] sm:$0xe]
      %v4439 = vld [vmem:[%s3439 + $0x24] sm:$0xe]
      %v4440 = vld [vmem:[%s3439 + $0x30] sm:$0xe]
      %v4441 = vld [vmem:[%s3439 + $0x3c] sm:$0xe]
      %v4442 = vld [vmem:[%s3439 + $0x48] sm:$0xe]
      %v4443 = vld [vmem:[%s3439 + $0x54] sm:$0xe]
      %v4444 = vld [vmem:[%s3439 + $0x60] sm:$0xe]
      %v4445 = vld [vmem:[%s3439 + $0x6c] sm:$0xe]
      %v4446 = vld [vmem:[%s3439 + $0x78] sm:$0xe]
      %v4447 = vld [vmem:[%s3439 + $0x84] sm:$0xe]
      %v4448 = vld [vmem:[%s3439 + $0x90] sm:$0xe]
      %v4449 = vld [vmem:[%s3439 + $0x9c] sm:$0xe]
      %v4450 = vld [vmem:[%s3439 + $0xa8] sm:$0xe]
      %v4451 = vld [vmem:[%s3439 + $0xb4] sm:$0xe]
      %v4500 = vrot.slane %v4436, 5
      %v4501 = vrot.slane %v4500, 4
      %v4502 = vrot.slane %v3755, 5
      %v4503 = vsel %vm1654, %v4501, %v4502
      %v4504 = vrot.slane %v4502, 4
      %v4505 = vrot.slane %v3756, 5
      %v4506 = vsel %vm1654, %v4504, %v4505
      %v4507 = vrot.slane %v4437, 5
      %v4508 = vrot.slane %v4507, 4
      %v4509 = vrot.slane %v3758, 5
      %v4510 = vsel %vm1654, %v4508, %v4509
      %v4511 = vrot.slane %v4509, 4
      %v4512 = vrot.slane %v3759, 5
      %v4513 = vsel %vm1654, %v4511, %v4512
      %v4514 = vrot.slane %v4438, 5
      %v4515 = vrot.slane %v4514, 4
      %v4516 = vrot.slane %v3761, 5
      %v4517 = vsel %vm1654, %v4515, %v4516
      %v4518 = vrot.slane %v4516, 4
      %v4519 = vrot.slane %v3762, 5
      %v4520 = vsel %vm1654, %v4518, %v4519
      %v4521 = vrot.slane %v4439, 5
      %v4522 = vrot.slane %v4521, 4
      %v4523 = vrot.slane %v3764, 5
      %v4524 = vsel %vm1654, %v4522, %v4523
      %v4525 = vrot.slane %v4523, 4
      %v4526 = vrot.slane %v3765, 5
      %v4527 = vsel %vm1654, %v4525, %v4526
      %v4528 = vrot.slane %v4440, 5
      %v4529 = vrot.slane %v4528, 4
      %v4530 = vrot.slane %v3767, 5
      %v4531 = vsel %vm1654, %v4529, %v4530
      %v4532 = vrot.slane %v4530, 4
      %v4533 = vrot.slane %v3768, 5
      %v4534 = vsel %vm1654, %v4532, %v4533
      %v4535 = vrot.slane %v4441, 5
      %v4536 = vrot.slane %v4535, 4
      %v4537 = vrot.slane %v3770, 5
      %v4538 = vsel %vm1654, %v4536, %v4537
      %v4539 = vrot.slane %v4537, 4
      %v4540 = vrot.slane %v3771, 5
      %v4541 = vsel %vm1654, %v4539, %v4540
      %v4542 = vrot.slane %v4442, 5
      %v4543 = vrot.slane %v4542, 4
      %v4544 = vrot.slane %v3773, 5
      %v4545 = vsel %vm1654, %v4543, %v4544
      %v4546 = vrot.slane %v4544, 4
      %v4547 = vrot.slane %v3774, 5
      %v4548 = vsel %vm1654, %v4546, %v4547
      %v4549 = vrot.slane %v4443, 5
      %v4550 = vrot.slane %v4549, 4
      %v4551 = vrot.slane %v3776, 5
      %v4552 = vsel %vm1654, %v4550, %v4551
      %v4553 = vrot.slane %v4551, 4
      %v4554 = vrot.slane %v3777, 5
      %v4555 = vsel %vm1654, %v4553, %v4554
      %v4556 = vrot.slane %v4444, 5
      %v4557 = vrot.slane %v4556, 4
      %v4558 = vrot.slane %v3779, 5
      %v4559 = vsel %vm1654, %v4557, %v4558
      %v4560 = vrot.slane %v4558, 4
      %v4561 = vrot.slane %v3780, 5
      %v4562 = vsel %vm1654, %v4560, %v4561
      %v4563 = vrot.slane %v4445, 5
      %v4564 = vrot.slane %v4563, 4
      %v4565 = vrot.slane %v3782, 5
      %v4566 = vsel %vm1654, %v4564, %v4565
      %v4567 = vrot.slane %v4565, 4
      %v4568 = vrot.slane %v3783, 5
      %v4569 = vsel %vm1654, %v4567, %v4568
      %v4570 = vrot.slane %v4446, 5
      %v4571 = vrot.slane %v4570, 4
      %v4572 = vrot.slane %v3785, 5
      %v4573 = vsel %vm1654, %v4571, %v4572
      %v4574 = vrot.slane %v4572, 4
      %v4575 = vrot.slane %v3786, 5
      %v4576 = vsel %vm1654, %v4574, %v4575
      %v4577 = vrot.slane %v4447, 5
      %v4578 = vrot.slane %v4577, 4
      %v4579 = vrot.slane %v3788, 5
      %v4580 = vsel %vm1654, %v4578, %v4579
      %v4581 = vrot.slane %v4579, 4
      %v4582 = vrot.slane %v3789, 5
      %v4583 = vsel %vm1654, %v4581, %v4582
      %v4584 = vrot.slane %v4448, 5
      %v4585 = vrot.slane %v4584, 4
      %v4586 = vrot.slane %v3791, 5
      %v4587 = vsel %vm1654, %v4585, %v4586
      %v4588 = vrot.slane %v4586, 4
      %v4589 = vrot.slane %v3792, 5
      %v4590 = vsel %vm1654, %v4588, %v4589
      %v4591 = vrot.slane %v4449, 5
      %v4592 = vrot.slane %v4591, 4
      %v4593 = vrot.slane %v3794, 5
      %v4594 = vsel %vm1654, %v4592, %v4593
      %v4595 = vrot.slane %v4593, 4
      %v4596 = vrot.slane %v3795, 5
      %v4597 = vsel %vm1654, %v4595, %v4596
      %v4598 = vrot.slane %v4450, 5
      %v4599 = vrot.slane %v4598, 4
      %v4600 = vrot.slane %v3797, 5
      %v4601 = vsel %vm1654, %v4599, %v4600
      %v4602 = vrot.slane %v4600, 4
      %v4603 = vrot.slane %v3798, 5
      %v4604 = vsel %vm1654, %v4602, %v4603
      %v4605 = vrot.slane %v4451, 5
      %v4606 = vrot.slane %v4605, 4
      %v4607 = vrot.slane %v3800, 5
      %v4608 = vsel %vm1654, %v4606, %v4607
      %v4609 = vrot.slane %v4607, 4
      %v4610 = vrot.slane %v3801, 5
      %v4611 = vsel %vm1654, %v4609, %v4610
      %s4612 = scalar_lea.vmem %s1, 256
      %v4613 = vld [vmem:[%s4612] sm:$0xf]
      %v4614 = vld [vmem:[%s4612 + $0x4] sm:$0xf]
      %v4615 = vld [vmem:[%s4612 + $0x8] sm:$0xf]
      %v4616 = vld [vmem:[%s4612 + $0xc] sm:$0xf]
      %v4617 = vld [vmem:[%s4612 + $0x10] sm:$0xf]
      %v4618 = vld [vmem:[%s4612 + $0x14] sm:$0xf]
      %v4619 = vld [vmem:[%s4612 + $0x18] sm:$0xf]
      %v4620 = vld [vmem:[%s4612 + $0x1c] sm:$0xf]
      %v4621 = vunpack.c.l.b16 %v4503
      %v4622 = vunpack.c.l.b16 %v4506
      %v4623 = vunpack.c.l.b16 %v4510
      %v4624 = vunpack.c.l.b16 %v4513
      %v4625 = vunpack.c.l.b16 %v4517
      %v4626 = vunpack.c.l.b16 %v4520
      %v4627 = vunpack.c.l.b16 %v4524
      %v4628 = vunpack.c.l.b16 %v4527
      %v4629 = vunpack.c.l.b16 %v4531
      %v4630 = vunpack.c.l.b16 %v4534
      %v4631 = vunpack.c.l.b16 %v4538
      %v4632 = vunpack.c.l.b16 %v4541
      %v4633 = vunpack.c.l.b16 %v4545
      %v4634 = vunpack.c.l.b16 %v4548
      %v4635 = vunpack.c.l.b16 %v4552
      %v4636 = vunpack.c.l.b16 %v4555
      %v4637 = vunpack.c.l.b16 %v4559
      %v4638 = vunpack.c.l.b16 %v4562
      %v4639 = vunpack.c.l.b16 %v4566
      %v4640 = vunpack.c.l.b16 %v4569
      %v4641 = vunpack.c.l.b16 %v4573
      %v4642 = vunpack.c.l.b16 %v4576
      %v4643 = vunpack.c.l.b16 %v4580
      %v4644 = vunpack.c.l.b16 %v4583
      %v4645 = vunpack.c.l.b16 %v4587
      %v4646 = vunpack.c.l.b16 %v4590
      %v4647 = vunpack.c.l.b16 %v4594
      %v4648 = vunpack.c.l.b16 %v4597
      %v4649 = vunpack.c.l.b16 %v4601
      %v4650 = vunpack.c.l.b16 %v4604
      %v4651 = vunpack.c.l.b16 %v4608
      %v4652 = vunpack.c.l.b16 %v4611
      %v4653 = vpack.c.b16 %v4622, %v4621
      %v4654 = vpack.c.b16 %v4624, %v4623
      %v4655 = vpack.c.b16 %v4626, %v4625
      %v4656 = vpack.c.b16 %v4628, %v4627
      %v4657 = vpack.c.b16 %v4630, %v4629
      %v4658 = vpack.c.b16 %v4632, %v4631
      %v4659 = vpack.c.b16 %v4634, %v4633
      %v4660 = vpack.c.b16 %v4636, %v4635
      %v4661 = vpack.c.b16 %v4638, %v4637
      %v4662 = vpack.c.b16 %v4640, %v4639
      %v4663 = vpack.c.b16 %v4642, %v4641
      %v4664 = vpack.c.b16 %v4644, %v4643
      %v4665 = vpack.c.b16 %v4646, %v4645
      %v4666 = vpack.c.b16 %v4648, %v4647
      %v4667 = vpack.c.b16 %v4650, %v4649
      %v4668 = vpack.c.b16 %v4652, %v4651
      %v4677 = vunpack.c.l.b16 %v4613
      %v4678 = vunpack.c.l.b16 %v4614
      %v4679 = vunpack.c.l.b16 %v4615
      %v4680 = vunpack.c.l.b16 %v4616
      %v4681 = vunpack.c.l.b16 %v4617
      %v4682 = vunpack.c.l.b16 %v4618
      %v4683 = vunpack.c.l.b16 %v4619
      %v4684 = vunpack.c.l.b16 %v4620
      %v4685 = vpack.c.b16 %v4678, %v4677
      %v4686 = vpack.c.b16 %v4680, %v4679
      %v4687 = vpack.c.b16 %v4682, %v4681
      %v4688 = vpack.c.b16 %v4684, %v4683
      %v4694 = vsel %vm1225, %v4653, 0
      %v4697 = vsel %vm1225, %v4654, 0
      %v4700 = vsel %vm1225, %v4655, 0
      %v4703 = vsel %vm1225, %v4656, 0
      %v4706 = vsel %vm1225, %v4657, 0
      %v4709 = vsel %vm1225, %v4658, 0
      %v4712 = vsel %vm1225, %v4659, 0
      %v4715 = vsel %vm1225, %v4660, 0
      %v4718 = vsel %vm1225, %v4661, 0
      %v4721 = vsel %vm1225, %v4662, 0
      %v4724 = vsel %vm1225, %v4663, 0
      %v4727 = vsel %vm1225, %v4664, 0
      %v4730 = vsel %vm1225, %v4665, 0
      %v4733 = vsel %vm1225, %v4666, 0
      %v4736 = vsel %vm1225, %v4667, 0
      %v4739 = vsel %vm1225, %v4668, 0
      %4741 = vmatpush.bf16.msra.mxu0 0
      %4742 = vmatpush.bf16.msra.mxu0 0
      %4743 = vmatpush.bf16.msra.mxu0 0
      %4744 = vmatpush.bf16.msra.mxu0 0
      %4745 = vmatpush.bf16.msra.mxu0 %v4688
      %4746 = vmatpush.bf16.msra.mxu0 %v4687
      %4747 = vmatpush.bf16.msra.mxu0 %v4686
      %4748 = vmatpush.bf16.msra.mxu0 %v4685
      %4749 = vmatmul.bf16.gmra.mxu0 %v4694
      %v4750 = vpop.f32.mrf.mxu0
      %v4751 = vadd.f32 0.0, %v4750
      %v4752 = vpop.f32.mrf.mxu0
      %v4753 = vadd.f32 0.0, %v4752
      %4754 = vmatmul.bf16.gmra.mxu0 %v4697
      %v4755 = vpop.f32.mrf.mxu0
      %v4756 = vadd.f32 0.0, %v4755
      %v4757 = vpop.f32.mrf.mxu0
      %v4758 = vadd.f32 0.0, %v4757
      %4759 = vmatmul.bf16.gmra.mxu0 %v4700
      %v4760 = vpop.f32.mrf.mxu0
      %v4761 = vadd.f32 0.0, %v4760
      %v4762 = vpop.f32.mrf.mxu0
      %v4763 = vadd.f32 0.0, %v4762
      %4764 = vmatmul.bf16.gmra.mxu0 %v4703
      %v4765 = vpop.f32.mrf.mxu0
      %v4766 = vadd.f32 0.0, %v4765
      %v4767 = vpop.f32.mrf.mxu0
      %v4768 = vadd.f32 0.0, %v4767
      %4769 = vmatmul.bf16.gmra.mxu0 %v4706
      %v4770 = vpop.f32.mrf.mxu0
      %v4771 = vadd.f32 0.0, %v4770
      %v4772 = vpop.f32.mrf.mxu0
      %v4773 = vadd.f32 0.0, %v4772
      %4774 = vmatmul.bf16.gmra.mxu0 %v4709
      %v4775 = vpop.f32.mrf.mxu0
      %v4776 = vadd.f32 0.0, %v4775
      %v4777 = vpop.f32.mrf.mxu0
      %v4778 = vadd.f32 0.0, %v4777
      %4779 = vmatmul.bf16.gmra.mxu0 %v4712
      %v4780 = vpop.f32.mrf.mxu0
      %v4781 = vadd.f32 0.0, %v4780
      %v4782 = vpop.f32.mrf.mxu0
      %v4783 = vadd.f32 0.0, %v4782
      %4784 = vmatmul.bf16.gmra.mxu0 %v4715
      %v4785 = vpop.f32.mrf.mxu0
      %v4786 = vadd.f32 0.0, %v4785
      %v4787 = vpop.f32.mrf.mxu0
      %v4788 = vadd.f32 0.0, %v4787
      %4789 = vmatmul.bf16.gmra.mxu0 %v4718
      %v4790 = vpop.f32.mrf.mxu0
      %v4791 = vadd.f32 0.0, %v4790
      %v4792 = vpop.f32.mrf.mxu0
      %v4793 = vadd.f32 0.0, %v4792
      %4794 = vmatmul.bf16.gmra.mxu0 %v4721
      %v4795 = vpop.f32.mrf.mxu0
      %v4796 = vadd.f32 0.0, %v4795
      %v4797 = vpop.f32.mrf.mxu0
      %v4798 = vadd.f32 0.0, %v4797
      %4799 = vmatmul.bf16.gmra.mxu0 %v4724
      %v4800 = vpop.f32.mrf.mxu0
      %v4801 = vadd.f32 0.0, %v4800
      %v4802 = vpop.f32.mrf.mxu0
      %v4803 = vadd.f32 0.0, %v4802
      %4804 = vmatmul.bf16.gmra.mxu0 %v4727
      %v4805 = vpop.f32.mrf.mxu0
      %v4806 = vadd.f32 0.0, %v4805
      %v4807 = vpop.f32.mrf.mxu0
      %v4808 = vadd.f32 0.0, %v4807
      %4809 = vmatmul.bf16.gmra.mxu0 %v4730
      %v4810 = vpop.f32.mrf.mxu0
      %v4811 = vadd.f32 0.0, %v4810
      %v4812 = vpop.f32.mrf.mxu0
      %v4813 = vadd.f32 0.0, %v4812
      %4814 = vmatmul.bf16.gmra.mxu0 %v4733
      %v4815 = vpop.f32.mrf.mxu0
      %v4816 = vadd.f32 0.0, %v4815
      %v4817 = vpop.f32.mrf.mxu0
      %v4818 = vadd.f32 0.0, %v4817
      %4819 = vmatmul.bf16.gmra.mxu0 %v4736
      %v4820 = vpop.f32.mrf.mxu0
      %v4821 = vadd.f32 0.0, %v4820
      %v4822 = vpop.f32.mrf.mxu0
      %v4823 = vadd.f32 0.0, %v4822
      %4824 = vmatmul.bf16.gmra.mxu0 %v4739
      %v4825 = vpop.f32.mrf.mxu0
      %v4826 = vadd.f32 0.0, %v4825
      %v4827 = vpop.f32.mrf.mxu0
      %v4828 = vadd.f32 0.0, %v4827
      %4829 = vdwg.mxu0
      %v4830 = vadd.f32 %v4404, %v4751
      %v4831 = vadd.f32 %v4405, %v4753
      %v4832 = vadd.f32 %v4406, %v4756
      %v4833 = vadd.f32 %v4407, %v4758
      %v4834 = vadd.f32 %v4408, %v4761
      %v4835 = vadd.f32 %v4409, %v4763
      %v4836 = vadd.f32 %v4410, %v4766
      %v4837 = vadd.f32 %v4411, %v4768
      %v4838 = vadd.f32 %v4412, %v4771
      %v4839 = vadd.f32 %v4413, %v4773
      %v4840 = vadd.f32 %v4414, %v4776
      %v4841 = vadd.f32 %v4415, %v4778
      %v4842 = vadd.f32 %v4416, %v4781
      %v4843 = vadd.f32 %v4417, %v4783
      %v4844 = vadd.f32 %v4418, %v4786
      %v4845 = vadd.f32 %v4419, %v4788
      %v4846 = vadd.f32 %v4420, %v4791
      %v4847 = vadd.f32 %v4421, %v4793
      %v4848 = vadd.f32 %v4422, %v4796
      %v4849 = vadd.f32 %v4423, %v4798
      %v4850 = vadd.f32 %v4424, %v4801
      %v4851 = vadd.f32 %v4425, %v4803
      %v4852 = vadd.f32 %v4426, %v4806
      %v4853 = vadd.f32 %v4427, %v4808
      %v4854 = vadd.f32 %v4428, %v4811
      %v4855 = vadd.f32 %v4429, %v4813
      %v4856 = vadd.f32 %v4430, %v4816
      %v4857 = vadd.f32 %v4431, %v4818
      %v4858 = vadd.f32 %v4432, %v4821
      %v4859 = vadd.f32 %v4433, %v4823
      %v4860 = vadd.f32 %v4434, %v4826
      %v4861 = vadd.f32 %v4435, %v4828
      %v4862 = vmax.f32 %v4830, 0.0
      %v4863 = vmax.f32 %v4831, 0.0
      %v4864 = vmax.f32 %v4832, 0.0
      %v4865 = vmax.f32 %v4833, 0.0
      %v4866 = vmax.f32 %v4834, 0.0
      %v4867 = vmax.f32 %v4835, 0.0
      %v4868 = vmax.f32 %v4836, 0.0
      %v4869 = vmax.f32 %v4837, 0.0
      %v4870 = vmax.f32 %v4838, 0.0
      %v4871 = vmax.f32 %v4839, 0.0
      %v4872 = vmax.f32 %v4840, 0.0
      %v4873 = vmax.f32 %v4841, 0.0
      %v4874 = vmax.f32 %v4842, 0.0
      %v4875 = vmax.f32 %v4843, 0.0
      %v4876 = vmax.f32 %v4844, 0.0
      %v4877 = vmax.f32 %v4845, 0.0
      %v4878 = vmax.f32 %v4846, 0.0
      %v4879 = vmax.f32 %v4847, 0.0
      %v4880 = vmax.f32 %v4848, 0.0
      %v4881 = vmax.f32 %v4849, 0.0
      %v4882 = vmax.f32 %v4850, 0.0
      %v4883 = vmax.f32 %v4851, 0.0
      %v4884 = vmax.f32 %v4852, 0.0
      %v4885 = vmax.f32 %v4853, 0.0
      %v4886 = vmax.f32 %v4854, 0.0
      %v4887 = vmax.f32 %v4855, 0.0
      %v4888 = vmax.f32 %v4856, 0.0
      %v4889 = vmax.f32 %v4857, 0.0
      %v4890 = vmax.f32 %v4858, 0.0
      %v4891 = vmax.f32 %v4859, 0.0
      %v4892 = vmax.f32 %v4860, 0.0
      %v4893 = vmax.f32 %v4861, 0.0
      %v4894 = vpack.c.bf16 %v4862, %v4862
      %v4895 = vpack.c.bf16 %v4863, %v4863
      %v4896 = vpack.c.bf16 %v4864, %v4864
      %v4897 = vpack.c.bf16 %v4865, %v4865
      %v4898 = vpack.c.bf16 %v4866, %v4866
      %v4899 = vpack.c.bf16 %v4867, %v4867
      %v4900 = vpack.c.bf16 %v4868, %v4868
      %v4901 = vpack.c.bf16 %v4869, %v4869
      %v4902 = vpack.c.bf16 %v4870, %v4870
      %v4903 = vpack.c.bf16 %v4871, %v4871
      %v4904 = vpack.c.bf16 %v4872, %v4872
      %v4905 = vpack.c.bf16 %v4873, %v4873
      %v4906 = vpack.c.bf16 %v4874, %v4874
      %v4907 = vpack.c.bf16 %v4875, %v4875
      %v4908 = vpack.c.bf16 %v4876, %v4876
      %v4909 = vpack.c.bf16 %v4877, %v4877
      %v4910 = vpack.c.bf16 %v4878, %v4878
      %v4911 = vpack.c.bf16 %v4879, %v4879
      %v4912 = vpack.c.bf16 %v4880, %v4880
      %v4913 = vpack.c.bf16 %v4881, %v4881
      %v4914 = vpack.c.bf16 %v4882, %v4882
      %v4915 = vpack.c.bf16 %v4883, %v4883
      %v4916 = vpack.c.bf16 %v4884, %v4884
      %v4917 = vpack.c.bf16 %v4885, %v4885
      %v4918 = vpack.c.bf16 %v4886, %v4886
      %v4919 = vpack.c.bf16 %v4887, %v4887
      %v4920 = vpack.c.bf16 %v4888, %v4888
      %v4921 = vpack.c.bf16 %v4889, %v4889
      %v4922 = vpack.c.bf16 %v4890, %v4890
      %v4923 = vpack.c.bf16 %v4891, %v4891
      %v4924 = vpack.c.bf16 %v4892, %v4892
      %v4925 = vpack.c.bf16 %v4893, %v4893
      %4926 = vst.msk [vmem:[#allocation3] sm:$0xf] %vm172, 0
      %4927 = vst.msk [vmem:[#allocation3 + $0x4] sm:$0xf] %vm172, 0
      %4928 = vst.msk [vmem:[#allocation3 + $0x8] sm:$0x1] %vm175, 0
      %4929 = vst.msk [vmem:[#allocation3 + $0xc] sm:$0xf] %vm172, 0
      %4930 = vst.msk [vmem:[#allocation3 + $0x10] sm:$0xf] %vm172, 0
      %4931 = vst.msk [vmem:[#allocation3 + $0x14] sm:$0x1] %vm175, 0
      %4932 = vst.msk [vmem:[#allocation3 + $0x18] sm:$0xf] %vm172, 0
      %4933 = vst.msk [vmem:[#allocation3 + $0x1c] sm:$0xf] %vm172, 0
      %4934 = vst.msk [vmem:[#allocation3 + $0x20] sm:$0x1] %vm175, 0
      %4935 = vst.msk [vmem:[#allocation3 + $0x24] sm:$0xf] %vm172, 0
      %4936 = vst.msk [vmem:[#allocation3 + $0x28] sm:$0xf] %vm172, 0
      %4937 = vst.msk [vmem:[#allocation3 + $0x2c] sm:$0x1] %vm175, 0
      %4938 = vst.msk [vmem:[#allocation3 + $0x30] sm:$0xf] %vm172, 0
      %4939 = vst.msk [vmem:[#allocation3 + $0x34] sm:$0xf] %vm172, 0
      %4940 = vst.msk [vmem:[#allocation3 + $0x38] sm:$0x1] %vm175, 0
      %4941 = vst.msk [vmem:[#allocation3 + $0x3c] sm:$0xf] %vm172, 0
      %4942 = vst.msk [vmem:[#allocation3 + $0x40] sm:$0xf] %vm172, 0
      %4943 = vst.msk [vmem:[#allocation3 + $0x44] sm:$0x1] %vm175, 0
      %4944 = vst.msk [vmem:[#allocation3 + $0x48] sm:$0xf] %vm172, 0
      %4945 = vst.msk [vmem:[#allocation3 + $0x4c] sm:$0xf] %vm172, 0
      %4946 = vst.msk [vmem:[#allocation3 + $0x50] sm:$0x1] %vm175, 0
      %4947 = vst.msk [vmem:[#allocation3 + $0x54] sm:$0xf] %vm172, 0
      %4948 = vst.msk [vmem:[#allocation3 + $0x58] sm:$0xf] %vm172, 0
      %4949 = vst.msk [vmem:[#allocation3 + $0x5c] sm:$0x1] %vm175, 0
      %4950 = vst.msk [vmem:[#allocation3 + $0x60] sm:$0xf] %vm172, 0
      %4951 = vst.msk [vmem:[#allocation3 + $0x64] sm:$0xf] %vm172, 0
      %4952 = vst.msk [vmem:[#allocation3 + $0x68] sm:$0x1] %vm175, 0
      %4953 = vst.msk [vmem:[#allocation3 + $0x6c] sm:$0xf] %vm172, 0
      %4954 = vst.msk [vmem:[#allocation3 + $0x70] sm:$0xf] %vm172, 0
      %4955 = vst.msk [vmem:[#allocation3 + $0x74] sm:$0x1] %vm175, 0
      %4956 = vst.msk [vmem:[#allocation3 + $0x78] sm:$0xf] %vm172, 0
      %4957 = vst.msk [vmem:[#allocation3 + $0x7c] sm:$0xf] %vm172, 0
      %4958 = vst.msk [vmem:[#allocation3 + $0x80] sm:$0x1] %vm175, 0
      %4959 = vst.msk [vmem:[#allocation3 + $0x84] sm:$0xf] %vm172, 0
      %4960 = vst.msk [vmem:[#allocation3 + $0x88] sm:$0xf] %vm172, 0
      %4961 = vst.msk [vmem:[#allocation3 + $0x8c] sm:$0x1] %vm175, 0
      %4962 = vst.msk [vmem:[#allocation3 + $0x90] sm:$0xf] %vm172, 0
      %4963 = vst.msk [vmem:[#allocation3 + $0x94] sm:$0xf] %vm172, 0
      %4964 = vst.msk [vmem:[#allocation3 + $0x98] sm:$0x1] %vm175, 0
      %4965 = vst.msk [vmem:[#allocation3 + $0x9c] sm:$0xf] %vm172, 0
      %4966 = vst.msk [vmem:[#allocation3 + $0xa0] sm:$0xf] %vm172, 0
      %4967 = vst.msk [vmem:[#allocation3 + $0xa4] sm:$0x1] %vm175, 0
      %4968 = vst.msk [vmem:[#allocation3 + $0xa8] sm:$0xf] %vm172, 0
      %4969 = vst.msk [vmem:[#allocation3 + $0xac] sm:$0xf] %vm172, 0
      %4970 = vst.msk [vmem:[#allocation3 + $0xb0] sm:$0x1] %vm175, 0
      %4971 = vst.msk [vmem:[#allocation3 + $0xb4] sm:$0xf] %vm172, 0
      %4972 = vst.msk [vmem:[#allocation3 + $0xb8] sm:$0xf] %vm172, 0
      %4973 = vst.msk [vmem:[#allocation3 + $0xbc] sm:$0x1] %vm175, 0
      %4974 = vst.msk [vmem:[#allocation3 + $0xc0] sm:$0xf] %vm172, 0
      %4975 = vst.msk [vmem:[#allocation3 + $0xc4] sm:$0xf] %vm172, 0
      %4976 = vst.msk [vmem:[#allocation3 + $0xc8] sm:$0x1] %vm175, 0
      %4977 = vst.msk [vmem:[#allocation3 + $0xcc] sm:$0xf] %vm172, 0
      %4978 = vst.msk [vmem:[#allocation3 + $0xd0] sm:$0xf] %vm172, 0
      %4979 = vst.msk [vmem:[#allocation3 + $0xd4] sm:$0x1] %vm175, 0
      %v4981 = vshrl.u32 %v4894, 16
      %v4983 = vrot.slane %v4981, 7
      %v4984 = vshll.u32 %v4894, 16
      %v4986 = vor.u32 %v4983, %v4984
      %v4987 = vrot.slane %v4983, 4
      %v4989 = vshrl.u32 %v4895, 16
      %v4991 = vrot.slane %v4989, 7
      %v4992 = vshll.u32 %v4895, 16
      %v4994 = vor.u32 %v4991, %v4992
      %v4995 = vsel %vm262, %v4987, %v4994
      %v4996 = vrot.slane %v4991, 4
      %v4998 = vshrl.u32 %v4896, 16
      %v5000 = vrot.slane %v4998, 7
      %v5001 = vshll.u32 %v4896, 16
      %v5003 = vor.u32 %v5000, %v5001
      %v5004 = vrot.slane %v5000, 4
      %v5006 = vshrl.u32 %v4897, 16
      %v5008 = vrot.slane %v5006, 7
      %v5009 = vshll.u32 %v4897, 16
      %v5011 = vor.u32 %v5008, %v5009
      %v5012 = vsel %vm262, %v5004, %v5011
      %v5013 = vrot.slane %v5008, 4
      %v5015 = vshrl.u32 %v4898, 16
      %v5017 = vrot.slane %v5015, 7
      %v5018 = vshll.u32 %v4898, 16
      %v5020 = vor.u32 %v5017, %v5018
      %v5021 = vrot.slane %v5017, 4
      %v5023 = vshrl.u32 %v4899, 16
      %v5025 = vrot.slane %v5023, 7
      %v5026 = vshll.u32 %v4899, 16
      %v5028 = vor.u32 %v5025, %v5026
      %v5029 = vsel %vm262, %v5021, %v5028
      %v5030 = vrot.slane %v5025, 4
      %v5032 = vshrl.u32 %v4900, 16
      %v5034 = vrot.slane %v5032, 7
      %v5035 = vshll.u32 %v4900, 16
      %v5037 = vor.u32 %v5034, %v5035
      %v5038 = vrot.slane %v5034, 4
      %v5040 = vshrl.u32 %v4901, 16
      %v5042 = vrot.slane %v5040, 7
      %v5043 = vshll.u32 %v4901, 16
      %v5045 = vor.u32 %v5042, %v5043
      %v5046 = vsel %vm262, %v5038, %v5045
      %v5047 = vrot.slane %v5042, 4
      %v5049 = vshrl.u32 %v4902, 16
      %v5051 = vrot.slane %v5049, 7
      %v5052 = vshll.u32 %v4902, 16
      %v5054 = vor.u32 %v5051, %v5052
      %v5055 = vrot.slane %v5051, 4
      %v5057 = vshrl.u32 %v4903, 16
      %v5059 = vrot.slane %v5057, 7
      %v5060 = vshll.u32 %v4903, 16
      %v5062 = vor.u32 %v5059, %v5060
      %v5063 = vsel %vm262, %v5055, %v5062
      %v5064 = vrot.slane %v5059, 4
      %v5066 = vshrl.u32 %v4904, 16
      %v5068 = vrot.slane %v5066, 7
      %v5069 = vshll.u32 %v4904, 16
      %v5071 = vor.u32 %v5068, %v5069
      %v5072 = vrot.slane %v5068, 4
      %v5074 = vshrl.u32 %v4905, 16
      %v5076 = vrot.slane %v5074, 7
      %v5077 = vshll.u32 %v4905, 16
      %v5079 = vor.u32 %v5076, %v5077
      %v5080 = vsel %vm262, %v5072, %v5079
      %v5081 = vrot.slane %v5076, 4
      %v5083 = vshrl.u32 %v4906, 16
      %v5085 = vrot.slane %v5083, 7
      %v5086 = vshll.u32 %v4906, 16
      %v5088 = vor.u32 %v5085, %v5086
      %v5089 = vrot.slane %v5085, 4
      %v5091 = vshrl.u32 %v4907, 16
      %v5093 = vrot.slane %v5091, 7
      %v5094 = vshll.u32 %v4907, 16
      %v5096 = vor.u32 %v5093, %v5094
      %v5097 = vsel %vm262, %v5089, %v5096
      %v5098 = vrot.slane %v5093, 4
      %v5100 = vshrl.u32 %v4908, 16
      %v5102 = vrot.slane %v5100, 7
      %v5103 = vshll.u32 %v4908, 16
      %v5105 = vor.u32 %v5102, %v5103
      %v5106 = vrot.slane %v5102, 4
      %v5108 = vshrl.u32 %v4909, 16
      %v5110 = vrot.slane %v5108, 7
      %v5111 = vshll.u32 %v4909, 16
      %v5113 = vor.u32 %v5110, %v5111
      %v5114 = vsel %vm262, %v5106, %v5113
      %v5115 = vrot.slane %v5110, 4
      %v5117 = vshrl.u32 %v4910, 16
      %v5119 = vrot.slane %v5117, 7
      %v5120 = vshll.u32 %v4910, 16
      %v5122 = vor.u32 %v5119, %v5120
      %v5123 = vrot.slane %v5119, 4
      %v5125 = vshrl.u32 %v4911, 16
      %v5127 = vrot.slane %v5125, 7
      %v5128 = vshll.u32 %v4911, 16
      %v5130 = vor.u32 %v5127, %v5128
      %v5131 = vsel %vm262, %v5123, %v5130
      %v5132 = vrot.slane %v5127, 4
      %v5134 = vshrl.u32 %v4912, 16
      %v5136 = vrot.slane %v5134, 7
      %v5137 = vshll.u32 %v4912, 16
      %v5139 = vor.u32 %v5136, %v5137
      %v5140 = vrot.slane %v5136, 4
      %v5142 = vshrl.u32 %v4913, 16
      %v5144 = vrot.slane %v5142, 7
      %v5145 = vshll.u32 %v4913, 16
      %v5147 = vor.u32 %v5144, %v5145
      %v5148 = vsel %vm262, %v5140, %v5147
      %v5149 = vrot.slane %v5144, 4
      %v5151 = vshrl.u32 %v4914, 16
      %v5153 = vrot.slane %v5151, 7
      %v5154 = vshll.u32 %v4914, 16
      %v5156 = vor.u32 %v5153, %v5154
      %v5157 = vrot.slane %v5153, 4
      %v5159 = vshrl.u32 %v4915, 16
      %v5161 = vrot.slane %v5159, 7
      %v5162 = vshll.u32 %v4915, 16
      %v5164 = vor.u32 %v5161, %v5162
      %v5165 = vsel %vm262, %v5157, %v5164
      %v5166 = vrot.slane %v5161, 4
      %v5168 = vshrl.u32 %v4916, 16
      %v5170 = vrot.slane %v5168, 7
      %v5171 = vshll.u32 %v4916, 16
      %v5173 = vor.u32 %v5170, %v5171
      %v5174 = vrot.slane %v5170, 4
      %v5176 = vshrl.u32 %v4917, 16
      %v5178 = vrot.slane %v5176, 7
      %v5179 = vshll.u32 %v4917, 16
      %v5181 = vor.u32 %v5178, %v5179
      %v5182 = vsel %vm262, %v5174, %v5181
      %v5183 = vrot.slane %v5178, 4
      %v5185 = vshrl.u32 %v4918, 16
      %v5187 = vrot.slane %v5185, 7
      %v5188 = vshll.u32 %v4918, 16
      %v5190 = vor.u32 %v5187, %v5188
      %v5191 = vrot.slane %v5187, 4
      %v5193 = vshrl.u32 %v4919, 16
      %v5195 = vrot.slane %v5193, 7
      %v5196 = vshll.u32 %v4919, 16
      %v5198 = vor.u32 %v5195, %v5196
      %v5199 = vsel %vm262, %v5191, %v5198
      %v5200 = vrot.slane %v5195, 4
      %v5202 = vshrl.u32 %v4920, 16
      %v5204 = vrot.slane %v5202, 7
      %v5205 = vshll.u32 %v4920, 16
      %v5207 = vor.u32 %v5204, %v5205
      %v5208 = vrot.slane %v5204, 4
      %v5210 = vshrl.u32 %v4921, 16
      %v5212 = vrot.slane %v5210, 7
      %v5213 = vshll.u32 %v4921, 16
      %v5215 = vor.u32 %v5212, %v5213
      %v5216 = vsel %vm262, %v5208, %v5215
      %v5217 = vrot.slane %v5212, 4
      %v5219 = vshrl.u32 %v4922, 16
      %v5221 = vrot.slane %v5219, 7
      %v5222 = vshll.u32 %v4922, 16
      %v5224 = vor.u32 %v5221, %v5222
      %v5225 = vrot.slane %v5221, 4
      %v5227 = vshrl.u32 %v4923, 16
      %v5229 = vrot.slane %v5227, 7
      %v5230 = vshll.u32 %v4923, 16
      %v5232 = vor.u32 %v5229, %v5230
      %v5233 = vsel %vm262, %v5225, %v5232
      %v5234 = vrot.slane %v5229, 4
      %v5236 = vshrl.u32 %v4924, 16
      %v5238 = vrot.slane %v5236, 7
      %v5239 = vshll.u32 %v4924, 16
      %v5241 = vor.u32 %v5238, %v5239
      %v5242 = vrot.slane %v5238, 4
      %v5244 = vshrl.u32 %v4925, 16
      %v5246 = vrot.slane %v5244, 7
      %v5247 = vshll.u32 %v4925, 16
      %v5249 = vor.u32 %v5246, %v5247
      %v5250 = vsel %vm262, %v5242, %v5249
      %v5251 = vrot.slane %v5246, 4
      %s5300 = scalar_lea.vmem [#allocation3], 12
      %v5301 = vld [vmem:[%s5300] sm:$0xf]
      %v5302 = vsel %vm586, %v4986, %v5301
      %5303 = vst [vmem:[%s5300] sm:$0xf] %v5302
      %5304 = vst.msk [vmem:[%s5300 + $0x4] sm:$0xf] %vm172, %v4995
      %v5305 = vld [vmem:[%s5300 + $0x8] sm:$0x1]
      %v5306 = vsel %vm592, %v4996, %v5305
      %5307 = vst [vmem:[%s5300 + $0x8] sm:$0x1] %v5306
      %v5308 = vld [vmem:[%s5300 + $0xc] sm:$0xf]
      %v5309 = vsel %vm586, %v5003, %v5308
      %5310 = vst [vmem:[%s5300 + $0xc] sm:$0xf] %v5309
      %5311 = vst.msk [vmem:[%s5300 + $0x10] sm:$0xf] %vm172, %v5012
      %v5312 = vld [vmem:[%s5300 + $0x14] sm:$0x1]
      %v5313 = vsel %vm592, %v5013, %v5312
      %5314 = vst [vmem:[%s5300 + $0x14] sm:$0x1] %v5313
      %v5315 = vld [vmem:[%s5300 + $0x18] sm:$0xf]
      %v5316 = vsel %vm586, %v5020, %v5315
      %5317 = vst [vmem:[%s5300 + $0x18] sm:$0xf] %v5316
      %5318 = vst.msk [vmem:[%s5300 + $0x1c] sm:$0xf] %vm172, %v5029
      %v5319 = vld [vmem:[%s5300 + $0x20] sm:$0x1]
      %v5320 = vsel %vm592, %v5030, %v5319
      %5321 = vst [vmem:[%s5300 + $0x20] sm:$0x1] %v5320
      %v5322 = vld [vmem:[%s5300 + $0x24] sm:$0xf]
      %v5323 = vsel %vm586, %v5037, %v5322
      %5324 = vst [vmem:[%s5300 + $0x24] sm:$0xf] %v5323
      %5325 = vst.msk [vmem:[%s5300 + $0x28] sm:$0xf] %vm172, %v5046
      %v5326 = vld [vmem:[%s5300 + $0x2c] sm:$0x1]
      %v5327 = vsel %vm592, %v5047, %v5326
      %5328 = vst [vmem:[%s5300 + $0x2c] sm:$0x1] %v5327
      %v5329 = vld [vmem:[%s5300 + $0x30] sm:$0xf]
      %v5330 = vsel %vm586, %v5054, %v5329
      %5331 = vst [vmem:[%s5300 + $0x30] sm:$0xf] %v5330
      %5332 = vst.msk [vmem:[%s5300 + $0x34] sm:$0xf] %vm172, %v5063
      %v5333 = vld [vmem:[%s5300 + $0x38] sm:$0x1]
      %v5334 = vsel %vm592, %v5064, %v5333
      %5335 = vst [vmem:[%s5300 + $0x38] sm:$0x1] %v5334
      %v5336 = vld [vmem:[%s5300 + $0x3c] sm:$0xf]
      %v5337 = vsel %vm586, %v5071, %v5336
      %5338 = vst [vmem:[%s5300 + $0x3c] sm:$0xf] %v5337
      %5339 = vst.msk [vmem:[%s5300 + $0x40] sm:$0xf] %vm172, %v5080
      %v5340 = vld [vmem:[%s5300 + $0x44] sm:$0x1]
      %v5341 = vsel %vm592, %v5081, %v5340
      %5342 = vst [vmem:[%s5300 + $0x44] sm:$0x1] %v5341
      %v5343 = vld [vmem:[%s5300 + $0x48] sm:$0xf]
      %v5344 = vsel %vm586, %v5088, %v5343
      %5345 = vst [vmem:[%s5300 + $0x48] sm:$0xf] %v5344
      %5346 = vst.msk [vmem:[%s5300 + $0x4c] sm:$0xf] %vm172, %v5097
      %v5347 = vld [vmem:[%s5300 + $0x50] sm:$0x1]
      %v5348 = vsel %vm592, %v5098, %v5347
      %5349 = vst [vmem:[%s5300 + $0x50] sm:$0x1] %v5348
      %v5350 = vld [vmem:[%s5300 + $0x54] sm:$0xf]
      %v5351 = vsel %vm586, %v5105, %v5350
      %5352 = vst [vmem:[%s5300 + $0x54] sm:$0xf] %v5351
      %5353 = vst.msk [vmem:[%s5300 + $0x58] sm:$0xf] %vm172, %v5114
      %v5354 = vld [vmem:[%s5300 + $0x5c] sm:$0x1]
      %v5355 = vsel %vm592, %v5115, %v5354
      %5356 = vst [vmem:[%s5300 + $0x5c] sm:$0x1] %v5355
      %v5357 = vld [vmem:[%s5300 + $0x60] sm:$0xf]
      %v5358 = vsel %vm586, %v5122, %v5357
      %5359 = vst [vmem:[%s5300 + $0x60] sm:$0xf] %v5358
      %5360 = vst.msk [vmem:[%s5300 + $0x64] sm:$0xf] %vm172, %v5131
      %v5361 = vld [vmem:[%s5300 + $0x68] sm:$0x1]
      %v5362 = vsel %vm592, %v5132, %v5361
      %5363 = vst [vmem:[%s5300 + $0x68] sm:$0x1] %v5362
      %v5364 = vld [vmem:[%s5300 + $0x6c] sm:$0xf]
      %v5365 = vsel %vm586, %v5139, %v5364
      %5366 = vst [vmem:[%s5300 + $0x6c] sm:$0xf] %v5365
      %5367 = vst.msk [vmem:[%s5300 + $0x70] sm:$0xf] %vm172, %v5148
      %v5368 = vld [vmem:[%s5300 + $0x74] sm:$0x1]
      %v5369 = vsel %vm592, %v5149, %v5368
      %5370 = vst [vmem:[%s5300 + $0x74] sm:$0x1] %v5369
      %v5371 = vld [vmem:[%s5300 + $0x78] sm:$0xf]
      %v5372 = vsel %vm586, %v5156, %v5371
      %5373 = vst [vmem:[%s5300 + $0x78] sm:$0xf] %v5372
      %5374 = vst.msk [vmem:[%s5300 + $0x7c] sm:$0xf] %vm172, %v5165
      %v5375 = vld [vmem:[%s5300 + $0x80] sm:$0x1]
      %v5376 = vsel %vm592, %v5166, %v5375
      %5377 = vst [vmem:[%s5300 + $0x80] sm:$0x1] %v5376
      %v5378 = vld [vmem:[%s5300 + $0x84] sm:$0xf]
      %v5379 = vsel %vm586, %v5173, %v5378
      %5380 = vst [vmem:[%s5300 + $0x84] sm:$0xf] %v5379
      %5381 = vst.msk [vmem:[%s5300 + $0x88] sm:$0xf] %vm172, %v5182
      %v5382 = vld [vmem:[%s5300 + $0x8c] sm:$0x1]
      %v5383 = vsel %vm592, %v5183, %v5382
      %5384 = vst [vmem:[%s5300 + $0x8c] sm:$0x1] %v5383
      %v5385 = vld [vmem:[%s5300 + $0x90] sm:$0xf]
      %v5386 = vsel %vm586, %v5190, %v5385
      %5387 = vst [vmem:[%s5300 + $0x90] sm:$0xf] %v5386
      %5388 = vst.msk [vmem:[%s5300 + $0x94] sm:$0xf] %vm172, %v5199
      %v5389 = vld [vmem:[%s5300 + $0x98] sm:$0x1]
      %v5390 = vsel %vm592, %v5200, %v5389
      %5391 = vst [vmem:[%s5300 + $0x98] sm:$0x1] %v5390
      %v5392 = vld [vmem:[%s5300 + $0x9c] sm:$0xf]
      %v5393 = vsel %vm586, %v5207, %v5392
      %5394 = vst [vmem:[%s5300 + $0x9c] sm:$0xf] %v5393
      %5395 = vst.msk [vmem:[%s5300 + $0xa0] sm:$0xf] %vm172, %v5216
      %v5396 = vld [vmem:[%s5300 + $0xa4] sm:$0x1]
      %v5397 = vsel %vm592, %v5217, %v5396
      %5398 = vst [vmem:[%s5300 + $0xa4] sm:$0x1] %v5397
      %v5399 = vld [vmem:[%s5300 + $0xa8] sm:$0xf]
      %v5400 = vsel %vm586, %v5224, %v5399
      %5401 = vst [vmem:[%s5300 + $0xa8] sm:$0xf] %v5400
      %5402 = vst.msk [vmem:[%s5300 + $0xac] sm:$0xf] %vm172, %v5233
      %v5403 = vld [vmem:[%s5300 + $0xb0] sm:$0x1]
      %v5404 = vsel %vm592, %v5234, %v5403
      %5405 = vst [vmem:[%s5300 + $0xb0] sm:$0x1] %v5404
      %v5406 = vld [vmem:[%s5300 + $0xb4] sm:$0xf]
      %v5407 = vsel %vm586, %v5241, %v5406
      %5408 = vst [vmem:[%s5300 + $0xb4] sm:$0xf] %v5407
      %5409 = vst.msk [vmem:[%s5300 + $0xb8] sm:$0xf] %vm172, %v5250
      %v5410 = vld [vmem:[%s5300 + $0xbc] sm:$0x1]
      %v5411 = vsel %vm592, %v5251, %v5410
      %5412 = vst [vmem:[%s5300 + $0xbc] sm:$0x1] %v5411
      %v5413 = vld [vmem:[#allocation3] sm:$0xf]
      %v5414 = vld [vmem:[#allocation3 + $0x4] sm:$0xf]
      %v5415 = vld [vmem:[#allocation3 + $0xc] sm:$0xf]
      %v5416 = vld [vmem:[#allocation3 + $0x10] sm:$0xf]
      %v5417 = vld [vmem:[#allocation3 + $0x18] sm:$0xf]
      %v5418 = vld [vmem:[#allocation3 + $0x1c] sm:$0xf]
      %v5419 = vld [vmem:[#allocation3 + $0x24] sm:$0xf]
      %v5420 = vld [vmem:[#allocation3 + $0x28] sm:$0xf]
      %v5421 = vld [vmem:[#allocation3 + $0x30] sm:$0xf]
      %v5422 = vld [vmem:[#allocation3 + $0x34] sm:$0xf]
      %v5423 = vld [vmem:[#allocation3 + $0x3c] sm:$0xf]
      %v5424 = vld [vmem:[#allocation3 + $0x40] sm:$0xf]
      %v5425 = vld [vmem:[#allocation3 + $0x48] sm:$0xf]
      %v5426 = vld [vmem:[#allocation3 + $0x4c] sm:$0xf]
      %v5427 = vld [vmem:[#allocation3 + $0x54] sm:$0xf]
      %v5428 = vld [vmem:[#allocation3 + $0x58] sm:$0xf]
      %v5429 = vld [vmem:[#allocation3 + $0x60] sm:$0xf]
      %v5430 = vld [vmem:[#allocation3 + $0x64] sm:$0xf]
      %v5431 = vld [vmem:[#allocation3 + $0x6c] sm:$0xf]
      %v5432 = vld [vmem:[#allocation3 + $0x70] sm:$0xf]
      %v5433 = vld [vmem:[#allocation3 + $0x78] sm:$0xf]
      %v5434 = vld [vmem:[#allocation3 + $0x7c] sm:$0xf]
      %v5435 = vld [vmem:[#allocation3 + $0x84] sm:$0xf]
      %v5436 = vld [vmem:[#allocation3 + $0x88] sm:$0xf]
      %v5437 = vld [vmem:[#allocation3 + $0x90] sm:$0xf]
      %v5438 = vld [vmem:[#allocation3 + $0x94] sm:$0xf]
      %v5439 = vld [vmem:[#allocation3 + $0x9c] sm:$0xf]
      %v5440 = vld [vmem:[#allocation3 + $0xa0] sm:$0xf]
      %v5441 = vld [vmem:[#allocation3 + $0xa8] sm:$0xf]
      %v5442 = vld [vmem:[#allocation3 + $0xac] sm:$0xf]
      %v5443 = vld [vmem:[#allocation3 + $0xb4] sm:$0xf]
      %v5444 = vld [vmem:[#allocation3 + $0xb8] sm:$0xf]
      %v5445 = vld [vmem:[%s2] sm:$0xf]
      %v5446 = vld [vmem:[%s2 + $0x4] sm:$0xf]
      %v5447 = vld [vmem:[%s2 + $0x8] sm:$0xf]
      %v5448 = vld [vmem:[%s2 + $0xc] sm:$0xf]
      %v5449 = vld [vmem:[%s2 + $0x10] sm:$0xf]
      %v5450 = vld [vmem:[%s2 + $0x14] sm:$0xf]
      %v5451 = vld [vmem:[%s2 + $0x18] sm:$0xf]
      %v5452 = vld [vmem:[%s2 + $0x1c] sm:$0xf]
      %v5453 = vld [vmem:[#allocation3 + $0x8] sm:$0x1]
      %v5454 = vld [vmem:[#allocation3 + $0x14] sm:$0x1]
      %v5455 = vld [vmem:[#allocation3 + $0x20] sm:$0x1]
      %v5456 = vld [vmem:[#allocation3 + $0x2c] sm:$0x1]
      %v5457 = vld [vmem:[#allocation3 + $0x38] sm:$0x1]
      %v5458 = vld [vmem:[#allocation3 + $0x44] sm:$0x1]
      %v5459 = vld [vmem:[#allocation3 + $0x50] sm:$0x1]
      %v5460 = vld [vmem:[#allocation3 + $0x5c] sm:$0x1]
      %v5461 = vld [vmem:[#allocation3 + $0x68] sm:$0x1]
      %v5462 = vld [vmem:[#allocation3 + $0x74] sm:$0x1]
      %v5463 = vld [vmem:[#allocation3 + $0x80] sm:$0x1]
      %v5464 = vld [vmem:[#allocation3 + $0x8c] sm:$0x1]
      %v5465 = vld [vmem:[#allocation3 + $0x98] sm:$0x1]
      %v5466 = vld [vmem:[#allocation3 + $0xa4] sm:$0x1]
      %v5467 = vld [vmem:[#allocation3 + $0xb0] sm:$0x1]
      %v5468 = vld [vmem:[#allocation3 + $0xbc] sm:$0x1]
      %v5470 = vshrl.u32 %v5413, 16
      %v5472 = vrot.slane %v5470, 4
      %v5473 = vshll.u32 %v5413, 16
      %v5475 = vrot.slane %v5473, 5
      %v5476 = vor.u32 %v5472, %v5475
      %v5477 = vrot.slane %v5476, 4
      %v5479 = vshll.u32 %v5414, 16
      %v5481 = vrot.slane %v5479, 5
      %v5482 = vsel %vm759, %v5477, %v5481
      %v5483 = vshrl.u32 %v5414, 16
      %v5485 = vrot.slane %v5483, 4
      %v5486 = vor.u32 %v5485, %v5481
      %v5487 = vrot.slane %v5486, 4
      %v5489 = vshll.u32 %v5453, 16
      %v5491 = vrot.slane %v5489, 5
      %v5492 = vsel %vm759, %v5487, %v5491
      %v5494 = vshrl.u32 %v5415, 16
      %v5496 = vrot.slane %v5494, 4
      %v5497 = vshll.u32 %v5415, 16
      %v5499 = vrot.slane %v5497, 5
      %v5500 = vor.u32 %v5496, %v5499
      %v5501 = vrot.slane %v5500, 4
      %v5503 = vshll.u32 %v5416, 16
      %v5505 = vrot.slane %v5503, 5
      %v5506 = vsel %vm759, %v5501, %v5505
      %v5507 = vshrl.u32 %v5416, 16
      %v5509 = vrot.slane %v5507, 4
      %v5510 = vor.u32 %v5509, %v5505
      %v5511 = vrot.slane %v5510, 4
      %v5513 = vshll.u32 %v5454, 16
      %v5515 = vrot.slane %v5513, 5
      %v5516 = vsel %vm759, %v5511, %v5515
      %v5518 = vshrl.u32 %v5417, 16
      %v5520 = vrot.slane %v5518, 4
      %v5521 = vshll.u32 %v5417, 16
      %v5523 = vrot.slane %v5521, 5
      %v5524 = vor.u32 %v5520, %v5523
      %v5525 = vrot.slane %v5524, 4
      %v5527 = vshll.u32 %v5418, 16
      %v5529 = vrot.slane %v5527, 5
      %v5530 = vsel %vm759, %v5525, %v5529
      %v5531 = vshrl.u32 %v5418, 16
      %v5533 = vrot.slane %v5531, 4
      %v5534 = vor.u32 %v5533, %v5529
      %v5535 = vrot.slane %v5534, 4
      %v5537 = vshll.u32 %v5455, 16
      %v5539 = vrot.slane %v5537, 5
      %v5540 = vsel %vm759, %v5535, %v5539
      %v5542 = vshrl.u32 %v5419, 16
      %v5544 = vrot.slane %v5542, 4
      %v5545 = vshll.u32 %v5419, 16
      %v5547 = vrot.slane %v5545, 5
      %v5548 = vor.u32 %v5544, %v5547
      %v5549 = vrot.slane %v5548, 4
      %v5551 = vshll.u32 %v5420, 16
      %v5553 = vrot.slane %v5551, 5
      %v5554 = vsel %vm759, %v5549, %v5553
      %v5555 = vshrl.u32 %v5420, 16
      %v5557 = vrot.slane %v5555, 4
      %v5558 = vor.u32 %v5557, %v5553
      %v5559 = vrot.slane %v5558, 4
      %v5561 = vshll.u32 %v5456, 16
      %v5563 = vrot.slane %v5561, 5
      %v5564 = vsel %vm759, %v5559, %v5563
      %v5566 = vshrl.u32 %v5421, 16
      %v5568 = vrot.slane %v5566, 4
      %v5569 = vshll.u32 %v5421, 16
      %v5571 = vrot.slane %v5569, 5
      %v5572 = vor.u32 %v5568, %v5571
      %v5573 = vrot.slane %v5572, 4
      %v5575 = vshll.u32 %v5422, 16
      %v5577 = vrot.slane %v5575, 5
      %v5578 = vsel %vm759, %v5573, %v5577
      %v5579 = vshrl.u32 %v5422, 16
      %v5581 = vrot.slane %v5579, 4
      %v5582 = vor.u32 %v5581, %v5577
      %v5583 = vrot.slane %v5582, 4
      %v5585 = vshll.u32 %v5457, 16
      %v5587 = vrot.slane %v5585, 5
      %v5588 = vsel %vm759, %v5583, %v5587
      %v5590 = vshrl.u32 %v5423, 16
      %v5592 = vrot.slane %v5590, 4
      %v5593 = vshll.u32 %v5423, 16
      %v5595 = vrot.slane %v5593, 5
      %v5596 = vor.u32 %v5592, %v5595
      %v5597 = vrot.slane %v5596, 4
      %v5599 = vshll.u32 %v5424, 16
      %v5601 = vrot.slane %v5599, 5
      %v5602 = vsel %vm759, %v5597, %v5601
      %v5603 = vshrl.u32 %v5424, 16
      %v5605 = vrot.slane %v5603, 4
      %v5606 = vor.u32 %v5605, %v5601
      %v5607 = vrot.slane %v5606, 4
      %v5609 = vshll.u32 %v5458, 16
      %v5611 = vrot.slane %v5609, 5
      %v5612 = vsel %vm759, %v5607, %v5611
      %v5614 = vshrl.u32 %v5425, 16
      %v5616 = vrot.slane %v5614, 4
      %v5617 = vshll.u32 %v5425, 16
      %v5619 = vrot.slane %v5617, 5
      %v5620 = vor.u32 %v5616, %v5619
      %v5621 = vrot.slane %v5620, 4
      %v5623 = vshll.u32 %v5426, 16
      %v5625 = vrot.slane %v5623, 5
      %v5626 = vsel %vm759, %v5621, %v5625
      %v5627 = vshrl.u32 %v5426, 16
      %v5629 = vrot.slane %v5627, 4
      %v5630 = vor.u32 %v5629, %v5625
      %v5631 = vrot.slane %v5630, 4
      %v5633 = vshll.u32 %v5459, 16
      %v5635 = vrot.slane %v5633, 5
      %v5636 = vsel %vm759, %v5631, %v5635
      %v5638 = vshrl.u32 %v5427, 16
      %v5640 = vrot.slane %v5638, 4
      %v5641 = vshll.u32 %v5427, 16
      %v5643 = vrot.slane %v5641, 5
      %v5644 = vor.u32 %v5640, %v5643
      %v5645 = vrot.slane %v5644, 4
      %v5647 = vshll.u32 %v5428, 16
      %v5649 = vrot.slane %v5647, 5
      %v5650 = vsel %vm759, %v5645, %v5649
      %v5651 = vshrl.u32 %v5428, 16
      %v5653 = vrot.slane %v5651, 4
      %v5654 = vor.u32 %v5653, %v5649
      %v5655 = vrot.slane %v5654, 4
      %v5657 = vshll.u32 %v5460, 16
      %v5659 = vrot.slane %v5657, 5
      %v5660 = vsel %vm759, %v5655, %v5659
      %v5662 = vshrl.u32 %v5429, 16
      %v5664 = vrot.slane %v5662, 4
      %v5665 = vshll.u32 %v5429, 16
      %v5667 = vrot.slane %v5665, 5
      %v5668 = vor.u32 %v5664, %v5667
      %v5669 = vrot.slane %v5668, 4
      %v5671 = vshll.u32 %v5430, 16
      %v5673 = vrot.slane %v5671, 5
      %v5674 = vsel %vm759, %v5669, %v5673
      %v5675 = vshrl.u32 %v5430, 16
      %v5677 = vrot.slane %v5675, 4
      %v5678 = vor.u32 %v5677, %v5673
      %v5679 = vrot.slane %v5678, 4
      %v5681 = vshll.u32 %v5461, 16
      %v5683 = vrot.slane %v5681, 5
      %v5684 = vsel %vm759, %v5679, %v5683
      %v5686 = vshrl.u32 %v5431, 16
      %v5688 = vrot.slane %v5686, 4
      %v5689 = vshll.u32 %v5431, 16
      %v5691 = vrot.slane %v5689, 5
      %v5692 = vor.u32 %v5688, %v5691
      %v5693 = vrot.slane %v5692, 4
      %v5695 = vshll.u32 %v5432, 16
      %v5697 = vrot.slane %v5695, 5
      %v5698 = vsel %vm759, %v5693, %v5697
      %v5699 = vshrl.u32 %v5432, 16
      %v5701 = vrot.slane %v5699, 4
      %v5702 = vor.u32 %v5701, %v5697
      %v5703 = vrot.slane %v5702, 4
      %v5705 = vshll.u32 %v5462, 16
      %v5707 = vrot.slane %v5705, 5
      %v5708 = vsel %vm759, %v5703, %v5707
      %v5710 = vshrl.u32 %v5433, 16
      %v5712 = vrot.slane %v5710, 4
      %v5713 = vshll.u32 %v5433, 16
      %v5715 = vrot.slane %v5713, 5
      %v5716 = vor.u32 %v5712, %v5715
      %v5717 = vrot.slane %v5716, 4
      %v5719 = vshll.u32 %v5434, 16
      %v5721 = vrot.slane %v5719, 5
      %v5722 = vsel %vm759, %v5717, %v5721
      %v5723 = vshrl.u32 %v5434, 16
      %v5725 = vrot.slane %v5723, 4
      %v5726 = vor.u32 %v5725, %v5721
      %v5727 = vrot.slane %v5726, 4
      %v5729 = vshll.u32 %v5463, 16
      %v5731 = vrot.slane %v5729, 5
      %v5732 = vsel %vm759, %v5727, %v5731
      %v5734 = vshrl.u32 %v5435, 16
      %v5736 = vrot.slane %v5734, 4
      %v5737 = vshll.u32 %v5435, 16
      %v5739 = vrot.slane %v5737, 5
      %v5740 = vor.u32 %v5736, %v5739
      %v5741 = vrot.slane %v5740, 4
      %v5743 = vshll.u32 %v5436, 16
      %v5745 = vrot.slane %v5743, 5
      %v5746 = vsel %vm759, %v5741, %v5745
      %v5747 = vshrl.u32 %v5436, 16
      %v5749 = vrot.slane %v5747, 4
      %v5750 = vor.u32 %v5749, %v5745
      %v5751 = vrot.slane %v5750, 4
      %v5753 = vshll.u32 %v5464, 16
      %v5755 = vrot.slane %v5753, 5
      %v5756 = vsel %vm759, %v5751, %v5755
      %v5758 = vshrl.u32 %v5437, 16
      %v5760 = vrot.slane %v5758, 4
      %v5761 = vshll.u32 %v5437, 16
      %v5763 = vrot.slane %v5761, 5
      %v5764 = vor.u32 %v5760, %v5763
      %v5765 = vrot.slane %v5764, 4
      %v5767 = vshll.u32 %v5438, 16
      %v5769 = vrot.slane %v5767, 5
      %v5770 = vsel %vm759, %v5765, %v5769
      %v5771 = vshrl.u32 %v5438, 16
      %v5773 = vrot.slane %v5771, 4
      %v5774 = vor.u32 %v5773, %v5769
      %v5775 = vrot.slane %v5774, 4
      %v5777 = vshll.u32 %v5465, 16
      %v5779 = vrot.slane %v5777, 5
      %v5780 = vsel %vm759, %v5775, %v5779
      %v5782 = vshrl.u32 %v5439, 16
      %v5784 = vrot.slane %v5782, 4
      %v5785 = vshll.u32 %v5439, 16
      %v5787 = vrot.slane %v5785, 5
      %v5788 = vor.u32 %v5784, %v5787
      %v5789 = vrot.slane %v5788, 4
      %v5791 = vshll.u32 %v5440, 16
      %v5793 = vrot.slane %v5791, 5
      %v5794 = vsel %vm759, %v5789, %v5793
      %v5795 = vshrl.u32 %v5440, 16
      %v5797 = vrot.slane %v5795, 4
      %v5798 = vor.u32 %v5797, %v5793
      %v5799 = vrot.slane %v5798, 4
      %v5801 = vshll.u32 %v5466, 16
      %v5803 = vrot.slane %v5801, 5
      %v5804 = vsel %vm759, %v5799, %v5803
      %v5806 = vshrl.u32 %v5441, 16
      %v5808 = vrot.slane %v5806, 4
      %v5809 = vshll.u32 %v5441, 16
      %v5811 = vrot.slane %v5809, 5
      %v5812 = vor.u32 %v5808, %v5811
      %v5813 = vrot.slane %v5812, 4
      %v5815 = vshll.u32 %v5442, 16
      %v5817 = vrot.slane %v5815, 5
      %v5818 = vsel %vm759, %v5813, %v5817
      %v5819 = vshrl.u32 %v5442, 16
      %v5821 = vrot.slane %v5819, 4
      %v5822 = vor.u32 %v5821, %v5817
      %v5823 = vrot.slane %v5822, 4
      %v5825 = vshll.u32 %v5467, 16
      %v5827 = vrot.slane %v5825, 5
      %v5828 = vsel %vm759, %v5823, %v5827
      %v5830 = vshrl.u32 %v5443, 16
      %v5832 = vrot.slane %v5830, 4
      %v5833 = vshll.u32 %v5443, 16
      %v5835 = vrot.slane %v5833, 5
      %v5836 = vor.u32 %v5832, %v5835
      %v5837 = vrot.slane %v5836, 4
      %v5839 = vshll.u32 %v5444, 16
      %v5841 = vrot.slane %v5839, 5
      %v5842 = vsel %vm759, %v5837, %v5841
      %v5843 = vshrl.u32 %v5444, 16
      %v5845 = vrot.slane %v5843, 4
      %v5846 = vor.u32 %v5845, %v5841
      %v5847 = vrot.slane %v5846, 4
      %v5849 = vshll.u32 %v5468, 16
      %v5851 = vrot.slane %v5849, 5
      %v5852 = vsel %vm759, %v5847, %v5851
      %s5853 = scalar_lea.vmem %s2, 32
      %v5854 = vld [vmem:[%s5853] sm:$0xf]
      %v5855 = vld [vmem:[%s5853 + $0x4] sm:$0xf]
      %v5856 = vld [vmem:[%s5853 + $0x8] sm:$0xf]
      %v5857 = vld [vmem:[%s5853 + $0xc] sm:$0xf]
      %v5858 = vld [vmem:[%s5853 + $0x10] sm:$0xf]
      %v5859 = vld [vmem:[%s5853 + $0x14] sm:$0xf]
      %v5860 = vld [vmem:[%s5853 + $0x18] sm:$0xf]
      %v5861 = vld [vmem:[%s5853 + $0x1c] sm:$0xf]
      %v5862 = vunpack.c.l.b16 %v5482
      %v5863 = vunpack.c.l.b16 %v5492
      %v5864 = vunpack.c.l.b16 %v5506
      %v5865 = vunpack.c.l.b16 %v5516
      %v5866 = vunpack.c.l.b16 %v5530
      %v5867 = vunpack.c.l.b16 %v5540
      %v5868 = vunpack.c.l.b16 %v5554
      %v5869 = vunpack.c.l.b16 %v5564
      %v5870 = vunpack.c.l.b16 %v5578
      %v5871 = vunpack.c.l.b16 %v5588
      %v5872 = vunpack.c.l.b16 %v5602
      %v5873 = vunpack.c.l.b16 %v5612
      %v5874 = vunpack.c.l.b16 %v5626
      %v5875 = vunpack.c.l.b16 %v5636
      %v5876 = vunpack.c.l.b16 %v5650
      %v5877 = vunpack.c.l.b16 %v5660
      %v5878 = vunpack.c.l.b16 %v5674
      %v5879 = vunpack.c.l.b16 %v5684
      %v5880 = vunpack.c.l.b16 %v5698
      %v5881 = vunpack.c.l.b16 %v5708
      %v5882 = vunpack.c.l.b16 %v5722
      %v5883 = vunpack.c.l.b16 %v5732
      %v5884 = vunpack.c.l.b16 %v5746
      %v5885 = vunpack.c.l.b16 %v5756
      %v5886 = vunpack.c.l.b16 %v5770
      %v5887 = vunpack.c.l.b16 %v5780
      %v5888 = vunpack.c.l.b16 %v5794
      %v5889 = vunpack.c.l.b16 %v5804
      %v5890 = vunpack.c.l.b16 %v5818
      %v5891 = vunpack.c.l.b16 %v5828
      %v5892 = vunpack.c.l.b16 %v5842
      %v5893 = vunpack.c.l.b16 %v5852
      %v5894 = vpack.c.b16 %v5863, %v5862
      %v5895 = vpack.c.b16 %v5865, %v5864
      %v5896 = vpack.c.b16 %v5867, %v5866
      %v5897 = vpack.c.b16 %v5869, %v5868
      %v5898 = vpack.c.b16 %v5871, %v5870
      %v5899 = vpack.c.b16 %v5873, %v5872
      %v5900 = vpack.c.b16 %v5875, %v5874
      %v5901 = vpack.c.b16 %v5877, %v5876
      %v5902 = vpack.c.b16 %v5879, %v5878
      %v5903 = vpack.c.b16 %v5881, %v5880
      %v5904 = vpack.c.b16 %v5883, %v5882
      %v5905 = vpack.c.b16 %v5885, %v5884
      %v5906 = vpack.c.b16 %v5887, %v5886
      %v5907 = vpack.c.b16 %v5889, %v5888
      %v5908 = vpack.c.b16 %v5891, %v5890
      %v5909 = vpack.c.b16 %v5893, %v5892
      %v5918 = vunpack.c.l.b16 %v5854
      %v5919 = vunpack.c.l.b16 %v5855
      %v5920 = vunpack.c.l.b16 %v5856
      %v5921 = vunpack.c.l.b16 %v5857
      %v5922 = vunpack.c.l.b16 %v5858
      %v5923 = vunpack.c.l.b16 %v5859
      %v5924 = vunpack.c.l.b16 %v5860
      %v5925 = vunpack.c.l.b16 %v5861
      %v5926 = vpack.c.b16 %v5919, %v5918
      %v5927 = vpack.c.b16 %v5921, %v5920
      %v5928 = vpack.c.b16 %v5923, %v5922
      %v5929 = vpack.c.b16 %v5925, %v5924
      %v5935 = vsel %vm1225, %v5894, 0
      %v5938 = vsel %vm1225, %v5895, 0
      %v5941 = vsel %vm1225, %v5896, 0
      %v5944 = vsel %vm1225, %v5897, 0
      %v5947 = vsel %vm1225, %v5898, 0
      %v5950 = vsel %vm1225, %v5899, 0
      %v5953 = vsel %vm1225, %v5900, 0
      %v5956 = vsel %vm1225, %v5901, 0
      %v5959 = vsel %vm1225, %v5902, 0
      %v5962 = vsel %vm1225, %v5903, 0
      %v5965 = vsel %vm1225, %v5904, 0
      %v5968 = vsel %vm1225, %v5905, 0
      %v5971 = vsel %vm1225, %v5906, 0
      %v5974 = vsel %vm1225, %v5907, 0
      %v5977 = vsel %vm1225, %v5908, 0
      %v5980 = vsel %vm1225, %v5909, 0
      %5982 = vmatpush.bf16.msra.mxu0 0
      %5983 = vmatpush.bf16.msra.mxu0 0
      %5984 = vmatpush.bf16.msra.mxu0 0
      %5985 = vmatpush.bf16.msra.mxu0 0
      %5986 = vmatpush.bf16.msra.mxu0 %v5929
      %5987 = vmatpush.bf16.msra.mxu0 %v5928
      %5988 = vmatpush.bf16.msra.mxu0 %v5927
      %5989 = vmatpush.bf16.msra.mxu0 %v5926
      %5990 = vmatmul.bf16.gmra.mxu0 %v5935
      %v5991 = vpop.f32.mrf.mxu0
      %v5992 = vadd.f32 0.0, %v5991
      %v5993 = vpop.f32.mrf.mxu0
      %v5994 = vadd.f32 0.0, %v5993
      %5995 = vmatmul.bf16.gmra.mxu0 %v5938
      %v5996 = vpop.f32.mrf.mxu0
      %v5997 = vadd.f32 0.0, %v5996
      %v5998 = vpop.f32.mrf.mxu0
      %v5999 = vadd.f32 0.0, %v5998
      %6000 = vmatmul.bf16.gmra.mxu0 %v5941
      %v6001 = vpop.f32.mrf.mxu0
      %v6002 = vadd.f32 0.0, %v6001
      %v6003 = vpop.f32.mrf.mxu0
      %v6004 = vadd.f32 0.0, %v6003
      %6005 = vmatmul.bf16.gmra.mxu0 %v5944
      %v6006 = vpop.f32.mrf.mxu0
      %v6007 = vadd.f32 0.0, %v6006
      %v6008 = vpop.f32.mrf.mxu0
      %v6009 = vadd.f32 0.0, %v6008
      %6010 = vmatmul.bf16.gmra.mxu0 %v5947
      %v6011 = vpop.f32.mrf.mxu0
      %v6012 = vadd.f32 0.0, %v6011
      %v6013 = vpop.f32.mrf.mxu0
      %v6014 = vadd.f32 0.0, %v6013
      %6015 = vmatmul.bf16.gmra.mxu0 %v5950
      %v6016 = vpop.f32.mrf.mxu0
      %v6017 = vadd.f32 0.0, %v6016
      %v6018 = vpop.f32.mrf.mxu0
      %v6019 = vadd.f32 0.0, %v6018
      %6020 = vmatmul.bf16.gmra.mxu0 %v5953
      %v6021 = vpop.f32.mrf.mxu0
      %v6022 = vadd.f32 0.0, %v6021
      %v6023 = vpop.f32.mrf.mxu0
      %v6024 = vadd.f32 0.0, %v6023
      %6025 = vmatmul.bf16.gmra.mxu0 %v5956
      %v6026 = vpop.f32.mrf.mxu0
      %v6027 = vadd.f32 0.0, %v6026
      %v6028 = vpop.f32.mrf.mxu0
      %v6029 = vadd.f32 0.0, %v6028
      %6030 = vmatmul.bf16.gmra.mxu0 %v5959
      %v6031 = vpop.f32.mrf.mxu0
      %v6032 = vadd.f32 0.0, %v6031
      %v6033 = vpop.f32.mrf.mxu0
      %v6034 = vadd.f32 0.0, %v6033
      %6035 = vmatmul.bf16.gmra.mxu0 %v5962
      %v6036 = vpop.f32.mrf.mxu0
      %v6037 = vadd.f32 0.0, %v6036
      %v6038 = vpop.f32.mrf.mxu0
      %v6039 = vadd.f32 0.0, %v6038
      %6040 = vmatmul.bf16.gmra.mxu0 %v5965
      %v6041 = vpop.f32.mrf.mxu0
      %v6042 = vadd.f32 0.0, %v6041
      %v6043 = vpop.f32.mrf.mxu0
      %v6044 = vadd.f32 0.0, %v6043
      %6045 = vmatmul.bf16.gmra.mxu0 %v5968
      %v6046 = vpop.f32.mrf.mxu0
      %v6047 = vadd.f32 0.0, %v6046
      %v6048 = vpop.f32.mrf.mxu0
      %v6049 = vadd.f32 0.0, %v6048
      %6050 = vmatmul.bf16.gmra.mxu0 %v5971
      %v6051 = vpop.f32.mrf.mxu0
      %v6052 = vadd.f32 0.0, %v6051
      %v6053 = vpop.f32.mrf.mxu0
      %v6054 = vadd.f32 0.0, %v6053
      %6055 = vmatmul.bf16.gmra.mxu0 %v5974
      %v6056 = vpop.f32.mrf.mxu0
      %v6057 = vadd.f32 0.0, %v6056
      %v6058 = vpop.f32.mrf.mxu0
      %v6059 = vadd.f32 0.0, %v6058
      %6060 = vmatmul.bf16.gmra.mxu0 %v5977
      %v6061 = vpop.f32.mrf.mxu0
      %v6062 = vadd.f32 0.0, %v6061
      %v6063 = vpop.f32.mrf.mxu0
      %v6064 = vadd.f32 0.0, %v6063
      %6065 = vmatmul.bf16.gmra.mxu0 %v5980
      %v6066 = vpop.f32.mrf.mxu0
      %v6067 = vadd.f32 0.0, %v6066
      %v6068 = vpop.f32.mrf.mxu0
      %v6069 = vadd.f32 0.0, %v6068
      %6070 = vdwg.mxu0
      %v6103 = vunpack.c.l.b16 %v5413
      %v6104 = vunpack.c.l.b16 %v5414
      %v6105 = vunpack.c.l.b16 %v5415
      %v6106 = vunpack.c.l.b16 %v5416
      %v6107 = vunpack.c.l.b16 %v5417
      %v6108 = vunpack.c.l.b16 %v5418
      %v6109 = vunpack.c.l.b16 %v5419
      %v6110 = vunpack.c.l.b16 %v5420
      %v6111 = vunpack.c.l.b16 %v5421
      %v6112 = vunpack.c.l.b16 %v5422
      %v6113 = vunpack.c.l.b16 %v5423
      %v6114 = vunpack.c.l.b16 %v5424
      %v6115 = vunpack.c.l.b16 %v5425
      %v6116 = vunpack.c.l.b16 %v5426
      %v6117 = vunpack.c.l.b16 %v5427
      %v6118 = vunpack.c.l.b16 %v5428
      %v6119 = vunpack.c.l.b16 %v5429
      %v6120 = vunpack.c.l.b16 %v5430
      %v6121 = vunpack.c.l.b16 %v5431
      %v6122 = vunpack.c.l.b16 %v5432
      %v6123 = vunpack.c.l.b16 %v5433
      %v6124 = vunpack.c.l.b16 %v5434
      %v6125 = vunpack.c.l.b16 %v5435
      %v6126 = vunpack.c.l.b16 %v5436
      %v6127 = vunpack.c.l.b16 %v5437
      %v6128 = vunpack.c.l.b16 %v5438
      %v6129 = vunpack.c.l.b16 %v5439
      %v6130 = vunpack.c.l.b16 %v5440
      %v6131 = vunpack.c.l.b16 %v5441
      %v6132 = vunpack.c.l.b16 %v5442
      %v6133 = vunpack.c.l.b16 %v5443
      %v6134 = vunpack.c.l.b16 %v5444
      %v6135 = vpack.c.b16 %v6104, %v6103
      %v6136 = vpack.c.b16 %v6106, %v6105
      %v6137 = vpack.c.b16 %v6108, %v6107
      %v6138 = vpack.c.b16 %v6110, %v6109
      %v6139 = vpack.c.b16 %v6112, %v6111
      %v6140 = vpack.c.b16 %v6114, %v6113
      %v6141 = vpack.c.b16 %v6116, %v6115
      %v6142 = vpack.c.b16 %v6118, %v6117
      %v6143 = vpack.c.b16 %v6120, %v6119
      %v6144 = vpack.c.b16 %v6122, %v6121
      %v6145 = vpack.c.b16 %v6124, %v6123
      %v6146 = vpack.c.b16 %v6126, %v6125
      %v6147 = vpack.c.b16 %v6128, %v6127
      %v6148 = vpack.c.b16 %v6130, %v6129
      %v6149 = vpack.c.b16 %v6132, %v6131
      %v6150 = vpack.c.b16 %v6134, %v6133
      %v6159 = vunpack.c.l.b16 %v5445
      %v6160 = vunpack.c.l.b16 %v5446
      %v6161 = vunpack.c.l.b16 %v5447
      %v6162 = vunpack.c.l.b16 %v5448
      %v6163 = vunpack.c.l.b16 %v5449
      %v6164 = vunpack.c.l.b16 %v5450
      %v6165 = vunpack.c.l.b16 %v5451
      %v6166 = vunpack.c.l.b16 %v5452
      %v6167 = vpack.c.b16 %v6160, %v6159
      %v6168 = vpack.c.b16 %v6162, %v6161
      %v6169 = vpack.c.b16 %v6164, %v6163
      %v6170 = vpack.c.b16 %v6166, %v6165
      %v6176 = vsel %vm1225, %v6135, 0
      %v6179 = vsel %vm1225, %v6136, 0
      %v6182 = vsel %vm1225, %v6137, 0
      %v6185 = vsel %vm1225, %v6138, 0
      %v6188 = vsel %vm1225, %v6139, 0
      %v6191 = vsel %vm1225, %v6140, 0
      %v6194 = vsel %vm1225, %v6141, 0
      %v6197 = vsel %vm1225, %v6142, 0
      %v6200 = vsel %vm1225, %v6143, 0
      %v6203 = vsel %vm1225, %v6144, 0
      %v6206 = vsel %vm1225, %v6145, 0
      %v6209 = vsel %vm1225, %v6146, 0
      %v6212 = vsel %vm1225, %v6147, 0
      %v6215 = vsel %vm1225, %v6148, 0
      %v6218 = vsel %vm1225, %v6149, 0
      %v6221 = vsel %vm1225, %v6150, 0
      %6223 = vmatpush.bf16.msra.mxu0 0
      %6224 = vmatpush.bf16.msra.mxu0 0
      %6225 = vmatpush.bf16.msra.mxu0 0
      %6226 = vmatpush.bf16.msra.mxu0 0
      %6227 = vmatpush.bf16.msra.mxu0 %v6170
      %6228 = vmatpush.bf16.msra.mxu0 %v6169
      %6229 = vmatpush.bf16.msra.mxu0 %v6168
      %6230 = vmatpush.bf16.msra.mxu0 %v6167
      %6231 = vmatmul.bf16.gmra.mxu0 %v6176
      %v6232 = vpop.f32.mrf.mxu0
      %v6233 = vadd.f32 %v5992, %v6232
      %v6234 = vpop.f32.mrf.mxu0
      %v6235 = vadd.f32 %v5994, %v6234
      %6236 = vmatmul.bf16.gmra.mxu0 %v6179
      %v6237 = vpop.f32.mrf.mxu0
      %v6238 = vadd.f32 %v5997, %v6237
      %v6239 = vpop.f32.mrf.mxu0
      %v6240 = vadd.f32 %v5999, %v6239
      %6241 = vmatmul.bf16.gmra.mxu0 %v6182
      %v6242 = vpop.f32.mrf.mxu0
      %v6243 = vadd.f32 %v6002, %v6242
      %v6244 = vpop.f32.mrf.mxu0
      %v6245 = vadd.f32 %v6004, %v6244
      %6246 = vmatmul.bf16.gmra.mxu0 %v6185
      %v6247 = vpop.f32.mrf.mxu0
      %v6248 = vadd.f32 %v6007, %v6247
      %v6249 = vpop.f32.mrf.mxu0
      %v6250 = vadd.f32 %v6009, %v6249
      %6251 = vmatmul.bf16.gmra.mxu0 %v6188
      %v6252 = vpop.f32.mrf.mxu0
      %v6253 = vadd.f32 %v6012, %v6252
      %v6254 = vpop.f32.mrf.mxu0
      %v6255 = vadd.f32 %v6014, %v6254
      %6256 = vmatmul.bf16.gmra.mxu0 %v6191
      %v6257 = vpop.f32.mrf.mxu0
      %v6258 = vadd.f32 %v6017, %v6257
      %v6259 = vpop.f32.mrf.mxu0
      %v6260 = vadd.f32 %v6019, %v6259
      %6261 = vmatmul.bf16.gmra.mxu0 %v6194
      %v6262 = vpop.f32.mrf.mxu0
      %v6263 = vadd.f32 %v6022, %v6262
      %v6264 = vpop.f32.mrf.mxu0
      %v6265 = vadd.f32 %v6024, %v6264
      %6266 = vmatmul.bf16.gmra.mxu0 %v6197
      %v6267 = vpop.f32.mrf.mxu0
      %v6268 = vadd.f32 %v6027, %v6267
      %v6269 = vpop.f32.mrf.mxu0
      %v6270 = vadd.f32 %v6029, %v6269
      %6271 = vmatmul.bf16.gmra.mxu0 %v6200
      %v6272 = vpop.f32.mrf.mxu0
      %v6273 = vadd.f32 %v6032, %v6272
      %v6274 = vpop.f32.mrf.mxu0
      %v6275 = vadd.f32 %v6034, %v6274
      %6276 = vmatmul.bf16.gmra.mxu0 %v6203
      %v6277 = vpop.f32.mrf.mxu0
      %v6278 = vadd.f32 %v6037, %v6277
      %v6279 = vpop.f32.mrf.mxu0
      %v6280 = vadd.f32 %v6039, %v6279
      %6281 = vmatmul.bf16.gmra.mxu0 %v6206
      %v6282 = vpop.f32.mrf.mxu0
      %v6283 = vadd.f32 %v6042, %v6282
      %v6284 = vpop.f32.mrf.mxu0
      %v6285 = vadd.f32 %v6044, %v6284
      %6286 = vmatmul.bf16.gmra.mxu0 %v6209
      %v6287 = vpop.f32.mrf.mxu0
      %v6288 = vadd.f32 %v6047, %v6287
      %v6289 = vpop.f32.mrf.mxu0
      %v6290 = vadd.f32 %v6049, %v6289
      %6291 = vmatmul.bf16.gmra.mxu0 %v6212
      %v6292 = vpop.f32.mrf.mxu0
      %v6293 = vadd.f32 %v6052, %v6292
      %v6294 = vpop.f32.mrf.mxu0
      %v6295 = vadd.f32 %v6054, %v6294
      %6296 = vmatmul.bf16.gmra.mxu0 %v6215
      %v6297 = vpop.f32.mrf.mxu0
      %v6298 = vadd.f32 %v6057, %v6297
      %v6299 = vpop.f32.mrf.mxu0
      %v6300 = vadd.f32 %v6059, %v6299
      %6301 = vmatmul.bf16.gmra.mxu0 %v6218
      %v6302 = vpop.f32.mrf.mxu0
      %v6303 = vadd.f32 %v6062, %v6302
      %v6304 = vpop.f32.mrf.mxu0
      %v6305 = vadd.f32 %v6064, %v6304
      %6306 = vmatmul.bf16.gmra.mxu0 %v6221
      %v6307 = vpop.f32.mrf.mxu0
      %v6308 = vadd.f32 %v6067, %v6307
      %v6309 = vpop.f32.mrf.mxu0
      %v6310 = vadd.f32 %v6069, %v6309
      %6311 = vdwg.mxu0
      %v6312 = vld [vmem:[#allocation3] sm:$0xe]
      %v6313 = vld [vmem:[#allocation3 + $0xc] sm:$0xe]
      %v6314 = vld [vmem:[#allocation3 + $0x18] sm:$0xe]
      %v6315 = vld [vmem:[#allocation3 + $0x24] sm:$0xe]
      %v6316 = vld [vmem:[#allocation3 + $0x30] sm:$0xe]
      %v6317 = vld [vmem:[#allocation3 + $0x3c] sm:$0xe]
      %v6318 = vld [vmem:[#allocation3 + $0x48] sm:$0xe]
      %v6319 = vld [vmem:[#allocation3 + $0x54] sm:$0xe]
      %v6320 = vld [vmem:[#allocation3 + $0x60] sm:$0xe]
      %v6321 = vld [vmem:[#allocation3 + $0x6c] sm:$0xe]
      %v6322 = vld [vmem:[#allocation3 + $0x78] sm:$0xe]
      %v6323 = vld [vmem:[#allocation3 + $0x84] sm:$0xe]
      %v6324 = vld [vmem:[#allocation3 + $0x90] sm:$0xe]
      %v6325 = vld [vmem:[#allocation3 + $0x9c] sm:$0xe]
      %v6326 = vld [vmem:[#allocation3 + $0xa8] sm:$0xe]
      %v6327 = vld [vmem:[#allocation3 + $0xb4] sm:$0xe]
      %v6360 = vrot.slane %v6312, 5
      %v6361 = vrot.slane %v6360, 4
      %v6362 = vrot.slane %v5414, 5
      %v6363 = vsel %vm1654, %v6361, %v6362
      %v6364 = vrot.slane %v6362, 4
      %v6365 = vrot.slane %v5453, 5
      %v6366 = vsel %vm1654, %v6364, %v6365
      %v6367 = vrot.slane %v6313, 5
      %v6368 = vrot.slane %v6367, 4
      %v6369 = vrot.slane %v5416, 5
      %v6370 = vsel %vm1654, %v6368, %v6369
      %v6371 = vrot.slane %v6369, 4
      %v6372 = vrot.slane %v5454, 5
      %v6373 = vsel %vm1654, %v6371, %v6372
      %v6374 = vrot.slane %v6314, 5
      %v6375 = vrot.slane %v6374, 4
      %v6376 = vrot.slane %v5418, 5
      %v6377 = vsel %vm1654, %v6375, %v6376
      %v6378 = vrot.slane %v6376, 4
      %v6379 = vrot.slane %v5455, 5
      %v6380 = vsel %vm1654, %v6378, %v6379
      %v6381 = vrot.slane %v6315, 5
      %v6382 = vrot.slane %v6381, 4
      %v6383 = vrot.slane %v5420, 5
      %v6384 = vsel %vm1654, %v6382, %v6383
      %v6385 = vrot.slane %v6383, 4
      %v6386 = vrot.slane %v5456, 5
      %v6387 = vsel %vm1654, %v6385, %v6386
      %v6388 = vrot.slane %v6316, 5
      %v6389 = vrot.slane %v6388, 4
      %v6390 = vrot.slane %v5422, 5
      %v6391 = vsel %vm1654, %v6389, %v6390
      %v6392 = vrot.slane %v6390, 4
      %v6393 = vrot.slane %v5457, 5
      %v6394 = vsel %vm1654, %v6392, %v6393
      %v6395 = vrot.slane %v6317, 5
      %v6396 = vrot.slane %v6395, 4
      %v6397 = vrot.slane %v5424, 5
      %v6398 = vsel %vm1654, %v6396, %v6397
      %v6399 = vrot.slane %v6397, 4
      %v6400 = vrot.slane %v5458, 5
      %v6401 = vsel %vm1654, %v6399, %v6400
      %v6402 = vrot.slane %v6318, 5
      %v6403 = vrot.slane %v6402, 4
      %v6404 = vrot.slane %v5426, 5
      %v6405 = vsel %vm1654, %v6403, %v6404
      %v6406 = vrot.slane %v6404, 4
      %v6407 = vrot.slane %v5459, 5
      %v6408 = vsel %vm1654, %v6406, %v6407
      %v6409 = vrot.slane %v6319, 5
      %v6410 = vrot.slane %v6409, 4
      %v6411 = vrot.slane %v5428, 5
      %v6412 = vsel %vm1654, %v6410, %v6411
      %v6413 = vrot.slane %v6411, 4
      %v6414 = vrot.slane %v5460, 5
      %v6415 = vsel %vm1654, %v6413, %v6414
      %v6416 = vrot.slane %v6320, 5
      %v6417 = vrot.slane %v6416, 4
      %v6418 = vrot.slane %v5430, 5
      %v6419 = vsel %vm1654, %v6417, %v6418
      %v6420 = vrot.slane %v6418, 4
      %v6421 = vrot.slane %v5461, 5
      %v6422 = vsel %vm1654, %v6420, %v6421
      %v6423 = vrot.slane %v6321, 5
      %v6424 = vrot.slane %v6423, 4
      %v6425 = vrot.slane %v5432, 5
      %v6426 = vsel %vm1654, %v6424, %v6425
      %v6427 = vrot.slane %v6425, 4
      %v6428 = vrot.slane %v5462, 5
      %v6429 = vsel %vm1654, %v6427, %v6428
      %v6430 = vrot.slane %v6322, 5
      %v6431 = vrot.slane %v6430, 4
      %v6432 = vrot.slane %v5434, 5
      %v6433 = vsel %vm1654, %v6431, %v6432
      %v6434 = vrot.slane %v6432, 4
      %v6435 = vrot.slane %v5463, 5
      %v6436 = vsel %vm1654, %v6434, %v6435
      %v6437 = vrot.slane %v6323, 5
      %v6438 = vrot.slane %v6437, 4
      %v6439 = vrot.slane %v5436, 5
      %v6440 = vsel %vm1654, %v6438, %v6439
      %v6441 = vrot.slane %v6439, 4
      %v6442 = vrot.slane %v5464, 5
      %v6443 = vsel %vm1654, %v6441, %v6442
      %v6444 = vrot.slane %v6324, 5
      %v6445 = vrot.slane %v6444, 4
      %v6446 = vrot.slane %v5438, 5
      %v6447 = vsel %vm1654, %v6445, %v6446
      %v6448 = vrot.slane %v6446, 4
      %v6449 = vrot.slane %v5465, 5
      %v6450 = vsel %vm1654, %v6448, %v6449
      %v6451 = vrot.slane %v6325, 5
      %v6452 = vrot.slane %v6451, 4
      %v6453 = vrot.slane %v5440, 5
      %v6454 = vsel %vm1654, %v6452, %v6453
      %v6455 = vrot.slane %v6453, 4
      %v6456 = vrot.slane %v5466, 5
      %v6457 = vsel %vm1654, %v6455, %v6456
      %v6458 = vrot.slane %v6326, 5
      %v6459 = vrot.slane %v6458, 4
      %v6460 = vrot.slane %v5442, 5
      %v6461 = vsel %vm1654, %v6459, %v6460
      %v6462 = vrot.slane %v6460, 4
      %v6463 = vrot.slane %v5467, 5
      %v6464 = vsel %vm1654, %v6462, %v6463
      %v6465 = vrot.slane %v6327, 5
      %v6466 = vrot.slane %v6465, 4
      %v6467 = vrot.slane %v5444, 5
      %v6468 = vsel %vm1654, %v6466, %v6467
      %v6469 = vrot.slane %v6467, 4
      %v6470 = vrot.slane %v5468, 5
      %v6471 = vsel %vm1654, %v6469, %v6470
      %s6472 = scalar_lea.vmem %s2, 64
      %v6473 = vld [vmem:[%s6472] sm:$0xf]
      %v6474 = vld [vmem:[%s6472 + $0x4] sm:$0xf]
      %v6475 = vld [vmem:[%s6472 + $0x8] sm:$0xf]
      %v6476 = vld [vmem:[%s6472 + $0xc] sm:$0xf]
      %v6477 = vld [vmem:[%s6472 + $0x10] sm:$0xf]
      %v6478 = vld [vmem:[%s6472 + $0x14] sm:$0xf]
      %v6479 = vld [vmem:[%s6472 + $0x18] sm:$0xf]
      %v6480 = vld [vmem:[%s6472 + $0x1c] sm:$0xf]
      %v6481 = vunpack.c.l.b16 %v6363
      %v6482 = vunpack.c.l.b16 %v6366
      %v6483 = vunpack.c.l.b16 %v6370
      %v6484 = vunpack.c.l.b16 %v6373
      %v6485 = vunpack.c.l.b16 %v6377
      %v6486 = vunpack.c.l.b16 %v6380
      %v6487 = vunpack.c.l.b16 %v6384
      %v6488 = vunpack.c.l.b16 %v6387
      %v6489 = vunpack.c.l.b16 %v6391
      %v6490 = vunpack.c.l.b16 %v6394
      %v6491 = vunpack.c.l.b16 %v6398
      %v6492 = vunpack.c.l.b16 %v6401
      %v6493 = vunpack.c.l.b16 %v6405
      %v6494 = vunpack.c.l.b16 %v6408
      %v6495 = vunpack.c.l.b16 %v6412
      %v6496 = vunpack.c.l.b16 %v6415
      %v6497 = vunpack.c.l.b16 %v6419
      %v6498 = vunpack.c.l.b16 %v6422
      %v6499 = vunpack.c.l.b16 %v6426
      %v6500 = vunpack.c.l.b16 %v6429
      %v6501 = vunpack.c.l.b16 %v6433
      %v6502 = vunpack.c.l.b16 %v6436
      %v6503 = vunpack.c.l.b16 %v6440
      %v6504 = vunpack.c.l.b16 %v6443
      %v6505 = vunpack.c.l.b16 %v6447
      %v6506 = vunpack.c.l.b16 %v6450
      %v6507 = vunpack.c.l.b16 %v6454
      %v6508 = vunpack.c.l.b16 %v6457
      %v6509 = vunpack.c.l.b16 %v6461
      %v6510 = vunpack.c.l.b16 %v6464
      %v6511 = vunpack.c.l.b16 %v6468
      %v6512 = vunpack.c.l.b16 %v6471
      %v6513 = vpack.c.b16 %v6482, %v6481
      %v6514 = vpack.c.b16 %v6484, %v6483
      %v6515 = vpack.c.b16 %v6486, %v6485
      %v6516 = vpack.c.b16 %v6488, %v6487
      %v6517 = vpack.c.b16 %v6490, %v6489
      %v6518 = vpack.c.b16 %v6492, %v6491
      %v6519 = vpack.c.b16 %v6494, %v6493
      %v6520 = vpack.c.b16 %v6496, %v6495
      %v6521 = vpack.c.b16 %v6498, %v6497
      %v6522 = vpack.c.b16 %v6500, %v6499
      %v6523 = vpack.c.b16 %v6502, %v6501
      %v6524 = vpack.c.b16 %v6504, %v6503
      %v6525 = vpack.c.b16 %v6506, %v6505
      %v6526 = vpack.c.b16 %v6508, %v6507
      %v6527 = vpack.c.b16 %v6510, %v6509
      %v6528 = vpack.c.b16 %v6512, %v6511
      %v6537 = vunpack.c.l.b16 %v6473
      %v6538 = vunpack.c.l.b16 %v6474
      %v6539 = vunpack.c.l.b16 %v6475
      %v6540 = vunpack.c.l.b16 %v6476
      %v6541 = vunpack.c.l.b16 %v6477
      %v6542 = vunpack.c.l.b16 %v6478
      %v6543 = vunpack.c.l.b16 %v6479
      %v6544 = vunpack.c.l.b16 %v6480
      %v6545 = vpack.c.b16 %v6538, %v6537
      %v6546 = vpack.c.b16 %v6540, %v6539
      %v6547 = vpack.c.b16 %v6542, %v6541
      %v6548 = vpack.c.b16 %v6544, %v6543
      %v6554 = vsel %vm1225, %v6513, 0
      %v6557 = vsel %vm1225, %v6514, 0
      %v6560 = vsel %vm1225, %v6515, 0
      %v6563 = vsel %vm1225, %v6516, 0
      %v6566 = vsel %vm1225, %v6517, 0
      %v6569 = vsel %vm1225, %v6518, 0
      %v6572 = vsel %vm1225, %v6519, 0
      %v6575 = vsel %vm1225, %v6520, 0
      %v6578 = vsel %vm1225, %v6521, 0
      %v6581 = vsel %vm1225, %v6522, 0
      %v6584 = vsel %vm1225, %v6523, 0
      %v6587 = vsel %vm1225, %v6524, 0
      %v6590 = vsel %vm1225, %v6525, 0
      %v6593 = vsel %vm1225, %v6526, 0
      %v6596 = vsel %vm1225, %v6527, 0
      %v6599 = vsel %vm1225, %v6528, 0
      %6601 = vmatpush.bf16.msra.mxu0 0
      %6602 = vmatpush.bf16.msra.mxu0 0
      %6603 = vmatpush.bf16.msra.mxu0 0
      %6604 = vmatpush.bf16.msra.mxu0 0
      %6605 = vmatpush.bf16.msra.mxu0 %v6548
      %6606 = vmatpush.bf16.msra.mxu0 %v6547
      %6607 = vmatpush.bf16.msra.mxu0 %v6546
      %6608 = vmatpush.bf16.msra.mxu0 %v6545
      %6609 = vmatmul.bf16.gmra.mxu0 %v6554
      %v6610 = vpop.f32.mrf.mxu0
      %v6611 = vadd.f32 0.0, %v6610
      %v6612 = vpop.f32.mrf.mxu0
      %v6613 = vadd.f32 0.0, %v6612
      %6614 = vmatmul.bf16.gmra.mxu0 %v6557
      %v6615 = vpop.f32.mrf.mxu0
      %v6616 = vadd.f32 0.0, %v6615
      %v6617 = vpop.f32.mrf.mxu0
      %v6618 = vadd.f32 0.0, %v6617
      %6619 = vmatmul.bf16.gmra.mxu0 %v6560
      %v6620 = vpop.f32.mrf.mxu0
      %v6621 = vadd.f32 0.0, %v6620
      %v6622 = vpop.f32.mrf.mxu0
      %v6623 = vadd.f32 0.0, %v6622
      %6624 = vmatmul.bf16.gmra.mxu0 %v6563
      %v6625 = vpop.f32.mrf.mxu0
      %v6626 = vadd.f32 0.0, %v6625
      %v6627 = vpop.f32.mrf.mxu0
      %v6628 = vadd.f32 0.0, %v6627
      %6629 = vmatmul.bf16.gmra.mxu0 %v6566
      %v6630 = vpop.f32.mrf.mxu0
      %v6631 = vadd.f32 0.0, %v6630
      %v6632 = vpop.f32.mrf.mxu0
      %v6633 = vadd.f32 0.0, %v6632
      %6634 = vmatmul.bf16.gmra.mxu0 %v6569
      %v6635 = vpop.f32.mrf.mxu0
      %v6636 = vadd.f32 0.0, %v6635
      %v6637 = vpop.f32.mrf.mxu0
      %v6638 = vadd.f32 0.0, %v6637
      %6639 = vmatmul.bf16.gmra.mxu0 %v6572
      %v6640 = vpop.f32.mrf.mxu0
      %v6641 = vadd.f32 0.0, %v6640
      %v6642 = vpop.f32.mrf.mxu0
      %v6643 = vadd.f32 0.0, %v6642
      %6644 = vmatmul.bf16.gmra.mxu0 %v6575
      %v6645 = vpop.f32.mrf.mxu0
      %v6646 = vadd.f32 0.0, %v6645
      %v6647 = vpop.f32.mrf.mxu0
      %v6648 = vadd.f32 0.0, %v6647
      %6649 = vmatmul.bf16.gmra.mxu0 %v6578
      %v6650 = vpop.f32.mrf.mxu0
      %v6651 = vadd.f32 0.0, %v6650
      %v6652 = vpop.f32.mrf.mxu0
      %v6653 = vadd.f32 0.0, %v6652
      %6654 = vmatmul.bf16.gmra.mxu0 %v6581
      %v6655 = vpop.f32.mrf.mxu0
      %v6656 = vadd.f32 0.0, %v6655
      %v6657 = vpop.f32.mrf.mxu0
      %v6658 = vadd.f32 0.0, %v6657
      %6659 = vmatmul.bf16.gmra.mxu0 %v6584
      %v6660 = vpop.f32.mrf.mxu0
      %v6661 = vadd.f32 0.0, %v6660
      %v6662 = vpop.f32.mrf.mxu0
      %v6663 = vadd.f32 0.0, %v6662
      %6664 = vmatmul.bf16.gmra.mxu0 %v6587
      %v6665 = vpop.f32.mrf.mxu0
      %v6666 = vadd.f32 0.0, %v6665
      %v6667 = vpop.f32.mrf.mxu0
      %v6668 = vadd.f32 0.0, %v6667
      %6669 = vmatmul.bf16.gmra.mxu0 %v6590
      %v6670 = vpop.f32.mrf.mxu0
      %v6671 = vadd.f32 0.0, %v6670
      %v6672 = vpop.f32.mrf.mxu0
      %v6673 = vadd.f32 0.0, %v6672
      %6674 = vmatmul.bf16.gmra.mxu0 %v6593
      %v6675 = vpop.f32.mrf.mxu0
      %v6676 = vadd.f32 0.0, %v6675
      %v6677 = vpop.f32.mrf.mxu0
      %v6678 = vadd.f32 0.0, %v6677
      %6679 = vmatmul.bf16.gmra.mxu0 %v6596
      %v6680 = vpop.f32.mrf.mxu0
      %v6681 = vadd.f32 0.0, %v6680
      %v6682 = vpop.f32.mrf.mxu0
      %v6683 = vadd.f32 0.0, %v6682
      %6684 = vmatmul.bf16.gmra.mxu0 %v6599
      %v6685 = vpop.f32.mrf.mxu0
      %v6686 = vadd.f32 0.0, %v6685
      %v6687 = vpop.f32.mrf.mxu0
      %v6688 = vadd.f32 0.0, %v6687
      %6689 = vdwg.mxu0
      %v6690 = vadd.f32 %v6233, %v6611
      %v6691 = vadd.f32 %v6235, %v6613
      %v6692 = vadd.f32 %v6238, %v6616
      %v6693 = vadd.f32 %v6240, %v6618
      %v6694 = vadd.f32 %v6243, %v6621
      %v6695 = vadd.f32 %v6245, %v6623
      %v6696 = vadd.f32 %v6248, %v6626
      %v6697 = vadd.f32 %v6250, %v6628
      %v6698 = vadd.f32 %v6253, %v6631
      %v6699 = vadd.f32 %v6255, %v6633
      %v6700 = vadd.f32 %v6258, %v6636
      %v6701 = vadd.f32 %v6260, %v6638
      %v6702 = vadd.f32 %v6263, %v6641
      %v6703 = vadd.f32 %v6265, %v6643
      %v6704 = vadd.f32 %v6268, %v6646
      %v6705 = vadd.f32 %v6270, %v6648
      %v6706 = vadd.f32 %v6273, %v6651
      %v6707 = vadd.f32 %v6275, %v6653
      %v6708 = vadd.f32 %v6278, %v6656
      %v6709 = vadd.f32 %v6280, %v6658
      %v6710 = vadd.f32 %v6283, %v6661
      %v6711 = vadd.f32 %v6285, %v6663
      %v6712 = vadd.f32 %v6288, %v6666
      %v6713 = vadd.f32 %v6290, %v6668
      %v6714 = vadd.f32 %v6293, %v6671
      %v6715 = vadd.f32 %v6295, %v6673
      %v6716 = vadd.f32 %v6298, %v6676
      %v6717 = vadd.f32 %v6300, %v6678
      %v6718 = vadd.f32 %v6303, %v6681
      %v6719 = vadd.f32 %v6305, %v6683
      %v6720 = vadd.f32 %v6308, %v6686
      %v6721 = vadd.f32 %v6310, %v6688
      %v6722 = vld [vmem:[%s5300] sm:$0xf]
      %v6723 = vld [vmem:[%s5300 + $0x4] sm:$0xf]
      %v6724 = vld [vmem:[%s5300 + $0xc] sm:$0xf]
      %v6725 = vld [vmem:[%s5300 + $0x10] sm:$0xf]
      %v6726 = vld [vmem:[%s5300 + $0x18] sm:$0xf]
      %v6727 = vld [vmem:[%s5300 + $0x1c] sm:$0xf]
      %v6728 = vld [vmem:[%s5300 + $0x24] sm:$0xf]
      %v6729 = vld [vmem:[%s5300 + $0x28] sm:$0xf]
      %v6730 = vld [vmem:[%s5300 + $0x30] sm:$0xf]
      %v6731 = vld [vmem:[%s5300 + $0x34] sm:$0xf]
      %v6732 = vld [vmem:[%s5300 + $0x3c] sm:$0xf]
      %v6733 = vld [vmem:[%s5300 + $0x40] sm:$0xf]
      %v6734 = vld [vmem:[%s5300 + $0x48] sm:$0xf]
      %v6735 = vld [vmem:[%s5300 + $0x4c] sm:$0xf]
      %v6736 = vld [vmem:[%s5300 + $0x54] sm:$0xf]
      %v6737 = vld [vmem:[%s5300 + $0x58] sm:$0xf]
      %v6738 = vld [vmem:[%s5300 + $0x60] sm:$0xf]
      %v6739 = vld [vmem:[%s5300 + $0x64] sm:$0xf]
      %v6740 = vld [vmem:[%s5300 + $0x6c] sm:$0xf]
      %v6741 = vld [vmem:[%s5300 + $0x70] sm:$0xf]
      %v6742 = vld [vmem:[%s5300 + $0x78] sm:$0xf]
      %v6743 = vld [vmem:[%s5300 + $0x7c] sm:$0xf]
      %v6744 = vld [vmem:[%s5300 + $0x84] sm:$0xf]
      %v6745 = vld [vmem:[%s5300 + $0x88] sm:$0xf]
      %v6746 = vld [vmem:[%s5300 + $0x90] sm:$0xf]
      %v6747 = vld [vmem:[%s5300 + $0x94] sm:$0xf]
      %v6748 = vld [vmem:[%s5300 + $0x9c] sm:$0xf]
      %v6749 = vld [vmem:[%s5300 + $0xa0] sm:$0xf]
      %v6750 = vld [vmem:[%s5300 + $0xa8] sm:$0xf]
      %v6751 = vld [vmem:[%s5300 + $0xac] sm:$0xf]
      %v6752 = vld [vmem:[%s5300 + $0xb4] sm:$0xf]
      %v6753 = vld [vmem:[%s5300 + $0xb8] sm:$0xf]
      %s6754 = scalar_lea.vmem %s2, 96
      %v6755 = vld [vmem:[%s6754] sm:$0xf]
      %v6756 = vld [vmem:[%s6754 + $0x4] sm:$0xf]
      %v6757 = vld [vmem:[%s6754 + $0x8] sm:$0xf]
      %v6758 = vld [vmem:[%s6754 + $0xc] sm:$0xf]
      %v6759 = vld [vmem:[%s6754 + $0x10] sm:$0xf]
      %v6760 = vld [vmem:[%s6754 + $0x14] sm:$0xf]
      %v6761 = vld [vmem:[%s6754 + $0x18] sm:$0xf]
      %v6762 = vld [vmem:[%s6754 + $0x1c] sm:$0xf]
      %v6795 = vunpack.c.l.b16 %v6722
      %v6796 = vunpack.c.l.b16 %v6723
      %v6797 = vunpack.c.l.b16 %v6724
      %v6798 = vunpack.c.l.b16 %v6725
      %v6799 = vunpack.c.l.b16 %v6726
      %v6800 = vunpack.c.l.b16 %v6727
      %v6801 = vunpack.c.l.b16 %v6728
      %v6802 = vunpack.c.l.b16 %v6729
      %v6803 = vunpack.c.l.b16 %v6730
      %v6804 = vunpack.c.l.b16 %v6731
      %v6805 = vunpack.c.l.b16 %v6732
      %v6806 = vunpack.c.l.b16 %v6733
      %v6807 = vunpack.c.l.b16 %v6734
      %v6808 = vunpack.c.l.b16 %v6735
      %v6809 = vunpack.c.l.b16 %v6736
      %v6810 = vunpack.c.l.b16 %v6737
      %v6811 = vunpack.c.l.b16 %v6738
      %v6812 = vunpack.c.l.b16 %v6739
      %v6813 = vunpack.c.l.b16 %v6740
      %v6814 = vunpack.c.l.b16 %v6741
      %v6815 = vunpack.c.l.b16 %v6742
      %v6816 = vunpack.c.l.b16 %v6743
      %v6817 = vunpack.c.l.b16 %v6744
      %v6818 = vunpack.c.l.b16 %v6745
      %v6819 = vunpack.c.l.b16 %v6746
      %v6820 = vunpack.c.l.b16 %v6747
      %v6821 = vunpack.c.l.b16 %v6748
      %v6822 = vunpack.c.l.b16 %v6749
      %v6823 = vunpack.c.l.b16 %v6750
      %v6824 = vunpack.c.l.b16 %v6751
      %v6825 = vunpack.c.l.b16 %v6752
      %v6826 = vunpack.c.l.b16 %v6753
      %v6827 = vpack.c.b16 %v6796, %v6795
      %v6828 = vpack.c.b16 %v6798, %v6797
      %v6829 = vpack.c.b16 %v6800, %v6799
      %v6830 = vpack.c.b16 %v6802, %v6801
      %v6831 = vpack.c.b16 %v6804, %v6803
      %v6832 = vpack.c.b16 %v6806, %v6805
      %v6833 = vpack.c.b16 %v6808, %v6807
      %v6834 = vpack.c.b16 %v6810, %v6809
      %v6835 = vpack.c.b16 %v6812, %v6811
      %v6836 = vpack.c.b16 %v6814, %v6813
      %v6837 = vpack.c.b16 %v6816, %v6815
      %v6838 = vpack.c.b16 %v6818, %v6817
      %v6839 = vpack.c.b16 %v6820, %v6819
      %v6840 = vpack.c.b16 %v6822, %v6821
      %v6841 = vpack.c.b16 %v6824, %v6823
      %v6842 = vpack.c.b16 %v6826, %v6825
      %v6851 = vunpack.c.l.b16 %v6755
      %v6852 = vunpack.c.l.b16 %v6756
      %v6853 = vunpack.c.l.b16 %v6757
      %v6854 = vunpack.c.l.b16 %v6758
      %v6855 = vunpack.c.l.b16 %v6759
      %v6856 = vunpack.c.l.b16 %v6760
      %v6857 = vunpack.c.l.b16 %v6761
      %v6858 = vunpack.c.l.b16 %v6762
      %v6859 = vpack.c.b16 %v6852, %v6851
      %v6860 = vpack.c.b16 %v6854, %v6853
      %v6861 = vpack.c.b16 %v6856, %v6855
      %v6862 = vpack.c.b16 %v6858, %v6857
      %v6868 = vsel %vm1225, %v6827, 0
      %v6871 = vsel %vm1225, %v6828, 0
      %v6874 = vsel %vm1225, %v6829, 0
      %v6877 = vsel %vm1225, %v6830, 0
      %v6880 = vsel %vm1225, %v6831, 0
      %v6883 = vsel %vm1225, %v6832, 0
      %v6886 = vsel %vm1225, %v6833, 0
      %v6889 = vsel %vm1225, %v6834, 0
      %v6892 = vsel %vm1225, %v6835, 0
      %v6895 = vsel %vm1225, %v6836, 0
      %v6898 = vsel %vm1225, %v6837, 0
      %v6901 = vsel %vm1225, %v6838, 0
      %v6904 = vsel %vm1225, %v6839, 0
      %v6907 = vsel %vm1225, %v6840, 0
      %v6910 = vsel %vm1225, %v6841, 0
      %v6913 = vsel %vm1225, %v6842, 0
      %6915 = vmatpush.bf16.msra.mxu0 0
      %6916 = vmatpush.bf16.msra.mxu0 0
      %6917 = vmatpush.bf16.msra.mxu0 0
      %6918 = vmatpush.bf16.msra.mxu0 0
      %6919 = vmatpush.bf16.msra.mxu0 %v6862
      %6920 = vmatpush.bf16.msra.mxu0 %v6861
      %6921 = vmatpush.bf16.msra.mxu0 %v6860
      %6922 = vmatpush.bf16.msra.mxu0 %v6859
      %6923 = vmatmul.bf16.gmra.mxu0 %v6868
      %v6924 = vpop.f32.mrf.mxu0
      %v6925 = vadd.f32 0.0, %v6924
      %v6926 = vpop.f32.mrf.mxu0
      %v6927 = vadd.f32 0.0, %v6926
      %6928 = vmatmul.bf16.gmra.mxu0 %v6871
      %v6929 = vpop.f32.mrf.mxu0
      %v6930 = vadd.f32 0.0, %v6929
      %v6931 = vpop.f32.mrf.mxu0
      %v6932 = vadd.f32 0.0, %v6931
      %6933 = vmatmul.bf16.gmra.mxu0 %v6874
      %v6934 = vpop.f32.mrf.mxu0
      %v6935 = vadd.f32 0.0, %v6934
      %v6936 = vpop.f32.mrf.mxu0
      %v6937 = vadd.f32 0.0, %v6936
      %6938 = vmatmul.bf16.gmra.mxu0 %v6877
      %v6939 = vpop.f32.mrf.mxu0
      %v6940 = vadd.f32 0.0, %v6939
      %v6941 = vpop.f32.mrf.mxu0
      %v6942 = vadd.f32 0.0, %v6941
      %6943 = vmatmul.bf16.gmra.mxu0 %v6880
      %v6944 = vpop.f32.mrf.mxu0
      %v6945 = vadd.f32 0.0, %v6944
      %v6946 = vpop.f32.mrf.mxu0
      %v6947 = vadd.f32 0.0, %v6946
      %6948 = vmatmul.bf16.gmra.mxu0 %v6883
      %v6949 = vpop.f32.mrf.mxu0
      %v6950 = vadd.f32 0.0, %v6949
      %v6951 = vpop.f32.mrf.mxu0
      %v6952 = vadd.f32 0.0, %v6951
      %6953 = vmatmul.bf16.gmra.mxu0 %v6886
      %v6954 = vpop.f32.mrf.mxu0
      %v6955 = vadd.f32 0.0, %v6954
      %v6956 = vpop.f32.mrf.mxu0
      %v6957 = vadd.f32 0.0, %v6956
      %6958 = vmatmul.bf16.gmra.mxu0 %v6889
      %v6959 = vpop.f32.mrf.mxu0
      %v6960 = vadd.f32 0.0, %v6959
      %v6961 = vpop.f32.mrf.mxu0
      %v6962 = vadd.f32 0.0, %v6961
      %6963 = vmatmul.bf16.gmra.mxu0 %v6892
      %v6964 = vpop.f32.mrf.mxu0
      %v6965 = vadd.f32 0.0, %v6964
      %v6966 = vpop.f32.mrf.mxu0
      %v6967 = vadd.f32 0.0, %v6966
      %6968 = vmatmul.bf16.gmra.mxu0 %v6895
      %v6969 = vpop.f32.mrf.mxu0
      %v6970 = vadd.f32 0.0, %v6969
      %v6971 = vpop.f32.mrf.mxu0
      %v6972 = vadd.f32 0.0, %v6971
      %6973 = vmatmul.bf16.gmra.mxu0 %v6898
      %v6974 = vpop.f32.mrf.mxu0
      %v6975 = vadd.f32 0.0, %v6974
      %v6976 = vpop.f32.mrf.mxu0
      %v6977 = vadd.f32 0.0, %v6976
      %6978 = vmatmul.bf16.gmra.mxu0 %v6901
      %v6979 = vpop.f32.mrf.mxu0
      %v6980 = vadd.f32 0.0, %v6979
      %v6981 = vpop.f32.mrf.mxu0
      %v6982 = vadd.f32 0.0, %v6981
      %6983 = vmatmul.bf16.gmra.mxu0 %v6904
      %v6984 = vpop.f32.mrf.mxu0
      %v6985 = vadd.f32 0.0, %v6984
      %v6986 = vpop.f32.mrf.mxu0
      %v6987 = vadd.f32 0.0, %v6986
      %6988 = vmatmul.bf16.gmra.mxu0 %v6907
      %v6989 = vpop.f32.mrf.mxu0
      %v6990 = vadd.f32 0.0, %v6989
      %v6991 = vpop.f32.mrf.mxu0
      %v6992 = vadd.f32 0.0, %v6991
      %6993 = vmatmul.bf16.gmra.mxu0 %v6910
      %v6994 = vpop.f32.mrf.mxu0
      %v6995 = vadd.f32 0.0, %v6994
      %v6996 = vpop.f32.mrf.mxu0
      %v6997 = vadd.f32 0.0, %v6996
      %6998 = vmatmul.bf16.gmra.mxu0 %v6913
      %v6999 = vpop.f32.mrf.mxu0
      %v7000 = vadd.f32 0.0, %v6999
      %v7001 = vpop.f32.mrf.mxu0
      %v7002 = vadd.f32 0.0, %v7001
      %7003 = vdwg.mxu0
      %v7004 = vadd.f32 %v6690, %v6925
      %v7005 = vadd.f32 %v6691, %v6927
      %v7006 = vadd.f32 %v6692, %v6930
      %v7007 = vadd.f32 %v6693, %v6932
      %v7008 = vadd.f32 %v6694, %v6935
      %v7009 = vadd.f32 %v6695, %v6937
      %v7010 = vadd.f32 %v6696, %v6940
      %v7011 = vadd.f32 %v6697, %v6942
      %v7012 = vadd.f32 %v6698, %v6945
      %v7013 = vadd.f32 %v6699, %v6947
      %v7014 = vadd.f32 %v6700, %v6950
      %v7015 = vadd.f32 %v6701, %v6952
      %v7016 = vadd.f32 %v6702, %v6955
      %v7017 = vadd.f32 %v6703, %v6957
      %v7018 = vadd.f32 %v6704, %v6960
      %v7019 = vadd.f32 %v6705, %v6962
      %v7020 = vadd.f32 %v6706, %v6965
      %v7021 = vadd.f32 %v6707, %v6967
      %v7022 = vadd.f32 %v6708, %v6970
      %v7023 = vadd.f32 %v6709, %v6972
      %v7024 = vadd.f32 %v6710, %v6975
      %v7025 = vadd.f32 %v6711, %v6977
      %v7026 = vadd.f32 %v6712, %v6980
      %v7027 = vadd.f32 %v6713, %v6982
      %v7028 = vadd.f32 %v6714, %v6985
      %v7029 = vadd.f32 %v6715, %v6987
      %v7030 = vadd.f32 %v6716, %v6990
      %v7031 = vadd.f32 %v6717, %v6992
      %v7032 = vadd.f32 %v6718, %v6995
      %v7033 = vadd.f32 %v6719, %v6997
      %v7034 = vadd.f32 %v6720, %v7000
      %v7035 = vadd.f32 %v6721, %v7002
      %v7036 = vld [vmem:[%s5300] sm:$0xf]
      %v7037 = vld [vmem:[%s5300 + $0x4] sm:$0xf]
      %v7038 = vld [vmem:[%s5300 + $0x8] sm:$0x1]
      %v7039 = vld [vmem:[%s5300 + $0xc] sm:$0xf]
      %v7040 = vld [vmem:[%s5300 + $0x10] sm:$0xf]
      %v7041 = vld [vmem:[%s5300 + $0x14] sm:$0x1]
      %v7042 = vld [vmem:[%s5300 + $0x18] sm:$0xf]
      %v7043 = vld [vmem:[%s5300 + $0x1c] sm:$0xf]
      %v7044 = vld [vmem:[%s5300 + $0x20] sm:$0x1]
      %v7045 = vld [vmem:[%s5300 + $0x24] sm:$0xf]
      %v7046 = vld [vmem:[%s5300 + $0x28] sm:$0xf]
      %v7047 = vld [vmem:[%s5300 + $0x2c] sm:$0x1]
      %v7048 = vld [vmem:[%s5300 + $0x30] sm:$0xf]
      %v7049 = vld [vmem:[%s5300 + $0x34] sm:$0xf]
      %v7050 = vld [vmem:[%s5300 + $0x38] sm:$0x1]
      %v7051 = vld [vmem:[%s5300 + $0x3c] sm:$0xf]
      %v7052 = vld [vmem:[%s5300 + $0x40] sm:$0xf]
      %v7053 = vld [vmem:[%s5300 + $0x44] sm:$0x1]
      %v7054 = vld [vmem:[%s5300 + $0x48] sm:$0xf]
      %v7055 = vld [vmem:[%s5300 + $0x4c] sm:$0xf]
      %v7056 = vld [vmem:[%s5300 + $0x50] sm:$0x1]
      %v7057 = vld [vmem:[%s5300 + $0x54] sm:$0xf]
      %v7058 = vld [vmem:[%s5300 + $0x58] sm:$0xf]
      %v7059 = vld [vmem:[%s5300 + $0x5c] sm:$0x1]
      %v7060 = vld [vmem:[%s5300 + $0x60] sm:$0xf]
      %v7061 = vld [vmem:[%s5300 + $0x64] sm:$0xf]
      %v7062 = vld [vmem:[%s5300 + $0x68] sm:$0x1]
      %v7063 = vld [vmem:[%s5300 + $0x6c] sm:$0xf]
      %v7064 = vld [vmem:[%s5300 + $0x70] sm:$0xf]
      %v7065 = vld [vmem:[%s5300 + $0x74] sm:$0x1]
      %v7066 = vld [vmem:[%s5300 + $0x78] sm:$0xf]
      %v7067 = vld [vmem:[%s5300 + $0x7c] sm:$0xf]
      %v7068 = vld [vmem:[%s5300 + $0x80] sm:$0x1]
      %v7069 = vld [vmem:[%s5300 + $0x84] sm:$0xf]
      %v7070 = vld [vmem:[%s5300 + $0x88] sm:$0xf]
      %v7071 = vld [vmem:[%s5300 + $0x8c] sm:$0x1]
      %v7072 = vld [vmem:[%s5300 + $0x90] sm:$0xf]
      %v7073 = vld [vmem:[%s5300 + $0x94] sm:$0xf]
      %v7074 = vld [vmem:[%s5300 + $0x98] sm:$0x1]
      %v7075 = vld [vmem:[%s5300 + $0x9c] sm:$0xf]
      %v7076 = vld [vmem:[%s5300 + $0xa0] sm:$0xf]
      %v7077 = vld [vmem:[%s5300 + $0xa4] sm:$0x1]
      %v7078 = vld [vmem:[%s5300 + $0xa8] sm:$0xf]
      %v7079 = vld [vmem:[%s5300 + $0xac] sm:$0xf]
      %v7080 = vld [vmem:[%s5300 + $0xb0] sm:$0x1]
      %v7081 = vld [vmem:[%s5300 + $0xb4] sm:$0xf]
      %v7082 = vld [vmem:[%s5300 + $0xb8] sm:$0xf]
      %v7083 = vld [vmem:[%s5300 + $0xbc] sm:$0x1]
      %v7085 = vshrl.u32 %v7036, 16
      %v7087 = vrot.slane %v7085, 4
      %v7088 = vshll.u32 %v7036, 16
      %v7090 = vrot.slane %v7088, 5
      %v7091 = vor.u32 %v7087, %v7090
      %v7092 = vrot.slane %v7091, 4
      %v7094 = vshll.u32 %v7037, 16
      %v7096 = vrot.slane %v7094, 5
      %v7097 = vsel %vm759, %v7092, %v7096
      %v7098 = vshrl.u32 %v7037, 16
      %v7100 = vrot.slane %v7098, 4
      %v7101 = vor.u32 %v7100, %v7096
      %v7102 = vrot.slane %v7101, 4
      %v7104 = vshll.u32 %v7038, 16
      %v7106 = vrot.slane %v7104, 5
      %v7107 = vsel %vm759, %v7102, %v7106
      %v7109 = vshrl.u32 %v7039, 16
      %v7111 = vrot.slane %v7109, 4
      %v7112 = vshll.u32 %v7039, 16
      %v7114 = vrot.slane %v7112, 5
      %v7115 = vor.u32 %v7111, %v7114
      %v7116 = vrot.slane %v7115, 4
      %v7118 = vshll.u32 %v7040, 16
      %v7120 = vrot.slane %v7118, 5
      %v7121 = vsel %vm759, %v7116, %v7120
      %v7122 = vshrl.u32 %v7040, 16
      %v7124 = vrot.slane %v7122, 4
      %v7125 = vor.u32 %v7124, %v7120
      %v7126 = vrot.slane %v7125, 4
      %v7128 = vshll.u32 %v7041, 16
      %v7130 = vrot.slane %v7128, 5
      %v7131 = vsel %vm759, %v7126, %v7130
      %v7133 = vshrl.u32 %v7042, 16
      %v7135 = vrot.slane %v7133, 4
      %v7136 = vshll.u32 %v7042, 16
      %v7138 = vrot.slane %v7136, 5
      %v7139 = vor.u32 %v7135, %v7138
      %v7140 = vrot.slane %v7139, 4
      %v7142 = vshll.u32 %v7043, 16
      %v7144 = vrot.slane %v7142, 5
      %v7145 = vsel %vm759, %v7140, %v7144
      %v7146 = vshrl.u32 %v7043, 16
      %v7148 = vrot.slane %v7146, 4
      %v7149 = vor.u32 %v7148, %v7144
      %v7150 = vrot.slane %v7149, 4
      %v7152 = vshll.u32 %v7044, 16
      %v7154 = vrot.slane %v7152, 5
      %v7155 = vsel %vm759, %v7150, %v7154
      %v7157 = vshrl.u32 %v7045, 16
      %v7159 = vrot.slane %v7157, 4
      %v7160 = vshll.u32 %v7045, 16
      %v7162 = vrot.slane %v7160, 5
      %v7163 = vor.u32 %v7159, %v7162
      %v7164 = vrot.slane %v7163, 4
      %v7166 = vshll.u32 %v7046, 16
      %v7168 = vrot.slane %v7166, 5
      %v7169 = vsel %vm759, %v7164, %v7168
      %v7170 = vshrl.u32 %v7046, 16
      %v7172 = vrot.slane %v7170, 4
      %v7173 = vor.u32 %v7172, %v7168
      %v7174 = vrot.slane %v7173, 4
      %v7176 = vshll.u32 %v7047, 16
      %v7178 = vrot.slane %v7176, 5
      %v7179 = vsel %vm759, %v7174, %v7178
      %v7181 = vshrl.u32 %v7048, 16
      %v7183 = vrot.slane %v7181, 4
      %v7184 = vshll.u32 %v7048, 16
      %v7186 = vrot.slane %v7184, 5
      %v7187 = vor.u32 %v7183, %v7186
      %v7188 = vrot.slane %v7187, 4
      %v7190 = vshll.u32 %v7049, 16
      %v7192 = vrot.slane %v7190, 5
      %v7193 = vsel %vm759, %v7188, %v7192
      %v7194 = vshrl.u32 %v7049, 16
      %v7196 = vrot.slane %v7194, 4
      %v7197 = vor.u32 %v7196, %v7192
      %v7198 = vrot.slane %v7197, 4
      %v7200 = vshll.u32 %v7050, 16
      %v7202 = vrot.slane %v7200, 5
      %v7203 = vsel %vm759, %v7198, %v7202
      %v7205 = vshrl.u32 %v7051, 16
      %v7207 = vrot.slane %v7205, 4
      %v7208 = vshll.u32 %v7051, 16
      %v7210 = vrot.slane %v7208, 5
      %v7211 = vor.u32 %v7207, %v7210
      %v7212 = vrot.slane %v7211, 4
      %v7214 = vshll.u32 %v7052, 16
      %v7216 = vrot.slane %v7214, 5
      %v7217 = vsel %vm759, %v7212, %v7216
      %v7218 = vshrl.u32 %v7052, 16
      %v7220 = vrot.slane %v7218, 4
      %v7221 = vor.u32 %v7220, %v7216
      %v7222 = vrot.slane %v7221, 4
      %v7224 = vshll.u32 %v7053, 16
      %v7226 = vrot.slane %v7224, 5
      %v7227 = vsel %vm759, %v7222, %v7226
      %v7229 = vshrl.u32 %v7054, 16
      %v7231 = vrot.slane %v7229, 4
      %v7232 = vshll.u32 %v7054, 16
      %v7234 = vrot.slane %v7232, 5
      %v7235 = vor.u32 %v7231, %v7234
      %v7236 = vrot.slane %v7235, 4
      %v7238 = vshll.u32 %v7055, 16
      %v7240 = vrot.slane %v7238, 5
      %v7241 = vsel %vm759, %v7236, %v7240
      %v7242 = vshrl.u32 %v7055, 16
      %v7244 = vrot.slane %v7242, 4
      %v7245 = vor.u32 %v7244, %v7240
      %v7246 = vrot.slane %v7245, 4
      %v7248 = vshll.u32 %v7056, 16
      %v7250 = vrot.slane %v7248, 5
      %v7251 = vsel %vm759, %v7246, %v7250
      %v7253 = vshrl.u32 %v7057, 16
      %v7255 = vrot.slane %v7253, 4
      %v7256 = vshll.u32 %v7057, 16
      %v7258 = vrot.slane %v7256, 5
      %v7259 = vor.u32 %v7255, %v7258
      %v7260 = vrot.slane %v7259, 4
      %v7262 = vshll.u32 %v7058, 16
      %v7264 = vrot.slane %v7262, 5
      %v7265 = vsel %vm759, %v7260, %v7264
      %v7266 = vshrl.u32 %v7058, 16
      %v7268 = vrot.slane %v7266, 4
      %v7269 = vor.u32 %v7268, %v7264
      %v7270 = vrot.slane %v7269, 4
      %v7272 = vshll.u32 %v7059, 16
      %v7274 = vrot.slane %v7272, 5
      %v7275 = vsel %vm759, %v7270, %v7274
      %v7277 = vshrl.u32 %v7060, 16
      %v7279 = vrot.slane %v7277, 4
      %v7280 = vshll.u32 %v7060, 16
      %v7282 = vrot.slane %v7280, 5
      %v7283 = vor.u32 %v7279, %v7282
      %v7284 = vrot.slane %v7283, 4
      %v7286 = vshll.u32 %v7061, 16
      %v7288 = vrot.slane %v7286, 5
      %v7289 = vsel %vm759, %v7284, %v7288
      %v7290 = vshrl.u32 %v7061, 16
      %v7292 = vrot.slane %v7290, 4
      %v7293 = vor.u32 %v7292, %v7288
      %v7294 = vrot.slane %v7293, 4
      %v7296 = vshll.u32 %v7062, 16
      %v7298 = vrot.slane %v7296, 5
      %v7299 = vsel %vm759, %v7294, %v7298
      %v7301 = vshrl.u32 %v7063, 16
      %v7303 = vrot.slane %v7301, 4
      %v7304 = vshll.u32 %v7063, 16
      %v7306 = vrot.slane %v7304, 5
      %v7307 = vor.u32 %v7303, %v7306
      %v7308 = vrot.slane %v7307, 4
      %v7310 = vshll.u32 %v7064, 16
      %v7312 = vrot.slane %v7310, 5
      %v7313 = vsel %vm759, %v7308, %v7312
      %v7314 = vshrl.u32 %v7064, 16
      %v7316 = vrot.slane %v7314, 4
      %v7317 = vor.u32 %v7316, %v7312
      %v7318 = vrot.slane %v7317, 4
      %v7320 = vshll.u32 %v7065, 16
      %v7322 = vrot.slane %v7320, 5
      %v7323 = vsel %vm759, %v7318, %v7322
      %v7325 = vshrl.u32 %v7066, 16
      %v7327 = vrot.slane %v7325, 4
      %v7328 = vshll.u32 %v7066, 16
      %v7330 = vrot.slane %v7328, 5
      %v7331 = vor.u32 %v7327, %v7330
      %v7332 = vrot.slane %v7331, 4
      %v7334 = vshll.u32 %v7067, 16
      %v7336 = vrot.slane %v7334, 5
      %v7337 = vsel %vm759, %v7332, %v7336
      %v7338 = vshrl.u32 %v7067, 16
      %v7340 = vrot.slane %v7338, 4
      %v7341 = vor.u32 %v7340, %v7336
      %v7342 = vrot.slane %v7341, 4
      %v7344 = vshll.u32 %v7068, 16
      %v7346 = vrot.slane %v7344, 5
      %v7347 = vsel %vm759, %v7342, %v7346
      %v7349 = vshrl.u32 %v7069, 16
      %v7351 = vrot.slane %v7349, 4
      %v7352 = vshll.u32 %v7069, 16
      %v7354 = vrot.slane %v7352, 5
      %v7355 = vor.u32 %v7351, %v7354
      %v7356 = vrot.slane %v7355, 4
      %v7358 = vshll.u32 %v7070, 16
      %v7360 = vrot.slane %v7358, 5
      %v7361 = vsel %vm759, %v7356, %v7360
      %v7362 = vshrl.u32 %v7070, 16
      %v7364 = vrot.slane %v7362, 4
      %v7365 = vor.u32 %v7364, %v7360
      %v7366 = vrot.slane %v7365, 4
      %v7368 = vshll.u32 %v7071, 16
      %v7370 = vrot.slane %v7368, 5
      %v7371 = vsel %vm759, %v7366, %v7370
      %v7373 = vshrl.u32 %v7072, 16
      %v7375 = vrot.slane %v7373, 4
      %v7376 = vshll.u32 %v7072, 16
      %v7378 = vrot.slane %v7376, 5
      %v7379 = vor.u32 %v7375, %v7378
      %v7380 = vrot.slane %v7379, 4
      %v7382 = vshll.u32 %v7073, 16
      %v7384 = vrot.slane %v7382, 5
      %v7385 = vsel %vm759, %v7380, %v7384
      %v7386 = vshrl.u32 %v7073, 16
      %v7388 = vrot.slane %v7386, 4
      %v7389 = vor.u32 %v7388, %v7384
      %v7390 = vrot.slane %v7389, 4
      %v7392 = vshll.u32 %v7074, 16
      %v7394 = vrot.slane %v7392, 5
      %v7395 = vsel %vm759, %v7390, %v7394
      %v7397 = vshrl.u32 %v7075, 16
      %v7399 = vrot.slane %v7397, 4
      %v7400 = vshll.u32 %v7075, 16
      %v7402 = vrot.slane %v7400, 5
      %v7403 = vor.u32 %v7399, %v7402
      %v7404 = vrot.slane %v7403, 4
      %v7406 = vshll.u32 %v7076, 16
      %v7408 = vrot.slane %v7406, 5
      %v7409 = vsel %vm759, %v7404, %v7408
      %v7410 = vshrl.u32 %v7076, 16
      %v7412 = vrot.slane %v7410, 4
      %v7413 = vor.u32 %v7412, %v7408
      %v7414 = vrot.slane %v7413, 4
      %v7416 = vshll.u32 %v7077, 16
      %v7418 = vrot.slane %v7416, 5
      %v7419 = vsel %vm759, %v7414, %v7418
      %v7421 = vshrl.u32 %v7078, 16
      %v7423 = vrot.slane %v7421, 4
      %v7424 = vshll.u32 %v7078, 16
      %v7426 = vrot.slane %v7424, 5
      %v7427 = vor.u32 %v7423, %v7426
      %v7428 = vrot.slane %v7427, 4
      %v7430 = vshll.u32 %v7079, 16
      %v7432 = vrot.slane %v7430, 5
      %v7433 = vsel %vm759, %v7428, %v7432
      %v7434 = vshrl.u32 %v7079, 16
      %v7436 = vrot.slane %v7434, 4
      %v7437 = vor.u32 %v7436, %v7432
      %v7438 = vrot.slane %v7437, 4
      %v7440 = vshll.u32 %v7080, 16
      %v7442 = vrot.slane %v7440, 5
      %v7443 = vsel %vm759, %v7438, %v7442
      %v7445 = vshrl.u32 %v7081, 16
      %v7447 = vrot.slane %v7445, 4
      %v7448 = vshll.u32 %v7081, 16
      %v7450 = vrot.slane %v7448, 5
      %v7451 = vor.u32 %v7447, %v7450
      %v7452 = vrot.slane %v7451, 4
      %v7454 = vshll.u32 %v7082, 16
      %v7456 = vrot.slane %v7454, 5
      %v7457 = vsel %vm759, %v7452, %v7456
      %v7458 = vshrl.u32 %v7082, 16
      %v7460 = vrot.slane %v7458, 4
      %v7461 = vor.u32 %v7460, %v7456
      %v7462 = vrot.slane %v7461, 4
      %v7464 = vshll.u32 %v7083, 16
      %v7466 = vrot.slane %v7464, 5
      %v7467 = vsel %vm759, %v7462, %v7466
      %s7468 = scalar_lea.vmem %s2, 128
      %v7469 = vld [vmem:[%s7468] sm:$0xf]
      %v7470 = vld [vmem:[%s7468 + $0x4] sm:$0xf]
      %v7471 = vld [vmem:[%s7468 + $0x8] sm:$0xf]
      %v7472 = vld [vmem:[%s7468 + $0xc] sm:$0xf]
      %v7473 = vld [vmem:[%s7468 + $0x10] sm:$0xf]
      %v7474 = vld [vmem:[%s7468 + $0x14] sm:$0xf]
      %v7475 = vld [vmem:[%s7468 + $0x18] sm:$0xf]
      %v7476 = vld [vmem:[%s7468 + $0x1c] sm:$0xf]
      %v7477 = vunpack.c.l.b16 %v7097
      %v7478 = vunpack.c.l.b16 %v7107
      %v7479 = vunpack.c.l.b16 %v7121
      %v7480 = vunpack.c.l.b16 %v7131
      %v7481 = vunpack.c.l.b16 %v7145
      %v7482 = vunpack.c.l.b16 %v7155
      %v7483 = vunpack.c.l.b16 %v7169
      %v7484 = vunpack.c.l.b16 %v7179
      %v7485 = vunpack.c.l.b16 %v7193
      %v7486 = vunpack.c.l.b16 %v7203
      %v7487 = vunpack.c.l.b16 %v7217
      %v7488 = vunpack.c.l.b16 %v7227
      %v7489 = vunpack.c.l.b16 %v7241
      %v7490 = vunpack.c.l.b16 %v7251
      %v7491 = vunpack.c.l.b16 %v7265
      %v7492 = vunpack.c.l.b16 %v7275
      %v7493 = vunpack.c.l.b16 %v7289
      %v7494 = vunpack.c.l.b16 %v7299
      %v7495 = vunpack.c.l.b16 %v7313
      %v7496 = vunpack.c.l.b16 %v7323
      %v7497 = vunpack.c.l.b16 %v7337
      %v7498 = vunpack.c.l.b16 %v7347
      %v7499 = vunpack.c.l.b16 %v7361
      %v7500 = vunpack.c.l.b16 %v7371
      %v7501 = vunpack.c.l.b16 %v7385
      %v7502 = vunpack.c.l.b16 %v7395
      %v7503 = vunpack.c.l.b16 %v7409
      %v7504 = vunpack.c.l.b16 %v7419
      %v7505 = vunpack.c.l.b16 %v7433
      %v7506 = vunpack.c.l.b16 %v7443
      %v7507 = vunpack.c.l.b16 %v7457
      %v7508 = vunpack.c.l.b16 %v7467
      %v7509 = vpack.c.b16 %v7478, %v7477
      %v7510 = vpack.c.b16 %v7480, %v7479
      %v7511 = vpack.c.b16 %v7482, %v7481
      %v7512 = vpack.c.b16 %v7484, %v7483
      %v7513 = vpack.c.b16 %v7486, %v7485
      %v7514 = vpack.c.b16 %v7488, %v7487
      %v7515 = vpack.c.b16 %v7490, %v7489
      %v7516 = vpack.c.b16 %v7492, %v7491
      %v7517 = vpack.c.b16 %v7494, %v7493
      %v7518 = vpack.c.b16 %v7496, %v7495
      %v7519 = vpack.c.b16 %v7498, %v7497
      %v7520 = vpack.c.b16 %v7500, %v7499
      %v7521 = vpack.c.b16 %v7502, %v7501
      %v7522 = vpack.c.b16 %v7504, %v7503
      %v7523 = vpack.c.b16 %v7506, %v7505
      %v7524 = vpack.c.b16 %v7508, %v7507
      %v7533 = vunpack.c.l.b16 %v7469
      %v7534 = vunpack.c.l.b16 %v7470
      %v7535 = vunpack.c.l.b16 %v7471
      %v7536 = vunpack.c.l.b16 %v7472
      %v7537 = vunpack.c.l.b16 %v7473
      %v7538 = vunpack.c.l.b16 %v7474
      %v7539 = vunpack.c.l.b16 %v7475
      %v7540 = vunpack.c.l.b16 %v7476
      %v7541 = vpack.c.b16 %v7534, %v7533
      %v7542 = vpack.c.b16 %v7536, %v7535
      %v7543 = vpack.c.b16 %v7538, %v7537
      %v7544 = vpack.c.b16 %v7540, %v7539
      %v7550 = vsel %vm1225, %v7509, 0
      %v7553 = vsel %vm1225, %v7510, 0
      %v7556 = vsel %vm1225, %v7511, 0
      %v7559 = vsel %vm1225, %v7512, 0
      %v7562 = vsel %vm1225, %v7513, 0
      %v7565 = vsel %vm1225, %v7514, 0
      %v7568 = vsel %vm1225, %v7515, 0
      %v7571 = vsel %vm1225, %v7516, 0
      %v7574 = vsel %vm1225, %v7517, 0
      %v7577 = vsel %vm1225, %v7518, 0
      %v7580 = vsel %vm1225, %v7519, 0
      %v7583 = vsel %vm1225, %v7520, 0
      %v7586 = vsel %vm1225, %v7521, 0
      %v7589 = vsel %vm1225, %v7522, 0
      %v7592 = vsel %vm1225, %v7523, 0
      %v7595 = vsel %vm1225, %v7524, 0
      %7597 = vmatpush.bf16.msra.mxu0 0
      %7598 = vmatpush.bf16.msra.mxu0 0
      %7599 = vmatpush.bf16.msra.mxu0 0
      %7600 = vmatpush.bf16.msra.mxu0 0
      %7601 = vmatpush.bf16.msra.mxu0 %v7544
      %7602 = vmatpush.bf16.msra.mxu0 %v7543
      %7603 = vmatpush.bf16.msra.mxu0 %v7542
      %7604 = vmatpush.bf16.msra.mxu0 %v7541
      %7605 = vmatmul.bf16.gmra.mxu0 %v7550
      %v7606 = vpop.f32.mrf.mxu0
      %v7607 = vadd.f32 0.0, %v7606
      %v7608 = vpop.f32.mrf.mxu0
      %v7609 = vadd.f32 0.0, %v7608
      %7610 = vmatmul.bf16.gmra.mxu0 %v7553
      %v7611 = vpop.f32.mrf.mxu0
      %v7612 = vadd.f32 0.0, %v7611
      %v7613 = vpop.f32.mrf.mxu0
      %v7614 = vadd.f32 0.0, %v7613
      %7615 = vmatmul.bf16.gmra.mxu0 %v7556
      %v7616 = vpop.f32.mrf.mxu0
      %v7617 = vadd.f32 0.0, %v7616
      %v7618 = vpop.f32.mrf.mxu0
      %v7619 = vadd.f32 0.0, %v7618
      %7620 = vmatmul.bf16.gmra.mxu0 %v7559
      %v7621 = vpop.f32.mrf.mxu0
      %v7622 = vadd.f32 0.0, %v7621
      %v7623 = vpop.f32.mrf.mxu0
      %v7624 = vadd.f32 0.0, %v7623
      %7625 = vmatmul.bf16.gmra.mxu0 %v7562
      %v7626 = vpop.f32.mrf.mxu0
      %v7627 = vadd.f32 0.0, %v7626
      %v7628 = vpop.f32.mrf.mxu0
      %v7629 = vadd.f32 0.0, %v7628
      %7630 = vmatmul.bf16.gmra.mxu0 %v7565
      %v7631 = vpop.f32.mrf.mxu0
      %v7632 = vadd.f32 0.0, %v7631
      %v7633 = vpop.f32.mrf.mxu0
      %v7634 = vadd.f32 0.0, %v7633
      %7635 = vmatmul.bf16.gmra.mxu0 %v7568
      %v7636 = vpop.f32.mrf.mxu0
      %v7637 = vadd.f32 0.0, %v7636
      %v7638 = vpop.f32.mrf.mxu0
      %v7639 = vadd.f32 0.0, %v7638
      %7640 = vmatmul.bf16.gmra.mxu0 %v7571
      %v7641 = vpop.f32.mrf.mxu0
      %v7642 = vadd.f32 0.0, %v7641
      %v7643 = vpop.f32.mrf.mxu0
      %v7644 = vadd.f32 0.0, %v7643
      %7645 = vmatmul.bf16.gmra.mxu0 %v7574
      %v7646 = vpop.f32.mrf.mxu0
      %v7647 = vadd.f32 0.0, %v7646
      %v7648 = vpop.f32.mrf.mxu0
      %v7649 = vadd.f32 0.0, %v7648
      %7650 = vmatmul.bf16.gmra.mxu0 %v7577
      %v7651 = vpop.f32.mrf.mxu0
      %v7652 = vadd.f32 0.0, %v7651
      %v7653 = vpop.f32.mrf.mxu0
      %v7654 = vadd.f32 0.0, %v7653
      %7655 = vmatmul.bf16.gmra.mxu0 %v7580
      %v7656 = vpop.f32.mrf.mxu0
      %v7657 = vadd.f32 0.0, %v7656
      %v7658 = vpop.f32.mrf.mxu0
      %v7659 = vadd.f32 0.0, %v7658
      %7660 = vmatmul.bf16.gmra.mxu0 %v7583
      %v7661 = vpop.f32.mrf.mxu0
      %v7662 = vadd.f32 0.0, %v7661
      %v7663 = vpop.f32.mrf.mxu0
      %v7664 = vadd.f32 0.0, %v7663
      %7665 = vmatmul.bf16.gmra.mxu0 %v7586
      %v7666 = vpop.f32.mrf.mxu0
      %v7667 = vadd.f32 0.0, %v7666
      %v7668 = vpop.f32.mrf.mxu0
      %v7669 = vadd.f32 0.0, %v7668
      %7670 = vmatmul.bf16.gmra.mxu0 %v7589
      %v7671 = vpop.f32.mrf.mxu0
      %v7672 = vadd.f32 0.0, %v7671
      %v7673 = vpop.f32.mrf.mxu0
      %v7674 = vadd.f32 0.0, %v7673
      %7675 = vmatmul.bf16.gmra.mxu0 %v7592
      %v7676 = vpop.f32.mrf.mxu0
      %v7677 = vadd.f32 0.0, %v7676
      %v7678 = vpop.f32.mrf.mxu0
      %v7679 = vadd.f32 0.0, %v7678
      %7680 = vmatmul.bf16.gmra.mxu0 %v7595
      %v7681 = vpop.f32.mrf.mxu0
      %v7682 = vadd.f32 0.0, %v7681
      %v7683 = vpop.f32.mrf.mxu0
      %v7684 = vadd.f32 0.0, %v7683
      %7685 = vdwg.mxu0
      %v7686 = vadd.f32 %v7004, %v7607
      %v7687 = vadd.f32 %v7005, %v7609
      %v7688 = vadd.f32 %v7006, %v7612
      %v7689 = vadd.f32 %v7007, %v7614
      %v7690 = vadd.f32 %v7008, %v7617
      %v7691 = vadd.f32 %v7009, %v7619
      %v7692 = vadd.f32 %v7010, %v7622
      %v7693 = vadd.f32 %v7011, %v7624
      %v7694 = vadd.f32 %v7012, %v7627
      %v7695 = vadd.f32 %v7013, %v7629
      %v7696 = vadd.f32 %v7014, %v7632
      %v7697 = vadd.f32 %v7015, %v7634
      %v7698 = vadd.f32 %v7016, %v7637
      %v7699 = vadd.f32 %v7017, %v7639
      %v7700 = vadd.f32 %v7018, %v7642
      %v7701 = vadd.f32 %v7019, %v7644
      %v7702 = vadd.f32 %v7020, %v7647
      %v7703 = vadd.f32 %v7021, %v7649
      %v7704 = vadd.f32 %v7022, %v7652
      %v7705 = vadd.f32 %v7023, %v7654
      %v7706 = vadd.f32 %v7024, %v7657
      %v7707 = vadd.f32 %v7025, %v7659
      %v7708 = vadd.f32 %v7026, %v7662
      %v7709 = vadd.f32 %v7027, %v7664
      %v7710 = vadd.f32 %v7028, %v7667
      %v7711 = vadd.f32 %v7029, %v7669
      %v7712 = vadd.f32 %v7030, %v7672
      %v7713 = vadd.f32 %v7031, %v7674
      %v7714 = vadd.f32 %v7032, %v7677
      %v7715 = vadd.f32 %v7033, %v7679
      %v7716 = vadd.f32 %v7034, %v7682
      %v7717 = vadd.f32 %v7035, %v7684
      %v7718 = vld [vmem:[%s5300] sm:$0xe]
      %v7719 = vld [vmem:[%s5300 + $0xc] sm:$0xe]
      %v7720 = vld [vmem:[%s5300 + $0x18] sm:$0xe]
      %v7721 = vld [vmem:[%s5300 + $0x24] sm:$0xe]
      %v7722 = vld [vmem:[%s5300 + $0x30] sm:$0xe]
      %v7723 = vld [vmem:[%s5300 + $0x3c] sm:$0xe]
      %v7724 = vld [vmem:[%s5300 + $0x48] sm:$0xe]
      %v7725 = vld [vmem:[%s5300 + $0x54] sm:$0xe]
      %v7726 = vld [vmem:[%s5300 + $0x60] sm:$0xe]
      %v7727 = vld [vmem:[%s5300 + $0x6c] sm:$0xe]
      %v7728 = vld [vmem:[%s5300 + $0x78] sm:$0xe]
      %v7729 = vld [vmem:[%s5300 + $0x84] sm:$0xe]
      %v7730 = vld [vmem:[%s5300 + $0x90] sm:$0xe]
      %v7731 = vld [vmem:[%s5300 + $0x9c] sm:$0xe]
      %v7732 = vld [vmem:[%s5300 + $0xa8] sm:$0xe]
      %v7733 = vld [vmem:[%s5300 + $0xb4] sm:$0xe]
      %v7782 = vrot.slane %v7718, 5
      %v7783 = vrot.slane %v7782, 4
      %v7784 = vrot.slane %v7037, 5
      %v7785 = vsel %vm1654, %v7783, %v7784
      %v7786 = vrot.slane %v7784, 4
      %v7787 = vrot.slane %v7038, 5
      %v7788 = vsel %vm1654, %v7786, %v7787
      %v7789 = vrot.slane %v7719, 5
      %v7790 = vrot.slane %v7789, 4
      %v7791 = vrot.slane %v7040, 5
      %v7792 = vsel %vm1654, %v7790, %v7791
      %v7793 = vrot.slane %v7791, 4
      %v7794 = vrot.slane %v7041, 5
      %v7795 = vsel %vm1654, %v7793, %v7794
      %v7796 = vrot.slane %v7720, 5
      %v7797 = vrot.slane %v7796, 4
      %v7798 = vrot.slane %v7043, 5
      %v7799 = vsel %vm1654, %v7797, %v7798
      %v7800 = vrot.slane %v7798, 4
      %v7801 = vrot.slane %v7044, 5
      %v7802 = vsel %vm1654, %v7800, %v7801
      %v7803 = vrot.slane %v7721, 5
      %v7804 = vrot.slane %v7803, 4
      %v7805 = vrot.slane %v7046, 5
      %v7806 = vsel %vm1654, %v7804, %v7805
      %v7807 = vrot.slane %v7805, 4
      %v7808 = vrot.slane %v7047, 5
      %v7809 = vsel %vm1654, %v7807, %v7808
      %v7810 = vrot.slane %v7722, 5
      %v7811 = vrot.slane %v7810, 4
      %v7812 = vrot.slane %v7049, 5
      %v7813 = vsel %vm1654, %v7811, %v7812
      %v7814 = vrot.slane %v7812, 4
      %v7815 = vrot.slane %v7050, 5
      %v7816 = vsel %vm1654, %v7814, %v7815
      %v7817 = vrot.slane %v7723, 5
      %v7818 = vrot.slane %v7817, 4
      %v7819 = vrot.slane %v7052, 5
      %v7820 = vsel %vm1654, %v7818, %v7819
      %v7821 = vrot.slane %v7819, 4
      %v7822 = vrot.slane %v7053, 5
      %v7823 = vsel %vm1654, %v7821, %v7822
      %v7824 = vrot.slane %v7724, 5
      %v7825 = vrot.slane %v7824, 4
      %v7826 = vrot.slane %v7055, 5
      %v7827 = vsel %vm1654, %v7825, %v7826
      %v7828 = vrot.slane %v7826, 4
      %v7829 = vrot.slane %v7056, 5
      %v7830 = vsel %vm1654, %v7828, %v7829
      %v7831 = vrot.slane %v7725, 5
      %v7832 = vrot.slane %v7831, 4
      %v7833 = vrot.slane %v7058, 5
      %v7834 = vsel %vm1654, %v7832, %v7833
      %v7835 = vrot.slane %v7833, 4
      %v7836 = vrot.slane %v7059, 5
      %v7837 = vsel %vm1654, %v7835, %v7836
      %v7838 = vrot.slane %v7726, 5
      %v7839 = vrot.slane %v7838, 4
      %v7840 = vrot.slane %v7061, 5
      %v7841 = vsel %vm1654, %v7839, %v7840
      %v7842 = vrot.slane %v7840, 4
      %v7843 = vrot.slane %v7062, 5
      %v7844 = vsel %vm1654, %v7842, %v7843
      %v7845 = vrot.slane %v7727, 5
      %v7846 = vrot.slane %v7845, 4
      %v7847 = vrot.slane %v7064, 5
      %v7848 = vsel %vm1654, %v7846, %v7847
      %v7849 = vrot.slane %v7847, 4
      %v7850 = vrot.slane %v7065, 5
      %v7851 = vsel %vm1654, %v7849, %v7850
      %v7852 = vrot.slane %v7728, 5
      %v7853 = vrot.slane %v7852, 4
      %v7854 = vrot.slane %v7067, 5
      %v7855 = vsel %vm1654, %v7853, %v7854
      %v7856 = vrot.slane %v7854, 4
      %v7857 = vrot.slane %v7068, 5
      %v7858 = vsel %vm1654, %v7856, %v7857
      %v7859 = vrot.slane %v7729, 5
      %v7860 = vrot.slane %v7859, 4
      %v7861 = vrot.slane %v7070, 5
      %v7862 = vsel %vm1654, %v7860, %v7861
      %v7863 = vrot.slane %v7861, 4
      %v7864 = vrot.slane %v7071, 5
      %v7865 = vsel %vm1654, %v7863, %v7864
      %v7866 = vrot.slane %v7730, 5
      %v7867 = vrot.slane %v7866, 4
      %v7868 = vrot.slane %v7073, 5
      %v7869 = vsel %vm1654, %v7867, %v7868
      %v7870 = vrot.slane %v7868, 4
      %v7871 = vrot.slane %v7074, 5
      %v7872 = vsel %vm1654, %v7870, %v7871
      %v7873 = vrot.slane %v7731, 5
      %v7874 = vrot.slane %v7873, 4
      %v7875 = vrot.slane %v7076, 5
      %v7876 = vsel %vm1654, %v7874, %v7875
      %v7877 = vrot.slane %v7875, 4
      %v7878 = vrot.slane %v7077, 5
      %v7879 = vsel %vm1654, %v7877, %v7878
      %v7880 = vrot.slane %v7732, 5
      %v7881 = vrot.slane %v7880, 4
      %v7882 = vrot.slane %v7079, 5
      %v7883 = vsel %vm1654, %v7881, %v7882
      %v7884 = vrot.slane %v7882, 4
      %v7885 = vrot.slane %v7080, 5
      %v7886 = vsel %vm1654, %v7884, %v7885
      %v7887 = vrot.slane %v7733, 5
      %v7888 = vrot.slane %v7887, 4
      %v7889 = vrot.slane %v7082, 5
      %v7890 = vsel %vm1654, %v7888, %v7889
      %v7891 = vrot.slane %v7889, 4
      %v7892 = vrot.slane %v7083, 5
      %v7893 = vsel %vm1654, %v7891, %v7892
      %s7894 = scalar_lea.vmem %s2, 160
      %v7895 = vld [vmem:[%s7894] sm:$0xf]
      %v7896 = vld [vmem:[%s7894 + $0x4] sm:$0xf]
      %v7897 = vld [vmem:[%s7894 + $0x8] sm:$0xf]
      %v7898 = vld [vmem:[%s7894 + $0xc] sm:$0xf]
      %v7899 = vld [vmem:[%s7894 + $0x10] sm:$0xf]
      %v7900 = vld [vmem:[%s7894 + $0x14] sm:$0xf]
      %v7901 = vld [vmem:[%s7894 + $0x18] sm:$0xf]
      %v7902 = vld [vmem:[%s7894 + $0x1c] sm:$0xf]
      %v7903 = vunpack.c.l.b16 %v7785
      %v7904 = vunpack.c.l.b16 %v7788
      %v7905 = vunpack.c.l.b16 %v7792
      %v7906 = vunpack.c.l.b16 %v7795
      %v7907 = vunpack.c.l.b16 %v7799
      %v7908 = vunpack.c.l.b16 %v7802
      %v7909 = vunpack.c.l.b16 %v7806
      %v7910 = vunpack.c.l.b16 %v7809
      %v7911 = vunpack.c.l.b16 %v7813
      %v7912 = vunpack.c.l.b16 %v7816
      %v7913 = vunpack.c.l.b16 %v7820
      %v7914 = vunpack.c.l.b16 %v7823
      %v7915 = vunpack.c.l.b16 %v7827
      %v7916 = vunpack.c.l.b16 %v7830
      %v7917 = vunpack.c.l.b16 %v7834
      %v7918 = vunpack.c.l.b16 %v7837
      %v7919 = vunpack.c.l.b16 %v7841
      %v7920 = vunpack.c.l.b16 %v7844
      %v7921 = vunpack.c.l.b16 %v7848
      %v7922 = vunpack.c.l.b16 %v7851
      %v7923 = vunpack.c.l.b16 %v7855
      %v7924 = vunpack.c.l.b16 %v7858
      %v7925 = vunpack.c.l.b16 %v7862
      %v7926 = vunpack.c.l.b16 %v7865
      %v7927 = vunpack.c.l.b16 %v7869
      %v7928 = vunpack.c.l.b16 %v7872
      %v7929 = vunpack.c.l.b16 %v7876
      %v7930 = vunpack.c.l.b16 %v7879
      %v7931 = vunpack.c.l.b16 %v7883
      %v7932 = vunpack.c.l.b16 %v7886
      %v7933 = vunpack.c.l.b16 %v7890
      %v7934 = vunpack.c.l.b16 %v7893
      %v7935 = vpack.c.b16 %v7904, %v7903
      %v7936 = vpack.c.b16 %v7906, %v7905
      %v7937 = vpack.c.b16 %v7908, %v7907
      %v7938 = vpack.c.b16 %v7910, %v7909
      %v7939 = vpack.c.b16 %v7912, %v7911
      %v7940 = vpack.c.b16 %v7914, %v7913
      %v7941 = vpack.c.b16 %v7916, %v7915
      %v7942 = vpack.c.b16 %v7918, %v7917
      %v7943 = vpack.c.b16 %v7920, %v7919
      %v7944 = vpack.c.b16 %v7922, %v7921
      %v7945 = vpack.c.b16 %v7924, %v7923
      %v7946 = vpack.c.b16 %v7926, %v7925
      %v7947 = vpack.c.b16 %v7928, %v7927
      %v7948 = vpack.c.b16 %v7930, %v7929
      %v7949 = vpack.c.b16 %v7932, %v7931
      %v7950 = vpack.c.b16 %v7934, %v7933
      %v7959 = vunpack.c.l.b16 %v7895
      %v7960 = vunpack.c.l.b16 %v7896
      %v7961 = vunpack.c.l.b16 %v7897
      %v7962 = vunpack.c.l.b16 %v7898
      %v7963 = vunpack.c.l.b16 %v7899
      %v7964 = vunpack.c.l.b16 %v7900
      %v7965 = vunpack.c.l.b16 %v7901
      %v7966 = vunpack.c.l.b16 %v7902
      %v7967 = vpack.c.b16 %v7960, %v7959
      %v7968 = vpack.c.b16 %v7962, %v7961
      %v7969 = vpack.c.b16 %v7964, %v7963
      %v7970 = vpack.c.b16 %v7966, %v7965
      %v7976 = vsel %vm1225, %v7935, 0
      %v7979 = vsel %vm1225, %v7936, 0
      %v7982 = vsel %vm1225, %v7937, 0
      %v7985 = vsel %vm1225, %v7938, 0
      %v7988 = vsel %vm1225, %v7939, 0
      %v7991 = vsel %vm1225, %v7940, 0
      %v7994 = vsel %vm1225, %v7941, 0
      %v7997 = vsel %vm1225, %v7942, 0
      %v8000 = vsel %vm1225, %v7943, 0
      %v8003 = vsel %vm1225, %v7944, 0
      %v8006 = vsel %vm1225, %v7945, 0
      %v8009 = vsel %vm1225, %v7946, 0
      %v8012 = vsel %vm1225, %v7947, 0
      %v8015 = vsel %vm1225, %v7948, 0
      %v8018 = vsel %vm1225, %v7949, 0
      %v8021 = vsel %vm1225, %v7950, 0
      %8023 = vmatpush.bf16.msra.mxu0 0
      %8024 = vmatpush.bf16.msra.mxu0 0
      %8025 = vmatpush.bf16.msra.mxu0 0
      %8026 = vmatpush.bf16.msra.mxu0 0
      %8027 = vmatpush.bf16.msra.mxu0 %v7970
      %8028 = vmatpush.bf16.msra.mxu0 %v7969
      %8029 = vmatpush.bf16.msra.mxu0 %v7968
      %8030 = vmatpush.bf16.msra.mxu0 %v7967
      %8031 = vmatmul.bf16.gmra.mxu0 %v7976
      %v8032 = vpop.f32.mrf.mxu0
      %v8033 = vadd.f32 0.0, %v8032
      %v8034 = vpop.f32.mrf.mxu0
      %v8035 = vadd.f32 0.0, %v8034
      %8036 = vmatmul.bf16.gmra.mxu0 %v7979
      %v8037 = vpop.f32.mrf.mxu0
      %v8038 = vadd.f32 0.0, %v8037
      %v8039 = vpop.f32.mrf.mxu0
      %v8040 = vadd.f32 0.0, %v8039
      %8041 = vmatmul.bf16.gmra.mxu0 %v7982
      %v8042 = vpop.f32.mrf.mxu0
      %v8043 = vadd.f32 0.0, %v8042
      %v8044 = vpop.f32.mrf.mxu0
      %v8045 = vadd.f32 0.0, %v8044
      %8046 = vmatmul.bf16.gmra.mxu0 %v7985
      %v8047 = vpop.f32.mrf.mxu0
      %v8048 = vadd.f32 0.0, %v8047
      %v8049 = vpop.f32.mrf.mxu0
      %v8050 = vadd.f32 0.0, %v8049
      %8051 = vmatmul.bf16.gmra.mxu0 %v7988
      %v8052 = vpop.f32.mrf.mxu0
      %v8053 = vadd.f32 0.0, %v8052
      %v8054 = vpop.f32.mrf.mxu0
      %v8055 = vadd.f32 0.0, %v8054
      %8056 = vmatmul.bf16.gmra.mxu0 %v7991
      %v8057 = vpop.f32.mrf.mxu0
      %v8058 = vadd.f32 0.0, %v8057
      %v8059 = vpop.f32.mrf.mxu0
      %v8060 = vadd.f32 0.0, %v8059
      %8061 = vmatmul.bf16.gmra.mxu0 %v7994
      %v8062 = vpop.f32.mrf.mxu0
      %v8063 = vadd.f32 0.0, %v8062
      %v8064 = vpop.f32.mrf.mxu0
      %v8065 = vadd.f32 0.0, %v8064
      %8066 = vmatmul.bf16.gmra.mxu0 %v7997
      %v8067 = vpop.f32.mrf.mxu0
      %v8068 = vadd.f32 0.0, %v8067
      %v8069 = vpop.f32.mrf.mxu0
      %v8070 = vadd.f32 0.0, %v8069
      %8071 = vmatmul.bf16.gmra.mxu0 %v8000
      %v8072 = vpop.f32.mrf.mxu0
      %v8073 = vadd.f32 0.0, %v8072
      %v8074 = vpop.f32.mrf.mxu0
      %v8075 = vadd.f32 0.0, %v8074
      %8076 = vmatmul.bf16.gmra.mxu0 %v8003
      %v8077 = vpop.f32.mrf.mxu0
      %v8078 = vadd.f32 0.0, %v8077
      %v8079 = vpop.f32.mrf.mxu0
      %v8080 = vadd.f32 0.0, %v8079
      %8081 = vmatmul.bf16.gmra.mxu0 %v8006
      %v8082 = vpop.f32.mrf.mxu0
      %v8083 = vadd.f32 0.0, %v8082
      %v8084 = vpop.f32.mrf.mxu0
      %v8085 = vadd.f32 0.0, %v8084
      %8086 = vmatmul.bf16.gmra.mxu0 %v8009
      %v8087 = vpop.f32.mrf.mxu0
      %v8088 = vadd.f32 0.0, %v8087
      %v8089 = vpop.f32.mrf.mxu0
      %v8090 = vadd.f32 0.0, %v8089
      %8091 = vmatmul.bf16.gmra.mxu0 %v8012
      %v8092 = vpop.f32.mrf.mxu0
      %v8093 = vadd.f32 0.0, %v8092
      %v8094 = vpop.f32.mrf.mxu0
      %v8095 = vadd.f32 0.0, %v8094
      %8096 = vmatmul.bf16.gmra.mxu0 %v8015
      %v8097 = vpop.f32.mrf.mxu0
      %v8098 = vadd.f32 0.0, %v8097
      %v8099 = vpop.f32.mrf.mxu0
      %v8100 = vadd.f32 0.0, %v8099
      %8101 = vmatmul.bf16.gmra.mxu0 %v8018
      %v8102 = vpop.f32.mrf.mxu0
      %v8103 = vadd.f32 0.0, %v8102
      %v8104 = vpop.f32.mrf.mxu0
      %v8105 = vadd.f32 0.0, %v8104
      %8106 = vmatmul.bf16.gmra.mxu0 %v8021
      %v8107 = vpop.f32.mrf.mxu0
      %v8108 = vadd.f32 0.0, %v8107
      %v8109 = vpop.f32.mrf.mxu0
      %v8110 = vadd.f32 0.0, %v8109
      %8111 = vdwg.mxu0
      %v8112 = vadd.f32 %v7686, %v8033
      %v8113 = vadd.f32 %v7687, %v8035
      %v8114 = vadd.f32 %v7688, %v8038
      %v8115 = vadd.f32 %v7689, %v8040
      %v8116 = vadd.f32 %v7690, %v8043
      %v8117 = vadd.f32 %v7691, %v8045
      %v8118 = vadd.f32 %v7692, %v8048
      %v8119 = vadd.f32 %v7693, %v8050
      %v8120 = vadd.f32 %v7694, %v8053
      %v8121 = vadd.f32 %v7695, %v8055
      %v8122 = vadd.f32 %v7696, %v8058
      %v8123 = vadd.f32 %v7697, %v8060
      %v8124 = vadd.f32 %v7698, %v8063
      %v8125 = vadd.f32 %v7699, %v8065
      %v8126 = vadd.f32 %v7700, %v8068
      %v8127 = vadd.f32 %v7701, %v8070
      %v8128 = vadd.f32 %v7702, %v8073
      %v8129 = vadd.f32 %v7703, %v8075
      %v8130 = vadd.f32 %v7704, %v8078
      %v8131 = vadd.f32 %v7705, %v8080
      %v8132 = vadd.f32 %v7706, %v8083
      %v8133 = vadd.f32 %v7707, %v8085
      %v8134 = vadd.f32 %v7708, %v8088
      %v8135 = vadd.f32 %v7709, %v8090
      %v8136 = vadd.f32 %v7710, %v8093
      %v8137 = vadd.f32 %v7711, %v8095
      %v8138 = vadd.f32 %v7712, %v8098
      %v8139 = vadd.f32 %v7713, %v8100
      %v8140 = vadd.f32 %v7714, %v8103
      %v8141 = vadd.f32 %v7715, %v8105
      %v8142 = vadd.f32 %v7716, %v8108
      %v8143 = vadd.f32 %v7717, %v8110
      %s8144 = scalar_lea.vmem [#allocation3], 24
      %v8145 = vld [vmem:[%s8144] sm:$0xf]
      %v8146 = vld [vmem:[%s8144 + $0x4] sm:$0xf]
      %v8147 = vld [vmem:[%s8144 + $0xc] sm:$0xf]
      %v8148 = vld [vmem:[%s8144 + $0x10] sm:$0xf]
      %v8149 = vld [vmem:[%s8144 + $0x18] sm:$0xf]
      %v8150 = vld [vmem:[%s8144 + $0x1c] sm:$0xf]
      %v8151 = vld [vmem:[%s8144 + $0x24] sm:$0xf]
      %v8152 = vld [vmem:[%s8144 + $0x28] sm:$0xf]
      %v8153 = vld [vmem:[%s8144 + $0x30] sm:$0xf]
      %v8154 = vld [vmem:[%s8144 + $0x34] sm:$0xf]
      %v8155 = vld [vmem:[%s8144 + $0x3c] sm:$0xf]
      %v8156 = vld [vmem:[%s8144 + $0x40] sm:$0xf]
      %v8157 = vld [vmem:[%s8144 + $0x48] sm:$0xf]
      %v8158 = vld [vmem:[%s8144 + $0x4c] sm:$0xf]
      %v8159 = vld [vmem:[%s8144 + $0x54] sm:$0xf]
      %v8160 = vld [vmem:[%s8144 + $0x58] sm:$0xf]
      %v8161 = vld [vmem:[%s8144 + $0x60] sm:$0xf]
      %v8162 = vld [vmem:[%s8144 + $0x64] sm:$0xf]
      %v8163 = vld [vmem:[%s8144 + $0x6c] sm:$0xf]
      %v8164 = vld [vmem:[%s8144 + $0x70] sm:$0xf]
      %v8165 = vld [vmem:[%s8144 + $0x78] sm:$0xf]
      %v8166 = vld [vmem:[%s8144 + $0x7c] sm:$0xf]
      %v8167 = vld [vmem:[%s8144 + $0x84] sm:$0xf]
      %v8168 = vld [vmem:[%s8144 + $0x88] sm:$0xf]
      %v8169 = vld [vmem:[%s8144 + $0x90] sm:$0xf]
      %v8170 = vld [vmem:[%s8144 + $0x94] sm:$0xf]
      %v8171 = vld [vmem:[%s8144 + $0x9c] sm:$0xf]
      %v8172 = vld [vmem:[%s8144 + $0xa0] sm:$0xf]
      %v8173 = vld [vmem:[%s8144 + $0xa8] sm:$0xf]
      %v8174 = vld [vmem:[%s8144 + $0xac] sm:$0xf]
      %v8175 = vld [vmem:[%s8144 + $0xb4] sm:$0xf]
      %v8176 = vld [vmem:[%s8144 + $0xb8] sm:$0xf]
      %s8177 = scalar_lea.vmem %s2, 192
      %v8178 = vld [vmem:[%s8177] sm:$0xf]
      %v8179 = vld [vmem:[%s8177 + $0x4] sm:$0xf]
      %v8180 = vld [vmem:[%s8177 + $0x8] sm:$0xf]
      %v8181 = vld [vmem:[%s8177 + $0xc] sm:$0xf]
      %v8182 = vld [vmem:[%s8177 + $0x10] sm:$0xf]
      %v8183 = vld [vmem:[%s8177 + $0x14] sm:$0xf]
      %v8184 = vld [vmem:[%s8177 + $0x18] sm:$0xf]
      %v8185 = vld [vmem:[%s8177 + $0x1c] sm:$0xf]
      %v8218 = vunpack.c.l.b16 %v8145
      %v8219 = vunpack.c.l.b16 %v8146
      %v8220 = vunpack.c.l.b16 %v8147
      %v8221 = vunpack.c.l.b16 %v8148
      %v8222 = vunpack.c.l.b16 %v8149
      %v8223 = vunpack.c.l.b16 %v8150
      %v8224 = vunpack.c.l.b16 %v8151
      %v8225 = vunpack.c.l.b16 %v8152
      %v8226 = vunpack.c.l.b16 %v8153
      %v8227 = vunpack.c.l.b16 %v8154
      %v8228 = vunpack.c.l.b16 %v8155
      %v8229 = vunpack.c.l.b16 %v8156
      %v8230 = vunpack.c.l.b16 %v8157
      %v8231 = vunpack.c.l.b16 %v8158
      %v8232 = vunpack.c.l.b16 %v8159
      %v8233 = vunpack.c.l.b16 %v8160
      %v8234 = vunpack.c.l.b16 %v8161
      %v8235 = vunpack.c.l.b16 %v8162
      %v8236 = vunpack.c.l.b16 %v8163
      %v8237 = vunpack.c.l.b16 %v8164
      %v8238 = vunpack.c.l.b16 %v8165
      %v8239 = vunpack.c.l.b16 %v8166
      %v8240 = vunpack.c.l.b16 %v8167
      %v8241 = vunpack.c.l.b16 %v8168
      %v8242 = vunpack.c.l.b16 %v8169
      %v8243 = vunpack.c.l.b16 %v8170
      %v8244 = vunpack.c.l.b16 %v8171
      %v8245 = vunpack.c.l.b16 %v8172
      %v8246 = vunpack.c.l.b16 %v8173
      %v8247 = vunpack.c.l.b16 %v8174
      %v8248 = vunpack.c.l.b16 %v8175
      %v8249 = vunpack.c.l.b16 %v8176
      %v8250 = vpack.c.b16 %v8219, %v8218
      %v8251 = vpack.c.b16 %v8221, %v8220
      %v8252 = vpack.c.b16 %v8223, %v8222
      %v8253 = vpack.c.b16 %v8225, %v8224
      %v8254 = vpack.c.b16 %v8227, %v8226
      %v8255 = vpack.c.b16 %v8229, %v8228
      %v8256 = vpack.c.b16 %v8231, %v8230
      %v8257 = vpack.c.b16 %v8233, %v8232
      %v8258 = vpack.c.b16 %v8235, %v8234
      %v8259 = vpack.c.b16 %v8237, %v8236
      %v8260 = vpack.c.b16 %v8239, %v8238
      %v8261 = vpack.c.b16 %v8241, %v8240
      %v8262 = vpack.c.b16 %v8243, %v8242
      %v8263 = vpack.c.b16 %v8245, %v8244
      %v8264 = vpack.c.b16 %v8247, %v8246
      %v8265 = vpack.c.b16 %v8249, %v8248
      %v8274 = vunpack.c.l.b16 %v8178
      %v8275 = vunpack.c.l.b16 %v8179
      %v8276 = vunpack.c.l.b16 %v8180
      %v8277 = vunpack.c.l.b16 %v8181
      %v8278 = vunpack.c.l.b16 %v8182
      %v8279 = vunpack.c.l.b16 %v8183
      %v8280 = vunpack.c.l.b16 %v8184
      %v8281 = vunpack.c.l.b16 %v8185
      %v8282 = vpack.c.b16 %v8275, %v8274
      %v8283 = vpack.c.b16 %v8277, %v8276
      %v8284 = vpack.c.b16 %v8279, %v8278
      %v8285 = vpack.c.b16 %v8281, %v8280
      %v8291 = vsel %vm1225, %v8250, 0
      %v8294 = vsel %vm1225, %v8251, 0
      %v8297 = vsel %vm1225, %v8252, 0
      %v8300 = vsel %vm1225, %v8253, 0
      %v8303 = vsel %vm1225, %v8254, 0
      %v8306 = vsel %vm1225, %v8255, 0
      %v8309 = vsel %vm1225, %v8256, 0
      %v8312 = vsel %vm1225, %v8257, 0
      %v8315 = vsel %vm1225, %v8258, 0
      %v8318 = vsel %vm1225, %v8259, 0
      %v8321 = vsel %vm1225, %v8260, 0
      %v8324 = vsel %vm1225, %v8261, 0
      %v8327 = vsel %vm1225, %v8262, 0
      %v8330 = vsel %vm1225, %v8263, 0
      %v8333 = vsel %vm1225, %v8264, 0
      %v8336 = vsel %vm1225, %v8265, 0
      %8338 = vmatpush.bf16.msra.mxu0 0
      %8339 = vmatpush.bf16.msra.mxu0 0
      %8340 = vmatpush.bf16.msra.mxu0 0
      %8341 = vmatpush.bf16.msra.mxu0 0
      %8342 = vmatpush.bf16.msra.mxu0 %v8285
      %8343 = vmatpush.bf16.msra.mxu0 %v8284
      %8344 = vmatpush.bf16.msra.mxu0 %v8283
      %8345 = vmatpush.bf16.msra.mxu0 %v8282
      %8346 = vmatmul.bf16.gmra.mxu0 %v8291
      %v8347 = vpop.f32.mrf.mxu0
      %v8348 = vadd.f32 0.0, %v8347
      %v8349 = vpop.f32.mrf.mxu0
      %v8350 = vadd.f32 0.0, %v8349
      %8351 = vmatmul.bf16.gmra.mxu0 %v8294
      %v8352 = vpop.f32.mrf.mxu0
      %v8353 = vadd.f32 0.0, %v8352
      %v8354 = vpop.f32.mrf.mxu0
      %v8355 = vadd.f32 0.0, %v8354
      %8356 = vmatmul.bf16.gmra.mxu0 %v8297
      %v8357 = vpop.f32.mrf.mxu0
      %v8358 = vadd.f32 0.0, %v8357
      %v8359 = vpop.f32.mrf.mxu0
      %v8360 = vadd.f32 0.0, %v8359
      %8361 = vmatmul.bf16.gmra.mxu0 %v8300
      %v8362 = vpop.f32.mrf.mxu0
      %v8363 = vadd.f32 0.0, %v8362
      %v8364 = vpop.f32.mrf.mxu0
      %v8365 = vadd.f32 0.0, %v8364
      %8366 = vmatmul.bf16.gmra.mxu0 %v8303
      %v8367 = vpop.f32.mrf.mxu0
      %v8368 = vadd.f32 0.0, %v8367
      %v8369 = vpop.f32.mrf.mxu0
      %v8370 = vadd.f32 0.0, %v8369
      %8371 = vmatmul.bf16.gmra.mxu0 %v8306
      %v8372 = vpop.f32.mrf.mxu0
      %v8373 = vadd.f32 0.0, %v8372
      %v8374 = vpop.f32.mrf.mxu0
      %v8375 = vadd.f32 0.0, %v8374
      %8376 = vmatmul.bf16.gmra.mxu0 %v8309
      %v8377 = vpop.f32.mrf.mxu0
      %v8378 = vadd.f32 0.0, %v8377
      %v8379 = vpop.f32.mrf.mxu0
      %v8380 = vadd.f32 0.0, %v8379
      %8381 = vmatmul.bf16.gmra.mxu0 %v8312
      %v8382 = vpop.f32.mrf.mxu0
      %v8383 = vadd.f32 0.0, %v8382
      %v8384 = vpop.f32.mrf.mxu0
      %v8385 = vadd.f32 0.0, %v8384
      %8386 = vmatmul.bf16.gmra.mxu0 %v8315
      %v8387 = vpop.f32.mrf.mxu0
      %v8388 = vadd.f32 0.0, %v8387
      %v8389 = vpop.f32.mrf.mxu0
      %v8390 = vadd.f32 0.0, %v8389
      %8391 = vmatmul.bf16.gmra.mxu0 %v8318
      %v8392 = vpop.f32.mrf.mxu0
      %v8393 = vadd.f32 0.0, %v8392
      %v8394 = vpop.f32.mrf.mxu0
      %v8395 = vadd.f32 0.0, %v8394
      %8396 = vmatmul.bf16.gmra.mxu0 %v8321
      %v8397 = vpop.f32.mrf.mxu0
      %v8398 = vadd.f32 0.0, %v8397
      %v8399 = vpop.f32.mrf.mxu0
      %v8400 = vadd.f32 0.0, %v8399
      %8401 = vmatmul.bf16.gmra.mxu0 %v8324
      %v8402 = vpop.f32.mrf.mxu0
      %v8403 = vadd.f32 0.0, %v8402
      %v8404 = vpop.f32.mrf.mxu0
      %v8405 = vadd.f32 0.0, %v8404
      %8406 = vmatmul.bf16.gmra.mxu0 %v8327
      %v8407 = vpop.f32.mrf.mxu0
      %v8408 = vadd.f32 0.0, %v8407
      %v8409 = vpop.f32.mrf.mxu0
      %v8410 = vadd.f32 0.0, %v8409
      %8411 = vmatmul.bf16.gmra.mxu0 %v8330
      %v8412 = vpop.f32.mrf.mxu0
      %v8413 = vadd.f32 0.0, %v8412
      %v8414 = vpop.f32.mrf.mxu0
      %v8415 = vadd.f32 0.0, %v8414
      %8416 = vmatmul.bf16.gmra.mxu0 %v8333
      %v8417 = vpop.f32.mrf.mxu0
      %v8418 = vadd.f32 0.0, %v8417
      %v8419 = vpop.f32.mrf.mxu0
      %v8420 = vadd.f32 0.0, %v8419
      %8421 = vmatmul.bf16.gmra.mxu0 %v8336
      %v8422 = vpop.f32.mrf.mxu0
      %v8423 = vadd.f32 0.0, %v8422
      %v8424 = vpop.f32.mrf.mxu0
      %v8425 = vadd.f32 0.0, %v8424
      %8426 = vdwg.mxu0
      %v8427 = vadd.f32 %v8112, %v8348
      %v8428 = vadd.f32 %v8113, %v8350
      %v8429 = vadd.f32 %v8114, %v8353
      %v8430 = vadd.f32 %v8115, %v8355
      %v8431 = vadd.f32 %v8116, %v8358
      %v8432 = vadd.f32 %v8117, %v8360
      %v8433 = vadd.f32 %v8118, %v8363
      %v8434 = vadd.f32 %v8119, %v8365
      %v8435 = vadd.f32 %v8120, %v8368
      %v8436 = vadd.f32 %v8121, %v8370
      %v8437 = vadd.f32 %v8122, %v8373
      %v8438 = vadd.f32 %v8123, %v8375
      %v8439 = vadd.f32 %v8124, %v8378
      %v8440 = vadd.f32 %v8125, %v8380
      %v8441 = vadd.f32 %v8126, %v8383
      %v8442 = vadd.f32 %v8127, %v8385
      %v8443 = vadd.f32 %v8128, %v8388
      %v8444 = vadd.f32 %v8129, %v8390
      %v8445 = vadd.f32 %v8130, %v8393
      %v8446 = vadd.f32 %v8131, %v8395
      %v8447 = vadd.f32 %v8132, %v8398
      %v8448 = vadd.f32 %v8133, %v8400
      %v8449 = vadd.f32 %v8134, %v8403
      %v8450 = vadd.f32 %v8135, %v8405
      %v8451 = vadd.f32 %v8136, %v8408
      %v8452 = vadd.f32 %v8137, %v8410
      %v8453 = vadd.f32 %v8138, %v8413
      %v8454 = vadd.f32 %v8139, %v8415
      %v8455 = vadd.f32 %v8140, %v8418
      %v8456 = vadd.f32 %v8141, %v8420
      %v8457 = vadd.f32 %v8142, %v8423
      %v8458 = vadd.f32 %v8143, %v8425
      %v8459 = vld [vmem:[%s8144] sm:$0xf]
      %v8460 = vld [vmem:[%s8144 + $0x4] sm:$0xf]
      %v8461 = vld [vmem:[%s8144 + $0x8] sm:$0x1]
      %v8462 = vld [vmem:[%s8144 + $0xc] sm:$0xf]
      %v8463 = vld [vmem:[%s8144 + $0x10] sm:$0xf]
      %v8464 = vld [vmem:[%s8144 + $0x14] sm:$0x1]
      %v8465 = vld [vmem:[%s8144 + $0x18] sm:$0xf]
      %v8466 = vld [vmem:[%s8144 + $0x1c] sm:$0xf]
      %v8467 = vld [vmem:[%s8144 + $0x20] sm:$0x1]
      %v8468 = vld [vmem:[%s8144 + $0x24] sm:$0xf]
      %v8469 = vld [vmem:[%s8144 + $0x28] sm:$0xf]
      %v8470 = vld [vmem:[%s8144 + $0x2c] sm:$0x1]
      %v8471 = vld [vmem:[%s8144 + $0x30] sm:$0xf]
      %v8472 = vld [vmem:[%s8144 + $0x34] sm:$0xf]
      %v8473 = vld [vmem:[%s8144 + $0x38] sm:$0x1]
      %v8474 = vld [vmem:[%s8144 + $0x3c] sm:$0xf]
      %v8475 = vld [vmem:[%s8144 + $0x40] sm:$0xf]
      %v8476 = vld [vmem:[%s8144 + $0x44] sm:$0x1]
      %v8477 = vld [vmem:[%s8144 + $0x48] sm:$0xf]
      %v8478 = vld [vmem:[%s8144 + $0x4c] sm:$0xf]
      %v8479 = vld [vmem:[%s8144 + $0x50] sm:$0x1]
      %v8480 = vld [vmem:[%s8144 + $0x54] sm:$0xf]
      %v8481 = vld [vmem:[%s8144 + $0x58] sm:$0xf]
      %v8482 = vld [vmem:[%s8144 + $0x5c] sm:$0x1]
      %v8483 = vld [vmem:[%s8144 + $0x60] sm:$0xf]
      %v8484 = vld [vmem:[%s8144 + $0x64] sm:$0xf]
      %v8485 = vld [vmem:[%s8144 + $0x68] sm:$0x1]
      %v8486 = vld [vmem:[%s8144 + $0x6c] sm:$0xf]
      %v8487 = vld [vmem:[%s8144 + $0x70] sm:$0xf]
      %v8488 = vld [vmem:[%s8144 + $0x74] sm:$0x1]
      %v8489 = vld [vmem:[%s8144 + $0x78] sm:$0xf]
      %v8490 = vld [vmem:[%s8144 + $0x7c] sm:$0xf]
      %v8491 = vld [vmem:[%s8144 + $0x80] sm:$0x1]
      %v8492 = vld [vmem:[%s8144 + $0x84] sm:$0xf]
      %v8493 = vld [vmem:[%s8144 + $0x88] sm:$0xf]
      %v8494 = vld [vmem:[%s8144 + $0x8c] sm:$0x1]
      %v8495 = vld [vmem:[%s8144 + $0x90] sm:$0xf]
      %v8496 = vld [vmem:[%s8144 + $0x94] sm:$0xf]
      %v8497 = vld [vmem:[%s8144 + $0x98] sm:$0x1]
      %v8498 = vld [vmem:[%s8144 + $0x9c] sm:$0xf]
      %v8499 = vld [vmem:[%s8144 + $0xa0] sm:$0xf]
      %v8500 = vld [vmem:[%s8144 + $0xa4] sm:$0x1]
      %v8501 = vld [vmem:[%s8144 + $0xa8] sm:$0xf]
      %v8502 = vld [vmem:[%s8144 + $0xac] sm:$0xf]
      %v8503 = vld [vmem:[%s8144 + $0xb0] sm:$0x1]
      %v8504 = vld [vmem:[%s8144 + $0xb4] sm:$0xf]
      %v8505 = vld [vmem:[%s8144 + $0xb8] sm:$0xf]
      %v8506 = vld [vmem:[%s8144 + $0xbc] sm:$0x1]
      %v8508 = vshrl.u32 %v8459, 16
      %v8510 = vrot.slane %v8508, 4
      %v8511 = vshll.u32 %v8459, 16
      %v8513 = vrot.slane %v8511, 5
      %v8514 = vor.u32 %v8510, %v8513
      %v8515 = vrot.slane %v8514, 4
      %v8517 = vshll.u32 %v8460, 16
      %v8519 = vrot.slane %v8517, 5
      %v8520 = vsel %vm759, %v8515, %v8519
      %v8521 = vshrl.u32 %v8460, 16
      %v8523 = vrot.slane %v8521, 4
      %v8524 = vor.u32 %v8523, %v8519
      %v8525 = vrot.slane %v8524, 4
      %v8527 = vshll.u32 %v8461, 16
      %v8529 = vrot.slane %v8527, 5
      %v8530 = vsel %vm759, %v8525, %v8529
      %v8532 = vshrl.u32 %v8462, 16
      %v8534 = vrot.slane %v8532, 4
      %v8535 = vshll.u32 %v8462, 16
      %v8537 = vrot.slane %v8535, 5
      %v8538 = vor.u32 %v8534, %v8537
      %v8539 = vrot.slane %v8538, 4
      %v8541 = vshll.u32 %v8463, 16
      %v8543 = vrot.slane %v8541, 5
      %v8544 = vsel %vm759, %v8539, %v8543
      %v8545 = vshrl.u32 %v8463, 16
      %v8547 = vrot.slane %v8545, 4
      %v8548 = vor.u32 %v8547, %v8543
      %v8549 = vrot.slane %v8548, 4
      %v8551 = vshll.u32 %v8464, 16
      %v8553 = vrot.slane %v8551, 5
      %v8554 = vsel %vm759, %v8549, %v8553
      %v8556 = vshrl.u32 %v8465, 16
      %v8558 = vrot.slane %v8556, 4
      %v8559 = vshll.u32 %v8465, 16
      %v8561 = vrot.slane %v8559, 5
      %v8562 = vor.u32 %v8558, %v8561
      %v8563 = vrot.slane %v8562, 4
      %v8565 = vshll.u32 %v8466, 16
      %v8567 = vrot.slane %v8565, 5
      %v8568 = vsel %vm759, %v8563, %v8567
      %v8569 = vshrl.u32 %v8466, 16
      %v8571 = vrot.slane %v8569, 4
      %v8572 = vor.u32 %v8571, %v8567
      %v8573 = vrot.slane %v8572, 4
      %v8575 = vshll.u32 %v8467, 16
      %v8577 = vrot.slane %v8575, 5
      %v8578 = vsel %vm759, %v8573, %v8577
      %v8580 = vshrl.u32 %v8468, 16
      %v8582 = vrot.slane %v8580, 4
      %v8583 = vshll.u32 %v8468, 16
      %v8585 = vrot.slane %v8583, 5
      %v8586 = vor.u32 %v8582, %v8585
      %v8587 = vrot.slane %v8586, 4
      %v8589 = vshll.u32 %v8469, 16
      %v8591 = vrot.slane %v8589, 5
      %v8592 = vsel %vm759, %v8587, %v8591
      %v8593 = vshrl.u32 %v8469, 16
      %v8595 = vrot.slane %v8593, 4
      %v8596 = vor.u32 %v8595, %v8591
      %v8597 = vrot.slane %v8596, 4
      %v8599 = vshll.u32 %v8470, 16
      %v8601 = vrot.slane %v8599, 5
      %v8602 = vsel %vm759, %v8597, %v8601
      %v8604 = vshrl.u32 %v8471, 16
      %v8606 = vrot.slane %v8604, 4
      %v8607 = vshll.u32 %v8471, 16
      %v8609 = vrot.slane %v8607, 5
      %v8610 = vor.u32 %v8606, %v8609
      %v8611 = vrot.slane %v8610, 4
      %v8613 = vshll.u32 %v8472, 16
      %v8615 = vrot.slane %v8613, 5
      %v8616 = vsel %vm759, %v8611, %v8615
      %v8617 = vshrl.u32 %v8472, 16
      %v8619 = vrot.slane %v8617, 4
      %v8620 = vor.u32 %v8619, %v8615
      %v8621 = vrot.slane %v8620, 4
      %v8623 = vshll.u32 %v8473, 16
      %v8625 = vrot.slane %v8623, 5
      %v8626 = vsel %vm759, %v8621, %v8625
      %v8628 = vshrl.u32 %v8474, 16
      %v8630 = vrot.slane %v8628, 4
      %v8631 = vshll.u32 %v8474, 16
      %v8633 = vrot.slane %v8631, 5
      %v8634 = vor.u32 %v8630, %v8633
      %v8635 = vrot.slane %v8634, 4
      %v8637 = vshll.u32 %v8475, 16
      %v8639 = vrot.slane %v8637, 5
      %v8640 = vsel %vm759, %v8635, %v8639
      %v8641 = vshrl.u32 %v8475, 16
      %v8643 = vrot.slane %v8641, 4
      %v8644 = vor.u32 %v8643, %v8639
      %v8645 = vrot.slane %v8644, 4
      %v8647 = vshll.u32 %v8476, 16
      %v8649 = vrot.slane %v8647, 5
      %v8650 = vsel %vm759, %v8645, %v8649
      %v8652 = vshrl.u32 %v8477, 16
      %v8654 = vrot.slane %v8652, 4
      %v8655 = vshll.u32 %v8477, 16
      %v8657 = vrot.slane %v8655, 5
      %v8658 = vor.u32 %v8654, %v8657
      %v8659 = vrot.slane %v8658, 4
      %v8661 = vshll.u32 %v8478, 16
      %v8663 = vrot.slane %v8661, 5
      %v8664 = vsel %vm759, %v8659, %v8663
      %v8665 = vshrl.u32 %v8478, 16
      %v8667 = vrot.slane %v8665, 4
      %v8668 = vor.u32 %v8667, %v8663
      %v8669 = vrot.slane %v8668, 4
      %v8671 = vshll.u32 %v8479, 16
      %v8673 = vrot.slane %v8671, 5
      %v8674 = vsel %vm759, %v8669, %v8673
      %v8676 = vshrl.u32 %v8480, 16
      %v8678 = vrot.slane %v8676, 4
      %v8679 = vshll.u32 %v8480, 16
      %v8681 = vrot.slane %v8679, 5
      %v8682 = vor.u32 %v8678, %v8681
      %v8683 = vrot.slane %v8682, 4
      %v8685 = vshll.u32 %v8481, 16
      %v8687 = vrot.slane %v8685, 5
      %v8688 = vsel %vm759, %v8683, %v8687
      %v8689 = vshrl.u32 %v8481, 16
      %v8691 = vrot.slane %v8689, 4
      %v8692 = vor.u32 %v8691, %v8687
      %v8693 = vrot.slane %v8692, 4
      %v8695 = vshll.u32 %v8482, 16
      %v8697 = vrot.slane %v8695, 5
      %v8698 = vsel %vm759, %v8693, %v8697
      %v8700 = vshrl.u32 %v8483, 16
      %v8702 = vrot.slane %v8700, 4
      %v8703 = vshll.u32 %v8483, 16
      %v8705 = vrot.slane %v8703, 5
      %v8706 = vor.u32 %v8702, %v8705
      %v8707 = vrot.slane %v8706, 4
      %v8709 = vshll.u32 %v8484, 16
      %v8711 = vrot.slane %v8709, 5
      %v8712 = vsel %vm759, %v8707, %v8711
      %v8713 = vshrl.u32 %v8484, 16
      %v8715 = vrot.slane %v8713, 4
      %v8716 = vor.u32 %v8715, %v8711
      %v8717 = vrot.slane %v8716, 4
      %v8719 = vshll.u32 %v8485, 16
      %v8721 = vrot.slane %v8719, 5
      %v8722 = vsel %vm759, %v8717, %v8721
      %v8724 = vshrl.u32 %v8486, 16
      %v8726 = vrot.slane %v8724, 4
      %v8727 = vshll.u32 %v8486, 16
      %v8729 = vrot.slane %v8727, 5
      %v8730 = vor.u32 %v8726, %v8729
      %v8731 = vrot.slane %v8730, 4
      %v8733 = vshll.u32 %v8487, 16
      %v8735 = vrot.slane %v8733, 5
      %v8736 = vsel %vm759, %v8731, %v8735
      %v8737 = vshrl.u32 %v8487, 16
      %v8739 = vrot.slane %v8737, 4
      %v8740 = vor.u32 %v8739, %v8735
      %v8741 = vrot.slane %v8740, 4
      %v8743 = vshll.u32 %v8488, 16
      %v8745 = vrot.slane %v8743, 5
      %v8746 = vsel %vm759, %v8741, %v8745
      %v8748 = vshrl.u32 %v8489, 16
      %v8750 = vrot.slane %v8748, 4
      %v8751 = vshll.u32 %v8489, 16
      %v8753 = vrot.slane %v8751, 5
      %v8754 = vor.u32 %v8750, %v8753
      %v8755 = vrot.slane %v8754, 4
      %v8757 = vshll.u32 %v8490, 16
      %v8759 = vrot.slane %v8757, 5
      %v8760 = vsel %vm759, %v8755, %v8759
      %v8761 = vshrl.u32 %v8490, 16
      %v8763 = vrot.slane %v8761, 4
      %v8764 = vor.u32 %v8763, %v8759
      %v8765 = vrot.slane %v8764, 4
      %v8767 = vshll.u32 %v8491, 16
      %v8769 = vrot.slane %v8767, 5
      %v8770 = vsel %vm759, %v8765, %v8769
      %v8772 = vshrl.u32 %v8492, 16
      %v8774 = vrot.slane %v8772, 4
      %v8775 = vshll.u32 %v8492, 16
      %v8777 = vrot.slane %v8775, 5
      %v8778 = vor.u32 %v8774, %v8777
      %v8779 = vrot.slane %v8778, 4
      %v8781 = vshll.u32 %v8493, 16
      %v8783 = vrot.slane %v8781, 5
      %v8784 = vsel %vm759, %v8779, %v8783
      %v8785 = vshrl.u32 %v8493, 16
      %v8787 = vrot.slane %v8785, 4
      %v8788 = vor.u32 %v8787, %v8783
      %v8789 = vrot.slane %v8788, 4
      %v8791 = vshll.u32 %v8494, 16
      %v8793 = vrot.slane %v8791, 5
      %v8794 = vsel %vm759, %v8789, %v8793
      %v8796 = vshrl.u32 %v8495, 16
      %v8798 = vrot.slane %v8796, 4
      %v8799 = vshll.u32 %v8495, 16
      %v8801 = vrot.slane %v8799, 5
      %v8802 = vor.u32 %v8798, %v8801
      %v8803 = vrot.slane %v8802, 4
      %v8805 = vshll.u32 %v8496, 16
      %v8807 = vrot.slane %v8805, 5
      %v8808 = vsel %vm759, %v8803, %v8807
      %v8809 = vshrl.u32 %v8496, 16
      %v8811 = vrot.slane %v8809, 4
      %v8812 = vor.u32 %v8811, %v8807
      %v8813 = vrot.slane %v8812, 4
      %v8815 = vshll.u32 %v8497, 16
      %v8817 = vrot.slane %v8815, 5
      %v8818 = vsel %vm759, %v8813, %v8817
      %v8820 = vshrl.u32 %v8498, 16
      %v8822 = vrot.slane %v8820, 4
      %v8823 = vshll.u32 %v8498, 16
      %v8825 = vrot.slane %v8823, 5
      %v8826 = vor.u32 %v8822, %v8825
      %v8827 = vrot.slane %v8826, 4
      %v8829 = vshll.u32 %v8499, 16
      %v8831 = vrot.slane %v8829, 5
      %v8832 = vsel %vm759, %v8827, %v8831
      %v8833 = vshrl.u32 %v8499, 16
      %v8835 = vrot.slane %v8833, 4
      %v8836 = vor.u32 %v8835, %v8831
      %v8837 = vrot.slane %v8836, 4
      %v8839 = vshll.u32 %v8500, 16
      %v8841 = vrot.slane %v8839, 5
      %v8842 = vsel %vm759, %v8837, %v8841
      %v8844 = vshrl.u32 %v8501, 16
      %v8846 = vrot.slane %v8844, 4
      %v8847 = vshll.u32 %v8501, 16
      %v8849 = vrot.slane %v8847, 5
      %v8850 = vor.u32 %v8846, %v8849
      %v8851 = vrot.slane %v8850, 4
      %v8853 = vshll.u32 %v8502, 16
      %v8855 = vrot.slane %v8853, 5
      %v8856 = vsel %vm759, %v8851, %v8855
      %v8857 = vshrl.u32 %v8502, 16
      %v8859 = vrot.slane %v8857, 4
      %v8860 = vor.u32 %v8859, %v8855
      %v8861 = vrot.slane %v8860, 4
      %v8863 = vshll.u32 %v8503, 16
      %v8865 = vrot.slane %v8863, 5
      %v8866 = vsel %vm759, %v8861, %v8865
      %v8868 = vshrl.u32 %v8504, 16
      %v8870 = vrot.slane %v8868, 4
      %v8871 = vshll.u32 %v8504, 16
      %v8873 = vrot.slane %v8871, 5
      %v8874 = vor.u32 %v8870, %v8873
      %v8875 = vrot.slane %v8874, 4
      %v8877 = vshll.u32 %v8505, 16
      %v8879 = vrot.slane %v8877, 5
      %v8880 = vsel %vm759, %v8875, %v8879
      %v8881 = vshrl.u32 %v8505, 16
      %v8883 = vrot.slane %v8881, 4
      %v8884 = vor.u32 %v8883, %v8879
      %v8885 = vrot.slane %v8884, 4
      %v8887 = vshll.u32 %v8506, 16
      %v8889 = vrot.slane %v8887, 5
      %v8890 = vsel %vm759, %v8885, %v8889
      %s8891 = scalar_lea.vmem %s2, 224
      %v8892 = vld [vmem:[%s8891] sm:$0xf]
      %v8893 = vld [vmem:[%s8891 + $0x4] sm:$0xf]
      %v8894 = vld [vmem:[%s8891 + $0x8] sm:$0xf]
      %v8895 = vld [vmem:[%s8891 + $0xc] sm:$0xf]
      %v8896 = vld [vmem:[%s8891 + $0x10] sm:$0xf]
      %v8897 = vld [vmem:[%s8891 + $0x14] sm:$0xf]
      %v8898 = vld [vmem:[%s8891 + $0x18] sm:$0xf]
      %v8899 = vld [vmem:[%s8891 + $0x1c] sm:$0xf]
      %v8900 = vunpack.c.l.b16 %v8520
      %v8901 = vunpack.c.l.b16 %v8530
      %v8902 = vunpack.c.l.b16 %v8544
      %v8903 = vunpack.c.l.b16 %v8554
      %v8904 = vunpack.c.l.b16 %v8568
      %v8905 = vunpack.c.l.b16 %v8578
      %v8906 = vunpack.c.l.b16 %v8592
      %v8907 = vunpack.c.l.b16 %v8602
      %v8908 = vunpack.c.l.b16 %v8616
      %v8909 = vunpack.c.l.b16 %v8626
      %v8910 = vunpack.c.l.b16 %v8640
      %v8911 = vunpack.c.l.b16 %v8650
      %v8912 = vunpack.c.l.b16 %v8664
      %v8913 = vunpack.c.l.b16 %v8674
      %v8914 = vunpack.c.l.b16 %v8688
      %v8915 = vunpack.c.l.b16 %v8698
      %v8916 = vunpack.c.l.b16 %v8712
      %v8917 = vunpack.c.l.b16 %v8722
      %v8918 = vunpack.c.l.b16 %v8736
      %v8919 = vunpack.c.l.b16 %v8746
      %v8920 = vunpack.c.l.b16 %v8760
      %v8921 = vunpack.c.l.b16 %v8770
      %v8922 = vunpack.c.l.b16 %v8784
      %v8923 = vunpack.c.l.b16 %v8794
      %v8924 = vunpack.c.l.b16 %v8808
      %v8925 = vunpack.c.l.b16 %v8818
      %v8926 = vunpack.c.l.b16 %v8832
      %v8927 = vunpack.c.l.b16 %v8842
      %v8928 = vunpack.c.l.b16 %v8856
      %v8929 = vunpack.c.l.b16 %v8866
      %v8930 = vunpack.c.l.b16 %v8880
      %v8931 = vunpack.c.l.b16 %v8890
      %v8932 = vpack.c.b16 %v8901, %v8900
      %v8933 = vpack.c.b16 %v8903, %v8902
      %v8934 = vpack.c.b16 %v8905, %v8904
      %v8935 = vpack.c.b16 %v8907, %v8906
      %v8936 = vpack.c.b16 %v8909, %v8908
      %v8937 = vpack.c.b16 %v8911, %v8910
      %v8938 = vpack.c.b16 %v8913, %v8912
      %v8939 = vpack.c.b16 %v8915, %v8914
      %v8940 = vpack.c.b16 %v8917, %v8916
      %v8941 = vpack.c.b16 %v8919, %v8918
      %v8942 = vpack.c.b16 %v8921, %v8920
      %v8943 = vpack.c.b16 %v8923, %v8922
      %v8944 = vpack.c.b16 %v8925, %v8924
      %v8945 = vpack.c.b16 %v8927, %v8926
      %v8946 = vpack.c.b16 %v8929, %v8928
      %v8947 = vpack.c.b16 %v8931, %v8930
      %v8956 = vunpack.c.l.b16 %v8892
      %v8957 = vunpack.c.l.b16 %v8893
      %v8958 = vunpack.c.l.b16 %v8894
      %v8959 = vunpack.c.l.b16 %v8895
      %v8960 = vunpack.c.l.b16 %v8896
      %v8961 = vunpack.c.l.b16 %v8897
      %v8962 = vunpack.c.l.b16 %v8898
      %v8963 = vunpack.c.l.b16 %v8899
      %v8964 = vpack.c.b16 %v8957, %v8956
      %v8965 = vpack.c.b16 %v8959, %v8958
      %v8966 = vpack.c.b16 %v8961, %v8960
      %v8967 = vpack.c.b16 %v8963, %v8962
      %v8973 = vsel %vm1225, %v8932, 0
      %v8976 = vsel %vm1225, %v8933, 0
      %v8979 = vsel %vm1225, %v8934, 0
      %v8982 = vsel %vm1225, %v8935, 0
      %v8985 = vsel %vm1225, %v8936, 0
      %v8988 = vsel %vm1225, %v8937, 0
      %v8991 = vsel %vm1225, %v8938, 0
      %v8994 = vsel %vm1225, %v8939, 0
      %v8997 = vsel %vm1225, %v8940, 0
      %v9000 = vsel %vm1225, %v8941, 0
      %v9003 = vsel %vm1225, %v8942, 0
      %v9006 = vsel %vm1225, %v8943, 0
      %v9009 = vsel %vm1225, %v8944, 0
      %v9012 = vsel %vm1225, %v8945, 0
      %v9015 = vsel %vm1225, %v8946, 0
      %v9018 = vsel %vm1225, %v8947, 0
      %9020 = vmatpush.bf16.msra.mxu0 0
      %9021 = vmatpush.bf16.msra.mxu0 0
      %9022 = vmatpush.bf16.msra.mxu0 0
      %9023 = vmatpush.bf16.msra.mxu0 0
      %9024 = vmatpush.bf16.msra.mxu0 %v8967
      %9025 = vmatpush.bf16.msra.mxu0 %v8966
      %9026 = vmatpush.bf16.msra.mxu0 %v8965
      %9027 = vmatpush.bf16.msra.mxu0 %v8964
      %9028 = vmatmul.bf16.gmra.mxu0 %v8973
      %v9029 = vpop.f32.mrf.mxu0
      %v9030 = vadd.f32 0.0, %v9029
      %v9031 = vpop.f32.mrf.mxu0
      %v9032 = vadd.f32 0.0, %v9031
      %9033 = vmatmul.bf16.gmra.mxu0 %v8976
      %v9034 = vpop.f32.mrf.mxu0
      %v9035 = vadd.f32 0.0, %v9034
      %v9036 = vpop.f32.mrf.mxu0
      %v9037 = vadd.f32 0.0, %v9036
      %9038 = vmatmul.bf16.gmra.mxu0 %v8979
      %v9039 = vpop.f32.mrf.mxu0
      %v9040 = vadd.f32 0.0, %v9039
      %v9041 = vpop.f32.mrf.mxu0
      %v9042 = vadd.f32 0.0, %v9041
      %9043 = vmatmul.bf16.gmra.mxu0 %v8982
      %v9044 = vpop.f32.mrf.mxu0
      %v9045 = vadd.f32 0.0, %v9044
      %v9046 = vpop.f32.mrf.mxu0
      %v9047 = vadd.f32 0.0, %v9046
      %9048 = vmatmul.bf16.gmra.mxu0 %v8985
      %v9049 = vpop.f32.mrf.mxu0
      %v9050 = vadd.f32 0.0, %v9049
      %v9051 = vpop.f32.mrf.mxu0
      %v9052 = vadd.f32 0.0, %v9051
      %9053 = vmatmul.bf16.gmra.mxu0 %v8988
      %v9054 = vpop.f32.mrf.mxu0
      %v9055 = vadd.f32 0.0, %v9054
      %v9056 = vpop.f32.mrf.mxu0
      %v9057 = vadd.f32 0.0, %v9056
      %9058 = vmatmul.bf16.gmra.mxu0 %v8991
      %v9059 = vpop.f32.mrf.mxu0
      %v9060 = vadd.f32 0.0, %v9059
      %v9061 = vpop.f32.mrf.mxu0
      %v9062 = vadd.f32 0.0, %v9061
      %9063 = vmatmul.bf16.gmra.mxu0 %v8994
      %v9064 = vpop.f32.mrf.mxu0
      %v9065 = vadd.f32 0.0, %v9064
      %v9066 = vpop.f32.mrf.mxu0
      %v9067 = vadd.f32 0.0, %v9066
      %9068 = vmatmul.bf16.gmra.mxu0 %v8997
      %v9069 = vpop.f32.mrf.mxu0
      %v9070 = vadd.f32 0.0, %v9069
      %v9071 = vpop.f32.mrf.mxu0
      %v9072 = vadd.f32 0.0, %v9071
      %9073 = vmatmul.bf16.gmra.mxu0 %v9000
      %v9074 = vpop.f32.mrf.mxu0
      %v9075 = vadd.f32 0.0, %v9074
      %v9076 = vpop.f32.mrf.mxu0
      %v9077 = vadd.f32 0.0, %v9076
      %9078 = vmatmul.bf16.gmra.mxu0 %v9003
      %v9079 = vpop.f32.mrf.mxu0
      %v9080 = vadd.f32 0.0, %v9079
      %v9081 = vpop.f32.mrf.mxu0
      %v9082 = vadd.f32 0.0, %v9081
      %9083 = vmatmul.bf16.gmra.mxu0 %v9006
      %v9084 = vpop.f32.mrf.mxu0
      %v9085 = vadd.f32 0.0, %v9084
      %v9086 = vpop.f32.mrf.mxu0
      %v9087 = vadd.f32 0.0, %v9086
      %9088 = vmatmul.bf16.gmra.mxu0 %v9009
      %v9089 = vpop.f32.mrf.mxu0
      %v9090 = vadd.f32 0.0, %v9089
      %v9091 = vpop.f32.mrf.mxu0
      %v9092 = vadd.f32 0.0, %v9091
      %9093 = vmatmul.bf16.gmra.mxu0 %v9012
      %v9094 = vpop.f32.mrf.mxu0
      %v9095 = vadd.f32 0.0, %v9094
      %v9096 = vpop.f32.mrf.mxu0
      %v9097 = vadd.f32 0.0, %v9096
      %9098 = vmatmul.bf16.gmra.mxu0 %v9015
      %v9099 = vpop.f32.mrf.mxu0
      %v9100 = vadd.f32 0.0, %v9099
      %v9101 = vpop.f32.mrf.mxu0
      %v9102 = vadd.f32 0.0, %v9101
      %9103 = vmatmul.bf16.gmra.mxu0 %v9018
      %v9104 = vpop.f32.mrf.mxu0
      %v9105 = vadd.f32 0.0, %v9104
      %v9106 = vpop.f32.mrf.mxu0
      %v9107 = vadd.f32 0.0, %v9106
      %9108 = vdwg.mxu0
      %v9109 = vadd.f32 %v8427, %v9030
      %v9110 = vadd.f32 %v8428, %v9032
      %v9111 = vadd.f32 %v8429, %v9035
      %v9112 = vadd.f32 %v8430, %v9037
      %v9113 = vadd.f32 %v8431, %v9040
      %v9114 = vadd.f32 %v8432, %v9042
      %v9115 = vadd.f32 %v8433, %v9045
      %v9116 = vadd.f32 %v8434, %v9047
      %v9117 = vadd.f32 %v8435, %v9050
      %v9118 = vadd.f32 %v8436, %v9052
      %v9119 = vadd.f32 %v8437, %v9055
      %v9120 = vadd.f32 %v8438, %v9057
      %v9121 = vadd.f32 %v8439, %v9060
      %v9122 = vadd.f32 %v8440, %v9062
      %v9123 = vadd.f32 %v8441, %v9065
      %v9124 = vadd.f32 %v8442, %v9067
      %v9125 = vadd.f32 %v8443, %v9070
      %v9126 = vadd.f32 %v8444, %v9072
      %v9127 = vadd.f32 %v8445, %v9075
      %v9128 = vadd.f32 %v8446, %v9077
      %v9129 = vadd.f32 %v8447, %v9080
      %v9130 = vadd.f32 %v8448, %v9082
      %v9131 = vadd.f32 %v8449, %v9085
      %v9132 = vadd.f32 %v8450, %v9087
      %v9133 = vadd.f32 %v8451, %v9090
      %v9134 = vadd.f32 %v8452, %v9092
      %v9135 = vadd.f32 %v8453, %v9095
      %v9136 = vadd.f32 %v8454, %v9097
      %v9137 = vadd.f32 %v8455, %v9100
      %v9138 = vadd.f32 %v8456, %v9102
      %v9139 = vadd.f32 %v8457, %v9105
      %v9140 = vadd.f32 %v8458, %v9107
      %v9141 = vld [vmem:[%s8144] sm:$0xe]
      %v9142 = vld [vmem:[%s8144 + $0xc] sm:$0xe]
      %v9143 = vld [vmem:[%s8144 + $0x18] sm:$0xe]
      %v9144 = vld [vmem:[%s8144 + $0x24] sm:$0xe]
      %v9145 = vld [vmem:[%s8144 + $0x30] sm:$0xe]
      %v9146 = vld [vmem:[%s8144 + $0x3c] sm:$0xe]
      %v9147 = vld [vmem:[%s8144 + $0x48] sm:$0xe]
      %v9148 = vld [vmem:[%s8144 + $0x54] sm:$0xe]
      %v9149 = vld [vmem:[%s8144 + $0x60] sm:$0xe]
      %v9150 = vld [vmem:[%s8144 + $0x6c] sm:$0xe]
      %v9151 = vld [vmem:[%s8144 + $0x78] sm:$0xe]
      %v9152 = vld [vmem:[%s8144 + $0x84] sm:$0xe]
      %v9153 = vld [vmem:[%s8144 + $0x90] sm:$0xe]
      %v9154 = vld [vmem:[%s8144 + $0x9c] sm:$0xe]
      %v9155 = vld [vmem:[%s8144 + $0xa8] sm:$0xe]
      %v9156 = vld [vmem:[%s8144 + $0xb4] sm:$0xe]
      %v9205 = vrot.slane %v9141, 5
      %v9206 = vrot.slane %v9205, 4
      %v9207 = vrot.slane %v8460, 5
      %v9208 = vsel %vm1654, %v9206, %v9207
      %v9209 = vrot.slane %v9207, 4
      %v9210 = vrot.slane %v8461, 5
      %v9211 = vsel %vm1654, %v9209, %v9210
      %v9212 = vrot.slane %v9142, 5
      %v9213 = vrot.slane %v9212, 4
      %v9214 = vrot.slane %v8463, 5
      %v9215 = vsel %vm1654, %v9213, %v9214
      %v9216 = vrot.slane %v9214, 4
      %v9217 = vrot.slane %v8464, 5
      %v9218 = vsel %vm1654, %v9216, %v9217
      %v9219 = vrot.slane %v9143, 5
      %v9220 = vrot.slane %v9219, 4
      %v9221 = vrot.slane %v8466, 5
      %v9222 = vsel %vm1654, %v9220, %v9221
      %v9223 = vrot.slane %v9221, 4
      %v9224 = vrot.slane %v8467, 5
      %v9225 = vsel %vm1654, %v9223, %v9224
      %v9226 = vrot.slane %v9144, 5
      %v9227 = vrot.slane %v9226, 4
      %v9228 = vrot.slane %v8469, 5
      %v9229 = vsel %vm1654, %v9227, %v9228
      %v9230 = vrot.slane %v9228, 4
      %v9231 = vrot.slane %v8470, 5
      %v9232 = vsel %vm1654, %v9230, %v9231
      %v9233 = vrot.slane %v9145, 5
      %v9234 = vrot.slane %v9233, 4
      %v9235 = vrot.slane %v8472, 5
      %v9236 = vsel %vm1654, %v9234, %v9235
      %v9237 = vrot.slane %v9235, 4
      %v9238 = vrot.slane %v8473, 5
      %v9239 = vsel %vm1654, %v9237, %v9238
      %v9240 = vrot.slane %v9146, 5
      %v9241 = vrot.slane %v9240, 4
      %v9242 = vrot.slane %v8475, 5
      %v9243 = vsel %vm1654, %v9241, %v9242
      %v9244 = vrot.slane %v9242, 4
      %v9245 = vrot.slane %v8476, 5
      %v9246 = vsel %vm1654, %v9244, %v9245
      %v9247 = vrot.slane %v9147, 5
      %v9248 = vrot.slane %v9247, 4
      %v9249 = vrot.slane %v8478, 5
      %v9250 = vsel %vm1654, %v9248, %v9249
      %v9251 = vrot.slane %v9249, 4
      %v9252 = vrot.slane %v8479, 5
      %v9253 = vsel %vm1654, %v9251, %v9252
      %v9254 = vrot.slane %v9148, 5
      %v9255 = vrot.slane %v9254, 4
      %v9256 = vrot.slane %v8481, 5
      %v9257 = vsel %vm1654, %v9255, %v9256
      %v9258 = vrot.slane %v9256, 4
      %v9259 = vrot.slane %v8482, 5
      %v9260 = vsel %vm1654, %v9258, %v9259
      %v9261 = vrot.slane %v9149, 5
      %v9262 = vrot.slane %v9261, 4
      %v9263 = vrot.slane %v8484, 5
      %v9264 = vsel %vm1654, %v9262, %v9263
      %v9265 = vrot.slane %v9263, 4
      %v9266 = vrot.slane %v8485, 5
      %v9267 = vsel %vm1654, %v9265, %v9266
      %v9268 = vrot.slane %v9150, 5
      %v9269 = vrot.slane %v9268, 4
      %v9270 = vrot.slane %v8487, 5
      %v9271 = vsel %vm1654, %v9269, %v9270
      %v9272 = vrot.slane %v9270, 4
      %v9273 = vrot.slane %v8488, 5
      %v9274 = vsel %vm1654, %v9272, %v9273
      %v9275 = vrot.slane %v9151, 5
      %v9276 = vrot.slane %v9275, 4
      %v9277 = vrot.slane %v8490, 5
      %v9278 = vsel %vm1654, %v9276, %v9277
      %v9279 = vrot.slane %v9277, 4
      %v9280 = vrot.slane %v8491, 5
      %v9281 = vsel %vm1654, %v9279, %v9280
      %v9282 = vrot.slane %v9152, 5
      %v9283 = vrot.slane %v9282, 4
      %v9284 = vrot.slane %v8493, 5
      %v9285 = vsel %vm1654, %v9283, %v9284
      %v9286 = vrot.slane %v9284, 4
      %v9287 = vrot.slane %v8494, 5
      %v9288 = vsel %vm1654, %v9286, %v9287
      %v9289 = vrot.slane %v9153, 5
      %v9290 = vrot.slane %v9289, 4
      %v9291 = vrot.slane %v8496, 5
      %v9292 = vsel %vm1654, %v9290, %v9291
      %v9293 = vrot.slane %v9291, 4
      %v9294 = vrot.slane %v8497, 5
      %v9295 = vsel %vm1654, %v9293, %v9294
      %v9296 = vrot.slane %v9154, 5
      %v9297 = vrot.slane %v9296, 4
      %v9298 = vrot.slane %v8499, 5
      %v9299 = vsel %vm1654, %v9297, %v9298
      %v9300 = vrot.slane %v9298, 4
      %v9301 = vrot.slane %v8500, 5
      %v9302 = vsel %vm1654, %v9300, %v9301
      %v9303 = vrot.slane %v9155, 5
      %v9304 = vrot.slane %v9303, 4
      %v9305 = vrot.slane %v8502, 5
      %v9306 = vsel %vm1654, %v9304, %v9305
      %v9307 = vrot.slane %v9305, 4
      %v9308 = vrot.slane %v8503, 5
      %v9309 = vsel %vm1654, %v9307, %v9308
      %v9310 = vrot.slane %v9156, 5
      %v9311 = vrot.slane %v9310, 4
      %v9312 = vrot.slane %v8505, 5
      %v9313 = vsel %vm1654, %v9311, %v9312
      %v9314 = vrot.slane %v9312, 4
      %v9315 = vrot.slane %v8506, 5
      %v9316 = vsel %vm1654, %v9314, %v9315
      %s9317 = scalar_lea.vmem %s2, 256
      %v9318 = vld [vmem:[%s9317] sm:$0xf]
      %v9319 = vld [vmem:[%s9317 + $0x4] sm:$0xf]
      %v9320 = vld [vmem:[%s9317 + $0x8] sm:$0xf]
      %v9321 = vld [vmem:[%s9317 + $0xc] sm:$0xf]
      %v9322 = vld [vmem:[%s9317 + $0x10] sm:$0xf]
      %v9323 = vld [vmem:[%s9317 + $0x14] sm:$0xf]
      %v9324 = vld [vmem:[%s9317 + $0x18] sm:$0xf]
      %v9325 = vld [vmem:[%s9317 + $0x1c] sm:$0xf]
      %v9326 = vunpack.c.l.b16 %v9208
      %v9327 = vunpack.c.l.b16 %v9211
      %v9328 = vunpack.c.l.b16 %v9215
      %v9329 = vunpack.c.l.b16 %v9218
      %v9330 = vunpack.c.l.b16 %v9222
      %v9331 = vunpack.c.l.b16 %v9225
      %v9332 = vunpack.c.l.b16 %v9229
      %v9333 = vunpack.c.l.b16 %v9232
      %v9334 = vunpack.c.l.b16 %v9236
      %v9335 = vunpack.c.l.b16 %v9239
      %v9336 = vunpack.c.l.b16 %v9243
      %v9337 = vunpack.c.l.b16 %v9246
      %v9338 = vunpack.c.l.b16 %v9250
      %v9339 = vunpack.c.l.b16 %v9253
      %v9340 = vunpack.c.l.b16 %v9257
      %v9341 = vunpack.c.l.b16 %v9260
      %v9342 = vunpack.c.l.b16 %v9264
      %v9343 = vunpack.c.l.b16 %v9267
      %v9344 = vunpack.c.l.b16 %v9271
      %v9345 = vunpack.c.l.b16 %v9274
      %v9346 = vunpack.c.l.b16 %v9278
      %v9347 = vunpack.c.l.b16 %v9281
      %v9348 = vunpack.c.l.b16 %v9285
      %v9349 = vunpack.c.l.b16 %v9288
      %v9350 = vunpack.c.l.b16 %v9292
      %v9351 = vunpack.c.l.b16 %v9295
      %v9352 = vunpack.c.l.b16 %v9299
      %v9353 = vunpack.c.l.b16 %v9302
      %v9354 = vunpack.c.l.b16 %v9306
      %v9355 = vunpack.c.l.b16 %v9309
      %v9356 = vunpack.c.l.b16 %v9313
      %v9357 = vunpack.c.l.b16 %v9316
      %v9358 = vpack.c.b16 %v9327, %v9326
      %v9359 = vpack.c.b16 %v9329, %v9328
      %v9360 = vpack.c.b16 %v9331, %v9330
      %v9361 = vpack.c.b16 %v9333, %v9332
      %v9362 = vpack.c.b16 %v9335, %v9334
      %v9363 = vpack.c.b16 %v9337, %v9336
      %v9364 = vpack.c.b16 %v9339, %v9338
      %v9365 = vpack.c.b16 %v9341, %v9340
      %v9366 = vpack.c.b16 %v9343, %v9342
      %v9367 = vpack.c.b16 %v9345, %v9344
      %v9368 = vpack.c.b16 %v9347, %v9346
      %v9369 = vpack.c.b16 %v9349, %v9348
      %v9370 = vpack.c.b16 %v9351, %v9350
      %v9371 = vpack.c.b16 %v9353, %v9352
      %v9372 = vpack.c.b16 %v9355, %v9354
      %v9373 = vpack.c.b16 %v9357, %v9356
      %v9382 = vunpack.c.l.b16 %v9318
      %v9383 = vunpack.c.l.b16 %v9319
      %v9384 = vunpack.c.l.b16 %v9320
      %v9385 = vunpack.c.l.b16 %v9321
      %v9386 = vunpack.c.l.b16 %v9322
      %v9387 = vunpack.c.l.b16 %v9323
      %v9388 = vunpack.c.l.b16 %v9324
      %v9389 = vunpack.c.l.b16 %v9325
      %v9390 = vpack.c.b16 %v9383, %v9382
      %v9391 = vpack.c.b16 %v9385, %v9384
      %v9392 = vpack.c.b16 %v9387, %v9386
      %v9393 = vpack.c.b16 %v9389, %v9388
      %v9399 = vsel %vm1225, %v9358, 0
      %v9402 = vsel %vm1225, %v9359, 0
      %v9405 = vsel %vm1225, %v9360, 0
      %v9408 = vsel %vm1225, %v9361, 0
      %v9411 = vsel %vm1225, %v9362, 0
      %v9414 = vsel %vm1225, %v9363, 0
      %v9417 = vsel %vm1225, %v9364, 0
      %v9420 = vsel %vm1225, %v9365, 0
      %v9423 = vsel %vm1225, %v9366, 0
      %v9426 = vsel %vm1225, %v9367, 0
      %v9429 = vsel %vm1225, %v9368, 0
      %v9432 = vsel %vm1225, %v9369, 0
      %v9435 = vsel %vm1225, %v9370, 0
      %v9438 = vsel %vm1225, %v9371, 0
      %v9441 = vsel %vm1225, %v9372, 0
      %v9444 = vsel %vm1225, %v9373, 0
      %9446 = vmatpush.bf16.msra.mxu0 0
      %9447 = vmatpush.bf16.msra.mxu0 0
      %9448 = vmatpush.bf16.msra.mxu0 0
      %9449 = vmatpush.bf16.msra.mxu0 0
      %9450 = vmatpush.bf16.msra.mxu0 %v9393
      %9451 = vmatpush.bf16.msra.mxu0 %v9392
      %9452 = vmatpush.bf16.msra.mxu0 %v9391
      %9453 = vmatpush.bf16.msra.mxu0 %v9390
      %9454 = vmatmul.bf16.gmra.mxu0 %v9399
      %v9455 = vpop.f32.mrf.mxu0
      %v9456 = vadd.f32 0.0, %v9455
      %v9457 = vpop.f32.mrf.mxu0
      %v9458 = vadd.f32 0.0, %v9457
      %9459 = vmatmul.bf16.gmra.mxu0 %v9402
      %v9460 = vpop.f32.mrf.mxu0
      %v9461 = vadd.f32 0.0, %v9460
      %v9462 = vpop.f32.mrf.mxu0
      %v9463 = vadd.f32 0.0, %v9462
      %9464 = vmatmul.bf16.gmra.mxu0 %v9405
      %v9465 = vpop.f32.mrf.mxu0
      %v9466 = vadd.f32 0.0, %v9465
      %v9467 = vpop.f32.mrf.mxu0
      %v9468 = vadd.f32 0.0, %v9467
      %9469 = vmatmul.bf16.gmra.mxu0 %v9408
      %v9470 = vpop.f32.mrf.mxu0
      %v9471 = vadd.f32 0.0, %v9470
      %v9472 = vpop.f32.mrf.mxu0
      %v9473 = vadd.f32 0.0, %v9472
      %9474 = vmatmul.bf16.gmra.mxu0 %v9411
      %v9475 = vpop.f32.mrf.mxu0
      %v9476 = vadd.f32 0.0, %v9475
      %v9477 = vpop.f32.mrf.mxu0
      %v9478 = vadd.f32 0.0, %v9477
      %9479 = vmatmul.bf16.gmra.mxu0 %v9414
      %v9480 = vpop.f32.mrf.mxu0
      %v9481 = vadd.f32 0.0, %v9480
      %v9482 = vpop.f32.mrf.mxu0
      %v9483 = vadd.f32 0.0, %v9482
      %9484 = vmatmul.bf16.gmra.mxu0 %v9417
      %v9485 = vpop.f32.mrf.mxu0
      %v9486 = vadd.f32 0.0, %v9485
      %v9487 = vpop.f32.mrf.mxu0
      %v9488 = vadd.f32 0.0, %v9487
      %9489 = vmatmul.bf16.gmra.mxu0 %v9420
      %v9490 = vpop.f32.mrf.mxu0
      %v9491 = vadd.f32 0.0, %v9490
      %v9492 = vpop.f32.mrf.mxu0
      %v9493 = vadd.f32 0.0, %v9492
      %9494 = vmatmul.bf16.gmra.mxu0 %v9423
      %v9495 = vpop.f32.mrf.mxu0
      %v9496 = vadd.f32 0.0, %v9495
      %v9497 = vpop.f32.mrf.mxu0
      %v9498 = vadd.f32 0.0, %v9497
      %9499 = vmatmul.bf16.gmra.mxu0 %v9426
      %v9500 = vpop.f32.mrf.mxu0
      %v9501 = vadd.f32 0.0, %v9500
      %v9502 = vpop.f32.mrf.mxu0
      %v9503 = vadd.f32 0.0, %v9502
      %9504 = vmatmul.bf16.gmra.mxu0 %v9429
      %v9505 = vpop.f32.mrf.mxu0
      %v9506 = vadd.f32 0.0, %v9505
      %v9507 = vpop.f32.mrf.mxu0
      %v9508 = vadd.f32 0.0, %v9507
      %9509 = vmatmul.bf16.gmra.mxu0 %v9432
      %v9510 = vpop.f32.mrf.mxu0
      %v9511 = vadd.f32 0.0, %v9510
      %v9512 = vpop.f32.mrf.mxu0
      %v9513 = vadd.f32 0.0, %v9512
      %9514 = vmatmul.bf16.gmra.mxu0 %v9435
      %v9515 = vpop.f32.mrf.mxu0
      %v9516 = vadd.f32 0.0, %v9515
      %v9517 = vpop.f32.mrf.mxu0
      %v9518 = vadd.f32 0.0, %v9517
      %9519 = vmatmul.bf16.gmra.mxu0 %v9438
      %v9520 = vpop.f32.mrf.mxu0
      %v9521 = vadd.f32 0.0, %v9520
      %v9522 = vpop.f32.mrf.mxu0
      %v9523 = vadd.f32 0.0, %v9522
      %9524 = vmatmul.bf16.gmra.mxu0 %v9441
      %v9525 = vpop.f32.mrf.mxu0
      %v9526 = vadd.f32 0.0, %v9525
      %v9527 = vpop.f32.mrf.mxu0
      %v9528 = vadd.f32 0.0, %v9527
      %9529 = vmatmul.bf16.gmra.mxu0 %v9444
      %v9530 = vpop.f32.mrf.mxu0
      %v9531 = vadd.f32 0.0, %v9530
      %v9532 = vpop.f32.mrf.mxu0
      %v9533 = vadd.f32 0.0, %v9532
      %9534 = vdwg.mxu0
      %v9535 = vadd.f32 %v9109, %v9456
      %v9536 = vadd.f32 %v9110, %v9458
      %v9537 = vadd.f32 %v9111, %v9461
      %v9538 = vadd.f32 %v9112, %v9463
      %v9539 = vadd.f32 %v9113, %v9466
      %v9540 = vadd.f32 %v9114, %v9468
      %v9541 = vadd.f32 %v9115, %v9471
      %v9542 = vadd.f32 %v9116, %v9473
      %v9543 = vadd.f32 %v9117, %v9476
      %v9544 = vadd.f32 %v9118, %v9478
      %v9545 = vadd.f32 %v9119, %v9481
      %v9546 = vadd.f32 %v9120, %v9483
      %v9547 = vadd.f32 %v9121, %v9486
      %v9548 = vadd.f32 %v9122, %v9488
      %v9549 = vadd.f32 %v9123, %v9491
      %v9550 = vadd.f32 %v9124, %v9493
      %v9551 = vadd.f32 %v9125, %v9496
      %v9552 = vadd.f32 %v9126, %v9498
      %v9553 = vadd.f32 %v9127, %v9501
      %v9554 = vadd.f32 %v9128, %v9503
      %v9555 = vadd.f32 %v9129, %v9506
      %v9556 = vadd.f32 %v9130, %v9508
      %v9557 = vadd.f32 %v9131, %v9511
      %v9558 = vadd.f32 %v9132, %v9513
      %v9559 = vadd.f32 %v9133, %v9516
      %v9560 = vadd.f32 %v9134, %v9518
      %v9561 = vadd.f32 %v9135, %v9521
      %v9562 = vadd.f32 %v9136, %v9523
      %v9563 = vadd.f32 %v9137, %v9526
      %v9564 = vadd.f32 %v9138, %v9528
      %v9565 = vadd.f32 %v9139, %v9531
      %v9566 = vadd.f32 %v9140, %v9533
      %v9567 = vmax.f32 %v9535, 0.0
      %v9568 = vmax.f32 %v9536, 0.0
      %v9569 = vmax.f32 %v9537, 0.0
      %v9570 = vmax.f32 %v9538, 0.0
      %v9571 = vmax.f32 %v9539, 0.0
      %v9572 = vmax.f32 %v9540, 0.0
      %v9573 = vmax.f32 %v9541, 0.0
      %v9574 = vmax.f32 %v9542, 0.0
      %v9575 = vmax.f32 %v9543, 0.0
      %v9576 = vmax.f32 %v9544, 0.0
      %v9577 = vmax.f32 %v9545, 0.0
      %v9578 = vmax.f32 %v9546, 0.0
      %v9579 = vmax.f32 %v9547, 0.0
      %v9580 = vmax.f32 %v9548, 0.0
      %v9581 = vmax.f32 %v9549, 0.0
      %v9582 = vmax.f32 %v9550, 0.0
      %v9583 = vmax.f32 %v9551, 0.0
      %v9584 = vmax.f32 %v9552, 0.0
      %v9585 = vmax.f32 %v9553, 0.0
      %v9586 = vmax.f32 %v9554, 0.0
      %v9587 = vmax.f32 %v9555, 0.0
      %v9588 = vmax.f32 %v9556, 0.0
      %v9589 = vmax.f32 %v9557, 0.0
      %v9590 = vmax.f32 %v9558, 0.0
      %v9591 = vmax.f32 %v9559, 0.0
      %v9592 = vmax.f32 %v9560, 0.0
      %v9593 = vmax.f32 %v9561, 0.0
      %v9594 = vmax.f32 %v9562, 0.0
      %v9595 = vmax.f32 %v9563, 0.0
      %v9596 = vmax.f32 %v9564, 0.0
      %v9597 = vmax.f32 %v9565, 0.0
      %v9598 = vmax.f32 %v9566, 0.0
      %9599 = vst [vmem:[%s170] sm:$0xff] %v9567
      %9600 = vst [vmem:[%s170 + $0x8] sm:$0xff] %v9568
      %9601 = vst [vmem:[%s170 + $0x10] sm:$0xff] %v9569
      %9602 = vst [vmem:[%s170 + $0x18] sm:$0xff] %v9570
      %9603 = vst [vmem:[%s170 + $0x20] sm:$0xff] %v9571
      %9604 = vst [vmem:[%s170 + $0x28] sm:$0xff] %v9572
      %9605 = vst [vmem:[%s170 + $0x30] sm:$0xff] %v9573
      %9606 = vst [vmem:[%s170 + $0x38] sm:$0xff] %v9574
      %9607 = vst [vmem:[%s170 + $0x40] sm:$0xff] %v9575
      %9608 = vst [vmem:[%s170 + $0x48] sm:$0xff] %v9576
      %9609 = vst [vmem:[%s170 + $0x50] sm:$0xff] %v9577
      %9610 = vst [vmem:[%s170 + $0x58] sm:$0xff] %v9578
      %9611 = vst [vmem:[%s170 + $0x60] sm:$0xff] %v9579
      %9612 = vst [vmem:[%s170 + $0x68] sm:$0xff] %v9580
      %9613 = vst [vmem:[%s170 + $0x70] sm:$0xff] %v9581
      %9614 = vst [vmem:[%s170 + $0x78] sm:$0xff] %v9582
      %9615 = vst [vmem:[%s170 + $0x80] sm:$0xff] %v9583
      %9616 = vst [vmem:[%s170 + $0x88] sm:$0xff] %v9584
      %9617 = vst [vmem:[%s170 + $0x90] sm:$0xff] %v9585
      %9618 = vst [vmem:[%s170 + $0x98] sm:$0xff] %v9586
      %9619 = vst [vmem:[%s170 + $0xa0] sm:$0xff] %v9587
      %9620 = vst [vmem:[%s170 + $0xa8] sm:$0xff] %v9588
      %9621 = vst [vmem:[%s170 + $0xb0] sm:$0xff] %v9589
      %9622 = vst [vmem:[%s170 + $0xb8] sm:$0xff] %v9590
      %9623 = vst [vmem:[%s170 + $0xc0] sm:$0xff] %v9591
      %9624 = vst [vmem:[%s170 + $0xc8] sm:$0xff] %v9592
      %9625 = vst [vmem:[%s170 + $0xd0] sm:$0xff] %v9593
      %9626 = vst [vmem:[%s170 + $0xd8] sm:$0xff] %v9594
      %9627 = vst [vmem:[%s170 + $0xe0] sm:$0xff] %v9595
      %9628 = vst [vmem:[%s170 + $0xe8] sm:$0xff] %v9596
      %9629 = vst [vmem:[%s170 + $0xf0] sm:$0xff] %v9597
      %9630 = vst [vmem:[%s170 + $0xf8] sm:$0xff] %v9598
      %p9631 = scmp.lt.s32.totalorder %s14, 1
      %s9632 = scalar_select %p9631, %s14, 1
      %s9633 = smul.addr %s9632, 32
      %s9634 = smul.addr %s9633, 8
      %s9635 = scalar_lea.vmem %s3, %s9634
      // Predicated region
      $region33: #{decoder_block_forward.1} parent=31 // pred_check
        %p9636 = pneg %p100
      $region34: #{decoder_block_forward.1} parent=31 // pred_check_branch
        %9638 = sbr.rel (%p9636) target = $region36
      $region35: #{decoder_block_forward.1} parent=31 // pred_region
        _
      $region36: #{decoder_block_forward.1} parent=31 // pred_fallthru
        _
    $region32: #{decoder_block_forward.1} parent=5 // pred_fallthru
      _
    %p9639 = scmp.le.s32.totalorder 2, %s9
    // Predicated region
    $region37: #{decoder_block_forward.1} parent=5 // pred_check
      %p9640 = pneg %p9639
    $region38: #{decoder_block_forward.1} parent=5 // pred_check_branch
      %9642 = sbr.rel (%p9640) target = $region40
    $region39: #{decoder_block_forward.1} parent=5 // pred_region
      %s9643 = ssub.s32 %s9, 2
      // Predicated region
      $region41: #{decoder_block_forward.1} parent=39 // pred_check
        %p9644 = pneg %p106
      $region42: #{decoder_block_forward.1} parent=39 // pred_check_branch
        %9646 = sbr.rel (%p9644) target = $region44
      $region43: #{decoder_block_forward.1} parent=39 // pred_region
        %p9647 = scmp.lt.s32.totalorder %s15, 1
        %s9648 = scalar_select %p9647, %s15, 1
        %s9649 = smul.addr %s9648, 32
        %s9650 = smul.addr %s9649, 8
        %s9651 = scalar_lea.vmem %s3, %s9650
      $region44: #{decoder_block_forward.1} parent=39 // pred_fallthru
        _
    $region40: #{decoder_block_forward.1} parent=5 // pred_fallthru
      _
  $region6: #{decoder_block_forward.1} parent=0 // loop_footer
    %s13 = sadd.s32 1, %s9
  $region7: #{decoder_block_forward.1} parent=0 // loop_footer_branch
    %8 = sbr.rel target = $region3
  $region8: #{decoder_block_forward.1} parent=0 // loop_exit
    _

</llo_original>
